<compile_context>
chip_gen: v7x
topology: tpu7x:2x2x1
jax: 0.10.0
libtpu: 0.0.40
codegen_flags: <defaults>
</compile_context>

<pallas_src>
import functools

import jax
import jax.numpy as jnp
import numpy as np
from jax.experimental import pallas as pl
from jax.experimental.pallas import tpu as pltpu


# ----------------------------------------------------------------------------
# Fused bidirectional LSTM layer kernel.
#   x_ref   : (T*B, Cin)   rows are time-major (row = t*B + b)
#   wih_ref : (Cin, 8H)    [Wih_fw.T | Wih_bw.T]
#   whh_ref : (2H, 8H)     block-diag([Whh_fw.T, Whh_bw.T])
#   b_ref   : (1, 8H)      [b_ih_fw + b_hh_fw | b_ih_bw + b_hh_bw]
#   out_ref : (T*B, 2H)    [h_fw | h_bw], rows time-major
#   gx_ref  : VMEM scratch (T*B, 8H), precomputed input projection
# ----------------------------------------------------------------------------
def _bilstm_kernel(x_ref, wih_ref, whh_ref, b_ref, out_ref, gx_ref, *, T, B, H):
    # Prologue: hoisted input projection for ALL time steps & both directions
    # (one MXU pass, bias folded in).
    gx_ref[...] = (
        jnp.dot(x_ref[...], wih_ref[...], preferred_element_type=jnp.float32)
        + b_ref[...]
    )
    whh = whh_ref[...]                                   # (2H, 8H) block-diag

    def cell(gates, c_prev):                             # gate order i, f, g, o
        i = jax.nn.sigmoid(gates[:, 0:H])
        f = jax.nn.sigmoid(gates[:, H:2 * H])
        g = jnp.tanh(gates[:, 2 * H:3 * H])
        o = jax.nn.sigmoid(gates[:, 3 * H:4 * H])
        c_new = f * c_prev + i * g
        return o * jnp.tanh(c_new), c_new

    h_cat = jnp.zeros((B, 2 * H), jnp.float32)           # [h_fw | h_bw]
    c_fw = jnp.zeros((B, H), jnp.float32)
    c_bw = jnp.zeros((B, H), jnp.float32)

    # Fully-unrolled static time loop: all ref slices have static offsets and
    # both directions share one (B,2H)x(2H,8H) recurrent matmul per step.
    for t in range(T):
        tb = T - 1 - t                                   # backward-direction time
        rec = jnp.dot(h_cat, whh, preferred_element_type=jnp.float32)  # (B, 8H)
        g_fw = gx_ref[t * B:(t + 1) * B, 0:4 * H] + rec[:, 0:4 * H]
        g_bw = gx_ref[tb * B:(tb + 1) * B, 4 * H:8 * H] + rec[:, 4 * H:8 * H]
        h_fw, c_fw = cell(g_fw, c_fw)
        h_bw, c_bw = cell(g_bw, c_bw)
        out_ref[t * B:(t + 1) * B, 0:H] = h_fw           # VMEM writes; HBM
        out_ref[tb * B:(tb + 1) * B, H:2 * H] = h_bw     # writeback once at end
        h_cat = jnp.concatenate([h_fw, h_bw], axis=-1)


def bilstm_layer_fused(x2d, wih_cat, whh_blk, b_cat, *, T, B, H):
    """One fused bidirectional LSTM layer: (T*B, Cin) -> (T*B, 2H)."""
    Cin = x2d.shape[1]
    kernel = functools.partial(_bilstm_kernel, T=T, B=B, H=H)
    return pl.pallas_call(
        kernel,
        out_shape=jax.ShapeDtypeStruct((T * B, 2 * H), jnp.float32),
        grid_spec=pltpu.PrefetchScalarGridSpec(
            num_scalar_prefetch=0,
            grid=(1,),
            in_specs=[
                pl.BlockSpec((T * B, Cin), lambda i: (0, 0)),
                pl.BlockSpec((Cin, 8 * H), lambda i: (0, 0)),
                pl.BlockSpec((2 * H, 8 * H), lambda i: (0, 0)),
                pl.BlockSpec((1, 8 * H), lambda i: (0, 0)),
            ],
            out_specs=pl.BlockSpec((T * B, 2 * H), lambda i: (0, 0)),
            scratch_shapes=[pltpu.VMEM((T * B, 8 * H), jnp.float32)],
        ),
        compiler_params=pltpu.CompilerParams(
            dimension_semantics=("arbitrary",)),
    )(x2d, wih_cat, whh_blk, b_cat)


# ----------------------------------------------------------------------------
# Fused SE-attention + MLP head kernel, all in the lane-dense (rows, C) layout.
#   x_ref : (N, C) with N = T*B, rows time-major (row = t*B + b).
#   SE weights pre-transposed to (C, R) / (R, C); MLP to (C, M) / (M, K).
# ----------------------------------------------------------------------------
def _se_mlp_head_kernel(x_ref, w1_ref, b1_ref, w2_ref, b2_ref,
                        m1_ref, mb1_ref, m2_ref, mb2_ref, o_ref, *, T, B):
    x = x_ref[...].astype(jnp.float32)                   # (N, C)
    N = x.shape[0]

    # Squeeze: per-batch temporal mean done on the MXU via a pooling matrix
    # (row r belongs to batch r % B). Avoids the (B, C, T) transpose + XLU
    # cross-lane reduce of the original layout.
    row_b = jax.lax.broadcasted_iota(jnp.int32, (B, N), 1) % B
    b_idx = jax.lax.broadcasted_iota(jnp.int32, (B, N), 0)
    pool = (row_b == b_idx).astype(jnp.float32) * (1.0 / T)        # (B, N)
    s = jnp.dot(pool, x, preferred_element_type=jnp.float32)       # (B, C)

    # Excite: Linear -> ReLU -> Linear -> sigmoid.
    z = jnp.maximum(
        jnp.dot(s, w1_ref[...], preferred_element_type=jnp.float32)
        + b1_ref[...], 0.0)                                        # (B, R)
    g = jax.nn.sigmoid(
        jnp.dot(z, w2_ref[...], preferred_element_type=jnp.float32)
        + b2_ref[...])                                             # (B, C)

    # Broadcast the per-batch gate back to rows (one-hot expand on the MXU).
    row_b2 = jax.lax.broadcasted_iota(jnp.int32, (N, B), 0) % B
    b_idx2 = jax.lax.broadcasted_iota(jnp.int32, (N, B), 1)
    expand = (row_b2 == b_idx2).astype(jnp.float32)                # (N, B)
    xg = x * jnp.dot(expand, g, preferred_element_type=jnp.float32)

    # MLP: Linear -> ReLU -> Linear (skip_last_activation).
    h1 = jnp.maximum(
        jnp.dot(xg, m1_ref[...], preferred_element_type=jnp.float32)
        + mb1_ref[...], 0.0)                                       # (N, M)
    o_ref[...] = (jnp.dot(h1, m2_ref[...], preferred_element_type=jnp.float32)
                  + mb2_ref[...]).astype(o_ref.dtype)              # (N, K)


def se_mlp_head(x2d, w1, b1, w2, b2, m1, mb1, m2, mb2, *, T, B):
    N, C = x2d.shape
    R = w1.shape[1]
    M = m1.shape[1]
    K = m2.shape[1]
    kernel = functools.partial(_se_mlp_head_kernel, T=T, B=B)
    full = lambda shape: pl.BlockSpec(shape, lambda i: (0,) * len(shape))
    return pl.pallas_call(
        kernel,
        out_shape=jax.ShapeDtypeStruct((N, K), jnp.float32),
        grid=(1,),
        in_specs=[full((N, C)),
                  full((C, R)), full((1, R)), full((R, C)), full((1, C)),
                  full((C, M)), full((1, M)), full((M, K)), full((1, K))],
        out_specs=full((N, K)),
    )(x2d, w1, b1, w2, b2, m1, mb1, m2, mb2)


# ----------------------------------------------------------------------------
# Parameter construction (deterministic, PyTorch-like uniform init) and
# one-time wrapper-side layout preparation (transpose / fuse / block-diag).
# ----------------------------------------------------------------------------
def _uniform(key, shape, scale):
    return jax.random.uniform(key, shape, jnp.float32, -scale, scale)


def init_params(key, input_size, hidden_sizes, se_reduction, mlp_hidden,
                n_classes):
    params = {"lstm": [], "se": {}, "mlp": {}}
    in_sz = input_size
    for H in hidden_sizes:
        layer = {}
        for direction in ("fw", "bw"):
            key, k1, k2, k3, k4 = jax.random.split(key, 5)
            s = 1.0 / np.sqrt(H)
            wih = _uniform(k1, (4 * H, in_sz), s)
            whh = _uniform(k2, (4 * H, H), s)
            b = (_uniform(k3, (1, 4 * H), s)
                 + _uniform(k4, (1, 4 * H), s))            # b_ih + b_hh fused
            layer[direction] = (wih, whh, b)
        params["lstm"].append(layer)
        in_sz = 2 * H                                       # bidirectional

    C = in_sz
    R = C // se_reduction
    key, k1, k2, k3, k4 = jax.random.split(key, 5)
    params["se"] = {
        "w1": _uniform(k1, (R, C), 1.0 / np.sqrt(C)),
        "b1": _uniform(k2, (1, R), 1.0 / np.sqrt(C)),
        "w2": _uniform(k3, (C, R), 1.0 / np.sqrt(R)),
        "b2": _uniform(k4, (1, C), 1.0 / np.sqrt(R)),
    }

    key, k1, k2, k3, k4 = jax.random.split(key, 5)
    params["mlp"] = {
        "w1": _uniform(k1, (mlp_hidden, C), 1.0 / np.sqrt(C)),
        "b1": _uniform(k2, (1, mlp_hidden), 1.0 / np.sqrt(C)),
        "w2": _uniform(k3, (n_classes, mlp_hidden), 1.0 / np.sqrt(mlp_hidden)),
        "b2": _uniform(k4, (1, n_classes), 1.0 / np.sqrt(mlp_hidden)),
    }
    return params


def _prepare_bilstm_weights(fw, bw):
    wih_f, whh_f, b_f = fw
    wih_b, whh_b, b_b = bw
    H = whh_f.shape[1]
    wih_cat = jnp.concatenate([wih_f.T, wih_b.T], axis=1)            # (Cin, 8H)
    zeros = jnp.zeros((H, 4 * H), jnp.float32)
    whh_blk = jnp.concatenate([
        jnp.concatenate([whh_f.T, zeros], axis=1),
        jnp.concatenate([zeros, whh_b.T], axis=1)], axis=0)          # (2H, 8H)
    b_cat = jnp.concatenate([b_f, b_b], axis=1)                      # (1, 8H)
    return wih_cat, whh_blk, b_cat


def prepare_params(params):
    """Layout plumbing done once outside the hot path (no in-kernel .T)."""
    lstm_layers = [_prepare_bilstm_weights(l["fw"], l["bw"])
                   for l in params["lstm"]]
    se, mlp = params["se"], params["mlp"]
    head = {
        "w1": se["w1"].T, "b1": se["b1"], "w2": se["w2"].T, "b2": se["b2"],
        "m1": mlp["w1"].T, "mb1": mlp["b1"],
        "m2": mlp["w2"].T, "mb2": mlp["b2"],
    }
    return {"lstm": lstm_layers, "head": head}


# ----------------------------------------------------------------------------
# Full RR_LSTM forward (Pallas hot path; only free reshapes + one tiny final
# transpose of the (T, B, n_classes) logits happen in plain JAX).
# ----------------------------------------------------------------------------
def rr_lstm_forward(x, params):
    """x: (T, B, 1) time-major (batch_first=False) -> (B, T, n_classes)."""
    T, B, Cin = x.shape
    h2d = x.reshape(T * B, Cin)                       # time-major rows
    for (wih_cat, whh_blk, b_cat) in params["lstm"]:
        H = whh_blk.shape[0] // 2
        h2d = bilstm_layer_fused(h2d, wih_cat, whh_blk, b_cat, T=T, B=B, H=H)
        # TODO(synk): inter-layer nn.Dropout omitted (eval-mode semantics).

    hd = params["head"]
    y2d = se_mlp_head(h2d, hd["w1"], hd["b1"], hd["w2"], hd["b2"],
                      hd["m1"], hd["mb1"], hd["m2"], hd["mb2"], T=T, B=B)
    K = y2d.shape[-1]
    return jnp.transpose(y2d.reshape(T, B, K), (1, 0, 2))


# ----------------------------------------------------------------------------
# Pure-JAX reference (uses the raw, untransformed parameters).
# ----------------------------------------------------------------------------
def _lstm_ref_dir(x, wih, whh, b):
    T, B, _ = x.shape
    H = whh.shape[1]

    def step(carry, xt):
        h, c = carry
        gates = xt @ wih.T + h @ whh.T + b
        i = jax.nn.sigmoid(gates[:, 0:H])
        f = jax.nn.sigmoid(gates[:, H:2 * H])
        g = jnp.tanh(gates[:, 2 * H:3 * H])
        o = jax.nn.sigmoid(gates[:, 3 * H:4 * H])
        c = f * c + i * g
        h = o * jnp.tanh(c)
        return (h, c), h

    init = (jnp.zeros((B, H), jnp.float32), jnp.zeros((B, H), jnp.float32))
    _, hs = jax.lax.scan(step, init, x)
    return hs


def rr_lstm_reference(x, params):
    h = x
    for layer in params["lstm"]:
        hf = _lstm_ref_dir(h, *layer["fw"])
        hb = _lstm_ref_dir(h[::-1], *layer["bw"])[::-1]
        h = jnp.concatenate([hf, hb], axis=-1)
    h = jnp.transpose(h, (1, 2, 0))                            # (B, C, T)
    se = params["se"]
    s = jnp.mean(h, axis=-1)
    z = jnp.maximum(s @ se["w1"].T + se["b1"], 0.0)
    g = jax.nn.sigmoid(z @ se["w2"].T + se["b2"])
    h = h * g[:, :, None]
    h = jnp.transpose(h, (0, 2, 1))                            # (B, T, C)
    mlp = params["mlp"]
    y = jnp.maximum(h @ mlp["w1"].T + mlp["b1"], 0.0)
    y = y @ mlp["w2"].T + mlp["b2"]
    return y


# ----------------------------------------------------------------------------
if __name__ == "__main__":
    T, B, C_IN = 16, 2, 1                 # RR series: 1 channel
    HIDDEN_SIZES = [32, 32]               # stacked bidirectional LSTM
    SE_REDUCTION = 8
    MLP_HIDDEN = 32
    N_CLASSES = 2

    key = jax.random.PRNGKey(0)
    key, kx, kp = jax.random.split(key, 3)
    x = jax.random.normal(kx, (T, B, C_IN), jnp.float32)       # (seq, batch, ch)
    params = init_params(kp, C_IN, HIDDEN_SIZES, SE_REDUCTION,
                         MLP_HIDDEN, N_CLASSES)
    kparams = prepare_params(params)                           # one-time layout prep

    fwd = jax.jit(functools.partial(rr_lstm_forward, params=kparams))
    out = jax.block_until_ready(fwd(x))
    assert out.shape == (B, T, N_CLASSES), out.shape

    ref = jax.block_until_ready(rr_lstm_reference(x, params))
    max_diff = float(jnp.max(jnp.abs(out - ref)))
    assert max_diff < 1e-4, f"mismatch vs reference: {max_diff}"

    print("KERNEL_OK")
</pallas_src>

<mosaic_0001>
module attributes {stable_mosaic.version = 11 : i64} {
  func.func @_bilstm_kernel(%arg0: i32, %arg1: memref<32x1xf32, #tpu.memory_space<vmem>>, %arg2: memref<1x256xf32, #tpu.memory_space<vmem>>, %arg3: memref<64x256xf32, #tpu.memory_space<vmem>>, %arg4: memref<1x256xf32, #tpu.memory_space<vmem>>, %arg5: memref<32x64xf32, #tpu.memory_space<vmem>>, %arg6: memref<32x256xf32, #tpu.memory_space<vmem>>) attributes {dimension_semantics = [#tpu.dimension_semantics<arbitrary>], iteration_bounds = array<i64: 1>, scalar_prefetch = 0 : i64, scratch_operands = 1 : i64, tpu.core_type = #tpu.core_type<tc>, window_params = [{pipeline_mode = #tpu.pipeline_mode<synchronous>, transform_indices = @transform_0, window_bounds = array<i64: 32, 1>}, {pipeline_mode = #tpu.pipeline_mode<synchronous>, transform_indices = @transform_1, window_bounds = array<i64: 1, 256>}, {pipeline_mode = #tpu.pipeline_mode<synchronous>, transform_indices = @transform_2, window_bounds = array<i64: 64, 256>}, {pipeline_mode = #tpu.pipeline_mode<synchronous>, transform_indices = @transform_3, window_bounds = array<i64: 1, 256>}, {pipeline_mode = #tpu.pipeline_mode<synchronous>, transform_indices = @transform_4, window_bounds = array<i64: 32, 64>}]} {
    %c0 = arith.constant 0 : index
    %c0_0 = arith.constant 0 : index
    %0 = vector.load %arg1[%c0, %c0_0] : memref<32x1xf32, #tpu.memory_space<vmem>>, vector<32x1xf32>
    %c0_1 = arith.constant 0 : index
    %c0_2 = arith.constant 0 : index
    %1 = vector.load %arg2[%c0_1, %c0_2] : memref<1x256xf32, #tpu.memory_space<vmem>>, vector<1x256xf32>
    %cst = arith.constant dense<0.000000e+00> : vector<32x256xf32>
    %2 = tpu.matmul %0, %1, %cst {dimension_numbers = #tpu.dot_dimension_numbers<[1], [0], [0], [1], [0, 0, 1, 1], [], []>} : vector<32x1xf32>, vector<1x256xf32>, vector<32x256xf32> -> vector<32x256xf32>
    %c0_3 = arith.constant 0 : index
    %c0_4 = arith.constant 0 : index
    %3 = vector.load %arg4[%c0_3, %c0_4] : memref<1x256xf32, #tpu.memory_space<vmem>>, vector<1x256xf32>
    %4 = vector.broadcast %3 : vector<1x256xf32> to vector<32x256xf32>
    %5 = arith.addf %2, %4 : vector<32x256xf32>
    %c0_5 = arith.constant 0 : index
    %c0_6 = arith.constant 0 : index
    %6 = vector.load %arg6[%c0_5, %c0_6] : memref<32x256xf32, #tpu.memory_space<vmem>>, vector<32x256xf32>
    tpu.vector_store %arg6[%c0_5, %c0_6], %5 {strides = array<i32>} : memref<32x256xf32, #tpu.memory_space<vmem>>, vector<32x256xf32>,
    %c0_7 = arith.constant 0 : index
    %c0_8 = arith.constant 0 : index
    %7 = vector.load %arg3[%c0_7, %c0_8] : memref<64x256xf32, #tpu.memory_space<vmem>>, vector<64x256xf32>
    %cst_9 = arith.constant 0.000000e+00 : f32
    %8 = vector.broadcast %cst_9 : f32 to vector<2x64xf32>
    %cst_10 = arith.constant 0.000000e+00 : f32
    %9 = vector.broadcast %cst_10 : f32 to vector<2x32xf32>
    %cst_11 = arith.constant 0.000000e+00 : f32
    %10 = vector.broadcast %cst_11 : f32 to vector<2x32xf32>
    %cst_12 = arith.constant dense<0.000000e+00> : vector<2x256xf32>
    %11 = tpu.matmul %8, %7, %cst_12 {dimension_numbers = #tpu.dot_dimension_numbers<[1], [0], [0], [1], [0, 0, 1, 1], [], []>} : vector<2x64xf32>, vector<64x256xf32>, vector<2x256xf32> -> vector<2x256xf32>
    %c0_13 = arith.constant 0 : index
    %c0_14 = arith.constant 0 : index
    %12 = vector.load %arg6[%c0_13, %c0_14] : memref<32x256xf32, #tpu.memory_space<vmem>>, vector<2x128xf32>
    %13 = vector.extract_strided_slice %11 {offsets = [0, 0], sizes = [2, 128], strides = [1, 1]} : vector<2x256xf32> to vector<2x128xf32>
    %14 = arith.addf %12, %13 : vector<2x128xf32>
    %c30 = arith.constant 30 : index
    %c128 = arith.constant 128 : index
    %15 = vector.load %arg6[%c30, %c128] : memref<32x256xf32, #tpu.memory_space<vmem>>, vector<2x128xf32>
    %16 = vector.extract_strided_slice %11 {offsets = [0, 128], sizes = [2, 128], strides = [1, 1]} : vector<2x256xf32> to vector<2x128xf32>
    %17 = arith.addf %15, %16 : vector<2x128xf32>
    %18 = vector.extract_strided_slice %14 {offsets = [0, 0], sizes = [2, 32], strides = [1, 1]} : vector<2x128xf32> to vector<2x32xf32>
    %19 = arith.negf %18 : vector<2x32xf32>
    %20 = math.exp %19 : vector<2x32xf32>
    %cst_15 = arith.constant 1.000000e+00 : f32
    %21 = vector.broadcast %cst_15 : f32 to vector<2x32xf32>
    %22 = arith.addf %21, %20 : vector<2x32xf32>
    %23 = arith.divf %21, %22 : vector<2x32xf32>
    %24 = vector.extract_strided_slice %14 {offsets = [0, 32], sizes = [2, 32], strides = [1, 1]} : vector<2x128xf32> to vector<2x32xf32>
    %25 = arith.negf %24 : vector<2x32xf32>
    %26 = math.exp %25 : vector<2x32xf32>
    %cst_16 = arith.constant 1.000000e+00 : f32
    %27 = vector.broadcast %cst_16 : f32 to vector<2x32xf32>
    %28 = arith.addf %27, %26 : vector<2x32xf32>
    %29 = arith.divf %27, %28 : vector<2x32xf32>
    %30 = vector.extract_strided_slice %14 {offsets = [0, 64], sizes = [2, 32], strides = [1, 1]} : vector<2x128xf32> to vector<2x32xf32>
    %31 = math.tanh %30 : vector<2x32xf32>
    %32 = vector.extract_strided_slice %14 {offsets = [0, 96], sizes = [2, 32], strides = [1, 1]} : vector<2x128xf32> to vector<2x32xf32>
    %33 = arith.negf %32 : vector<2x32xf32>
    %34 = math.exp %33 : vector<2x32xf32>
    %cst_17 = arith.constant 1.000000e+00 : f32
    %35 = vector.broadcast %cst_17 : f32 to vector<2x32xf32>
    %36 = arith.addf %35, %34 : vector<2x32xf32>
    %37 = arith.divf %35, %36 : vector<2x32xf32>
    %38 = arith.mulf %29, %9 : vector<2x32xf32>
    %39 = arith.mulf %23, %31 : vector<2x32xf32>
    %40 = arith.addf %38, %39 : vector<2x32xf32>
    %41 = math.tanh %40 : vector<2x32xf32>
    %42 = arith.mulf %37, %41 : vector<2x32xf32>
    %43 = vector.extract_strided_slice %17 {offsets = [0, 0], sizes = [2, 32], strides = [1, 1]} : vector<2x128xf32> to vector<2x32xf32>
    %44 = arith.negf %43 : vector<2x32xf32>
    %45 = math.exp %44 : vector<2x32xf32>
    %cst_18 = arith.constant 1.000000e+00 : f32
    %46 = vector.broadcast %cst_18 : f32 to vector<2x32xf32>
    %47 = arith.addf %46, %45 : vector<2x32xf32>
    %48 = arith.divf %46, %47 : vector<2x32xf32>
    %49 = vector.extract_strided_slice %17 {offsets = [0, 32], sizes = [2, 32], strides = [1, 1]} : vector<2x128xf32> to vector<2x32xf32>
    %50 = arith.negf %49 : vector<2x32xf32>
    %51 = math.exp %50 : vector<2x32xf32>
    %cst_19 = arith.constant 1.000000e+00 : f32
    %52 = vector.broadcast %cst_19 : f32 to vector<2x32xf32>
    %53 = arith.addf %52, %51 : vector<2x32xf32>
    %54 = arith.divf %52, %53 : vector<2x32xf32>
    %55 = vector.extract_strided_slice %17 {offsets = [0, 64], sizes = [2, 32], strides = [1, 1]} : vector<2x128xf32> to vector<2x32xf32>
    %56 = math.tanh %55 : vector<2x32xf32>
    %57 = vector.extract_strided_slice %17 {offsets = [0, 96], sizes = [2, 32], strides = [1, 1]} : vector<2x128xf32> to vector<2x32xf32>
    %58 = arith.negf %57 : vector<2x32xf32>
    %59 = math.exp %58 : vector<2x32xf32>
    %cst_20 = arith.constant 1.000000e+00 : f32
    %60 = vector.broadcast %cst_20 : f32 to vector<2x32xf32>
    %61 = arith.addf %60, %59 : vector<2x32xf32>
    %62 = arith.divf %60, %61 : vector<2x32xf32>
    %63 = arith.mulf %54, %10 : vector<2x32xf32>
    %64 = arith.mulf %48, %56 : vector<2x32xf32>
    %65 = arith.addf %63, %64 : vector<2x32xf32>
    %66 = math.tanh %65 : vector<2x32xf32>
    %67 = arith.mulf %62, %66 : vector<2x32xf32>
    %c0_21 = arith.constant 0 : index
    %c0_22 = arith.constant 0 : index
    %68 = vector.load %arg5[%c0_21, %c0_22] : memref<32x64xf32, #tpu.memory_space<vmem>>, vector<2x32xf32>
    tpu.vector_store %arg5[%c0_21, %c0_22], %42 {strides = array<i32>} : memref<32x64xf32, #tpu.memory_space<vmem>>, vector<2x32xf32>,
    %c30_23 = arith.constant 30 : index
    %c32 = arith.constant 32 : index
    %69 = vector.load %arg5[%c30_23, %c32] : memref<32x64xf32, #tpu.memory_space<vmem>>, vector<2x32xf32>
    tpu.vector_store %arg5[%c30_23, %c32], %67 {strides = array<i32>} : memref<32x64xf32, #tpu.memory_space<vmem>>, vector<2x32xf32>,
    %70 = tpu.concatenate %42, %67 in 1 : vector<2x32xf32>, vector<2x32xf32> -> vector<2x64xf32>
    %cst_24 = arith.constant dense<0.000000e+00> : vector<2x256xf32>
    %71 = tpu.matmul %70, %7, %cst_24 {dimension_numbers = #tpu.dot_dimension_numbers<[1], [0], [0], [1], [0, 0, 1, 1], [], []>} : vector<2x64xf32>, vector<64x256xf32>, vector<2x256xf32> -> vector<2x256xf32>
    %c2 = arith.constant 2 : index
    %c0_25 = arith.constant 0 : index
    %72 = vector.load %arg6[%c2, %c0_25] : memref<32x256xf32, #tpu.memory_space<vmem>>, vector<2x128xf32>
    %73 = vector.extract_strided_slice %71 {offsets = [0, 0], sizes = [2, 128], strides = [1, 1]} : vector<2x256xf32> to vector<2x128xf32>
    %74 = arith.addf %72, %73 : vector<2x128xf32>
    %c28 = arith.constant 28 : index
    %c128_26 = arith.constant 128 : index
    %75 = vector.load %arg6[%c28, %c128_26] : memref<32x256xf32, #tpu.memory_space<vmem>>, vector<2x128xf32>
    %76 = vector.extract_strided_slice %71 {offsets = [0, 128], sizes = [2, 128], strides = [1, 1]} : vector<2x256xf32> to vector<2x128xf32>
    %77 = arith.addf %75, %76 : vector<2x128xf32>
    %78 = vector.extract_strided_slice %74 {offsets = [0, 0], sizes = [2, 32], strides = [1, 1]} : vector<2x128xf32> to vector<2x32xf32>
    %79 = arith.negf %78 : vector<2x32xf32>
    %80 = math.exp %79 : vector<2x32xf32>
    %cst_27 = arith.constant 1.000000e+00 : f32
    %81 = vector.broadcast %cst_27 : f32 to vector<2x32xf32>
    %82 = arith.addf %81, %80 : vector<2x32xf32>
    %83 = arith.divf %81, %82 : vector<2x32xf32>
    %84 = vector.extract_strided_slice %74 {offsets = [0, 32], sizes = [2, 32], strides = [1, 1]} : vector<2x128xf32> to vector<2x32xf32>
    %85 = arith.negf %84 : vector<2x32xf32>
    %86 = math.exp %85 : vector<2x32xf32>
    %cst_28 = arith.constant 1.000000e+00 : f32
    %87 = vector.broadcast %cst_28 : f32 to vector<2x32xf32>
    %88 = arith.addf %87, %86 : vector<2x32xf32>
    %89 = arith.divf %87, %88 : vector<2x32xf32>
    %90 = vector.extract_strided_slice %74 {offsets = [0, 64], sizes = [2, 32], strides = [1, 1]} : vector<2x128xf32> to vector<2x32xf32>
    %91 = math.tanh %90 : vector<2x32xf32>
    %92 = vector.extract_strided_slice %74 {offsets = [0, 96], sizes = [2, 32], strides = [1, 1]} : vector<2x128xf32> to vector<2x32xf32>
    %93 = arith.negf %92 : vector<2x32xf32>
    %94 = math.exp %93 : vector<2x32xf32>
    %cst_29 = arith.constant 1.000000e+00 : f32
    %95 = vector.broadcast %cst_29 : f32 to vector<2x32xf32>
    %96 = arith.addf %95, %94 : vector<2x32xf32>
    %97 = arith.divf %95, %96 : vector<2x32xf32>
    %98 = arith.mulf %89, %40 : vector<2x32xf32>
    %99 = arith.mulf %83, %91 : vector<2x32xf32>
    %100 = arith.addf %98, %99 : vector<2x32xf32>
    %101 = math.tanh %100 : vector<2x32xf32>
    %102 = arith.mulf %97, %101 : vector<2x32xf32>
    %103 = vector.extract_strided_slice %77 {offsets = [0, 0], sizes = [2, 32], strides = [1, 1]} : vector<2x128xf32> to vector<2x32xf32>
    %104 = arith.negf %103 : vector<2x32xf32>
    %105 = math.exp %104 : vector<2x32xf32>
    %cst_30 = arith.constant 1.000000e+00 : f32
    %106 = vector.broadcast %cst_30 : f32 to vector<2x32xf32>
    %107 = arith.addf %106, %105 : vector<2x32xf32>
    %108 = arith.divf %106, %107 : vector<2x32xf32>
    %109 = vector.extract_strided_slice %77 {offsets = [0, 32], sizes = [2, 32], strides = [1, 1]} : vector<2x128xf32> to vector<2x32xf32>
    %110 = arith.negf %109 : vector<2x32xf32>
    %111 = math.exp %110 : vector<2x32xf32>
    %cst_31 = arith.constant 1.000000e+00 : f32
    %112 = vector.broadcast %cst_31 : f32 to vector<2x32xf32>
    %113 = arith.addf %112, %111 : vector<2x32xf32>
    %114 = arith.divf %112, %113 : vector<2x32xf32>
    %115 = vector.extract_strided_slice %77 {offsets = [0, 64], sizes = [2, 32], strides = [1, 1]} : vector<2x128xf32> to vector<2x32xf32>
    %116 = math.tanh %115 : vector<2x32xf32>
    %117 = vector.extract_strided_slice %77 {offsets = [0, 96], sizes = [2, 32], strides = [1, 1]} : vector<2x128xf32> to vector<2x32xf32>
    %118 = arith.negf %117 : vector<2x32xf32>
    %119 = math.exp %118 : vector<2x32xf32>
    %cst_32 = arith.constant 1.000000e+00 : f32
    %120 = vector.broadcast %cst_32 : f32 to vector<2x32xf32>
    %121 = arith.addf %120, %119 : vector<2x32xf32>
    %122 = arith.divf %120, %121 : vector<2x32xf32>
    %123 = arith.mulf %114, %65 : vector<2x32xf32>
    %124 = arith.mulf %108, %116 : vector<2x32xf32>
    %125 = arith.addf %123, %124 : vector<2x32xf32>
    %126 = math.tanh %125 : vector<2x32xf32>
    %127 = arith.mulf %122, %126 : vector<2x32xf32>
    %c2_33 = arith.constant 2 : index
    %c0_34 = arith.constant 0 : index
    %128 = vector.load %arg5[%c2_33, %c0_34] : memref<32x64xf32, #tpu.memory_space<vmem>>, vector<2x32xf32>
    tpu.vector_store %arg5[%c2_33, %c0_34], %102 {strides = array<i32>} : memref<32x64xf32, #tpu.memory_space<vmem>>, vector<2x32xf32>,
    %c28_35 = arith.constant 28 : index
    %c32_36 = arith.constant 32 : index
    %129 = vector.load %arg5[%c28_35, %c32_36] : memref<32x64xf32, #tpu.memory_space<vmem>>, vector<2x32xf32>
    tpu.vector_store %arg5[%c28_35, %c32_36], %127 {strides = array<i32>} : memref<32x64xf32, #tpu.memory_space<vmem>>, vector<2x32xf32>,
    %130 = tpu.concatenate %102, %127 in 1 : vector<2x32xf32>, vector<2x32xf32> -> vector<2x64xf32>
    %cst_37 = arith.constant dense<0.000000e+00> : vector<2x256xf32>
    %131 = tpu.matmul %130, %7, %cst_37 {dimension_numbers = #tpu.dot_dimension_numbers<[1], [0], [0], [1], [0, 0, 1, 1], [], []>} : vector<2x64xf32>, vector<64x256xf32>, vector<2x256xf32> -> vector<2x256xf32>
    %c4 = arith.constant 4 : index
    %c0_38 = arith.constant 0 : index
    %132 = vector.load %arg6[%c4, %c0_38] : memref<32x256xf32, #tpu.memory_space<vmem>>, vector<2x128xf32>
    %133 = vector.extract_strided_slice %131 {offsets = [0, 0], sizes = [2, 128], strides = [1, 1]} : vector<2x256xf32> to vector<2x128xf32>
    %134 = arith.addf %132, %133 : vector<2x128xf32>
    %c26 = arith.constant 26 : index
    %c128_39 = arith.constant 128 : index
    %135 = vector.load %arg6[%c26, %c128_39] : memref<32x256xf32, #tpu.memory_space<vmem>>, vector<2x128xf32>
    %136 = vector.extract_strided_slice %131 {offsets = [0, 128], sizes = [2, 128], strides = [1, 1]} : vector<2x256xf32> to vector<2x128xf32>
    %137 = arith.addf %135, %136 : vector<2x128xf32>
    %138 = vector.extract_strided_slice %134 {offsets = [0, 0], sizes = [2, 32], strides = [1, 1]} : vector<2x128xf32> to vector<2x32xf32>
    %139 = arith.negf %138 : vector<2x32xf32>
    %140 = math.exp %139 : vector<2x32xf32>
    %cst_40 = arith.constant 1.000000e+00 : f32
    %141 = vector.broadcast %cst_40 : f32 to vector<2x32xf32>
    %142 = arith.addf %141, %140 : vector<2x32xf32>
    %143 = arith.divf %141, %142 : vector<2x32xf32>
    %144 = vector.extract_strided_slice %134 {offsets = [0, 32], sizes = [2, 32], strides = [1, 1]} : vector<2x128xf32> to vector<2x32xf32>
    %145 = arith.negf %144 : vector<2x32xf32>
    %146 = math.exp %145 : vector<2x32xf32>
    %cst_41 = arith.constant 1.000000e+00 : f32
    %147 = vector.broadcast %cst_41 : f32 to vector<2x32xf32>
    %148 = arith.addf %147, %146 : vector<2x32xf32>
    %149 = arith.divf %147, %148 : vector<2x32xf32>
    %150 = vector.extract_strided_slice %134 {offsets = [0, 64], sizes = [2, 32], strides = [1, 1]} : vector<2x128xf32> to vector<2x32xf32>
    %151 = math.tanh %150 : vector<2x32xf32>
    %152 = vector.extract_strided_slice %134 {offsets = [0, 96], sizes = [2, 32], strides = [1, 1]} : vector<2x128xf32> to vector<2x32xf32>
    %153 = arith.negf %152 : vector<2x32xf32>
    %154 = math.exp %153 : vector<2x32xf32>
    %cst_42 = arith.constant 1.000000e+00 : f32
    %155 = vector.broadcast %cst_42 : f32 to vector<2x32xf32>
    %156 = arith.addf %155, %154 : vector<2x32xf32>
    %157 = arith.divf %155, %156 : vector<2x32xf32>
    %158 = arith.mulf %149, %100 : vector<2x32xf32>
    %159 = arith.mulf %143, %151 : vector<2x32xf32>
    %160 = arith.addf %158, %159 : vector<2x32xf32>
    %161 = math.tanh %160 : vector<2x32xf32>
    %162 = arith.mulf %157, %161 : vector<2x32xf32>
    %163 = vector.extract_strided_slice %137 {offsets = [0, 0], sizes = [2, 32], strides = [1, 1]} : vector<2x128xf32> to vector<2x32xf32>
    %164 = arith.negf %163 : vector<2x32xf32>
    %165 = math.exp %164 : vector<2x32xf32>
    %cst_43 = arith.constant 1.000000e+00 : f32
    %166 = vector.broadcast %cst_43 : f32 to vector<2x32xf32>
    %167 = arith.addf %166, %165 : vector<2x32xf32>
    %168 = arith.divf %166, %167 : vector<2x32xf32>
    %169 = vector.extract_strided_slice %137 {offsets = [0, 32], sizes = [2, 32], strides = [1, 1]} : vector<2x128xf32> to vector<2x32xf32>
    %170 = arith.negf %169 : vector<2x32xf32>
    %171 = math.exp %170 : vector<2x32xf32>
    %cst_44 = arith.constant 1.000000e+00 : f32
    %172 = vector.broadcast %cst_44 : f32 to vector<2x32xf32>
    %173 = arith.addf %172, %171 : vector<2x32xf32>
    %174 = arith.divf %172, %173 : vector<2x32xf32>
    %175 = vector.extract_strided_slice %137 {offsets = [0, 64], sizes = [2, 32], strides = [1, 1]} : vector<2x128xf32> to vector<2x32xf32>
    %176 = math.tanh %175 : vector<2x32xf32>
    %177 = vector.extract_strided_slice %137 {offsets = [0, 96], sizes = [2, 32], strides = [1, 1]} : vector<2x128xf32> to vector<2x32xf32>
    %178 = arith.negf %177 : vector<2x32xf32>
    %179 = math.exp %178 : vector<2x32xf32>
    %cst_45 = arith.constant 1.000000e+00 : f32
    %180 = vector.broadcast %cst_45 : f32 to vector<2x32xf32>
    %181 = arith.addf %180, %179 : vector<2x32xf32>
    %182 = arith.divf %180, %181 : vector<2x32xf32>
    %183 = arith.mulf %174, %125 : vector<2x32xf32>
    %184 = arith.mulf %168, %176 : vector<2x32xf32>
    %185 = arith.addf %183, %184 : vector<2x32xf32>
    %186 = math.tanh %185 : vector<2x32xf32>
    %187 = arith.mulf %182, %186 : vector<2x32xf32>
    %c4_46 = arith.constant 4 : index
    %c0_47 = arith.constant 0 : index
    %188 = vector.load %arg5[%c4_46, %c0_47] : memref<32x64xf32, #tpu.memory_space<vmem>>, vector<2x32xf32>
    tpu.vector_store %arg5[%c4_46, %c0_47], %162 {strides = array<i32>} : memref<32x64xf32, #tpu.memory_space<vmem>>, vector<2x32xf32>,
    %c26_48 = arith.constant 26 : index
    %c32_49 = arith.constant 32 : index
    %189 = vector.load %arg5[%c26_48, %c32_49] : memref<32x64xf32, #tpu.memory_space<vmem>>, vector<2x32xf32>
    tpu.vector_store %arg5[%c26_48, %c32_49], %187 {strides = array<i32>} : memref<32x64xf32, #tpu.memory_space<vmem>>, vector<2x32xf32>,
    %190 = tpu.concatenate %162, %187 in 1 : vector<2x32xf32>, vector<2x32xf32> -> vector<2x64xf32>
    %cst_50 = arith.constant dense<0.000000e+00> : vector<2x256xf32>
    %191 = tpu.matmul %190, %7, %cst_50 {dimension_numbers = #tpu.dot_dimension_numbers<[1], [0], [0], [1], [0, 0, 1, 1], [], []>} : vector<2x64xf32>, vector<64x256xf32>, vector<2x256xf32> -> vector<2x256xf32>
    %c6 = arith.constant 6 : index
    %c0_51 = arith.constant 0 : index
    %192 = vector.load %arg6[%c6, %c0_51] : memref<32x256xf32, #tpu.memory_space<vmem>>, vector<2x128xf32>
    %193 = vector.extract_strided_slice %191 {offsets = [0, 0], sizes = [2, 128], strides = [1, 1]} : vector<2x256xf32> to vector<2x128xf32>
    %194 = arith.addf %192, %193 : vector<2x128xf32>
    %c24 = arith.constant 24 : index
    %c128_52 = arith.constant 128 : index
    %195 = vector.load %arg6[%c24, %c128_52] : memref<32x256xf32, #tpu.memory_space<vmem>>, vector<2x128xf32>
    %196 = vector.extract_strided_slice %191 {offsets = [0, 128], sizes = [2, 128], strides = [1, 1]} : vector<2x256xf32> to vector<2x128xf32>
    %197 = arith.addf %195, %196 : vector<2x128xf32>
    %198 = vector.extract_strided_slice %194 {offsets = [0, 0], sizes = [2, 32], strides = [1, 1]} : vector<2x128xf32> to vector<2x32xf32>
    %199 = arith.negf %198 : vector<2x32xf32>
    %200 = math.exp %199 : vector<2x32xf32>
    %cst_53 = arith.constant 1.000000e+00 : f32
    %201 = vector.broadcast %cst_53 : f32 to vector<2x32xf32>
    %202 = arith.addf %201, %200 : vector<2x32xf32>
    %203 = arith.divf %201, %202 : vector<2x32xf32>
    %204 = vector.extract_strided_slice %194 {offsets = [0, 32], sizes = [2, 32], strides = [1, 1]} : vector<2x128xf32> to vector<2x32xf32>
    %205 = arith.negf %204 : vector<2x32xf32>
    %206 = math.exp %205 : vector<2x32xf32>
    %cst_54 = arith.constant 1.000000e+00 : f32
    %207 = vector.broadcast %cst_54 : f32 to vector<2x32xf32>
    %208 = arith.addf %207, %206 : vector<2x32xf32>
    %209 = arith.divf %207, %208 : vector<2x32xf32>
    %210 = vector.extract_strided_slice %194 {offsets = [0, 64], sizes = [2, 32], strides = [1, 1]} : vector<2x128xf32> to vector<2x32xf32>
    %211 = math.tanh %210 : vector<2x32xf32>
    %212 = vector.extract_strided_slice %194 {offsets = [0, 96], sizes = [2, 32], strides = [1, 1]} : vector<2x128xf32> to vector<2x32xf32>
    %213 = arith.negf %212 : vector<2x32xf32>
    %214 = math.exp %213 : vector<2x32xf32>
    %cst_55 = arith.constant 1.000000e+00 : f32
    %215 = vector.broadcast %cst_55 : f32 to vector<2x32xf32>
    %216 = arith.addf %215, %214 : vector<2x32xf32>
    %217 = arith.divf %215, %216 : vector<2x32xf32>
    %218 = arith.mulf %209, %160 : vector<2x32xf32>
    %219 = arith.mulf %203, %211 : vector<2x32xf32>
    %220 = arith.addf %218, %219 : vector<2x32xf32>
    %221 = math.tanh %220 : vector<2x32xf32>
    %222 = arith.mulf %217, %221 : vector<2x32xf32>
    %223 = vector.extract_strided_slice %197 {offsets = [0, 0], sizes = [2, 32], strides = [1, 1]} : vector<2x128xf32> to vector<2x32xf32>
    %224 = arith.negf %223 : vector<2x32xf32>
    %225 = math.exp %224 : vector<2x32xf32>
    %cst_56 = arith.constant 1.000000e+00 : f32
    %226 = vector.broadcast %cst_56 : f32 to vector<2x32xf32>
    %227 = arith.addf %226, %225 : vector<2x32xf32>
    %228 = arith.divf %226, %227 : vector<2x32xf32>
    %229 = vector.extract_strided_slice %197 {offsets = [0, 32], sizes = [2, 32], strides = [1, 1]} : vector<2x128xf32> to vector<2x32xf32>
    %230 = arith.negf %229 : vector<2x32xf32>
    %231 = math.exp %230 : vector<2x32xf32>
    %cst_57 = arith.constant 1.000000e+00 : f32
    %232 = vector.broadcast %cst_57 : f32 to vector<2x32xf32>
    %233 = arith.addf %232, %231 : vector<2x32xf32>
    %234 = arith.divf %232, %233 : vector<2x32xf32>
    %235 = vector.extract_strided_slice %197 {offsets = [0, 64], sizes = [2, 32], strides = [1, 1]} : vector<2x128xf32> to vector<2x32xf32>
    %236 = math.tanh %235 : vector<2x32xf32>
    %237 = vector.extract_strided_slice %197 {offsets = [0, 96], sizes = [2, 32], strides = [1, 1]} : vector<2x128xf32> to vector<2x32xf32>
    %238 = arith.negf %237 : vector<2x32xf32>
    %239 = math.exp %238 : vector<2x32xf32>
    %cst_58 = arith.constant 1.000000e+00 : f32
    %240 = vector.broadcast %cst_58 : f32 to vector<2x32xf32>
    %241 = arith.addf %240, %239 : vector<2x32xf32>
    %242 = arith.divf %240, %241 : vector<2x32xf32>
    %243 = arith.mulf %234, %185 : vector<2x32xf32>
    %244 = arith.mulf %228, %236 : vector<2x32xf32>
    %245 = arith.addf %243, %244 : vector<2x32xf32>
    %246 = math.tanh %245 : vector<2x32xf32>
    %247 = arith.mulf %242, %246 : vector<2x32xf32>
    %c6_59 = arith.constant 6 : index
    %c0_60 = arith.constant 0 : index
    %248 = vector.load %arg5[%c6_59, %c0_60] : memref<32x64xf32, #tpu.memory_space<vmem>>, vector<2x32xf32>
    tpu.vector_store %arg5[%c6_59, %c0_60], %222 {strides = array<i32>} : memref<32x64xf32, #tpu.memory_space<vmem>>, vector<2x32xf32>,
    %c24_61 = arith.constant 24 : index
    %c32_62 = arith.constant 32 : index
    %249 = vector.load %arg5[%c24_61, %c32_62] : memref<32x64xf32, #tpu.memory_space<vmem>>, vector<2x32xf32>
    tpu.vector_store %arg5[%c24_61, %c32_62], %247 {strides = array<i32>} : memref<32x64xf32, #tpu.memory_space<vmem>>, vector<2x32xf32>,
    %250 = tpu.concatenate %222, %247 in 1 : vector<2x32xf32>, vector<2x32xf32> -> vector<2x64xf32>
    %cst_63 = arith.constant dense<0.000000e+00> : vector<2x256xf32>
    %251 = tpu.matmul %250, %7, %cst_63 {dimension_numbers = #tpu.dot_dimension_numbers<[1], [0], [0], [1], [0, 0, 1, 1], [], []>} : vector<2x64xf32>, vector<64x256xf32>, vector<2x256xf32> -> vector<2x256xf32>
    %c8 = arith.constant 8 : index
    %c0_64 = arith.constant 0 : index
    %252 = vector.load %arg6[%c8, %c0_64] : memref<32x256xf32, #tpu.memory_space<vmem>>, vector<2x128xf32>
    %253 = vector.extract_strided_slice %251 {offsets = [0, 0], sizes = [2, 128], strides = [1, 1]} : vector<2x256xf32> to vector<2x128xf32>
    %254 = arith.addf %252, %253 : vector<2x128xf32>
    %c22 = arith.constant 22 : index
    %c128_65 = arith.constant 128 : index
    %255 = vector.load %arg6[%c22, %c128_65] : memref<32x256xf32, #tpu.memory_space<vmem>>, vector<2x128xf32>
    %256 = vector.extract_strided_slice %251 {offsets = [0, 128], sizes = [2, 128], strides = [1, 1]} : vector<2x256xf32> to vector<2x128xf32>
    %257 = arith.addf %255, %256 : vector<2x128xf32>
    %258 = vector.extract_strided_slice %254 {offsets = [0, 0], sizes = [2, 32], strides = [1, 1]} : vector<2x128xf32> to vector<2x32xf32>
    %259 = arith.negf %258 : vector<2x32xf32>
    %260 = math.exp %259 : vector<2x32xf32>
    %cst_66 = arith.constant 1.000000e+00 : f32
    %261 = vector.broadcast %cst_66 : f32 to vector<2x32xf32>
    %262 = arith.addf %261, %260 : vector<2x32xf32>
    %263 = arith.divf %261, %262 : vector<2x32xf32>
    %264 = vector.extract_strided_slice %254 {offsets = [0, 32], sizes = [2, 32], strides = [1, 1]} : vector<2x128xf32> to vector<2x32xf32>
    %265 = arith.negf %264 : vector<2x32xf32>
    %266 = math.exp %265 : vector<2x32xf32>
    %cst_67 = arith.constant 1.000000e+00 : f32
    %267 = vector.broadcast %cst_67 : f32 to vector<2x32xf32>
    %268 = arith.addf %267, %266 : vector<2x32xf32>
    %269 = arith.divf %267, %268 : vector<2x32xf32>
    %270 = vector.extract_strided_slice %254 {offsets = [0, 64], sizes = [2, 32], strides = [1, 1]} : vector<2x128xf32> to vector<2x32xf32>
    %271 = math.tanh %270 : vector<2x32xf32>
    %272 = vector.extract_strided_slice %254 {offsets = [0, 96], sizes = [2, 32], strides = [1, 1]} : vector<2x128xf32> to vector<2x32xf32>
    %273 = arith.negf %272 : vector<2x32xf32>
    %274 = math.exp %273 : vector<2x32xf32>
    %cst_68 = arith.constant 1.000000e+00 : f32
    %275 = vector.broadcast %cst_68 : f32 to vector<2x32xf32>
    %276 = arith.addf %275, %274 : vector<2x32xf32>
    %277 = arith.divf %275, %276 : vector<2x32xf32>
    %278 = arith.mulf %269, %220 : vector<2x32xf32>
    %279 = arith.mulf %263, %271 : vector<2x32xf32>
    %280 = arith.addf %278, %279 : vector<2x32xf32>
    %281 = math.tanh %280 : vector<2x32xf32>
    %282 = arith.mulf %277, %281 : vector<2x32xf32>
    %283 = vector.extract_strided_slice %257 {offsets = [0, 0], sizes = [2, 32], strides = [1, 1]} : vector<2x128xf32> to vector<2x32xf32>
    %284 = arith.negf %283 : vector<2x32xf32>
    %285 = math.exp %284 : vector<2x32xf32>
    %cst_69 = arith.constant 1.000000e+00 : f32
    %286 = vector.broadcast %cst_69 : f32 to vector<2x32xf32>
    %287 = arith.addf %286, %285 : vector<2x32xf32>
    %288 = arith.divf %286, %287 : vector<2x32xf32>
    %289 = vector.extract_strided_slice %257 {offsets = [0, 32], sizes = [2, 32], strides = [1, 1]} : vector<2x128xf32> to vector<2x32xf32>
    %290 = arith.negf %289 : vector<2x32xf32>
    %291 = math.exp %290 : vector<2x32xf32>
    %cst_70 = arith.constant 1.000000e+00 : f32
    %292 = vector.broadcast %cst_70 : f32 to vector<2x32xf32>
    %293 = arith.addf %292, %291 : vector<2x32xf32>
    %294 = arith.divf %292, %293 : vector<2x32xf32>
    %295 = vector.extract_strided_slice %257 {offsets = [0, 64], sizes = [2, 32], strides = [1, 1]} : vector<2x128xf32> to vector<2x32xf32>
    %296 = math.tanh %295 : vector<2x32xf32>
    %297 = vector.extract_strided_slice %257 {offsets = [0, 96], sizes = [2, 32], strides = [1, 1]} : vector<2x128xf32> to vector<2x32xf32>
    %298 = arith.negf %297 : vector<2x32xf32>
    %299 = math.exp %298 : vector<2x32xf32>
    %cst_71 = arith.constant 1.000000e+00 : f32
    %300 = vector.broadcast %cst_71 : f32 to vector<2x32xf32>
    %301 = arith.addf %300, %299 : vector<2x32xf32>
    %302 = arith.divf %300, %301 : vector<2x32xf32>
    %303 = arith.mulf %294, %245 : vector<2x32xf32>
    %304 = arith.mulf %288, %296 : vector<2x32xf32>
    %305 = arith.addf %303, %304 : vector<2x32xf32>
    %306 = math.tanh %305 : vector<2x32xf32>
    %307 = arith.mulf %302, %306 : vector<2x32xf32>
    %c8_72 = arith.constant 8 : index
    %c0_73 = arith.constant 0 : index
    %308 = vector.load %arg5[%c8_72, %c0_73] : memref<32x64xf32, #tpu.memory_space<vmem>>, vector<2x32xf32>
    tpu.vector_store %arg5[%c8_72, %c0_73], %282 {strides = array<i32>} : memref<32x64xf32, #tpu.memory_space<vmem>>, vector<2x32xf32>,
    %c22_74 = arith.constant 22 : index
    %c32_75 = arith.constant 32 : index
    %309 = vector.load %arg5[%c22_74, %c32_75] : memref<32x64xf32, #tpu.memory_space<vmem>>, vector<2x32xf32>
    tpu.vector_store %arg5[%c22_74, %c32_75], %307 {strides = array<i32>} : memref<32x64xf32, #tpu.memory_space<vmem>>, vector<2x32xf32>,
    %310 = tpu.concatenate %282, %307 in 1 : vector<2x32xf32>, vector<2x32xf32> -> vector<2x64xf32>
    %cst_76 = arith.constant dense<0.000000e+00> : vector<2x256xf32>
    %311 = tpu.matmul %310, %7, %cst_76 {dimension_numbers = #tpu.dot_dimension_numbers<[1], [0], [0], [1], [0, 0, 1, 1], [], []>} : vector<2x64xf32>, vector<64x256xf32>, vector<2x256xf32> -> vector<2x256xf32>
    %c10 = arith.constant 10 : index
    %c0_77 = arith.constant 0 : index
    %312 = vector.load %arg6[%c10, %c0_77] : memref<32x256xf32, #tpu.memory_space<vmem>>, vector<2x128xf32>
    %313 = vector.extract_strided_slice %311 {offsets = [0, 0], sizes = [2, 128], strides = [1, 1]} : vector<2x256xf32> to vector<2x128xf32>
    %314 = arith.addf %312, %313 : vector<2x128xf32>
    %c20 = arith.constant 20 : index
    %c128_78 = arith.constant 128 : index
    %315 = vector.load %arg6[%c20, %c128_78] : memref<32x256xf32, #tpu.memory_space<vmem>>, vector<2x128xf32>
    %316 = vector.extract_strided_slice %311 {offsets = [0, 128], sizes = [2, 128], strides = [1, 1]} : vector<2x256xf32> to vector<2x128xf32>
    %317 = arith.addf %315, %316 : vector<2x128xf32>
    %318 = vector.extract_strided_slice %314 {offsets = [0, 0], sizes = [2, 32], strides = [1, 1]} : vector<2x128xf32> to vector<2x32xf32>
    %319 = arith.negf %318 : vector<2x32xf32>
    %320 = math.exp %319 : vector<2x32xf32>
    %cst_79 = arith.constant 1.000000e+00 : f32
    %321 = vector.broadcast %cst_79 : f32 to vector<2x32xf32>
    %322 = arith.addf %321, %320 : vector<2x32xf32>
    %323 = arith.divf %321, %322 : vector<2x32xf32>
    %324 = vector.extract_strided_slice %314 {offsets = [0, 32], sizes = [2, 32], strides = [1, 1]} : vector<2x128xf32> to vector<2x32xf32>
    %325 = arith.negf %324 : vector<2x32xf32>
    %326 = math.exp %325 : vector<2x32xf32>
    %cst_80 = arith.constant 1.000000e+00 : f32
    %327 = vector.broadcast %cst_80 : f32 to vector<2x32xf32>
    %328 = arith.addf %327, %326 : vector<2x32xf32>
    %329 = arith.divf %327, %328 : vector<2x32xf32>
    %330 = vector.extract_strided_slice %314 {offsets = [0, 64], sizes = [2, 32], strides = [1, 1]} : vector<2x128xf32> to vector<2x32xf32>
    %331 = math.tanh %330 : vector<2x32xf32>
    %332 = vector.extract_strided_slice %314 {offsets = [0, 96], sizes = [2, 32], strides = [1, 1]} : vector<2x128xf32> to vector<2x32xf32>
    %333 = arith.negf %332 : vector<2x32xf32>
    %334 = math.exp %333 : vector<2x32xf32>
    %cst_81 = arith.constant 1.000000e+00 : f32
    %335 = vector.broadcast %cst_81 : f32 to vector<2x32xf32>
    %336 = arith.addf %335, %334 : vector<2x32xf32>
    %337 = arith.divf %335, %336 : vector<2x32xf32>
    %338 = arith.mulf %329, %280 : vector<2x32xf32>
    %339 = arith.mulf %323, %331 : vector<2x32xf32>
    %340 = arith.addf %338, %339 : vector<2x32xf32>
    %341 = math.tanh %340 : vector<2x32xf32>
    %342 = arith.mulf %337, %341 : vector<2x32xf32>
    %343 = vector.extract_strided_slice %317 {offsets = [0, 0], sizes = [2, 32], strides = [1, 1]} : vector<2x128xf32> to vector<2x32xf32>
    %344 = arith.negf %343 : vector<2x32xf32>
    %345 = math.exp %344 : vector<2x32xf32>
    %cst_82 = arith.constant 1.000000e+00 : f32
    %346 = vector.broadcast %cst_82 : f32 to vector<2x32xf32>
    %347 = arith.addf %346, %345 : vector<2x32xf32>
    %348 = arith.divf %346, %347 : vector<2x32xf32>
    %349 = vector.extract_strided_slice %317 {offsets = [0, 32], sizes = [2, 32], strides = [1, 1]} : vector<2x128xf32> to vector<2x32xf32>
    %350 = arith.negf %349 : vector<2x32xf32>
    %351 = math.exp %350 : vector<2x32xf32>
    %cst_83 = arith.constant 1.000000e+00 : f32
    %352 = vector.broadcast %cst_83 : f32 to vector<2x32xf32>
    %353 = arith.addf %352, %351 : vector<2x32xf32>
    %354 = arith.divf %352, %353 : vector<2x32xf32>
    %355 = vector.extract_strided_slice %317 {offsets = [0, 64], sizes = [2, 32], strides = [1, 1]} : vector<2x128xf32> to vector<2x32xf32>
    %356 = math.tanh %355 : vector<2x32xf32>
    %357 = vector.extract_strided_slice %317 {offsets = [0, 96], sizes = [2, 32], strides = [1, 1]} : vector<2x128xf32> to vector<2x32xf32>
    %358 = arith.negf %357 : vector<2x32xf32>
    %359 = math.exp %358 : vector<2x32xf32>
    %cst_84 = arith.constant 1.000000e+00 : f32
    %360 = vector.broadcast %cst_84 : f32 to vector<2x32xf32>
    %361 = arith.addf %360, %359 : vector<2x32xf32>
    %362 = arith.divf %360, %361 : vector<2x32xf32>
    %363 = arith.mulf %354, %305 : vector<2x32xf32>
    %364 = arith.mulf %348, %356 : vector<2x32xf32>
    %365 = arith.addf %363, %364 : vector<2x32xf32>
    %366 = math.tanh %365 : vector<2x32xf32>
    %367 = arith.mulf %362, %366 : vector<2x32xf32>
    %c10_85 = arith.constant 10 : index
    %c0_86 = arith.constant 0 : index
    %368 = vector.load %arg5[%c10_85, %c0_86] : memref<32x64xf32, #tpu.memory_space<vmem>>, vector<2x32xf32>
    tpu.vector_store %arg5[%c10_85, %c0_86], %342 {strides = array<i32>} : memref<32x64xf32, #tpu.memory_space<vmem>>, vector<2x32xf32>,
    %c20_87 = arith.constant 20 : index
    %c32_88 = arith.constant 32 : index
    %369 = vector.load %arg5[%c20_87, %c32_88] : memref<32x64xf32, #tpu.memory_space<vmem>>, vector<2x32xf32>
    tpu.vector_store %arg5[%c20_87, %c32_88], %367 {strides = array<i32>} : memref<32x64xf32, #tpu.memory_space<vmem>>, vector<2x32xf32>,
    %370 = tpu.concatenate %342, %367 in 1 : vector<2x32xf32>, vector<2x32xf32> -> vector<2x64xf32>
    %cst_89 = arith.constant dense<0.000000e+00> : vector<2x256xf32>
    %371 = tpu.matmul %370, %7, %cst_89 {dimension_numbers = #tpu.dot_dimension_numbers<[1], [0], [0], [1], [0, 0, 1, 1], [], []>} : vector<2x64xf32>, vector<64x256xf32>, vector<2x256xf32> -> vector<2x256xf32>
    %c12 = arith.constant 12 : index
    %c0_90 = arith.constant 0 : index
    %372 = vector.load %arg6[%c12, %c0_90] : memref<32x256xf32, #tpu.memory_space<vmem>>, vector<2x128xf32>
    %373 = vector.extract_strided_slice %371 {offsets = [0, 0], sizes = [2, 128], strides = [1, 1]} : vector<2x256xf32> to vector<2x128xf32>
    %374 = arith.addf %372, %373 : vector<2x128xf32>
    %c18 = arith.constant 18 : index
    %c128_91 = arith.constant 128 : index
    %375 = vector.load %arg6[%c18, %c128_91] : memref<32x256xf32, #tpu.memory_space<vmem>>, vector<2x128xf32>
    %376 = vector.extract_strided_slice %371 {offsets = [0, 128], sizes = [2, 128], strides = [1, 1]} : vector<2x256xf32> to vector<2x128xf32>
    %377 = arith.addf %375, %376 : vector<2x128xf32>
    %378 = vector.extract_strided_slice %374 {offsets = [0, 0], sizes = [2, 32], strides = [1, 1]} : vector<2x128xf32> to vector<2x32xf32>
    %379 = arith.negf %378 : vector<2x32xf32>
    %380 = math.exp %379 : vector<2x32xf32>
    %cst_92 = arith.constant 1.000000e+00 : f32
    %381 = vector.broadcast %cst_92 : f32 to vector<2x32xf32>
    %382 = arith.addf %381, %380 : vector<2x32xf32>
    %383 = arith.divf %381, %382 : vector<2x32xf32>
    %384 = vector.extract_strided_slice %374 {offsets = [0, 32], sizes = [2, 32], strides = [1, 1]} : vector<2x128xf32> to vector<2x32xf32>
    %385 = arith.negf %384 : vector<2x32xf32>
    %386 = math.exp %385 : vector<2x32xf32>
    %cst_93 = arith.constant 1.000000e+00 : f32
    %387 = vector.broadcast %cst_93 : f32 to vector<2x32xf32>
    %388 = arith.addf %387, %386 : vector<2x32xf32>
    %389 = arith.divf %387, %388 : vector<2x32xf32>
    %390 = vector.extract_strided_slice %374 {offsets = [0, 64], sizes = [2, 32], strides = [1, 1]} : vector<2x128xf32> to vector<2x32xf32>
    %391 = math.tanh %390 : vector<2x32xf32>
    %392 = vector.extract_strided_slice %374 {offsets = [0, 96], sizes = [2, 32], strides = [1, 1]} : vector<2x128xf32> to vector<2x32xf32>
    %393 = arith.negf %392 : vector<2x32xf32>
    %394 = math.exp %393 : vector<2x32xf32>
    %cst_94 = arith.constant 1.000000e+00 : f32
    %395 = vector.broadcast %cst_94 : f32 to vector<2x32xf32>
    %396 = arith.addf %395, %394 : vector<2x32xf32>
    %397 = arith.divf %395, %396 : vector<2x32xf32>
    %398 = arith.mulf %389, %340 : vector<2x32xf32>
    %399 = arith.mulf %383, %391 : vector<2x32xf32>
    %400 = arith.addf %398, %399 : vector<2x32xf32>
    %401 = math.tanh %400 : vector<2x32xf32>
    %402 = arith.mulf %397, %401 : vector<2x32xf32>
    %403 = vector.extract_strided_slice %377 {offsets = [0, 0], sizes = [2, 32], strides = [1, 1]} : vector<2x128xf32> to vector<2x32xf32>
    %404 = arith.negf %403 : vector<2x32xf32>
    %405 = math.exp %404 : vector<2x32xf32>
    %cst_95 = arith.constant 1.000000e+00 : f32
    %406 = vector.broadcast %cst_95 : f32 to vector<2x32xf32>
    %407 = arith.addf %406, %405 : vector<2x32xf32>
    %408 = arith.divf %406, %407 : vector<2x32xf32>
    %409 = vector.extract_strided_slice %377 {offsets = [0, 32], sizes = [2, 32], strides = [1, 1]} : vector<2x128xf32> to vector<2x32xf32>
    %410 = arith.negf %409 : vector<2x32xf32>
    %411 = math.exp %410 : vector<2x32xf32>
    %cst_96 = arith.constant 1.000000e+00 : f32
    %412 = vector.broadcast %cst_96 : f32 to vector<2x32xf32>
    %413 = arith.addf %412, %411 : vector<2x32xf32>
    %414 = arith.divf %412, %413 : vector<2x32xf32>
    %415 = vector.extract_strided_slice %377 {offsets = [0, 64], sizes = [2, 32], strides = [1, 1]} : vector<2x128xf32> to vector<2x32xf32>
    %416 = math.tanh %415 : vector<2x32xf32>
    %417 = vector.extract_strided_slice %377 {offsets = [0, 96], sizes = [2, 32], strides = [1, 1]} : vector<2x128xf32> to vector<2x32xf32>
    %418 = arith.negf %417 : vector<2x32xf32>
    %419 = math.exp %418 : vector<2x32xf32>
    %cst_97 = arith.constant 1.000000e+00 : f32
    %420 = vector.broadcast %cst_97 : f32 to vector<2x32xf32>
    %421 = arith.addf %420, %419 : vector<2x32xf32>
    %422 = arith.divf %420, %421 : vector<2x32xf32>
    %423 = arith.mulf %414, %365 : vector<2x32xf32>
    %424 = arith.mulf %408, %416 : vector<2x32xf32>
    %425 = arith.addf %423, %424 : vector<2x32xf32>
    %426 = math.tanh %425 : vector<2x32xf32>
    %427 = arith.mulf %422, %426 : vector<2x32xf32>
    %c12_98 = arith.constant 12 : index
    %c0_99 = arith.constant 0 : index
    %428 = vector.load %arg5[%c12_98, %c0_99] : memref<32x64xf32, #tpu.memory_space<vmem>>, vector<2x32xf32>
    tpu.vector_store %arg5[%c12_98, %c0_99], %402 {strides = array<i32>} : memref<32x64xf32, #tpu.memory_space<vmem>>, vector<2x32xf32>,
    %c18_100 = arith.constant 18 : index
    %c32_101 = arith.constant 32 : index
    %429 = vector.load %arg5[%c18_100, %c32_101] : memref<32x64xf32, #tpu.memory_space<vmem>>, vector<2x32xf32>
    tpu.vector_store %arg5[%c18_100, %c32_101], %427 {strides = array<i32>} : memref<32x64xf32, #tpu.memory_space<vmem>>, vector<2x32xf32>,
    %430 = tpu.concatenate %402, %427 in 1 : vector<2x32xf32>, vector<2x32xf32> -> vector<2x64xf32>
    %cst_102 = arith.constant dense<0.000000e+00> : vector<2x256xf32>
    %431 = tpu.matmul %430, %7, %cst_102 {dimension_numbers = #tpu.dot_dimension_numbers<[1], [0], [0], [1], [0, 0, 1, 1], [], []>} : vector<2x64xf32>, vector<64x256xf32>, vector<2x256xf32> -> vector<2x256xf32>
    %c14 = arith.constant 14 : index
    %c0_103 = arith.constant 0 : index
    %432 = vector.load %arg6[%c14, %c0_103] : memref<32x256xf32, #tpu.memory_space<vmem>>, vector<2x128xf32>
    %433 = vector.extract_strided_slice %431 {offsets = [0, 0], sizes = [2, 128], strides = [1, 1]} : vector<2x256xf32> to vector<2x128xf32>
    %434 = arith.addf %432, %433 : vector<2x128xf32>
    %c16 = arith.constant 16 : index
    %c128_104 = arith.constant 128 : index
    %435 = vector.load %arg6[%c16, %c128_104] : memref<32x256xf32, #tpu.memory_space<vmem>>, vector<2x128xf32>
    %436 = vector.extract_strided_slice %431 {offsets = [0, 128], sizes = [2, 128], strides = [1, 1]} : vector<2x256xf32> to vector<2x128xf32>
    %437 = arith.addf %435, %436 : vector<2x128xf32>
    %438 = vector.extract_strided_slice %434 {offsets = [0, 0], sizes = [2, 32], strides = [1, 1]} : vector<2x128xf32> to vector<2x32xf32>
    %439 = arith.negf %438 : vector<2x32xf32>
    %440 = math.exp %439 : vector<2x32xf32>
    %cst_105 = arith.constant 1.000000e+00 : f32
    %441 = vector.broadcast %cst_105 : f32 to vector<2x32xf32>
    %442 = arith.addf %441, %440 : vector<2x32xf32>
    %443 = arith.divf %441, %442 : vector<2x32xf32>
    %444 = vector.extract_strided_slice %434 {offsets = [0, 32], sizes = [2, 32], strides = [1, 1]} : vector<2x128xf32> to vector<2x32xf32>
    %445 = arith.negf %444 : vector<2x32xf32>
    %446 = math.exp %445 : vector<2x32xf32>
    %cst_106 = arith.constant 1.000000e+00 : f32
    %447 = vector.broadcast %cst_106 : f32 to vector<2x32xf32>
    %448 = arith.addf %447, %446 : vector<2x32xf32>
    %449 = arith.divf %447, %448 : vector<2x32xf32>
    %450 = vector.extract_strided_slice %434 {offsets = [0, 64], sizes = [2, 32], strides = [1, 1]} : vector<2x128xf32> to vector<2x32xf32>
    %451 = math.tanh %450 : vector<2x32xf32>
    %452 = vector.extract_strided_slice %434 {offsets = [0, 96], sizes = [2, 32], strides = [1, 1]} : vector<2x128xf32> to vector<2x32xf32>
    %453 = arith.negf %452 : vector<2x32xf32>
    %454 = math.exp %453 : vector<2x32xf32>
    %cst_107 = arith.constant 1.000000e+00 : f32
    %455 = vector.broadcast %cst_107 : f32 to vector<2x32xf32>
    %456 = arith.addf %455, %454 : vector<2x32xf32>
    %457 = arith.divf %455, %456 : vector<2x32xf32>
    %458 = arith.mulf %449, %400 : vector<2x32xf32>
    %459 = arith.mulf %443, %451 : vector<2x32xf32>
    %460 = arith.addf %458, %459 : vector<2x32xf32>
    %461 = math.tanh %460 : vector<2x32xf32>
    %462 = arith.mulf %457, %461 : vector<2x32xf32>
    %463 = vector.extract_strided_slice %437 {offsets = [0, 0], sizes = [2, 32], strides = [1, 1]} : vector<2x128xf32> to vector<2x32xf32>
    %464 = arith.negf %463 : vector<2x32xf32>
    %465 = math.exp %464 : vector<2x32xf32>
    %cst_108 = arith.constant 1.000000e+00 : f32
    %466 = vector.broadcast %cst_108 : f32 to vector<2x32xf32>
    %467 = arith.addf %466, %465 : vector<2x32xf32>
    %468 = arith.divf %466, %467 : vector<2x32xf32>
    %469 = vector.extract_strided_slice %437 {offsets = [0, 32], sizes = [2, 32], strides = [1, 1]} : vector<2x128xf32> to vector<2x32xf32>
    %470 = arith.negf %469 : vector<2x32xf32>
    %471 = math.exp %470 : vector<2x32xf32>
    %cst_109 = arith.constant 1.000000e+00 : f32
    %472 = vector.broadcast %cst_109 : f32 to vector<2x32xf32>
    %473 = arith.addf %472, %471 : vector<2x32xf32>
    %474 = arith.divf %472, %473 : vector<2x32xf32>
    %475 = vector.extract_strided_slice %437 {offsets = [0, 64], sizes = [2, 32], strides = [1, 1]} : vector<2x128xf32> to vector<2x32xf32>
    %476 = math.tanh %475 : vector<2x32xf32>
    %477 = vector.extract_strided_slice %437 {offsets = [0, 96], sizes = [2, 32], strides = [1, 1]} : vector<2x128xf32> to vector<2x32xf32>
    %478 = arith.negf %477 : vector<2x32xf32>
    %479 = math.exp %478 : vector<2x32xf32>
    %cst_110 = arith.constant 1.000000e+00 : f32
    %480 = vector.broadcast %cst_110 : f32 to vector<2x32xf32>
    %481 = arith.addf %480, %479 : vector<2x32xf32>
    %482 = arith.divf %480, %481 : vector<2x32xf32>
    %483 = arith.mulf %474, %425 : vector<2x32xf32>
    %484 = arith.mulf %468, %476 : vector<2x32xf32>
    %485 = arith.addf %483, %484 : vector<2x32xf32>
    %486 = math.tanh %485 : vector<2x32xf32>
    %487 = arith.mulf %482, %486 : vector<2x32xf32>
    %c14_111 = arith.constant 14 : index
    %c0_112 = arith.constant 0 : index
    %488 = vector.load %arg5[%c14_111, %c0_112] : memref<32x64xf32, #tpu.memory_space<vmem>>, vector<2x32xf32>
    tpu.vector_store %arg5[%c14_111, %c0_112], %462 {strides = array<i32>} : memref<32x64xf32, #tpu.memory_space<vmem>>, vector<2x32xf32>,
    %c16_113 = arith.constant 16 : index
    %c32_114 = arith.constant 32 : index
    %489 = vector.load %arg5[%c16_113, %c32_114] : memref<32x64xf32, #tpu.memory_space<vmem>>, vector<2x32xf32>
    tpu.vector_store %arg5[%c16_113, %c32_114], %487 {strides = array<i32>} : memref<32x64xf32, #tpu.memory_space<vmem>>, vector<2x32xf32>,
    %490 = tpu.concatenate %462, %487 in 1 : vector<2x32xf32>, vector<2x32xf32> -> vector<2x64xf32>
    %cst_115 = arith.constant dense<0.000000e+00> : vector<2x256xf32>
    %491 = tpu.matmul %490, %7, %cst_115 {dimension_numbers = #tpu.dot_dimension_numbers<[1], [0], [0], [1], [0, 0, 1, 1], [], []>} : vector<2x64xf32>, vector<64x256xf32>, vector<2x256xf32> -> vector<2x256xf32>
    %c16_116 = arith.constant 16 : index
    %c0_117 = arith.constant 0 : index
    %492 = vector.load %arg6[%c16_116, %c0_117] : memref<32x256xf32, #tpu.memory_space<vmem>>, vector<2x128xf32>
    %493 = vector.extract_strided_slice %491 {offsets = [0, 0], sizes = [2, 128], strides = [1, 1]} : vector<2x256xf32> to vector<2x128xf32>
    %494 = arith.addf %492, %493 : vector<2x128xf32>
    %c14_118 = arith.constant 14 : index
    %c128_119 = arith.constant 128 : index
    %495 = vector.load %arg6[%c14_118, %c128_119] : memref<32x256xf32, #tpu.memory_space<vmem>>, vector<2x128xf32>
    %496 = vector.extract_strided_slice %491 {offsets = [0, 128], sizes = [2, 128], strides = [1, 1]} : vector<2x256xf32> to vector<2x128xf32>
    %497 = arith.addf %495, %496 : vector<2x128xf32>
    %498 = vector.extract_strided_slice %494 {offsets = [0, 0], sizes = [2, 32], strides = [1, 1]} : vector<2x128xf32> to vector<2x32xf32>
    %499 = arith.negf %498 : vector<2x32xf32>
    %500 = math.exp %499 : vector<2x32xf32>
    %cst_120 = arith.constant 1.000000e+00 : f32
    %501 = vector.broadcast %cst_120 : f32 to vector<2x32xf32>
    %502 = arith.addf %501, %500 : vector<2x32xf32>
    %503 = arith.divf %501, %502 : vector<2x32xf32>
    %504 = vector.extract_strided_slice %494 {offsets = [0, 32], sizes = [2, 32], strides = [1, 1]} : vector<2x128xf32> to vector<2x32xf32>
    %505 = arith.negf %504 : vector<2x32xf32>
    %506 = math.exp %505 : vector<2x32xf32>
    %cst_121 = arith.constant 1.000000e+00 : f32
    %507 = vector.broadcast %cst_121 : f32 to vector<2x32xf32>
    %508 = arith.addf %507, %506 : vector<2x32xf32>
    %509 = arith.divf %507, %508 : vector<2x32xf32>
    %510 = vector.extract_strided_slice %494 {offsets = [0, 64], sizes = [2, 32], strides = [1, 1]} : vector<2x128xf32> to vector<2x32xf32>
    %511 = math.tanh %510 : vector<2x32xf32>
    %512 = vector.extract_strided_slice %494 {offsets = [0, 96], sizes = [2, 32], strides = [1, 1]} : vector<2x128xf32> to vector<2x32xf32>
    %513 = arith.negf %512 : vector<2x32xf32>
    %514 = math.exp %513 : vector<2x32xf32>
    %cst_122 = arith.constant 1.000000e+00 : f32
    %515 = vector.broadcast %cst_122 : f32 to vector<2x32xf32>
    %516 = arith.addf %515, %514 : vector<2x32xf32>
    %517 = arith.divf %515, %516 : vector<2x32xf32>
    %518 = arith.mulf %509, %460 : vector<2x32xf32>
    %519 = arith.mulf %503, %511 : vector<2x32xf32>
    %520 = arith.addf %518, %519 : vector<2x32xf32>
    %521 = math.tanh %520 : vector<2x32xf32>
    %522 = arith.mulf %517, %521 : vector<2x32xf32>
    %523 = vector.extract_strided_slice %497 {offsets = [0, 0], sizes = [2, 32], strides = [1, 1]} : vector<2x128xf32> to vector<2x32xf32>
    %524 = arith.negf %523 : vector<2x32xf32>
    %525 = math.exp %524 : vector<2x32xf32>
    %cst_123 = arith.constant 1.000000e+00 : f32
    %526 = vector.broadcast %cst_123 : f32 to vector<2x32xf32>
    %527 = arith.addf %526, %525 : vector<2x32xf32>
    %528 = arith.divf %526, %527 : vector<2x32xf32>
    %529 = vector.extract_strided_slice %497 {offsets = [0, 32], sizes = [2, 32], strides = [1, 1]} : vector<2x128xf32> to vector<2x32xf32>
    %530 = arith.negf %529 : vector<2x32xf32>
    %531 = math.exp %530 : vector<2x32xf32>
    %cst_124 = arith.constant 1.000000e+00 : f32
    %532 = vector.broadcast %cst_124 : f32 to vector<2x32xf32>
    %533 = arith.addf %532, %531 : vector<2x32xf32>
    %534 = arith.divf %532, %533 : vector<2x32xf32>
    %535 = vector.extract_strided_slice %497 {offsets = [0, 64], sizes = [2, 32], strides = [1, 1]} : vector<2x128xf32> to vector<2x32xf32>
    %536 = math.tanh %535 : vector<2x32xf32>
    %537 = vector.extract_strided_slice %497 {offsets = [0, 96], sizes = [2, 32], strides = [1, 1]} : vector<2x128xf32> to vector<2x32xf32>
    %538 = arith.negf %537 : vector<2x32xf32>
    %539 = math.exp %538 : vector<2x32xf32>
    %cst_125 = arith.constant 1.000000e+00 : f32
    %540 = vector.broadcast %cst_125 : f32 to vector<2x32xf32>
    %541 = arith.addf %540, %539 : vector<2x32xf32>
    %542 = arith.divf %540, %541 : vector<2x32xf32>
    %543 = arith.mulf %534, %485 : vector<2x32xf32>
    %544 = arith.mulf %528, %536 : vector<2x32xf32>
    %545 = arith.addf %543, %544 : vector<2x32xf32>
    %546 = math.tanh %545 : vector<2x32xf32>
    %547 = arith.mulf %542, %546 : vector<2x32xf32>
    %c16_126 = arith.constant 16 : index
    %c0_127 = arith.constant 0 : index
    %548 = vector.load %arg5[%c16_126, %c0_127] : memref<32x64xf32, #tpu.memory_space<vmem>>, vector<2x32xf32>
    tpu.vector_store %arg5[%c16_126, %c0_127], %522 {strides = array<i32>} : memref<32x64xf32, #tpu.memory_space<vmem>>, vector<2x32xf32>,
    %c14_128 = arith.constant 14 : index
    %c32_129 = arith.constant 32 : index
    %549 = vector.load %arg5[%c14_128, %c32_129] : memref<32x64xf32, #tpu.memory_space<vmem>>, vector<2x32xf32>
    tpu.vector_store %arg5[%c14_128, %c32_129], %547 {strides = array<i32>} : memref<32x64xf32, #tpu.memory_space<vmem>>, vector<2x32xf32>,
    %550 = tpu.concatenate %522, %547 in 1 : vector<2x32xf32>, vector<2x32xf32> -> vector<2x64xf32>
    %cst_130 = arith.constant dense<0.000000e+00> : vector<2x256xf32>
    %551 = tpu.matmul %550, %7, %cst_130 {dimension_numbers = #tpu.dot_dimension_numbers<[1], [0], [0], [1], [0, 0, 1, 1], [], []>} : vector<2x64xf32>, vector<64x256xf32>, vector<2x256xf32> -> vector<2x256xf32>
    %c18_131 = arith.constant 18 : index
    %c0_132 = arith.constant 0 : index
    %552 = vector.load %arg6[%c18_131, %c0_132] : memref<32x256xf32, #tpu.memory_space<vmem>>, vector<2x128xf32>
    %553 = vector.extract_strided_slice %551 {offsets = [0, 0], sizes = [2, 128], strides = [1, 1]} : vector<2x256xf32> to vector<2x128xf32>
    %554 = arith.addf %552, %553 : vector<2x128xf32>
    %c12_133 = arith.constant 12 : index
    %c128_134 = arith.constant 128 : index
    %555 = vector.load %arg6[%c12_133, %c128_134] : memref<32x256xf32, #tpu.memory_space<vmem>>, vector<2x128xf32>
    %556 = vector.extract_strided_slice %551 {offsets = [0, 128], sizes = [2, 128], strides = [1, 1]} : vector<2x256xf32> to vector<2x128xf32>
    %557 = arith.addf %555, %556 : vector<2x128xf32>
    %558 = vector.extract_strided_slice %554 {offsets = [0, 0], sizes = [2, 32], strides = [1, 1]} : vector<2x128xf32> to vector<2x32xf32>
    %559 = arith.negf %558 : vector<2x32xf32>
    %560 = math.exp %559 : vector<2x32xf32>
    %cst_135 = arith.constant 1.000000e+00 : f32
    %561 = vector.broadcast %cst_135 : f32 to vector<2x32xf32>
    %562 = arith.addf %561, %560 : vector<2x32xf32>
    %563 = arith.divf %561, %562 : vector<2x32xf32>
    %564 = vector.extract_strided_slice %554 {offsets = [0, 32], sizes = [2, 32], strides = [1, 1]} : vector<2x128xf32> to vector<2x32xf32>
    %565 = arith.negf %564 : vector<2x32xf32>
    %566 = math.exp %565 : vector<2x32xf32>
    %cst_136 = arith.constant 1.000000e+00 : f32
    %567 = vector.broadcast %cst_136 : f32 to vector<2x32xf32>
    %568 = arith.addf %567, %566 : vector<2x32xf32>
    %569 = arith.divf %567, %568 : vector<2x32xf32>
    %570 = vector.extract_strided_slice %554 {offsets = [0, 64], sizes = [2, 32], strides = [1, 1]} : vector<2x128xf32> to vector<2x32xf32>
    %571 = math.tanh %570 : vector<2x32xf32>
    %572 = vector.extract_strided_slice %554 {offsets = [0, 96], sizes = [2, 32], strides = [1, 1]} : vector<2x128xf32> to vector<2x32xf32>
    %573 = arith.negf %572 : vector<2x32xf32>
    %574 = math.exp %573 : vector<2x32xf32>
    %cst_137 = arith.constant 1.000000e+00 : f32
    %575 = vector.broadcast %cst_137 : f32 to vector<2x32xf32>
    %576 = arith.addf %575, %574 : vector<2x32xf32>
    %577 = arith.divf %575, %576 : vector<2x32xf32>
    %578 = arith.mulf %569, %520 : vector<2x32xf32>
    %579 = arith.mulf %563, %571 : vector<2x32xf32>
    %580 = arith.addf %578, %579 : vector<2x32xf32>
    %581 = math.tanh %580 : vector<2x32xf32>
    %582 = arith.mulf %577, %581 : vector<2x32xf32>
    %583 = vector.extract_strided_slice %557 {offsets = [0, 0], sizes = [2, 32], strides = [1, 1]} : vector<2x128xf32> to vector<2x32xf32>
    %584 = arith.negf %583 : vector<2x32xf32>
    %585 = math.exp %584 : vector<2x32xf32>
    %cst_138 = arith.constant 1.000000e+00 : f32
    %586 = vector.broadcast %cst_138 : f32 to vector<2x32xf32>
    %587 = arith.addf %586, %585 : vector<2x32xf32>
    %588 = arith.divf %586, %587 : vector<2x32xf32>
    %589 = vector.extract_strided_slice %557 {offsets = [0, 32], sizes = [2, 32], strides = [1, 1]} : vector<2x128xf32> to vector<2x32xf32>
    %590 = arith.negf %589 : vector<2x32xf32>
    %591 = math.exp %590 : vector<2x32xf32>
    %cst_139 = arith.constant 1.000000e+00 : f32
    %592 = vector.broadcast %cst_139 : f32 to vector<2x32xf32>
    %593 = arith.addf %592, %591 : vector<2x32xf32>
    %594 = arith.divf %592, %593 : vector<2x32xf32>
    %595 = vector.extract_strided_slice %557 {offsets = [0, 64], sizes = [2, 32], strides = [1, 1]} : vector<2x128xf32> to vector<2x32xf32>
    %596 = math.tanh %595 : vector<2x32xf32>
    %597 = vector.extract_strided_slice %557 {offsets = [0, 96], sizes = [2, 32], strides = [1, 1]} : vector<2x128xf32> to vector<2x32xf32>
    %598 = arith.negf %597 : vector<2x32xf32>
    %599 = math.exp %598 : vector<2x32xf32>
    %cst_140 = arith.constant 1.000000e+00 : f32
    %600 = vector.broadcast %cst_140 : f32 to vector<2x32xf32>
    %601 = arith.addf %600, %599 : vector<2x32xf32>
    %602 = arith.divf %600, %601 : vector<2x32xf32>
    %603 = arith.mulf %594, %545 : vector<2x32xf32>
    %604 = arith.mulf %588, %596 : vector<2x32xf32>
    %605 = arith.addf %603, %604 : vector<2x32xf32>
    %606 = math.tanh %605 : vector<2x32xf32>
    %607 = arith.mulf %602, %606 : vector<2x32xf32>
    %c18_141 = arith.constant 18 : index
    %c0_142 = arith.constant 0 : index
    %608 = vector.load %arg5[%c18_141, %c0_142] : memref<32x64xf32, #tpu.memory_space<vmem>>, vector<2x32xf32>
    tpu.vector_store %arg5[%c18_141, %c0_142], %582 {strides = array<i32>} : memref<32x64xf32, #tpu.memory_space<vmem>>, vector<2x32xf32>,
    %c12_143 = arith.constant 12 : index
    %c32_144 = arith.constant 32 : index
    %609 = vector.load %arg5[%c12_143, %c32_144] : memref<32x64xf32, #tpu.memory_space<vmem>>, vector<2x32xf32>
    tpu.vector_store %arg5[%c12_143, %c32_144], %607 {strides = array<i32>} : memref<32x64xf32, #tpu.memory_space<vmem>>, vector<2x32xf32>,
    %610 = tpu.concatenate %582, %607 in 1 : vector<2x32xf32>, vector<2x32xf32> -> vector<2x64xf32>
    %cst_145 = arith.constant dense<0.000000e+00> : vector<2x256xf32>
    %611 = tpu.matmul %610, %7, %cst_145 {dimension_numbers = #tpu.dot_dimension_numbers<[1], [0], [0], [1], [0, 0, 1, 1], [], []>} : vector<2x64xf32>, vector<64x256xf32>, vector<2x256xf32> -> vector<2x256xf32>
    %c20_146 = arith.constant 20 : index
    %c0_147 = arith.constant 0 : index
    %612 = vector.load %arg6[%c20_146, %c0_147] : memref<32x256xf32, #tpu.memory_space<vmem>>, vector<2x128xf32>
    %613 = vector.extract_strided_slice %611 {offsets = [0, 0], sizes = [2, 128], strides = [1, 1]} : vector<2x256xf32> to vector<2x128xf32>
    %614 = arith.addf %612, %613 : vector<2x128xf32>
    %c10_148 = arith.constant 10 : index
    %c128_149 = arith.constant 128 : index
    %615 = vector.load %arg6[%c10_148, %c128_149] : memref<32x256xf32, #tpu.memory_space<vmem>>, vector<2x128xf32>
    %616 = vector.extract_strided_slice %611 {offsets = [0, 128], sizes = [2, 128], strides = [1, 1]} : vector<2x256xf32> to vector<2x128xf32>
    %617 = arith.addf %615, %616 : vector<2x128xf32>
    %618 = vector.extract_strided_slice %614 {offsets = [0, 0], sizes = [2, 32], strides = [1, 1]} : vector<2x128xf32> to vector<2x32xf32>
    %619 = arith.negf %618 : vector<2x32xf32>
    %620 = math.exp %619 : vector<2x32xf32>
    %cst_150 = arith.constant 1.000000e+00 : f32
    %621 = vector.broadcast %cst_150 : f32 to vector<2x32xf32>
    %622 = arith.addf %621, %620 : vector<2x32xf32>
    %623 = arith.divf %621, %622 : vector<2x32xf32>
    %624 = vector.extract_strided_slice %614 {offsets = [0, 32], sizes = [2, 32], strides = [1, 1]} : vector<2x128xf32> to vector<2x32xf32>
    %625 = arith.negf %624 : vector<2x32xf32>
    %626 = math.exp %625 : vector<2x32xf32>
    %cst_151 = arith.constant 1.000000e+00 : f32
    %627 = vector.broadcast %cst_151 : f32 to vector<2x32xf32>
    %628 = arith.addf %627, %626 : vector<2x32xf32>
    %629 = arith.divf %627, %628 : vector<2x32xf32>
    %630 = vector.extract_strided_slice %614 {offsets = [0, 64], sizes = [2, 32], strides = [1, 1]} : vector<2x128xf32> to vector<2x32xf32>
    %631 = math.tanh %630 : vector<2x32xf32>
    %632 = vector.extract_strided_slice %614 {offsets = [0, 96], sizes = [2, 32], strides = [1, 1]} : vector<2x128xf32> to vector<2x32xf32>
    %633 = arith.negf %632 : vector<2x32xf32>
    %634 = math.exp %633 : vector<2x32xf32>
    %cst_152 = arith.constant 1.000000e+00 : f32
    %635 = vector.broadcast %cst_152 : f32 to vector<2x32xf32>
    %636 = arith.addf %635, %634 : vector<2x32xf32>
    %637 = arith.divf %635, %636 : vector<2x32xf32>
    %638 = arith.mulf %629, %580 : vector<2x32xf32>
    %639 = arith.mulf %623, %631 : vector<2x32xf32>
    %640 = arith.addf %638, %639 : vector<2x32xf32>
    %641 = math.tanh %640 : vector<2x32xf32>
    %642 = arith.mulf %637, %641 : vector<2x32xf32>
    %643 = vector.extract_strided_slice %617 {offsets = [0, 0], sizes = [2, 32], strides = [1, 1]} : vector<2x128xf32> to vector<2x32xf32>
    %644 = arith.negf %643 : vector<2x32xf32>
    %645 = math.exp %644 : vector<2x32xf32>
    %cst_153 = arith.constant 1.000000e+00 : f32
    %646 = vector.broadcast %cst_153 : f32 to vector<2x32xf32>
    %647 = arith.addf %646, %645 : vector<2x32xf32>
    %648 = arith.divf %646, %647 : vector<2x32xf32>
    %649 = vector.extract_strided_slice %617 {offsets = [0, 32], sizes = [2, 32], strides = [1, 1]} : vector<2x128xf32> to vector<2x32xf32>
    %650 = arith.negf %649 : vector<2x32xf32>
    %651 = math.exp %650 : vector<2x32xf32>
    %cst_154 = arith.constant 1.000000e+00 : f32
    %652 = vector.broadcast %cst_154 : f32 to vector<2x32xf32>
    %653 = arith.addf %652, %651 : vector<2x32xf32>
    %654 = arith.divf %652, %653 : vector<2x32xf32>
    %655 = vector.extract_strided_slice %617 {offsets = [0, 64], sizes = [2, 32], strides = [1, 1]} : vector<2x128xf32> to vector<2x32xf32>
    %656 = math.tanh %655 : vector<2x32xf32>
    %657 = vector.extract_strided_slice %617 {offsets = [0, 96], sizes = [2, 32], strides = [1, 1]} : vector<2x128xf32> to vector<2x32xf32>
    %658 = arith.negf %657 : vector<2x32xf32>
    %659 = math.exp %658 : vector<2x32xf32>
    %cst_155 = arith.constant 1.000000e+00 : f32
    %660 = vector.broadcast %cst_155 : f32 to vector<2x32xf32>
    %661 = arith.addf %660, %659 : vector<2x32xf32>
    %662 = arith.divf %660, %661 : vector<2x32xf32>
    %663 = arith.mulf %654, %605 : vector<2x32xf32>
    %664 = arith.mulf %648, %656 : vector<2x32xf32>
    %665 = arith.addf %663, %664 : vector<2x32xf32>
    %666 = math.tanh %665 : vector<2x32xf32>
    %667 = arith.mulf %662, %666 : vector<2x32xf32>
    %c20_156 = arith.constant 20 : index
    %c0_157 = arith.constant 0 : index
    %668 = vector.load %arg5[%c20_156, %c0_157] : memref<32x64xf32, #tpu.memory_space<vmem>>, vector<2x32xf32>
    tpu.vector_store %arg5[%c20_156, %c0_157], %642 {strides = array<i32>} : memref<32x64xf32, #tpu.memory_space<vmem>>, vector<2x32xf32>,
    %c10_158 = arith.constant 10 : index
    %c32_159 = arith.constant 32 : index
    %669 = vector.load %arg5[%c10_158, %c32_159] : memref<32x64xf32, #tpu.memory_space<vmem>>, vector<2x32xf32>
    tpu.vector_store %arg5[%c10_158, %c32_159], %667 {strides = array<i32>} : memref<32x64xf32, #tpu.memory_space<vmem>>, vector<2x32xf32>,
    %670 = tpu.concatenate %642, %667 in 1 : vector<2x32xf32>, vector<2x32xf32> -> vector<2x64xf32>
    %cst_160 = arith.constant dense<0.000000e+00> : vector<2x256xf32>
    %671 = tpu.matmul %670, %7, %cst_160 {dimension_numbers = #tpu.dot_dimension_numbers<[1], [0], [0], [1], [0, 0, 1, 1], [], []>} : vector<2x64xf32>, vector<64x256xf32>, vector<2x256xf32> -> vector<2x256xf32>
    %c22_161 = arith.constant 22 : index
    %c0_162 = arith.constant 0 : index
    %672 = vector.load %arg6[%c22_161, %c0_162] : memref<32x256xf32, #tpu.memory_space<vmem>>, vector<2x128xf32>
    %673 = vector.extract_strided_slice %671 {offsets = [0, 0], sizes = [2, 128], strides = [1, 1]} : vector<2x256xf32> to vector<2x128xf32>
    %674 = arith.addf %672, %673 : vector<2x128xf32>
    %c8_163 = arith.constant 8 : index
    %c128_164 = arith.constant 128 : index
    %675 = vector.load %arg6[%c8_163, %c128_164] : memref<32x256xf32, #tpu.memory_space<vmem>>, vector<2x128xf32>
    %676 = vector.extract_strided_slice %671 {offsets = [0, 128], sizes = [2, 128], strides = [1, 1]} : vector<2x256xf32> to vector<2x128xf32>
    %677 = arith.addf %675, %676 : vector<2x128xf32>
    %678 = vector.extract_strided_slice %674 {offsets = [0, 0], sizes = [2, 32], strides = [1, 1]} : vector<2x128xf32> to vector<2x32xf32>
    %679 = arith.negf %678 : vector<2x32xf32>
    %680 = math.exp %679 : vector<2x32xf32>
    %cst_165 = arith.constant 1.000000e+00 : f32
    %681 = vector.broadcast %cst_165 : f32 to vector<2x32xf32>
    %682 = arith.addf %681, %680 : vector<2x32xf32>
    %683 = arith.divf %681, %682 : vector<2x32xf32>
    %684 = vector.extract_strided_slice %674 {offsets = [0, 32], sizes = [2, 32], strides = [1, 1]} : vector<2x128xf32> to vector<2x32xf32>
    %685 = arith.negf %684 : vector<2x32xf32>
    %686 = math.exp %685 : vector<2x32xf32>
    %cst_166 = arith.constant 1.000000e+00 : f32
    %687 = vector.broadcast %cst_166 : f32 to vector<2x32xf32>
    %688 = arith.addf %687, %686 : vector<2x32xf32>
    %689 = arith.divf %687, %688 : vector<2x32xf32>
    %690 = vector.extract_strided_slice %674 {offsets = [0, 64], sizes = [2, 32], strides = [1, 1]} : vector<2x128xf32> to vector<2x32xf32>
    %691 = math.tanh %690 : vector<2x32xf32>
    %692 = vector.extract_strided_slice %674 {offsets = [0, 96], sizes = [2, 32], strides = [1, 1]} : vector<2x128xf32> to vector<2x32xf32>
    %693 = arith.negf %692 : vector<2x32xf32>
    %694 = math.exp %693 : vector<2x32xf32>
    %cst_167 = arith.constant 1.000000e+00 : f32
    %695 = vector.broadcast %cst_167 : f32 to vector<2x32xf32>
    %696 = arith.addf %695, %694 : vector<2x32xf32>
    %697 = arith.divf %695, %696 : vector<2x32xf32>
    %698 = arith.mulf %689, %640 : vector<2x32xf32>
    %699 = arith.mulf %683, %691 : vector<2x32xf32>
    %700 = arith.addf %698, %699 : vector<2x32xf32>
    %701 = math.tanh %700 : vector<2x32xf32>
    %702 = arith.mulf %697, %701 : vector<2x32xf32>
    %703 = vector.extract_strided_slice %677 {offsets = [0, 0], sizes = [2, 32], strides = [1, 1]} : vector<2x128xf32> to vector<2x32xf32>
    %704 = arith.negf %703 : vector<2x32xf32>
    %705 = math.exp %704 : vector<2x32xf32>
    %cst_168 = arith.constant 1.000000e+00 : f32
    %706 = vector.broadcast %cst_168 : f32 to vector<2x32xf32>
    %707 = arith.addf %706, %705 : vector<2x32xf32>
    %708 = arith.divf %706, %707 : vector<2x32xf32>
    %709 = vector.extract_strided_slice %677 {offsets = [0, 32], sizes = [2, 32], strides = [1, 1]} : vector<2x128xf32> to vector<2x32xf32>
    %710 = arith.negf %709 : vector<2x32xf32>
    %711 = math.exp %710 : vector<2x32xf32>
    %cst_169 = arith.constant 1.000000e+00 : f32
    %712 = vector.broadcast %cst_169 : f32 to vector<2x32xf32>
    %713 = arith.addf %712, %711 : vector<2x32xf32>
    %714 = arith.divf %712, %713 : vector<2x32xf32>
    %715 = vector.extract_strided_slice %677 {offsets = [0, 64], sizes = [2, 32], strides = [1, 1]} : vector<2x128xf32> to vector<2x32xf32>
    %716 = math.tanh %715 : vector<2x32xf32>
    %717 = vector.extract_strided_slice %677 {offsets = [0, 96], sizes = [2, 32], strides = [1, 1]} : vector<2x128xf32> to vector<2x32xf32>
    %718 = arith.negf %717 : vector<2x32xf32>
    %719 = math.exp %718 : vector<2x32xf32>
    %cst_170 = arith.constant 1.000000e+00 : f32
    %720 = vector.broadcast %cst_170 : f32 to vector<2x32xf32>
    %721 = arith.addf %720, %719 : vector<2x32xf32>
    %722 = arith.divf %720, %721 : vector<2x32xf32>
    %723 = arith.mulf %714, %665 : vector<2x32xf32>
    %724 = arith.mulf %708, %716 : vector<2x32xf32>
    %725 = arith.addf %723, %724 : vector<2x32xf32>
    %726 = math.tanh %725 : vector<2x32xf32>
    %727 = arith.mulf %722, %726 : vector<2x32xf32>
    %c22_171 = arith.constant 22 : index
    %c0_172 = arith.constant 0 : index
    %728 = vector.load %arg5[%c22_171, %c0_172] : memref<32x64xf32, #tpu.memory_space<vmem>>, vector<2x32xf32>
    tpu.vector_store %arg5[%c22_171, %c0_172], %702 {strides = array<i32>} : memref<32x64xf32, #tpu.memory_space<vmem>>, vector<2x32xf32>,
    %c8_173 = arith.constant 8 : index
    %c32_174 = arith.constant 32 : index
    %729 = vector.load %arg5[%c8_173, %c32_174] : memref<32x64xf32, #tpu.memory_space<vmem>>, vector<2x32xf32>
    tpu.vector_store %arg5[%c8_173, %c32_174], %727 {strides = array<i32>} : memref<32x64xf32, #tpu.memory_space<vmem>>, vector<2x32xf32>,
    %730 = tpu.concatenate %702, %727 in 1 : vector<2x32xf32>, vector<2x32xf32> -> vector<2x64xf32>
    %cst_175 = arith.constant dense<0.000000e+00> : vector<2x256xf32>
    %731 = tpu.matmul %730, %7, %cst_175 {dimension_numbers = #tpu.dot_dimension_numbers<[1], [0], [0], [1], [0, 0, 1, 1], [], []>} : vector<2x64xf32>, vector<64x256xf32>, vector<2x256xf32> -> vector<2x256xf32>
    %c24_176 = arith.constant 24 : index
    %c0_177 = arith.constant 0 : index
    %732 = vector.load %arg6[%c24_176, %c0_177] : memref<32x256xf32, #tpu.memory_space<vmem>>, vector<2x128xf32>
    %733 = vector.extract_strided_slice %731 {offsets = [0, 0], sizes = [2, 128], strides = [1, 1]} : vector<2x256xf32> to vector<2x128xf32>
    %734 = arith.addf %732, %733 : vector<2x128xf32>
    %c6_178 = arith.constant 6 : index
    %c128_179 = arith.constant 128 : index
    %735 = vector.load %arg6[%c6_178, %c128_179] : memref<32x256xf32, #tpu.memory_space<vmem>>, vector<2x128xf32>
    %736 = vector.extract_strided_slice %731 {offsets = [0, 128], sizes = [2, 128], strides = [1, 1]} : vector<2x256xf32> to vector<2x128xf32>
    %737 = arith.addf %735, %736 : vector<2x128xf32>
    %738 = vector.extract_strided_slice %734 {offsets = [0, 0], sizes = [2, 32], strides = [1, 1]} : vector<2x128xf32> to vector<2x32xf32>
    %739 = arith.negf %738 : vector<2x32xf32>
    %740 = math.exp %739 : vector<2x32xf32>
    %cst_180 = arith.constant 1.000000e+00 : f32
    %741 = vector.broadcast %cst_180 : f32 to vector<2x32xf32>
    %742 = arith.addf %741, %740 : vector<2x32xf32>
    %743 = arith.divf %741, %742 : vector<2x32xf32>
    %744 = vector.extract_strided_slice %734 {offsets = [0, 32], sizes = [2, 32], strides = [1, 1]} : vector<2x128xf32> to vector<2x32xf32>
    %745 = arith.negf %744 : vector<2x32xf32>
    %746 = math.exp %745 : vector<2x32xf32>
    %cst_181 = arith.constant 1.000000e+00 : f32
    %747 = vector.broadcast %cst_181 : f32 to vector<2x32xf32>
    %748 = arith.addf %747, %746 : vector<2x32xf32>
    %749 = arith.divf %747, %748 : vector<2x32xf32>
    %750 = vector.extract_strided_slice %734 {offsets = [0, 64], sizes = [2, 32], strides = [1, 1]} : vector<2x128xf32> to vector<2x32xf32>
    %751 = math.tanh %750 : vector<2x32xf32>
    %752 = vector.extract_strided_slice %734 {offsets = [0, 96], sizes = [2, 32], strides = [1, 1]} : vector<2x128xf32> to vector<2x32xf32>
    %753 = arith.negf %752 : vector<2x32xf32>
    %754 = math.exp %753 : vector<2x32xf32>
    %cst_182 = arith.constant 1.000000e+00 : f32
    %755 = vector.broadcast %cst_182 : f32 to vector<2x32xf32>
    %756 = arith.addf %755, %754 : vector<2x32xf32>
    %757 = arith.divf %755, %756 : vector<2x32xf32>
    %758 = arith.mulf %749, %700 : vector<2x32xf32>
    %759 = arith.mulf %743, %751 : vector<2x32xf32>
    %760 = arith.addf %758, %759 : vector<2x32xf32>
    %761 = math.tanh %760 : vector<2x32xf32>
    %762 = arith.mulf %757, %761 : vector<2x32xf32>
    %763 = vector.extract_strided_slice %737 {offsets = [0, 0], sizes = [2, 32], strides = [1, 1]} : vector<2x128xf32> to vector<2x32xf32>
    %764 = arith.negf %763 : vector<2x32xf32>
    %765 = math.exp %764 : vector<2x32xf32>
    %cst_183 = arith.constant 1.000000e+00 : f32
    %766 = vector.broadcast %cst_183 : f32 to vector<2x32xf32>
    %767 = arith.addf %766, %765 : vector<2x32xf32>
    %768 = arith.divf %766, %767 : vector<2x32xf32>
    %769 = vector.extract_strided_slice %737 {offsets = [0, 32], sizes = [2, 32], strides = [1, 1]} : vector<2x128xf32> to vector<2x32xf32>
    %770 = arith.negf %769 : vector<2x32xf32>
    %771 = math.exp %770 : vector<2x32xf32>
    %cst_184 = arith.constant 1.000000e+00 : f32
    %772 = vector.broadcast %cst_184 : f32 to vector<2x32xf32>
    %773 = arith.addf %772, %771 : vector<2x32xf32>
    %774 = arith.divf %772, %773 : vector<2x32xf32>
    %775 = vector.extract_strided_slice %737 {offsets = [0, 64], sizes = [2, 32], strides = [1, 1]} : vector<2x128xf32> to vector<2x32xf32>
    %776 = math.tanh %775 : vector<2x32xf32>
    %777 = vector.extract_strided_slice %737 {offsets = [0, 96], sizes = [2, 32], strides = [1, 1]} : vector<2x128xf32> to vector<2x32xf32>
    %778 = arith.negf %777 : vector<2x32xf32>
    %779 = math.exp %778 : vector<2x32xf32>
    %cst_185 = arith.constant 1.000000e+00 : f32
    %780 = vector.broadcast %cst_185 : f32 to vector<2x32xf32>
    %781 = arith.addf %780, %779 : vector<2x32xf32>
    %782 = arith.divf %780, %781 : vector<2x32xf32>
    %783 = arith.mulf %774, %725 : vector<2x32xf32>
    %784 = arith.mulf %768, %776 : vector<2x32xf32>
    %785 = arith.addf %783, %784 : vector<2x32xf32>
    %786 = math.tanh %785 : vector<2x32xf32>
    %787 = arith.mulf %782, %786 : vector<2x32xf32>
    %c24_186 = arith.constant 24 : index
    %c0_187 = arith.constant 0 : index
    %788 = vector.load %arg5[%c24_186, %c0_187] : memref<32x64xf32, #tpu.memory_space<vmem>>, vector<2x32xf32>
    tpu.vector_store %arg5[%c24_186, %c0_187], %762 {strides = array<i32>} : memref<32x64xf32, #tpu.memory_space<vmem>>, vector<2x32xf32>,
    %c6_188 = arith.constant 6 : index
    %c32_189 = arith.constant 32 : index
    %789 = vector.load %arg5[%c6_188, %c32_189] : memref<32x64xf32, #tpu.memory_space<vmem>>, vector<2x32xf32>
    tpu.vector_store %arg5[%c6_188, %c32_189], %787 {strides = array<i32>} : memref<32x64xf32, #tpu.memory_space<vmem>>, vector<2x32xf32>,
    %790 = tpu.concatenate %762, %787 in 1 : vector<2x32xf32>, vector<2x32xf32> -> vector<2x64xf32>
    %cst_190 = arith.constant dense<0.000000e+00> : vector<2x256xf32>
    %791 = tpu.matmul %790, %7, %cst_190 {dimension_numbers = #tpu.dot_dimension_numbers<[1], [0], [0], [1], [0, 0, 1, 1], [], []>} : vector<2x64xf32>, vector<64x256xf32>, vector<2x256xf32> -> vector<2x256xf32>
    %c26_191 = arith.constant 26 : index
    %c0_192 = arith.constant 0 : index
    %792 = vector.load %arg6[%c26_191, %c0_192] : memref<32x256xf32, #tpu.memory_space<vmem>>, vector<2x128xf32>
    %793 = vector.extract_strided_slice %791 {offsets = [0, 0], sizes = [2, 128], strides = [1, 1]} : vector<2x256xf32> to vector<2x128xf32>
    %794 = arith.addf %792, %793 : vector<2x128xf32>
    %c4_193 = arith.constant 4 : index
    %c128_194 = arith.constant 128 : index
    %795 = vector.load %arg6[%c4_193, %c128_194] : memref<32x256xf32, #tpu.memory_space<vmem>>, vector<2x128xf32>
    %796 = vector.extract_strided_slice %791 {offsets = [0, 128], sizes = [2, 128], strides = [1, 1]} : vector<2x256xf32> to vector<2x128xf32>
    %797 = arith.addf %795, %796 : vector<2x128xf32>
    %798 = vector.extract_strided_slice %794 {offsets = [0, 0], sizes = [2, 32], strides = [1, 1]} : vector<2x128xf32> to vector<2x32xf32>
    %799 = arith.negf %798 : vector<2x32xf32>
    %800 = math.exp %799 : vector<2x32xf32>
    %cst_195 = arith.constant 1.000000e+00 : f32
    %801 = vector.broadcast %cst_195 : f32 to vector<2x32xf32>
    %802 = arith.addf %801, %800 : vector<2x32xf32>
    %803 = arith.divf %801, %802 : vector<2x32xf32>
    %804 = vector.extract_strided_slice %794 {offsets = [0, 32], sizes = [2, 32], strides = [1, 1]} : vector<2x128xf32> to vector<2x32xf32>
    %805 = arith.negf %804 : vector<2x32xf32>
    %806 = math.exp %805 : vector<2x32xf32>
    %cst_196 = arith.constant 1.000000e+00 : f32
    %807 = vector.broadcast %cst_196 : f32 to vector<2x32xf32>
    %808 = arith.addf %807, %806 : vector<2x32xf32>
    %809 = arith.divf %807, %808 : vector<2x32xf32>
    %810 = vector.extract_strided_slice %794 {offsets = [0, 64], sizes = [2, 32], strides = [1, 1]} : vector<2x128xf32> to vector<2x32xf32>
    %811 = math.tanh %810 : vector<2x32xf32>
    %812 = vector.extract_strided_slice %794 {offsets = [0, 96], sizes = [2, 32], strides = [1, 1]} : vector<2x128xf32> to vector<2x32xf32>
    %813 = arith.negf %812 : vector<2x32xf32>
    %814 = math.exp %813 : vector<2x32xf32>
    %cst_197 = arith.constant 1.000000e+00 : f32
    %815 = vector.broadcast %cst_197 : f32 to vector<2x32xf32>
    %816 = arith.addf %815, %814 : vector<2x32xf32>
    %817 = arith.divf %815, %816 : vector<2x32xf32>
    %818 = arith.mulf %809, %760 : vector<2x32xf32>
    %819 = arith.mulf %803, %811 : vector<2x32xf32>
    %820 = arith.addf %818, %819 : vector<2x32xf32>
    %821 = math.tanh %820 : vector<2x32xf32>
    %822 = arith.mulf %817, %821 : vector<2x32xf32>
    %823 = vector.extract_strided_slice %797 {offsets = [0, 0], sizes = [2, 32], strides = [1, 1]} : vector<2x128xf32> to vector<2x32xf32>
    %824 = arith.negf %823 : vector<2x32xf32>
    %825 = math.exp %824 : vector<2x32xf32>
    %cst_198 = arith.constant 1.000000e+00 : f32
    %826 = vector.broadcast %cst_198 : f32 to vector<2x32xf32>
    %827 = arith.addf %826, %825 : vector<2x32xf32>
    %828 = arith.divf %826, %827 : vector<2x32xf32>
    %829 = vector.extract_strided_slice %797 {offsets = [0, 32], sizes = [2, 32], strides = [1, 1]} : vector<2x128xf32> to vector<2x32xf32>
    %830 = arith.negf %829 : vector<2x32xf32>
    %831 = math.exp %830 : vector<2x32xf32>
    %cst_199 = arith.constant 1.000000e+00 : f32
    %832 = vector.broadcast %cst_199 : f32 to vector<2x32xf32>
    %833 = arith.addf %832, %831 : vector<2x32xf32>
    %834 = arith.divf %832, %833 : vector<2x32xf32>
    %835 = vector.extract_strided_slice %797 {offsets = [0, 64], sizes = [2, 32], strides = [1, 1]} : vector<2x128xf32> to vector<2x32xf32>
    %836 = math.tanh %835 : vector<2x32xf32>
    %837 = vector.extract_strided_slice %797 {offsets = [0, 96], sizes = [2, 32], strides = [1, 1]} : vector<2x128xf32> to vector<2x32xf32>
    %838 = arith.negf %837 : vector<2x32xf32>
    %839 = math.exp %838 : vector<2x32xf32>
    %cst_200 = arith.constant 1.000000e+00 : f32
    %840 = vector.broadcast %cst_200 : f32 to vector<2x32xf32>
    %841 = arith.addf %840, %839 : vector<2x32xf32>
    %842 = arith.divf %840, %841 : vector<2x32xf32>
    %843 = arith.mulf %834, %785 : vector<2x32xf32>
    %844 = arith.mulf %828, %836 : vector<2x32xf32>
    %845 = arith.addf %843, %844 : vector<2x32xf32>
    %846 = math.tanh %845 : vector<2x32xf32>
    %847 = arith.mulf %842, %846 : vector<2x32xf32>
    %c26_201 = arith.constant 26 : index
    %c0_202 = arith.constant 0 : index
    %848 = vector.load %arg5[%c26_201, %c0_202] : memref<32x64xf32, #tpu.memory_space<vmem>>, vector<2x32xf32>
    tpu.vector_store %arg5[%c26_201, %c0_202], %822 {strides = array<i32>} : memref<32x64xf32, #tpu.memory_space<vmem>>, vector<2x32xf32>,
    %c4_203 = arith.constant 4 : index
    %c32_204 = arith.constant 32 : index
    %849 = vector.load %arg5[%c4_203, %c32_204] : memref<32x64xf32, #tpu.memory_space<vmem>>, vector<2x32xf32>
    tpu.vector_store %arg5[%c4_203, %c32_204], %847 {strides = array<i32>} : memref<32x64xf32, #tpu.memory_space<vmem>>, vector<2x32xf32>,
    %850 = tpu.concatenate %822, %847 in 1 : vector<2x32xf32>, vector<2x32xf32> -> vector<2x64xf32>
    %cst_205 = arith.constant dense<0.000000e+00> : vector<2x256xf32>
    %851 = tpu.matmul %850, %7, %cst_205 {dimension_numbers = #tpu.dot_dimension_numbers<[1], [0], [0], [1], [0, 0, 1, 1], [], []>} : vector<2x64xf32>, vector<64x256xf32>, vector<2x256xf32> -> vector<2x256xf32>
    %c28_206 = arith.constant 28 : index
    %c0_207 = arith.constant 0 : index
    %852 = vector.load %arg6[%c28_206, %c0_207] : memref<32x256xf32, #tpu.memory_space<vmem>>, vector<2x128xf32>
    %853 = vector.extract_strided_slice %851 {offsets = [0, 0], sizes = [2, 128], strides = [1, 1]} : vector<2x256xf32> to vector<2x128xf32>
    %854 = arith.addf %852, %853 : vector<2x128xf32>
    %c2_208 = arith.constant 2 : index
    %c128_209 = arith.constant 128 : index
    %855 = vector.load %arg6[%c2_208, %c128_209] : memref<32x256xf32, #tpu.memory_space<vmem>>, vector<2x128xf32>
    %856 = vector.extract_strided_slice %851 {offsets = [0, 128], sizes = [2, 128], strides = [1, 1]} : vector<2x256xf32> to vector<2x128xf32>
    %857 = arith.addf %855, %856 : vector<2x128xf32>
    %858 = vector.extract_strided_slice %854 {offsets = [0, 0], sizes = [2, 32], strides = [1, 1]} : vector<2x128xf32> to vector<2x32xf32>
    %859 = arith.negf %858 : vector<2x32xf32>
    %860 = math.exp %859 : vector<2x32xf32>
    %cst_210 = arith.constant 1.000000e+00 : f32
    %861 = vector.broadcast %cst_210 : f32 to vector<2x32xf32>
    %862 = arith.addf %861, %860 : vector<2x32xf32>
    %863 = arith.divf %861, %862 : vector<2x32xf32>
    %864 = vector.extract_strided_slice %854 {offsets = [0, 32], sizes = [2, 32], strides = [1, 1]} : vector<2x128xf32> to vector<2x32xf32>
    %865 = arith.negf %864 : vector<2x32xf32>
    %866 = math.exp %865 : vector<2x32xf32>
    %cst_211 = arith.constant 1.000000e+00 : f32
    %867 = vector.broadcast %cst_211 : f32 to vector<2x32xf32>
    %868 = arith.addf %867, %866 : vector<2x32xf32>
    %869 = arith.divf %867, %868 : vector<2x32xf32>
    %870 = vector.extract_strided_slice %854 {offsets = [0, 64], sizes = [2, 32], strides = [1, 1]} : vector<2x128xf32> to vector<2x32xf32>
    %871 = math.tanh %870 : vector<2x32xf32>
    %872 = vector.extract_strided_slice %854 {offsets = [0, 96], sizes = [2, 32], strides = [1, 1]} : vector<2x128xf32> to vector<2x32xf32>
    %873 = arith.negf %872 : vector<2x32xf32>
    %874 = math.exp %873 : vector<2x32xf32>
    %cst_212 = arith.constant 1.000000e+00 : f32
    %875 = vector.broadcast %cst_212 : f32 to vector<2x32xf32>
    %876 = arith.addf %875, %874 : vector<2x32xf32>
    %877 = arith.divf %875, %876 : vector<2x32xf32>
    %878 = arith.mulf %869, %820 : vector<2x32xf32>
    %879 = arith.mulf %863, %871 : vector<2x32xf32>
    %880 = arith.addf %878, %879 : vector<2x32xf32>
    %881 = math.tanh %880 : vector<2x32xf32>
    %882 = arith.mulf %877, %881 : vector<2x32xf32>
    %883 = vector.extract_strided_slice %857 {offsets = [0, 0], sizes = [2, 32], strides = [1, 1]} : vector<2x128xf32> to vector<2x32xf32>
    %884 = arith.negf %883 : vector<2x32xf32>
    %885 = math.exp %884 : vector<2x32xf32>
    %cst_213 = arith.constant 1.000000e+00 : f32
    %886 = vector.broadcast %cst_213 : f32 to vector<2x32xf32>
    %887 = arith.addf %886, %885 : vector<2x32xf32>
    %888 = arith.divf %886, %887 : vector<2x32xf32>
    %889 = vector.extract_strided_slice %857 {offsets = [0, 32], sizes = [2, 32], strides = [1, 1]} : vector<2x128xf32> to vector<2x32xf32>
    %890 = arith.negf %889 : vector<2x32xf32>
    %891 = math.exp %890 : vector<2x32xf32>
    %cst_214 = arith.constant 1.000000e+00 : f32
    %892 = vector.broadcast %cst_214 : f32 to vector<2x32xf32>
    %893 = arith.addf %892, %891 : vector<2x32xf32>
    %894 = arith.divf %892, %893 : vector<2x32xf32>
    %895 = vector.extract_strided_slice %857 {offsets = [0, 64], sizes = [2, 32], strides = [1, 1]} : vector<2x128xf32> to vector<2x32xf32>
    %896 = math.tanh %895 : vector<2x32xf32>
    %897 = vector.extract_strided_slice %857 {offsets = [0, 96], sizes = [2, 32], strides = [1, 1]} : vector<2x128xf32> to vector<2x32xf32>
    %898 = arith.negf %897 : vector<2x32xf32>
    %899 = math.exp %898 : vector<2x32xf32>
    %cst_215 = arith.constant 1.000000e+00 : f32
    %900 = vector.broadcast %cst_215 : f32 to vector<2x32xf32>
    %901 = arith.addf %900, %899 : vector<2x32xf32>
    %902 = arith.divf %900, %901 : vector<2x32xf32>
    %903 = arith.mulf %894, %845 : vector<2x32xf32>
    %904 = arith.mulf %888, %896 : vector<2x32xf32>
    %905 = arith.addf %903, %904 : vector<2x32xf32>
    %906 = math.tanh %905 : vector<2x32xf32>
    %907 = arith.mulf %902, %906 : vector<2x32xf32>
    %c28_216 = arith.constant 28 : index
    %c0_217 = arith.constant 0 : index
    %908 = vector.load %arg5[%c28_216, %c0_217] : memref<32x64xf32, #tpu.memory_space<vmem>>, vector<2x32xf32>
    tpu.vector_store %arg5[%c28_216, %c0_217], %882 {strides = array<i32>} : memref<32x64xf32, #tpu.memory_space<vmem>>, vector<2x32xf32>,
    %c2_218 = arith.constant 2 : index
    %c32_219 = arith.constant 32 : index
    %909 = vector.load %arg5[%c2_218, %c32_219] : memref<32x64xf32, #tpu.memory_space<vmem>>, vector<2x32xf32>
    tpu.vector_store %arg5[%c2_218, %c32_219], %907 {strides = array<i32>} : memref<32x64xf32, #tpu.memory_space<vmem>>, vector<2x32xf32>,
    %910 = tpu.concatenate %882, %907 in 1 : vector<2x32xf32>, vector<2x32xf32> -> vector<2x64xf32>
    %cst_220 = arith.constant dense<0.000000e+00> : vector<2x256xf32>
    %911 = tpu.matmul %910, %7, %cst_220 {dimension_numbers = #tpu.dot_dimension_numbers<[1], [0], [0], [1], [0, 0, 1, 1], [], []>} : vector<2x64xf32>, vector<64x256xf32>, vector<2x256xf32> -> vector<2x256xf32>
    %c30_221 = arith.constant 30 : index
    %c0_222 = arith.constant 0 : index
    %912 = vector.load %arg6[%c30_221, %c0_222] : memref<32x256xf32, #tpu.memory_space<vmem>>, vector<2x128xf32>
    %913 = vector.extract_strided_slice %911 {offsets = [0, 0], sizes = [2, 128], strides = [1, 1]} : vector<2x256xf32> to vector<2x128xf32>
    %914 = arith.addf %912, %913 : vector<2x128xf32>
    %c0_223 = arith.constant 0 : index
    %c128_224 = arith.constant 128 : index
    %915 = vector.load %arg6[%c0_223, %c128_224] : memref<32x256xf32, #tpu.memory_space<vmem>>, vector<2x128xf32>
    %916 = vector.extract_strided_slice %911 {offsets = [0, 128], sizes = [2, 128], strides = [1, 1]} : vector<2x256xf32> to vector<2x128xf32>
    %917 = arith.addf %915, %916 : vector<2x128xf32>
    %918 = vector.extract_strided_slice %914 {offsets = [0, 0], sizes = [2, 32], strides = [1, 1]} : vector<2x128xf32> to vector<2x32xf32>
    %919 = arith.negf %918 : vector<2x32xf32>
    %920 = math.exp %919 : vector<2x32xf32>
    %cst_225 = arith.constant 1.000000e+00 : f32
    %921 = vector.broadcast %cst_225 : f32 to vector<2x32xf32>
    %922 = arith.addf %921, %920 : vector<2x32xf32>
    %923 = arith.divf %921, %922 : vector<2x32xf32>
    %924 = vector.extract_strided_slice %914 {offsets = [0, 32], sizes = [2, 32], strides = [1, 1]} : vector<2x128xf32> to vector<2x32xf32>
    %925 = arith.negf %924 : vector<2x32xf32>
    %926 = math.exp %925 : vector<2x32xf32>
    %cst_226 = arith.constant 1.000000e+00 : f32
    %927 = vector.broadcast %cst_226 : f32 to vector<2x32xf32>
    %928 = arith.addf %927, %926 : vector<2x32xf32>
    %929 = arith.divf %927, %928 : vector<2x32xf32>
    %930 = vector.extract_strided_slice %914 {offsets = [0, 64], sizes = [2, 32], strides = [1, 1]} : vector<2x128xf32> to vector<2x32xf32>
    %931 = math.tanh %930 : vector<2x32xf32>
    %932 = vector.extract_strided_slice %914 {offsets = [0, 96], sizes = [2, 32], strides = [1, 1]} : vector<2x128xf32> to vector<2x32xf32>
    %933 = arith.negf %932 : vector<2x32xf32>
    %934 = math.exp %933 : vector<2x32xf32>
    %cst_227 = arith.constant 1.000000e+00 : f32
    %935 = vector.broadcast %cst_227 : f32 to vector<2x32xf32>
    %936 = arith.addf %935, %934 : vector<2x32xf32>
    %937 = arith.divf %935, %936 : vector<2x32xf32>
    %938 = arith.mulf %929, %880 : vector<2x32xf32>
    %939 = arith.mulf %923, %931 : vector<2x32xf32>
    %940 = arith.addf %938, %939 : vector<2x32xf32>
    %941 = math.tanh %940 : vector<2x32xf32>
    %942 = arith.mulf %937, %941 : vector<2x32xf32>
    %943 = vector.extract_strided_slice %917 {offsets = [0, 0], sizes = [2, 32], strides = [1, 1]} : vector<2x128xf32> to vector<2x32xf32>
    %944 = arith.negf %943 : vector<2x32xf32>
    %945 = math.exp %944 : vector<2x32xf32>
    %cst_228 = arith.constant 1.000000e+00 : f32
    %946 = vector.broadcast %cst_228 : f32 to vector<2x32xf32>
    %947 = arith.addf %946, %945 : vector<2x32xf32>
    %948 = arith.divf %946, %947 : vector<2x32xf32>
    %949 = vector.extract_strided_slice %917 {offsets = [0, 32], sizes = [2, 32], strides = [1, 1]} : vector<2x128xf32> to vector<2x32xf32>
    %950 = arith.negf %949 : vector<2x32xf32>
    %951 = math.exp %950 : vector<2x32xf32>
    %cst_229 = arith.constant 1.000000e+00 : f32
    %952 = vector.broadcast %cst_229 : f32 to vector<2x32xf32>
    %953 = arith.addf %952, %951 : vector<2x32xf32>
    %954 = arith.divf %952, %953 : vector<2x32xf32>
    %955 = vector.extract_strided_slice %917 {offsets = [0, 64], sizes = [2, 32], strides = [1, 1]} : vector<2x128xf32> to vector<2x32xf32>
    %956 = math.tanh %955 : vector<2x32xf32>
    %957 = vector.extract_strided_slice %917 {offsets = [0, 96], sizes = [2, 32], strides = [1, 1]} : vector<2x128xf32> to vector<2x32xf32>
    %958 = arith.negf %957 : vector<2x32xf32>
    %959 = math.exp %958 : vector<2x32xf32>
    %cst_230 = arith.constant 1.000000e+00 : f32
    %960 = vector.broadcast %cst_230 : f32 to vector<2x32xf32>
    %961 = arith.addf %960, %959 : vector<2x32xf32>
    %962 = arith.divf %960, %961 : vector<2x32xf32>
    %963 = arith.mulf %954, %905 : vector<2x32xf32>
    %964 = arith.mulf %948, %956 : vector<2x32xf32>
    %965 = arith.addf %963, %964 : vector<2x32xf32>
    %966 = math.tanh %965 : vector<2x32xf32>
    %967 = arith.mulf %962, %966 : vector<2x32xf32>
    %c30_231 = arith.constant 30 : index
    %c0_232 = arith.constant 0 : index
    %968 = vector.load %arg5[%c30_231, %c0_232] : memref<32x64xf32, #tpu.memory_space<vmem>>, vector<2x32xf32>
    tpu.vector_store %arg5[%c30_231, %c0_232], %942 {strides = array<i32>} : memref<32x64xf32, #tpu.memory_space<vmem>>, vector<2x32xf32>,
    %c0_233 = arith.constant 0 : index
    %c32_234 = arith.constant 32 : index
    %969 = vector.load %arg5[%c0_233, %c32_234] : memref<32x64xf32, #tpu.memory_space<vmem>>, vector<2x32xf32>
    tpu.vector_store %arg5[%c0_233, %c32_234], %967 {strides = array<i32>} : memref<32x64xf32, #tpu.memory_space<vmem>>, vector<2x32xf32>,
    return
  }
  func.func @transform_0(%arg0: i32) -> (i32, i32) {
    %c0_i32 = arith.constant 0 : i32
    %c0_i32_0 = arith.constant 0 : i32
    %c0_i32_1 = arith.constant 0 : i32
    return %c0_i32, %c0_i32_0 : i32, i32
  }
  func.func @transform_1(%arg0: i32) -> (i32, i32) {
    %c0_i32 = arith.constant 0 : i32
    %c0_i32_0 = arith.constant 0 : i32
    %c0_i32_1 = arith.constant 0 : i32
    return %c0_i32, %c0_i32_0 : i32, i32
  }
  func.func @transform_2(%arg0: i32) -> (i32, i32) {
    %c0_i32 = arith.constant 0 : i32
    %c0_i32_0 = arith.constant 0 : i32
    %c0_i32_1 = arith.constant 0 : i32
    return %c0_i32, %c0_i32_0 : i32, i32
  }
  func.func @transform_3(%arg0: i32) -> (i32, i32) {
    %c0_i32 = arith.constant 0 : i32
    %c0_i32_0 = arith.constant 0 : i32
    %c0_i32_1 = arith.constant 0 : i32
    return %c0_i32, %c0_i32_0 : i32, i32
  }
  func.func @transform_4(%arg0: i32) -> (i32, i32) {
    %c0_i32 = arith.constant 0 : i32
    %c0_i32_0 = arith.constant 0 : i32
    %c0_i32_1 = arith.constant 0 : i32
    return %c0_i32, %c0_i32_0 : i32, i32
  }
}

module attributes {stable_mosaic.version = 11 : i64} {
  func.func @_bilstm_kernel(%arg0: i32, %arg1: memref<32x64xf32, #tpu.memory_space<vmem>>, %arg2: memref<64x256xf32, #tpu.memory_space<vmem>>, %arg3: memref<64x256xf32, #tpu.memory_space<vmem>>, %arg4: memref<1x256xf32, #tpu.memory_space<vmem>>, %arg5: memref<32x64xf32, #tpu.memory_space<vmem>>, %arg6: memref<32x256xf32, #tpu.memory_space<vmem>>) attributes {dimension_semantics = [#tpu.dimension_semantics<arbitrary>], iteration_bounds = array<i64: 1>, scalar_prefetch = 0 : i64, scratch_operands = 1 : i64, tpu.core_type = #tpu.core_type<tc>, window_params = [{pipeline_mode = #tpu.pipeline_mode<synchronous>, transform_indices = @transform_0, window_bounds = array<i64: 32, 64>}, {pipeline_mode = #tpu.pipeline_mode<synchronous>, transform_indices = @transform_1, window_bounds = array<i64: 64, 256>}, {pipeline_mode = #tpu.pipeline_mode<synchronous>, transform_indices = @transform_2, window_bounds = array<i64: 64, 256>}, {pipeline_mode = #tpu.pipeline_mode<synchronous>, transform_indices = @transform_3, window_bounds = array<i64: 1, 256>}, {pipeline_mode = #tpu.pipeline_mode<synchronous>, transform_indices = @transform_4, window_bounds = array<i64: 32, 64>}]} {
    %c0 = arith.constant 0 : index
    %c0_0 = arith.constant 0 : index
    %0 = vector.load %arg1[%c0, %c0_0] : memref<32x64xf32, #tpu.memory_space<vmem>>, vector<32x64xf32>
    %c0_1 = arith.constant 0 : index
    %c0_2 = arith.constant 0 : index
    %1 = vector.load %arg2[%c0_1, %c0_2] : memref<64x256xf32, #tpu.memory_space<vmem>>, vector<64x256xf32>
    %cst = arith.constant dense<0.000000e+00> : vector<32x256xf32>
    %2 = tpu.matmul %0, %1, %cst {dimension_numbers = #tpu.dot_dimension_numbers<[1], [0], [0], [1], [0, 0, 1, 1], [], []>} : vector<32x64xf32>, vector<64x256xf32>, vector<32x256xf32> -> vector<32x256xf32>
    %c0_3 = arith.constant 0 : index
    %c0_4 = arith.constant 0 : index
    %3 = vector.load %arg4[%c0_3, %c0_4] : memref<1x256xf32, #tpu.memory_space<vmem>>, vector<1x256xf32>
    %4 = vector.broadcast %3 : vector<1x256xf32> to vector<32x256xf32>
    %5 = arith.addf %2, %4 : vector<32x256xf32>
    %c0_5 = arith.constant 0 : index
    %c0_6 = arith.constant 0 : index
    %6 = vector.load %arg6[%c0_5, %c0_6] : memref<32x256xf32, #tpu.memory_space<vmem>>, vector<32x256xf32>
    tpu.vector_store %arg6[%c0_5, %c0_6], %5 {strides = array<i32>} : memref<32x256xf32, #tpu.memory_space<vmem>>, vector<32x256xf32>,
    %c0_7 = arith.constant 0 : index
    %c0_8 = arith.constant 0 : index
    %7 = vector.load %arg3[%c0_7, %c0_8] : memref<64x256xf32, #tpu.memory_space<vmem>>, vector<64x256xf32>
    %cst_9 = arith.constant 0.000000e+00 : f32
    %8 = vector.broadcast %cst_9 : f32 to vector<2x64xf32>
    %cst_10 = arith.constant 0.000000e+00 : f32
    %9 = vector.broadcast %cst_10 : f32 to vector<2x32xf32>
    %cst_11 = arith.constant 0.000000e+00 : f32
    %10 = vector.broadcast %cst_11 : f32 to vector<2x32xf32>
    %cst_12 = arith.constant dense<0.000000e+00> : vector<2x256xf32>
    %11 = tpu.matmul %8, %7, %cst_12 {dimension_numbers = #tpu.dot_dimension_numbers<[1], [0], [0], [1], [0, 0, 1, 1], [], []>} : vector<2x64xf32>, vector<64x256xf32>, vector<2x256xf32> -> vector<2x256xf32>
    %c0_13 = arith.constant 0 : index
    %c0_14 = arith.constant 0 : index
    %12 = vector.load %arg6[%c0_13, %c0_14] : memref<32x256xf32, #tpu.memory_space<vmem>>, vector<2x128xf32>
    %13 = vector.extract_strided_slice %11 {offsets = [0, 0], sizes = [2, 128], strides = [1, 1]} : vector<2x256xf32> to vector<2x128xf32>
    %14 = arith.addf %12, %13 : vector<2x128xf32>
    %c30 = arith.constant 30 : index
    %c128 = arith.constant 128 : index
    %15 = vector.load %arg6[%c30, %c128] : memref<32x256xf32, #tpu.memory_space<vmem>>, vector<2x128xf32>
    %16 = vector.extract_strided_slice %11 {offsets = [0, 128], sizes = [2, 128], strides = [1, 1]} : vector<2x256xf32> to vector<2x128xf32>
    %17 = arith.addf %15, %16 : vector<2x128xf32>
    %18 = vector.extract_strided_slice %14 {offsets = [0, 0], sizes = [2, 32], strides = [1, 1]} : vector<2x128xf32> to vector<2x32xf32>
    %19 = arith.negf %18 : vector<2x32xf32>
    %20 = math.exp %19 : vector<2x32xf32>
    %cst_15 = arith.constant 1.000000e+00 : f32
    %21 = vector.broadcast %cst_15 : f32 to vector<2x32xf32>
    %22 = arith.addf %21, %20 : vector<2x32xf32>
    %23 = arith.divf %21, %22 : vector<2x32xf32>
    %24 = vector.extract_strided_slice %14 {offsets = [0, 32], sizes = [2, 32], strides = [1, 1]} : vector<2x128xf32> to vector<2x32xf32>
    %25 = arith.negf %24 : vector<2x32xf32>
    %26 = math.exp %25 : vector<2x32xf32>
    %cst_16 = arith.constant 1.000000e+00 : f32
    %27 = vector.broadcast %cst_16 : f32 to vector<2x32xf32>
    %28 = arith.addf %27, %26 : vector<2x32xf32>
    %29 = arith.divf %27, %28 : vector<2x32xf32>
    %30 = vector.extract_strided_slice %14 {offsets = [0, 64], sizes = [2, 32], strides = [1, 1]} : vector<2x128xf32> to vector<2x32xf32>
    %31 = math.tanh %30 : vector<2x32xf32>
    %32 = vector.extract_strided_slice %14 {offsets = [0, 96], sizes = [2, 32], strides = [1, 1]} : vector<2x128xf32> to vector<2x32xf32>
    %33 = arith.negf %32 : vector<2x32xf32>
    %34 = math.exp %33 : vector<2x32xf32>
    %cst_17 = arith.constant 1.000000e+00 : f32
    %35 = vector.broadcast %cst_17 : f32 to vector<2x32xf32>
    %36 = arith.addf %35, %34 : vector<2x32xf32>
    %37 = arith.divf %35, %36 : vector<2x32xf32>
    %38 = arith.mulf %29, %9 : vector<2x32xf32>
    %39 = arith.mulf %23, %31 : vector<2x32xf32>
    %40 = arith.addf %38, %39 : vector<2x32xf32>
    %41 = math.tanh %40 : vector<2x32xf32>
    %42 = arith.mulf %37, %41 : vector<2x32xf32>
    %43 = vector.extract_strided_slice %17 {offsets = [0, 0], sizes = [2, 32], strides = [1, 1]} : vector<2x128xf32> to vector<2x32xf32>
    %44 = arith.negf %43 : vector<2x32xf32>
    %45 = math.exp %44 : vector<2x32xf32>
    %cst_18 = arith.constant 1.000000e+00 : f32
    %46 = vector.broadcast %cst_18 : f32 to vector<2x32xf32>
    %47 = arith.addf %46, %45 : vector<2x32xf32>
    %48 = arith.divf %46, %47 : vector<2x32xf32>
    %49 = vector.extract_strided_slice %17 {offsets = [0, 32], sizes = [2, 32], strides = [1, 1]} : vector<2x128xf32> to vector<2x32xf32>
    %50 = arith.negf %49 : vector<2x32xf32>
    %51 = math.exp %50 : vector<2x32xf32>
    %cst_19 = arith.constant 1.000000e+00 : f32
    %52 = vector.broadcast %cst_19 : f32 to vector<2x32xf32>
    %53 = arith.addf %52, %51 : vector<2x32xf32>
    %54 = arith.divf %52, %53 : vector<2x32xf32>
    %55 = vector.extract_strided_slice %17 {offsets = [0, 64], sizes = [2, 32], strides = [1, 1]} : vector<2x128xf32> to vector<2x32xf32>
    %56 = math.tanh %55 : vector<2x32xf32>
    %57 = vector.extract_strided_slice %17 {offsets = [0, 96], sizes = [2, 32], strides = [1, 1]} : vector<2x128xf32> to vector<2x32xf32>
    %58 = arith.negf %57 : vector<2x32xf32>
    %59 = math.exp %58 : vector<2x32xf32>
    %cst_20 = arith.constant 1.000000e+00 : f32
    %60 = vector.broadcast %cst_20 : f32 to vector<2x32xf32>
    %61 = arith.addf %60, %59 : vector<2x32xf32>
    %62 = arith.divf %60, %61 : vector<2x32xf32>
    %63 = arith.mulf %54, %10 : vector<2x32xf32>
    %64 = arith.mulf %48, %56 : vector<2x32xf32>
    %65 = arith.addf %63, %64 : vector<2x32xf32>
    %66 = math.tanh %65 : vector<2x32xf32>
    %67 = arith.mulf %62, %66 : vector<2x32xf32>
    %c0_21 = arith.constant 0 : index
    %c0_22 = arith.constant 0 : index
    %68 = vector.load %arg5[%c0_21, %c0_22] : memref<32x64xf32, #tpu.memory_space<vmem>>, vector<2x32xf32>
    tpu.vector_store %arg5[%c0_21, %c0_22], %42 {strides = array<i32>} : memref<32x64xf32, #tpu.memory_space<vmem>>, vector<2x32xf32>,
    %c30_23 = arith.constant 30 : index
    %c32 = arith.constant 32 : index
    %69 = vector.load %arg5[%c30_23, %c32] : memref<32x64xf32, #tpu.memory_space<vmem>>, vector<2x32xf32>
    tpu.vector_store %arg5[%c30_23, %c32], %67 {strides = array<i32>} : memref<32x64xf32, #tpu.memory_space<vmem>>, vector<2x32xf32>,
    %70 = tpu.concatenate %42, %67 in 1 : vector<2x32xf32>, vector<2x32xf32> -> vector<2x64xf32>
    %cst_24 = arith.constant dense<0.000000e+00> : vector<2x256xf32>
    %71 = tpu.matmul %70, %7, %cst_24 {dimension_numbers = #tpu.dot_dimension_numbers<[1], [0], [0], [1], [0, 0, 1, 1], [], []>} : vector<2x64xf32>, vector<64x256xf32>, vector<2x256xf32> -> vector<2x256xf32>
    %c2 = arith.constant 2 : index
    %c0_25 = arith.constant 0 : index
    %72 = vector.load %arg6[%c2, %c0_25] : memref<32x256xf32, #tpu.memory_space<vmem>>, vector<2x128xf32>
    %73 = vector.extract_strided_slice %71 {offsets = [0, 0], sizes = [2, 128], strides = [1, 1]} : vector<2x256xf32> to vector<2x128xf32>
    %74 = arith.addf %72, %73 : vector<2x128xf32>
    %c28 = arith.constant 28 : index
    %c128_26 = arith.constant 128 : index
    %75 = vector.load %arg6[%c28, %c128_26] : memref<32x256xf32, #tpu.memory_space<vmem>>, vector<2x128xf32>
    %76 = vector.extract_strided_slice %71 {offsets = [0, 128], sizes = [2, 128], strides = [1, 1]} : vector<2x256xf32> to vector<2x128xf32>
    %77 = arith.addf %75, %76 : vector<2x128xf32>
    %78 = vector.extract_strided_slice %74 {offsets = [0, 0], sizes = [2, 32], strides = [1, 1]} : vector<2x128xf32> to vector<2x32xf32>
    %79 = arith.negf %78 : vector<2x32xf32>
    %80 = math.exp %79 : vector<2x32xf32>
    %cst_27 = arith.constant 1.000000e+00 : f32
    %81 = vector.broadcast %cst_27 : f32 to vector<2x32xf32>
    %82 = arith.addf %81, %80 : vector<2x32xf32>
    %83 = arith.divf %81, %82 : vector<2x32xf32>
    %84 = vector.extract_strided_slice %74 {offsets = [0, 32], sizes = [2, 32], strides = [1, 1]} : vector<2x128xf32> to vector<2x32xf32>
    %85 = arith.negf %84 : vector<2x32xf32>
    %86 = math.exp %85 : vector<2x32xf32>
    %cst_28 = arith.constant 1.000000e+00 : f32
    %87 = vector.broadcast %cst_28 : f32 to vector<2x32xf32>
    %88 = arith.addf %87, %86 : vector<2x32xf32>
    %89 = arith.divf %87, %88 : vector<2x32xf32>
    %90 = vector.extract_strided_slice %74 {offsets = [0, 64], sizes = [2, 32], strides = [1, 1]} : vector<2x128xf32> to vector<2x32xf32>
    %91 = math.tanh %90 : vector<2x32xf32>
    %92 = vector.extract_strided_slice %74 {offsets = [0, 96], sizes = [2, 32], strides = [1, 1]} : vector<2x128xf32> to vector<2x32xf32>
    %93 = arith.negf %92 : vector<2x32xf32>
    %94 = math.exp %93 : vector<2x32xf32>
    %cst_29 = arith.constant 1.000000e+00 : f32
    %95 = vector.broadcast %cst_29 : f32 to vector<2x32xf32>
    %96 = arith.addf %95, %94 : vector<2x32xf32>
    %97 = arith.divf %95, %96 : vector<2x32xf32>
    %98 = arith.mulf %89, %40 : vector<2x32xf32>
    %99 = arith.mulf %83, %91 : vector<2x32xf32>
    %100 = arith.addf %98, %99 : vector<2x32xf32>
    %101 = math.tanh %100 : vector<2x32xf32>
    %102 = arith.mulf %97, %101 : vector<2x32xf32>
    %103 = vector.extract_strided_slice %77 {offsets = [0, 0], sizes = [2, 32], strides = [1, 1]} : vector<2x128xf32> to vector<2x32xf32>
    %104 = arith.negf %103 : vector<2x32xf32>
    %105 = math.exp %104 : vector<2x32xf32>
    %cst_30 = arith.constant 1.000000e+00 : f32
    %106 = vector.broadcast %cst_30 : f32 to vector<2x32xf32>
    %107 = arith.addf %106, %105 : vector<2x32xf32>
    %108 = arith.divf %106, %107 : vector<2x32xf32>
    %109 = vector.extract_strided_slice %77 {offsets = [0, 32], sizes = [2, 32], strides = [1, 1]} : vector<2x128xf32> to vector<2x32xf32>
    %110 = arith.negf %109 : vector<2x32xf32>
    %111 = math.exp %110 : vector<2x32xf32>
    %cst_31 = arith.constant 1.000000e+00 : f32
    %112 = vector.broadcast %cst_31 : f32 to vector<2x32xf32>
    %113 = arith.addf %112, %111 : vector<2x32xf32>
    %114 = arith.divf %112, %113 : vector<2x32xf32>
    %115 = vector.extract_strided_slice %77 {offsets = [0, 64], sizes = [2, 32], strides = [1, 1]} : vector<2x128xf32> to vector<2x32xf32>
    %116 = math.tanh %115 : vector<2x32xf32>
    %117 = vector.extract_strided_slice %77 {offsets = [0, 96], sizes = [2, 32], strides = [1, 1]} : vector<2x128xf32> to vector<2x32xf32>
    %118 = arith.negf %117 : vector<2x32xf32>
    %119 = math.exp %118 : vector<2x32xf32>
    %cst_32 = arith.constant 1.000000e+00 : f32
    %120 = vector.broadcast %cst_32 : f32 to vector<2x32xf32>
    %121 = arith.addf %120, %119 : vector<2x32xf32>
    %122 = arith.divf %120, %121 : vector<2x32xf32>
    %123 = arith.mulf %114, %65 : vector<2x32xf32>
    %124 = arith.mulf %108, %116 : vector<2x32xf32>
    %125 = arith.addf %123, %124 : vector<2x32xf32>
    %126 = math.tanh %125 : vector<2x32xf32>
    %127 = arith.mulf %122, %126 : vector<2x32xf32>
    %c2_33 = arith.constant 2 : index
    %c0_34 = arith.constant 0 : index
    %128 = vector.load %arg5[%c2_33, %c0_34] : memref<32x64xf32, #tpu.memory_space<vmem>>, vector<2x32xf32>
    tpu.vector_store %arg5[%c2_33, %c0_34], %102 {strides = array<i32>} : memref<32x64xf32, #tpu.memory_space<vmem>>, vector<2x32xf32>,
    %c28_35 = arith.constant 28 : index
    %c32_36 = arith.constant 32 : index
    %129 = vector.load %arg5[%c28_35, %c32_36] : memref<32x64xf32, #tpu.memory_space<vmem>>, vector<2x32xf32>
    tpu.vector_store %arg5[%c28_35, %c32_36], %127 {strides = array<i32>} : memref<32x64xf32, #tpu.memory_space<vmem>>, vector<2x32xf32>,
    %130 = tpu.concatenate %102, %127 in 1 : vector<2x32xf32>, vector<2x32xf32> -> vector<2x64xf32>
    %cst_37 = arith.constant dense<0.000000e+00> : vector<2x256xf32>
    %131 = tpu.matmul %130, %7, %cst_37 {dimension_numbers = #tpu.dot_dimension_numbers<[1], [0], [0], [1], [0, 0, 1, 1], [], []>} : vector<2x64xf32>, vector<64x256xf32>, vector<2x256xf32> -> vector<2x256xf32>
    %c4 = arith.constant 4 : index
    %c0_38 = arith.constant 0 : index
    %132 = vector.load %arg6[%c4, %c0_38] : memref<32x256xf32, #tpu.memory_space<vmem>>, vector<2x128xf32>
    %133 = vector.extract_strided_slice %131 {offsets = [0, 0], sizes = [2, 128], strides = [1, 1]} : vector<2x256xf32> to vector<2x128xf32>
    %134 = arith.addf %132, %133 : vector<2x128xf32>
    %c26 = arith.constant 26 : index
    %c128_39 = arith.constant 128 : index
    %135 = vector.load %arg6[%c26, %c128_39] : memref<32x256xf32, #tpu.memory_space<vmem>>, vector<2x128xf32>
    %136 = vector.extract_strided_slice %131 {offsets = [0, 128], sizes = [2, 128], strides = [1, 1]} : vector<2x256xf32> to vector<2x128xf32>
    %137 = arith.addf %135, %136 : vector<2x128xf32>
    %138 = vector.extract_strided_slice %134 {offsets = [0, 0], sizes = [2, 32], strides = [1, 1]} : vector<2x128xf32> to vector<2x32xf32>
    %139 = arith.negf %138 : vector<2x32xf32>
    %140 = math.exp %139 : vector<2x32xf32>
    %cst_40 = arith.constant 1.000000e+00 : f32
    %141 = vector.broadcast %cst_40 : f32 to vector<2x32xf32>
    %142 = arith.addf %141, %140 : vector<2x32xf32>
    %143 = arith.divf %141, %142 : vector<2x32xf32>
    %144 = vector.extract_strided_slice %134 {offsets = [0, 32], sizes = [2, 32], strides = [1, 1]} : vector<2x128xf32> to vector<2x32xf32>
    %145 = arith.negf %144 : vector<2x32xf32>
    %146 = math.exp %145 : vector<2x32xf32>
    %cst_41 = arith.constant 1.000000e+00 : f32
    %147 = vector.broadcast %cst_41 : f32 to vector<2x32xf32>
    %148 = arith.addf %147, %146 : vector<2x32xf32>
    %149 = arith.divf %147, %148 : vector<2x32xf32>
    %150 = vector.extract_strided_slice %134 {offsets = [0, 64], sizes = [2, 32], strides = [1, 1]} : vector<2x128xf32> to vector<2x32xf32>
    %151 = math.tanh %150 : vector<2x32xf32>
    %152 = vector.extract_strided_slice %134 {offsets = [0, 96], sizes = [2, 32], strides = [1, 1]} : vector<2x128xf32> to vector<2x32xf32>
    %153 = arith.negf %152 : vector<2x32xf32>
    %154 = math.exp %153 : vector<2x32xf32>
    %cst_42 = arith.constant 1.000000e+00 : f32
    %155 = vector.broadcast %cst_42 : f32 to vector<2x32xf32>
    %156 = arith.addf %155, %154 : vector<2x32xf32>
    %157 = arith.divf %155, %156 : vector<2x32xf32>
    %158 = arith.mulf %149, %100 : vector<2x32xf32>
    %159 = arith.mulf %143, %151 : vector<2x32xf32>
    %160 = arith.addf %158, %159 : vector<2x32xf32>
    %161 = math.tanh %160 : vector<2x32xf32>
    %162 = arith.mulf %157, %161 : vector<2x32xf32>
    %163 = vector.extract_strided_slice %137 {offsets = [0, 0], sizes = [2, 32], strides = [1, 1]} : vector<2x128xf32> to vector<2x32xf32>
    %164 = arith.negf %163 : vector<2x32xf32>
    %165 = math.exp %164 : vector<2x32xf32>
    %cst_43 = arith.constant 1.000000e+00 : f32
    %166 = vector.broadcast %cst_43 : f32 to vector<2x32xf32>
    %167 = arith.addf %166, %165 : vector<2x32xf32>
    %168 = arith.divf %166, %167 : vector<2x32xf32>
    %169 = vector.extract_strided_slice %137 {offsets = [0, 32], sizes = [2, 32], strides = [1, 1]} : vector<2x128xf32> to vector<2x32xf32>
    %170 = arith.negf %169 : vector<2x32xf32>
    %171 = math.exp %170 : vector<2x32xf32>
    %cst_44 = arith.constant 1.000000e+00 : f32
    %172 = vector.broadcast %cst_44 : f32 to vector<2x32xf32>
    %173 = arith.addf %172, %171 : vector<2x32xf32>
    %174 = arith.divf %172, %173 : vector<2x32xf32>
    %175 = vector.extract_strided_slice %137 {offsets = [0, 64], sizes = [2, 32], strides = [1, 1]} : vector<2x128xf32> to vector<2x32xf32>
    %176 = math.tanh %175 : vector<2x32xf32>
    %177 = vector.extract_strided_slice %137 {offsets = [0, 96], sizes = [2, 32], strides = [1, 1]} : vector<2x128xf32> to vector<2x32xf32>
    %178 = arith.negf %177 : vector<2x32xf32>
    %179 = math.exp %178 : vector<2x32xf32>
    %cst_45 = arith.constant 1.000000e+00 : f32
    %180 = vector.broadcast %cst_45 : f32 to vector<2x32xf32>
    %181 = arith.addf %180, %179 : vector<2x32xf32>
    %182 = arith.divf %180, %181 : vector<2x32xf32>
    %183 = arith.mulf %174, %125 : vector<2x32xf32>
    %184 = arith.mulf %168, %176 : vector<2x32xf32>
    %185 = arith.addf %183, %184 : vector<2x32xf32>
    %186 = math.tanh %185 : vector<2x32xf32>
    %187 = arith.mulf %182, %186 : vector<2x32xf32>
    %c4_46 = arith.constant 4 : index
    %c0_47 = arith.constant 0 : index
    %188 = vector.load %arg5[%c4_46, %c0_47] : memref<32x64xf32, #tpu.memory_space<vmem>>, vector<2x32xf32>
    tpu.vector_store %arg5[%c4_46, %c0_47], %162 {strides = array<i32>} : memref<32x64xf32, #tpu.memory_space<vmem>>, vector<2x32xf32>,
    %c26_48 = arith.constant 26 : index
    %c32_49 = arith.constant 32 : index
    %189 = vector.load %arg5[%c26_48, %c32_49] : memref<32x64xf32, #tpu.memory_space<vmem>>, vector<2x32xf32>
    tpu.vector_store %arg5[%c26_48, %c32_49], %187 {strides = array<i32>} : memref<32x64xf32, #tpu.memory_space<vmem>>, vector<2x32xf32>,
    %190 = tpu.concatenate %162, %187 in 1 : vector<2x32xf32>, vector<2x32xf32> -> vector<2x64xf32>
    %cst_50 = arith.constant dense<0.000000e+00> : vector<2x256xf32>
    %191 = tpu.matmul %190, %7, %cst_50 {dimension_numbers = #tpu.dot_dimension_numbers<[1], [0], [0], [1], [0, 0, 1, 1], [], []>} : vector<2x64xf32>, vector<64x256xf32>, vector<2x256xf32> -> vector<2x256xf32>
    %c6 = arith.constant 6 : index
    %c0_51 = arith.constant 0 : index
    %192 = vector.load %arg6[%c6, %c0_51] : memref<32x256xf32, #tpu.memory_space<vmem>>, vector<2x128xf32>
    %193 = vector.extract_strided_slice %191 {offsets = [0, 0], sizes = [2, 128], strides = [1, 1]} : vector<2x256xf32> to vector<2x128xf32>
    %194 = arith.addf %192, %193 : vector<2x128xf32>
    %c24 = arith.constant 24 : index
    %c128_52 = arith.constant 128 : index
    %195 = vector.load %arg6[%c24, %c128_52] : memref<32x256xf32, #tpu.memory_space<vmem>>, vector<2x128xf32>
    %196 = vector.extract_strided_slice %191 {offsets = [0, 128], sizes = [2, 128], strides = [1, 1]} : vector<2x256xf32> to vector<2x128xf32>
    %197 = arith.addf %195, %196 : vector<2x128xf32>
    %198 = vector.extract_strided_slice %194 {offsets = [0, 0], sizes = [2, 32], strides = [1, 1]} : vector<2x128xf32> to vector<2x32xf32>
    %199 = arith.negf %198 : vector<2x32xf32>
    %200 = math.exp %199 : vector<2x32xf32>
    %cst_53 = arith.constant 1.000000e+00 : f32
    %201 = vector.broadcast %cst_53 : f32 to vector<2x32xf32>
    %202 = arith.addf %201, %200 : vector<2x32xf32>
    %203 = arith.divf %201, %202 : vector<2x32xf32>
    %204 = vector.extract_strided_slice %194 {offsets = [0, 32], sizes = [2, 32], strides = [1, 1]} : vector<2x128xf32> to vector<2x32xf32>
    %205 = arith.negf %204 : vector<2x32xf32>
    %206 = math.exp %205 : vector<2x32xf32>
    %cst_54 = arith.constant 1.000000e+00 : f32
    %207 = vector.broadcast %cst_54 : f32 to vector<2x32xf32>
    %208 = arith.addf %207, %206 : vector<2x32xf32>
    %209 = arith.divf %207, %208 : vector<2x32xf32>
    %210 = vector.extract_strided_slice %194 {offsets = [0, 64], sizes = [2, 32], strides = [1, 1]} : vector<2x128xf32> to vector<2x32xf32>
    %211 = math.tanh %210 : vector<2x32xf32>
    %212 = vector.extract_strided_slice %194 {offsets = [0, 96], sizes = [2, 32], strides = [1, 1]} : vector<2x128xf32> to vector<2x32xf32>
    %213 = arith.negf %212 : vector<2x32xf32>
    %214 = math.exp %213 : vector<2x32xf32>
    %cst_55 = arith.constant 1.000000e+00 : f32
    %215 = vector.broadcast %cst_55 : f32 to vector<2x32xf32>
    %216 = arith.addf %215, %214 : vector<2x32xf32>
    %217 = arith.divf %215, %216 : vector<2x32xf32>
    %218 = arith.mulf %209, %160 : vector<2x32xf32>
    %219 = arith.mulf %203, %211 : vector<2x32xf32>
    %220 = arith.addf %218, %219 : vector<2x32xf32>
    %221 = math.tanh %220 : vector<2x32xf32>
    %222 = arith.mulf %217, %221 : vector<2x32xf32>
    %223 = vector.extract_strided_slice %197 {offsets = [0, 0], sizes = [2, 32], strides = [1, 1]} : vector<2x128xf32> to vector<2x32xf32>
    %224 = arith.negf %223 : vector<2x32xf32>
    %225 = math.exp %224 : vector<2x32xf32>
    %cst_56 = arith.constant 1.000000e+00 : f32
    %226 = vector.broadcast %cst_56 : f32 to vector<2x32xf32>
    %227 = arith.addf %226, %225 : vector<2x32xf32>
    %228 = arith.divf %226, %227 : vector<2x32xf32>
    %229 = vector.extract_strided_slice %197 {offsets = [0, 32], sizes = [2, 32], strides = [1, 1]} : vector<2x128xf32> to vector<2x32xf32>
    %230 = arith.negf %229 : vector<2x32xf32>
    %231 = math.exp %230 : vector<2x32xf32>
    %cst_57 = arith.constant 1.000000e+00 : f32
    %232 = vector.broadcast %cst_57 : f32 to vector<2x32xf32>
    %233 = arith.addf %232, %231 : vector<2x32xf32>
    %234 = arith.divf %232, %233 : vector<2x32xf32>
    %235 = vector.extract_strided_slice %197 {offsets = [0, 64], sizes = [2, 32], strides = [1, 1]} : vector<2x128xf32> to vector<2x32xf32>
    %236 = math.tanh %235 : vector<2x32xf32>
    %237 = vector.extract_strided_slice %197 {offsets = [0, 96], sizes = [2, 32], strides = [1, 1]} : vector<2x128xf32> to vector<2x32xf32>
    %238 = arith.negf %237 : vector<2x32xf32>
    %239 = math.exp %238 : vector<2x32xf32>
    %cst_58 = arith.constant 1.000000e+00 : f32
    %240 = vector.broadcast %cst_58 : f32 to vector<2x32xf32>
    %241 = arith.addf %240, %239 : vector<2x32xf32>
    %242 = arith.divf %240, %241 : vector<2x32xf32>
    %243 = arith.mulf %234, %185 : vector<2x32xf32>
    %244 = arith.mulf %228, %236 : vector<2x32xf32>
    %245 = arith.addf %243, %244 : vector<2x32xf32>
    %246 = math.tanh %245 : vector<2x32xf32>
    %247 = arith.mulf %242, %246 : vector<2x32xf32>
    %c6_59 = arith.constant 6 : index
    %c0_60 = arith.constant 0 : index
    %248 = vector.load %arg5[%c6_59, %c0_60] : memref<32x64xf32, #tpu.memory_space<vmem>>, vector<2x32xf32>
    tpu.vector_store %arg5[%c6_59, %c0_60], %222 {strides = array<i32>} : memref<32x64xf32, #tpu.memory_space<vmem>>, vector<2x32xf32>,
    %c24_61 = arith.constant 24 : index
    %c32_62 = arith.constant 32 : index
    %249 = vector.load %arg5[%c24_61, %c32_62] : memref<32x64xf32, #tpu.memory_space<vmem>>, vector<2x32xf32>
    tpu.vector_store %arg5[%c24_61, %c32_62], %247 {strides = array<i32>} : memref<32x64xf32, #tpu.memory_space<vmem>>, vector<2x32xf32>,
    %250 = tpu.concatenate %222, %247 in 1 : vector<2x32xf32>, vector<2x32xf32> -> vector<2x64xf32>
    %cst_63 = arith.constant dense<0.000000e+00> : vector<2x256xf32>
    %251 = tpu.matmul %250, %7, %cst_63 {dimension_numbers = #tpu.dot_dimension_numbers<[1], [0], [0], [1], [0, 0, 1, 1], [], []>} : vector<2x64xf32>, vector<64x256xf32>, vector<2x256xf32> -> vector<2x256xf32>
    %c8 = arith.constant 8 : index
    %c0_64 = arith.constant 0 : index
    %252 = vector.load %arg6[%c8, %c0_64] : memref<32x256xf32, #tpu.memory_space<vmem>>, vector<2x128xf32>
    %253 = vector.extract_strided_slice %251 {offsets = [0, 0], sizes = [2, 128], strides = [1, 1]} : vector<2x256xf32> to vector<2x128xf32>
    %254 = arith.addf %252, %253 : vector<2x128xf32>
    %c22 = arith.constant 22 : index
    %c128_65 = arith.constant 128 : index
    %255 = vector.load %arg6[%c22, %c128_65] : memref<32x256xf32, #tpu.memory_space<vmem>>, vector<2x128xf32>
    %256 = vector.extract_strided_slice %251 {offsets = [0, 128], sizes = [2, 128], strides = [1, 1]} : vector<2x256xf32> to vector<2x128xf32>
    %257 = arith.addf %255, %256 : vector<2x128xf32>
    %258 = vector.extract_strided_slice %254 {offsets = [0, 0], sizes = [2, 32], strides = [1, 1]} : vector<2x128xf32> to vector<2x32xf32>
    %259 = arith.negf %258 : vector<2x32xf32>
    %260 = math.exp %259 : vector<2x32xf32>
    %cst_66 = arith.constant 1.000000e+00 : f32
    %261 = vector.broadcast %cst_66 : f32 to vector<2x32xf32>
    %262 = arith.addf %261, %260 : vector<2x32xf32>
    %263 = arith.divf %261, %262 : vector<2x32xf32>
    %264 = vector.extract_strided_slice %254 {offsets = [0, 32], sizes = [2, 32], strides = [1, 1]} : vector<2x128xf32> to vector<2x32xf32>
    %265 = arith.negf %264 : vector<2x32xf32>
    %266 = math.exp %265 : vector<2x32xf32>
    %cst_67 = arith.constant 1.000000e+00 : f32
    %267 = vector.broadcast %cst_67 : f32 to vector<2x32xf32>
    %268 = arith.addf %267, %266 : vector<2x32xf32>
    %269 = arith.divf %267, %268 : vector<2x32xf32>
    %270 = vector.extract_strided_slice %254 {offsets = [0, 64], sizes = [2, 32], strides = [1, 1]} : vector<2x128xf32> to vector<2x32xf32>
    %271 = math.tanh %270 : vector<2x32xf32>
    %272 = vector.extract_strided_slice %254 {offsets = [0, 96], sizes = [2, 32], strides = [1, 1]} : vector<2x128xf32> to vector<2x32xf32>
    %273 = arith.negf %272 : vector<2x32xf32>
    %274 = math.exp %273 : vector<2x32xf32>
    %cst_68 = arith.constant 1.000000e+00 : f32
    %275 = vector.broadcast %cst_68 : f32 to vector<2x32xf32>
    %276 = arith.addf %275, %274 : vector<2x32xf32>
    %277 = arith.divf %275, %276 : vector<2x32xf32>
    %278 = arith.mulf %269, %220 : vector<2x32xf32>
    %279 = arith.mulf %263, %271 : vector<2x32xf32>
    %280 = arith.addf %278, %279 : vector<2x32xf32>
    %281 = math.tanh %280 : vector<2x32xf32>
    %282 = arith.mulf %277, %281 : vector<2x32xf32>
    %283 = vector.extract_strided_slice %257 {offsets = [0, 0], sizes = [2, 32], strides = [1, 1]} : vector<2x128xf32> to vector<2x32xf32>
    %284 = arith.negf %283 : vector<2x32xf32>
    %285 = math.exp %284 : vector<2x32xf32>
    %cst_69 = arith.constant 1.000000e+00 : f32
    %286 = vector.broadcast %cst_69 : f32 to vector<2x32xf32>
    %287 = arith.addf %286, %285 : vector<2x32xf32>
    %288 = arith.divf %286, %287 : vector<2x32xf32>
    %289 = vector.extract_strided_slice %257 {offsets = [0, 32], sizes = [2, 32], strides = [1, 1]} : vector<2x128xf32> to vector<2x32xf32>
    %290 = arith.negf %289 : vector<2x32xf32>
    %291 = math.exp %290 : vector<2x32xf32>
    %cst_70 = arith.constant 1.000000e+00 : f32
    %292 = vector.broadcast %cst_70 : f32 to vector<2x32xf32>
    %293 = arith.addf %292, %291 : vector<2x32xf32>
    %294 = arith.divf %292, %293 : vector<2x32xf32>
    %295 = vector.extract_strided_slice %257 {offsets = [0, 64], sizes = [2, 32], strides = [1, 1]} : vector<2x128xf32> to vector<2x32xf32>
    %296 = math.tanh %295 : vector<2x32xf32>
    %297 = vector.extract_strided_slice %257 {offsets = [0, 96], sizes = [2, 32], strides = [1, 1]} : vector<2x128xf32> to vector<2x32xf32>
    %298 = arith.negf %297 : vector<2x32xf32>
    %299 = math.exp %298 : vector<2x32xf32>
    %cst_71 = arith.constant 1.000000e+00 : f32
    %300 = vector.broadcast %cst_71 : f32 to vector<2x32xf32>
    %301 = arith.addf %300, %299 : vector<2x32xf32>
    %302 = arith.divf %300, %301 : vector<2x32xf32>
    %303 = arith.mulf %294, %245 : vector<2x32xf32>
    %304 = arith.mulf %288, %296 : vector<2x32xf32>
    %305 = arith.addf %303, %304 : vector<2x32xf32>
    %306 = math.tanh %305 : vector<2x32xf32>
    %307 = arith.mulf %302, %306 : vector<2x32xf32>
    %c8_72 = arith.constant 8 : index
    %c0_73 = arith.constant 0 : index
    %308 = vector.load %arg5[%c8_72, %c0_73] : memref<32x64xf32, #tpu.memory_space<vmem>>, vector<2x32xf32>
    tpu.vector_store %arg5[%c8_72, %c0_73], %282 {strides = array<i32>} : memref<32x64xf32, #tpu.memory_space<vmem>>, vector<2x32xf32>,
    %c22_74 = arith.constant 22 : index
    %c32_75 = arith.constant 32 : index
    %309 = vector.load %arg5[%c22_74, %c32_75] : memref<32x64xf32, #tpu.memory_space<vmem>>, vector<2x32xf32>
    tpu.vector_store %arg5[%c22_74, %c32_75], %307 {strides = array<i32>} : memref<32x64xf32, #tpu.memory_space<vmem>>, vector<2x32xf32>,
    %310 = tpu.concatenate %282, %307 in 1 : vector<2x32xf32>, vector<2x32xf32> -> vector<2x64xf32>
    %cst_76 = arith.constant dense<0.000000e+00> : vector<2x256xf32>
    %311 = tpu.matmul %310, %7, %cst_76 {dimension_numbers = #tpu.dot_dimension_numbers<[1], [0], [0], [1], [0, 0, 1, 1], [], []>} : vector<2x64xf32>, vector<64x256xf32>, vector<2x256xf32> -> vector<2x256xf32>
    %c10 = arith.constant 10 : index
    %c0_77 = arith.constant 0 : index
    %312 = vector.load %arg6[%c10, %c0_77] : memref<32x256xf32, #tpu.memory_space<vmem>>, vector<2x128xf32>
    %313 = vector.extract_strided_slice %311 {offsets = [0, 0], sizes = [2, 128], strides = [1, 1]} : vector<2x256xf32> to vector<2x128xf32>
    %314 = arith.addf %312, %313 : vector<2x128xf32>
    %c20 = arith.constant 20 : index
    %c128_78 = arith.constant 128 : index
    %315 = vector.load %arg6[%c20, %c128_78] : memref<32x256xf32, #tpu.memory_space<vmem>>, vector<2x128xf32>
    %316 = vector.extract_strided_slice %311 {offsets = [0, 128], sizes = [2, 128], strides = [1, 1]} : vector<2x256xf32> to vector<2x128xf32>
    %317 = arith.addf %315, %316 : vector<2x128xf32>
    %318 = vector.extract_strided_slice %314 {offsets = [0, 0], sizes = [2, 32], strides = [1, 1]} : vector<2x128xf32> to vector<2x32xf32>
    %319 = arith.negf %318 : vector<2x32xf32>
    %320 = math.exp %319 : vector<2x32xf32>
    %cst_79 = arith.constant 1.000000e+00 : f32
    %321 = vector.broadcast %cst_79 : f32 to vector<2x32xf32>
    %322 = arith.addf %321, %320 : vector<2x32xf32>
    %323 = arith.divf %321, %322 : vector<2x32xf32>
    %324 = vector.extract_strided_slice %314 {offsets = [0, 32], sizes = [2, 32], strides = [1, 1]} : vector<2x128xf32> to vector<2x32xf32>
    %325 = arith.negf %324 : vector<2x32xf32>
    %326 = math.exp %325 : vector<2x32xf32>
    %cst_80 = arith.constant 1.000000e+00 : f32
    %327 = vector.broadcast %cst_80 : f32 to vector<2x32xf32>
    %328 = arith.addf %327, %326 : vector<2x32xf32>
    %329 = arith.divf %327, %328 : vector<2x32xf32>
    %330 = vector.extract_strided_slice %314 {offsets = [0, 64], sizes = [2, 32], strides = [1, 1]} : vector<2x128xf32> to vector<2x32xf32>
    %331 = math.tanh %330 : vector<2x32xf32>
    %332 = vector.extract_strided_slice %314 {offsets = [0, 96], sizes = [2, 32], strides = [1, 1]} : vector<2x128xf32> to vector<2x32xf32>
    %333 = arith.negf %332 : vector<2x32xf32>
    %334 = math.exp %333 : vector<2x32xf32>
    %cst_81 = arith.constant 1.000000e+00 : f32
    %335 = vector.broadcast %cst_81 : f32 to vector<2x32xf32>
    %336 = arith.addf %335, %334 : vector<2x32xf32>
    %337 = arith.divf %335, %336 : vector<2x32xf32>
    %338 = arith.mulf %329, %280 : vector<2x32xf32>
    %339 = arith.mulf %323, %331 : vector<2x32xf32>
    %340 = arith.addf %338, %339 : vector<2x32xf32>
    %341 = math.tanh %340 : vector<2x32xf32>
    %342 = arith.mulf %337, %341 : vector<2x32xf32>
    %343 = vector.extract_strided_slice %317 {offsets = [0, 0], sizes = [2, 32], strides = [1, 1]} : vector<2x128xf32> to vector<2x32xf32>
    %344 = arith.negf %343 : vector<2x32xf32>
    %345 = math.exp %344 : vector<2x32xf32>
    %cst_82 = arith.constant 1.000000e+00 : f32
    %346 = vector.broadcast %cst_82 : f32 to vector<2x32xf32>
    %347 = arith.addf %346, %345 : vector<2x32xf32>
    %348 = arith.divf %346, %347 : vector<2x32xf32>
    %349 = vector.extract_strided_slice %317 {offsets = [0, 32], sizes = [2, 32], strides = [1, 1]} : vector<2x128xf32> to vector<2x32xf32>
    %350 = arith.negf %349 : vector<2x32xf32>
    %351 = math.exp %350 : vector<2x32xf32>
    %cst_83 = arith.constant 1.000000e+00 : f32
    %352 = vector.broadcast %cst_83 : f32 to vector<2x32xf32>
    %353 = arith.addf %352, %351 : vector<2x32xf32>
    %354 = arith.divf %352, %353 : vector<2x32xf32>
    %355 = vector.extract_strided_slice %317 {offsets = [0, 64], sizes = [2, 32], strides = [1, 1]} : vector<2x128xf32> to vector<2x32xf32>
    %356 = math.tanh %355 : vector<2x32xf32>
    %357 = vector.extract_strided_slice %317 {offsets = [0, 96], sizes = [2, 32], strides = [1, 1]} : vector<2x128xf32> to vector<2x32xf32>
    %358 = arith.negf %357 : vector<2x32xf32>
    %359 = math.exp %358 : vector<2x32xf32>
    %cst_84 = arith.constant 1.000000e+00 : f32
    %360 = vector.broadcast %cst_84 : f32 to vector<2x32xf32>
    %361 = arith.addf %360, %359 : vector<2x32xf32>
    %362 = arith.divf %360, %361 : vector<2x32xf32>
    %363 = arith.mulf %354, %305 : vector<2x32xf32>
    %364 = arith.mulf %348, %356 : vector<2x32xf32>
    %365 = arith.addf %363, %364 : vector<2x32xf32>
    %366 = math.tanh %365 : vector<2x32xf32>
    %367 = arith.mulf %362, %366 : vector<2x32xf32>
    %c10_85 = arith.constant 10 : index
    %c0_86 = arith.constant 0 : index
    %368 = vector.load %arg5[%c10_85, %c0_86] : memref<32x64xf32, #tpu.memory_space<vmem>>, vector<2x32xf32>
    tpu.vector_store %arg5[%c10_85, %c0_86], %342 {strides = array<i32>} : memref<32x64xf32, #tpu.memory_space<vmem>>, vector<2x32xf32>,
    %c20_87 = arith.constant 20 : index
    %c32_88 = arith.constant 32 : index
    %369 = vector.load %arg5[%c20_87, %c32_88] : memref<32x64xf32, #tpu.memory_space<vmem>>, vector<2x32xf32>
    tpu.vector_store %arg5[%c20_87, %c32_88], %367 {strides = array<i32>} : memref<32x64xf32, #tpu.memory_space<vmem>>, vector<2x32xf32>,
    %370 = tpu.concatenate %342, %367 in 1 : vector<2x32xf32>, vector<2x32xf32> -> vector<2x64xf32>
    %cst_89 = arith.constant dense<0.000000e+00> : vector<2x256xf32>
    %371 = tpu.matmul %370, %7, %cst_89 {dimension_numbers = #tpu.dot_dimension_numbers<[1], [0], [0], [1], [0, 0, 1, 1], [], []>} : vector<2x64xf32>, vector<64x256xf32>, vector<2x256xf32> -> vector<2x256xf32>
    %c12 = arith.constant 12 : index
    %c0_90 = arith.constant 0 : index
    %372 = vector.load %arg6[%c12, %c0_90] : memref<32x256xf32, #tpu.memory_space<vmem>>, vector<2x128xf32>
    %373 = vector.extract_strided_slice %371 {offsets = [0, 0], sizes = [2, 128], strides = [1, 1]} : vector<2x256xf32> to vector<2x128xf32>
    %374 = arith.addf %372, %373 : vector<2x128xf32>
    %c18 = arith.constant 18 : index
    %c128_91 = arith.constant 128 : index
    %375 = vector.load %arg6[%c18, %c128_91] : memref<32x256xf32, #tpu.memory_space<vmem>>, vector<2x128xf32>
    %376 = vector.extract_strided_slice %371 {offsets = [0, 128], sizes = [2, 128], strides = [1, 1]} : vector<2x256xf32> to vector<2x128xf32>
    %377 = arith.addf %375, %376 : vector<2x128xf32>
    %378 = vector.extract_strided_slice %374 {offsets = [0, 0], sizes = [2, 32], strides = [1, 1]} : vector<2x128xf32> to vector<2x32xf32>
    %379 = arith.negf %378 : vector<2x32xf32>
    %380 = math.exp %379 : vector<2x32xf32>
    %cst_92 = arith.constant 1.000000e+00 : f32
    %381 = vector.broadcast %cst_92 : f32 to vector<2x32xf32>
    %382 = arith.addf %381, %380 : vector<2x32xf32>
    %383 = arith.divf %381, %382 : vector<2x32xf32>
    %384 = vector.extract_strided_slice %374 {offsets = [0, 32], sizes = [2, 32], strides = [1, 1]} : vector<2x128xf32> to vector<2x32xf32>
    %385 = arith.negf %384 : vector<2x32xf32>
    %386 = math.exp %385 : vector<2x32xf32>
    %cst_93 = arith.constant 1.000000e+00 : f32
    %387 = vector.broadcast %cst_93 : f32 to vector<2x32xf32>
    %388 = arith.addf %387, %386 : vector<2x32xf32>
    %389 = arith.divf %387, %388 : vector<2x32xf32>
    %390 = vector.extract_strided_slice %374 {offsets = [0, 64], sizes = [2, 32], strides = [1, 1]} : vector<2x128xf32> to vector<2x32xf32>
    %391 = math.tanh %390 : vector<2x32xf32>
    %392 = vector.extract_strided_slice %374 {offsets = [0, 96], sizes = [2, 32], strides = [1, 1]} : vector<2x128xf32> to vector<2x32xf32>
    %393 = arith.negf %392 : vector<2x32xf32>
    %394 = math.exp %393 : vector<2x32xf32>
    %cst_94 = arith.constant 1.000000e+00 : f32
    %395 = vector.broadcast %cst_94 : f32 to vector<2x32xf32>
    %396 = arith.addf %395, %394 : vector<2x32xf32>
    %397 = arith.divf %395, %396 : vector<2x32xf32>
    %398 = arith.mulf %389, %340 : vector<2x32xf32>
    %399 = arith.mulf %383, %391 : vector<2x32xf32>
    %400 = arith.addf %398, %399 : vector<2x32xf32>
    %401 = math.tanh %400 : vector<2x32xf32>
    %402 = arith.mulf %397, %401 : vector<2x32xf32>
    %403 = vector.extract_strided_slice %377 {offsets = [0, 0], sizes = [2, 32], strides = [1, 1]} : vector<2x128xf32> to vector<2x32xf32>
    %404 = arith.negf %403 : vector<2x32xf32>
    %405 = math.exp %404 : vector<2x32xf32>
    %cst_95 = arith.constant 1.000000e+00 : f32
    %406 = vector.broadcast %cst_95 : f32 to vector<2x32xf32>
    %407 = arith.addf %406, %405 : vector<2x32xf32>
    %408 = arith.divf %406, %407 : vector<2x32xf32>
    %409 = vector.extract_strided_slice %377 {offsets = [0, 32], sizes = [2, 32], strides = [1, 1]} : vector<2x128xf32> to vector<2x32xf32>
    %410 = arith.negf %409 : vector<2x32xf32>
    %411 = math.exp %410 : vector<2x32xf32>
    %cst_96 = arith.constant 1.000000e+00 : f32
    %412 = vector.broadcast %cst_96 : f32 to vector<2x32xf32>
    %413 = arith.addf %412, %411 : vector<2x32xf32>
    %414 = arith.divf %412, %413 : vector<2x32xf32>
    %415 = vector.extract_strided_slice %377 {offsets = [0, 64], sizes = [2, 32], strides = [1, 1]} : vector<2x128xf32> to vector<2x32xf32>
    %416 = math.tanh %415 : vector<2x32xf32>
    %417 = vector.extract_strided_slice %377 {offsets = [0, 96], sizes = [2, 32], strides = [1, 1]} : vector<2x128xf32> to vector<2x32xf32>
    %418 = arith.negf %417 : vector<2x32xf32>
    %419 = math.exp %418 : vector<2x32xf32>
    %cst_97 = arith.constant 1.000000e+00 : f32
    %420 = vector.broadcast %cst_97 : f32 to vector<2x32xf32>
    %421 = arith.addf %420, %419 : vector<2x32xf32>
    %422 = arith.divf %420, %421 : vector<2x32xf32>
    %423 = arith.mulf %414, %365 : vector<2x32xf32>
    %424 = arith.mulf %408, %416 : vector<2x32xf32>
    %425 = arith.addf %423, %424 : vector<2x32xf32>
    %426 = math.tanh %425 : vector<2x32xf32>
    %427 = arith.mulf %422, %426 : vector<2x32xf32>
    %c12_98 = arith.constant 12 : index
    %c0_99 = arith.constant 0 : index
    %428 = vector.load %arg5[%c12_98, %c0_99] : memref<32x64xf32, #tpu.memory_space<vmem>>, vector<2x32xf32>
    tpu.vector_store %arg5[%c12_98, %c0_99], %402 {strides = array<i32>} : memref<32x64xf32, #tpu.memory_space<vmem>>, vector<2x32xf32>,
    %c18_100 = arith.constant 18 : index
    %c32_101 = arith.constant 32 : index
    %429 = vector.load %arg5[%c18_100, %c32_101] : memref<32x64xf32, #tpu.memory_space<vmem>>, vector<2x32xf32>
    tpu.vector_store %arg5[%c18_100, %c32_101], %427 {strides = array<i32>} : memref<32x64xf32, #tpu.memory_space<vmem>>, vector<2x32xf32>,
    %430 = tpu.concatenate %402, %427 in 1 : vector<2x32xf32>, vector<2x32xf32> -> vector<2x64xf32>
    %cst_102 = arith.constant dense<0.000000e+00> : vector<2x256xf32>
    %431 = tpu.matmul %430, %7, %cst_102 {dimension_numbers = #tpu.dot_dimension_numbers<[1], [0], [0], [1], [0, 0, 1, 1], [], []>} : vector<2x64xf32>, vector<64x256xf32>, vector<2x256xf32> -> vector<2x256xf32>
    %c14 = arith.constant 14 : index
    %c0_103 = arith.constant 0 : index
    %432 = vector.load %arg6[%c14, %c0_103] : memref<32x256xf32, #tpu.memory_space<vmem>>, vector<2x128xf32>
    %433 = vector.extract_strided_slice %431 {offsets = [0, 0], sizes = [2, 128], strides = [1, 1]} : vector<2x256xf32> to vector<2x128xf32>
    %434 = arith.addf %432, %433 : vector<2x128xf32>
    %c16 = arith.constant 16 : index
    %c128_104 = arith.constant 128 : index
    %435 = vector.load %arg6[%c16, %c128_104] : memref<32x256xf32, #tpu.memory_space<vmem>>, vector<2x128xf32>
    %436 = vector.extract_strided_slice %431 {offsets = [0, 128], sizes = [2, 128], strides = [1, 1]} : vector<2x256xf32> to vector<2x128xf32>
    %437 = arith.addf %435, %436 : vector<2x128xf32>
    %438 = vector.extract_strided_slice %434 {offsets = [0, 0], sizes = [2, 32], strides = [1, 1]} : vector<2x128xf32> to vector<2x32xf32>
    %439 = arith.negf %438 : vector<2x32xf32>
    %440 = math.exp %439 : vector<2x32xf32>
    %cst_105 = arith.constant 1.000000e+00 : f32
    %441 = vector.broadcast %cst_105 : f32 to vector<2x32xf32>
    %442 = arith.addf %441, %440 : vector<2x32xf32>
    %443 = arith.divf %441, %442 : vector<2x32xf32>
    %444 = vector.extract_strided_slice %434 {offsets = [0, 32], sizes = [2, 32], strides = [1, 1]} : vector<2x128xf32> to vector<2x32xf32>
    %445 = arith.negf %444 : vector<2x32xf32>
    %446 = math.exp %445 : vector<2x32xf32>
    %cst_106 = arith.constant 1.000000e+00 : f32
    %447 = vector.broadcast %cst_106 : f32 to vector<2x32xf32>
    %448 = arith.addf %447, %446 : vector<2x32xf32>
    %449 = arith.divf %447, %448 : vector<2x32xf32>
    %450 = vector.extract_strided_slice %434 {offsets = [0, 64], sizes = [2, 32], strides = [1, 1]} : vector<2x128xf32> to vector<2x32xf32>
    %451 = math.tanh %450 : vector<2x32xf32>
    %452 = vector.extract_strided_slice %434 {offsets = [0, 96], sizes = [2, 32], strides = [1, 1]} : vector<2x128xf32> to vector<2x32xf32>
    %453 = arith.negf %452 : vector<2x32xf32>
    %454 = math.exp %453 : vector<2x32xf32>
    %cst_107 = arith.constant 1.000000e+00 : f32
    %455 = vector.broadcast %cst_107 : f32 to vector<2x32xf32>
    %456 = arith.addf %455, %454 : vector<2x32xf32>
    %457 = arith.divf %455, %456 : vector<2x32xf32>
    %458 = arith.mulf %449, %400 : vector<2x32xf32>
    %459 = arith.mulf %443, %451 : vector<2x32xf32>
    %460 = arith.addf %458, %459 : vector<2x32xf32>
    %461 = math.tanh %460 : vector<2x32xf32>
    %462 = arith.mulf %457, %461 : vector<2x32xf32>
    %463 = vector.extract_strided_slice %437 {offsets = [0, 0], sizes = [2, 32], strides = [1, 1]} : vector<2x128xf32> to vector<2x32xf32>
    %464 = arith.negf %463 : vector<2x32xf32>
    %465 = math.exp %464 : vector<2x32xf32>
    %cst_108 = arith.constant 1.000000e+00 : f32
    %466 = vector.broadcast %cst_108 : f32 to vector<2x32xf32>
    %467 = arith.addf %466, %465 : vector<2x32xf32>
    %468 = arith.divf %466, %467 : vector<2x32xf32>
    %469 = vector.extract_strided_slice %437 {offsets = [0, 32], sizes = [2, 32], strides = [1, 1]} : vector<2x128xf32> to vector<2x32xf32>
    %470 = arith.negf %469 : vector<2x32xf32>
    %471 = math.exp %470 : vector<2x32xf32>
    %cst_109 = arith.constant 1.000000e+00 : f32
    %472 = vector.broadcast %cst_109 : f32 to vector<2x32xf32>
    %473 = arith.addf %472, %471 : vector<2x32xf32>
    %474 = arith.divf %472, %473 : vector<2x32xf32>
    %475 = vector.extract_strided_slice %437 {offsets = [0, 64], sizes = [2, 32], strides = [1, 1]} : vector<2x128xf32> to vector<2x32xf32>
    %476 = math.tanh %475 : vector<2x32xf32>
    %477 = vector.extract_strided_slice %437 {offsets = [0, 96], sizes = [2, 32], strides = [1, 1]} : vector<2x128xf32> to vector<2x32xf32>
    %478 = arith.negf %477 : vector<2x32xf32>
    %479 = math.exp %478 : vector<2x32xf32>
    %cst_110 = arith.constant 1.000000e+00 : f32
    %480 = vector.broadcast %cst_110 : f32 to vector<2x32xf32>
    %481 = arith.addf %480, %479 : vector<2x32xf32>
    %482 = arith.divf %480, %481 : vector<2x32xf32>
    %483 = arith.mulf %474, %425 : vector<2x32xf32>
    %484 = arith.mulf %468, %476 : vector<2x32xf32>
    %485 = arith.addf %483, %484 : vector<2x32xf32>
    %486 = math.tanh %485 : vector<2x32xf32>
    %487 = arith.mulf %482, %486 : vector<2x32xf32>
    %c14_111 = arith.constant 14 : index
    %c0_112 = arith.constant 0 : index
    %488 = vector.load %arg5[%c14_111, %c0_112] : memref<32x64xf32, #tpu.memory_space<vmem>>, vector<2x32xf32>
    tpu.vector_store %arg5[%c14_111, %c0_112], %462 {strides = array<i32>} : memref<32x64xf32, #tpu.memory_space<vmem>>, vector<2x32xf32>,
    %c16_113 = arith.constant 16 : index
    %c32_114 = arith.constant 32 : index
    %489 = vector.load %arg5[%c16_113, %c32_114] : memref<32x64xf32, #tpu.memory_space<vmem>>, vector<2x32xf32>
    tpu.vector_store %arg5[%c16_113, %c32_114], %487 {strides = array<i32>} : memref<32x64xf32, #tpu.memory_space<vmem>>, vector<2x32xf32>,
    %490 = tpu.concatenate %462, %487 in 1 : vector<2x32xf32>, vector<2x32xf32> -> vector<2x64xf32>
    %cst_115 = arith.constant dense<0.000000e+00> : vector<2x256xf32>
    %491 = tpu.matmul %490, %7, %cst_115 {dimension_numbers = #tpu.dot_dimension_numbers<[1], [0], [0], [1], [0, 0, 1, 1], [], []>} : vector<2x64xf32>, vector<64x256xf32>, vector<2x256xf32> -> vector<2x256xf32>
    %c16_116 = arith.constant 16 : index
    %c0_117 = arith.constant 0 : index
    %492 = vector.load %arg6[%c16_116, %c0_117] : memref<32x256xf32, #tpu.memory_space<vmem>>, vector<2x128xf32>
    %493 = vector.extract_strided_slice %491 {offsets = [0, 0], sizes = [2, 128], strides = [1, 1]} : vector<2x256xf32> to vector<2x128xf32>
    %494 = arith.addf %492, %493 : vector<2x128xf32>
    %c14_118 = arith.constant 14 : index
    %c128_119 = arith.constant 128 : index
    %495 = vector.load %arg6[%c14_118, %c128_119] : memref<32x256xf32, #tpu.memory_space<vmem>>, vector<2x128xf32>
    %496 = vector.extract_strided_slice %491 {offsets = [0, 128], sizes = [2, 128], strides = [1, 1]} : vector<2x256xf32> to vector<2x128xf32>
    %497 = arith.addf %495, %496 : vector<2x128xf32>
    %498 = vector.extract_strided_slice %494 {offsets = [0, 0], sizes = [2, 32], strides = [1, 1]} : vector<2x128xf32> to vector<2x32xf32>
    %499 = arith.negf %498 : vector<2x32xf32>
    %500 = math.exp %499 : vector<2x32xf32>
    %cst_120 = arith.constant 1.000000e+00 : f32
    %501 = vector.broadcast %cst_120 : f32 to vector<2x32xf32>
    %502 = arith.addf %501, %500 : vector<2x32xf32>
    %503 = arith.divf %501, %502 : vector<2x32xf32>
    %504 = vector.extract_strided_slice %494 {offsets = [0, 32], sizes = [2, 32], strides = [1, 1]} : vector<2x128xf32> to vector<2x32xf32>
    %505 = arith.negf %504 : vector<2x32xf32>
    %506 = math.exp %505 : vector<2x32xf32>
    %cst_121 = arith.constant 1.000000e+00 : f32
    %507 = vector.broadcast %cst_121 : f32 to vector<2x32xf32>
    %508 = arith.addf %507, %506 : vector<2x32xf32>
    %509 = arith.divf %507, %508 : vector<2x32xf32>
    %510 = vector.extract_strided_slice %494 {offsets = [0, 64], sizes = [2, 32], strides = [1, 1]} : vector<2x128xf32> to vector<2x32xf32>
    %511 = math.tanh %510 : vector<2x32xf32>
    %512 = vector.extract_strided_slice %494 {offsets = [0, 96], sizes = [2, 32], strides = [1, 1]} : vector<2x128xf32> to vector<2x32xf32>
    %513 = arith.negf %512 : vector<2x32xf32>
    %514 = math.exp %513 : vector<2x32xf32>
    %cst_122 = arith.constant 1.000000e+00 : f32
    %515 = vector.broadcast %cst_122 : f32 to vector<2x32xf32>
    %516 = arith.addf %515, %514 : vector<2x32xf32>
    %517 = arith.divf %515, %516 : vector<2x32xf32>
    %518 = arith.mulf %509, %460 : vector<2x32xf32>
    %519 = arith.mulf %503, %511 : vector<2x32xf32>
    %520 = arith.addf %518, %519 : vector<2x32xf32>
    %521 = math.tanh %520 : vector<2x32xf32>
    %522 = arith.mulf %517, %521 : vector<2x32xf32>
    %523 = vector.extract_strided_slice %497 {offsets = [0, 0], sizes = [2, 32], strides = [1, 1]} : vector<2x128xf32> to vector<2x32xf32>
    %524 = arith.negf %523 : vector<2x32xf32>
    %525 = math.exp %524 : vector<2x32xf32>
    %cst_123 = arith.constant 1.000000e+00 : f32
    %526 = vector.broadcast %cst_123 : f32 to vector<2x32xf32>
    %527 = arith.addf %526, %525 : vector<2x32xf32>
    %528 = arith.divf %526, %527 : vector<2x32xf32>
    %529 = vector.extract_strided_slice %497 {offsets = [0, 32], sizes = [2, 32], strides = [1, 1]} : vector<2x128xf32> to vector<2x32xf32>
    %530 = arith.negf %529 : vector<2x32xf32>
    %531 = math.exp %530 : vector<2x32xf32>
    %cst_124 = arith.constant 1.000000e+00 : f32
    %532 = vector.broadcast %cst_124 : f32 to vector<2x32xf32>
    %533 = arith.addf %532, %531 : vector<2x32xf32>
    %534 = arith.divf %532, %533 : vector<2x32xf32>
    %535 = vector.extract_strided_slice %497 {offsets = [0, 64], sizes = [2, 32], strides = [1, 1]} : vector<2x128xf32> to vector<2x32xf32>
    %536 = math.tanh %535 : vector<2x32xf32>
    %537 = vector.extract_strided_slice %497 {offsets = [0, 96], sizes = [2, 32], strides = [1, 1]} : vector<2x128xf32> to vector<2x32xf32>
    %538 = arith.negf %537 : vector<2x32xf32>
    %539 = math.exp %538 : vector<2x32xf32>
    %cst_125 = arith.constant 1.000000e+00 : f32
    %540 = vector.broadcast %cst_125 : f32 to vector<2x32xf32>
    %541 = arith.addf %540, %539 : vector<2x32xf32>
    %542 = arith.divf %540, %541 : vector<2x32xf32>
    %543 = arith.mulf %534, %485 : vector<2x32xf32>
    %544 = arith.mulf %528, %536 : vector<2x32xf32>
    %545 = arith.addf %543, %544 : vector<2x32xf32>
    %546 = math.tanh %545 : vector<2x32xf32>
    %547 = arith.mulf %542, %546 : vector<2x32xf32>
    %c16_126 = arith.constant 16 : index
    %c0_127 = arith.constant 0 : index
    %548 = vector.load %arg5[%c16_126, %c0_127] : memref<32x64xf32, #tpu.memory_space<vmem>>, vector<2x32xf32>
    tpu.vector_store %arg5[%c16_126, %c0_127], %522 {strides = array<i32>} : memref<32x64xf32, #tpu.memory_space<vmem>>, vector<2x32xf32>,
    %c14_128 = arith.constant 14 : index
    %c32_129 = arith.constant 32 : index
    %549 = vector.load %arg5[%c14_128, %c32_129] : memref<32x64xf32, #tpu.memory_space<vmem>>, vector<2x32xf32>
    tpu.vector_store %arg5[%c14_128, %c32_129], %547 {strides = array<i32>} : memref<32x64xf32, #tpu.memory_space<vmem>>, vector<2x32xf32>,
    %550 = tpu.concatenate %522, %547 in 1 : vector<2x32xf32>, vector<2x32xf32> -> vector<2x64xf32>
    %cst_130 = arith.constant dense<0.000000e+00> : vector<2x256xf32>
    %551 = tpu.matmul %550, %7, %cst_130 {dimension_numbers = #tpu.dot_dimension_numbers<[1], [0], [0], [1], [0, 0, 1, 1], [], []>} : vector<2x64xf32>, vector<64x256xf32>, vector<2x256xf32> -> vector<2x256xf32>
    %c18_131 = arith.constant 18 : index
    %c0_132 = arith.constant 0 : index
    %552 = vector.load %arg6[%c18_131, %c0_132] : memref<32x256xf32, #tpu.memory_space<vmem>>, vector<2x128xf32>
    %553 = vector.extract_strided_slice %551 {offsets = [0, 0], sizes = [2, 128], strides = [1, 1]} : vector<2x256xf32> to vector<2x128xf32>
    %554 = arith.addf %552, %553 : vector<2x128xf32>
    %c12_133 = arith.constant 12 : index
    %c128_134 = arith.constant 128 : index
    %555 = vector.load %arg6[%c12_133, %c128_134] : memref<32x256xf32, #tpu.memory_space<vmem>>, vector<2x128xf32>
    %556 = vector.extract_strided_slice %551 {offsets = [0, 128], sizes = [2, 128], strides = [1, 1]} : vector<2x256xf32> to vector<2x128xf32>
    %557 = arith.addf %555, %556 : vector<2x128xf32>
    %558 = vector.extract_strided_slice %554 {offsets = [0, 0], sizes = [2, 32], strides = [1, 1]} : vector<2x128xf32> to vector<2x32xf32>
    %559 = arith.negf %558 : vector<2x32xf32>
    %560 = math.exp %559 : vector<2x32xf32>
    %cst_135 = arith.constant 1.000000e+00 : f32
    %561 = vector.broadcast %cst_135 : f32 to vector<2x32xf32>
    %562 = arith.addf %561, %560 : vector<2x32xf32>
    %563 = arith.divf %561, %562 : vector<2x32xf32>
    %564 = vector.extract_strided_slice %554 {offsets = [0, 32], sizes = [2, 32], strides = [1, 1]} : vector<2x128xf32> to vector<2x32xf32>
    %565 = arith.negf %564 : vector<2x32xf32>
    %566 = math.exp %565 : vector<2x32xf32>
    %cst_136 = arith.constant 1.000000e+00 : f32
    %567 = vector.broadcast %cst_136 : f32 to vector<2x32xf32>
    %568 = arith.addf %567, %566 : vector<2x32xf32>
    %569 = arith.divf %567, %568 : vector<2x32xf32>
    %570 = vector.extract_strided_slice %554 {offsets = [0, 64], sizes = [2, 32], strides = [1, 1]} : vector<2x128xf32> to vector<2x32xf32>
    %571 = math.tanh %570 : vector<2x32xf32>
    %572 = vector.extract_strided_slice %554 {offsets = [0, 96], sizes = [2, 32], strides = [1, 1]} : vector<2x128xf32> to vector<2x32xf32>
    %573 = arith.negf %572 : vector<2x32xf32>
    %574 = math.exp %573 : vector<2x32xf32>
    %cst_137 = arith.constant 1.000000e+00 : f32
    %575 = vector.broadcast %cst_137 : f32 to vector<2x32xf32>
    %576 = arith.addf %575, %574 : vector<2x32xf32>
    %577 = arith.divf %575, %576 : vector<2x32xf32>
    %578 = arith.mulf %569, %520 : vector<2x32xf32>
    %579 = arith.mulf %563, %571 : vector<2x32xf32>
    %580 = arith.addf %578, %579 : vector<2x32xf32>
    %581 = math.tanh %580 : vector<2x32xf32>
    %582 = arith.mulf %577, %581 : vector<2x32xf32>
    %583 = vector.extract_strided_slice %557 {offsets = [0, 0], sizes = [2, 32], strides = [1, 1]} : vector<2x128xf32> to vector<2x32xf32>
    %584 = arith.negf %583 : vector<2x32xf32>
    %585 = math.exp %584 : vector<2x32xf32>
    %cst_138 = arith.constant 1.000000e+00 : f32
    %586 = vector.broadcast %cst_138 : f32 to vector<2x32xf32>
    %587 = arith.addf %586, %585 : vector<2x32xf32>
    %588 = arith.divf %586, %587 : vector<2x32xf32>
    %589 = vector.extract_strided_slice %557 {offsets = [0, 32], sizes = [2, 32], strides = [1, 1]} : vector<2x128xf32> to vector<2x32xf32>
    %590 = arith.negf %589 : vector<2x32xf32>
    %591 = math.exp %590 : vector<2x32xf32>
    %cst_139 = arith.constant 1.000000e+00 : f32
    %592 = vector.broadcast %cst_139 : f32 to vector<2x32xf32>
    %593 = arith.addf %592, %591 : vector<2x32xf32>
    %594 = arith.divf %592, %593 : vector<2x32xf32>
    %595 = vector.extract_strided_slice %557 {offsets = [0, 64], sizes = [2, 32], strides = [1, 1]} : vector<2x128xf32> to vector<2x32xf32>
    %596 = math.tanh %595 : vector<2x32xf32>
    %597 = vector.extract_strided_slice %557 {offsets = [0, 96], sizes = [2, 32], strides = [1, 1]} : vector<2x128xf32> to vector<2x32xf32>
    %598 = arith.negf %597 : vector<2x32xf32>
    %599 = math.exp %598 : vector<2x32xf32>
    %cst_140 = arith.constant 1.000000e+00 : f32
    %600 = vector.broadcast %cst_140 : f32 to vector<2x32xf32>
    %601 = arith.addf %600, %599 : vector<2x32xf32>
    %602 = arith.divf %600, %601 : vector<2x32xf32>
    %603 = arith.mulf %594, %545 : vector<2x32xf32>
    %604 = arith.mulf %588, %596 : vector<2x32xf32>
    %605 = arith.addf %603, %604 : vector<2x32xf32>
    %606 = math.tanh %605 : vector<2x32xf32>
    %607 = arith.mulf %602, %606 : vector<2x32xf32>
    %c18_141 = arith.constant 18 : index
    %c0_142 = arith.constant 0 : index
    %608 = vector.load %arg5[%c18_141, %c0_142] : memref<32x64xf32, #tpu.memory_space<vmem>>, vector<2x32xf32>
    tpu.vector_store %arg5[%c18_141, %c0_142], %582 {strides = array<i32>} : memref<32x64xf32, #tpu.memory_space<vmem>>, vector<2x32xf32>,
    %c12_143 = arith.constant 12 : index
    %c32_144 = arith.constant 32 : index
    %609 = vector.load %arg5[%c12_143, %c32_144] : memref<32x64xf32, #tpu.memory_space<vmem>>, vector<2x32xf32>
    tpu.vector_store %arg5[%c12_143, %c32_144], %607 {strides = array<i32>} : memref<32x64xf32, #tpu.memory_space<vmem>>, vector<2x32xf32>,
    %610 = tpu.concatenate %582, %607 in 1 : vector<2x32xf32>, vector<2x32xf32> -> vector<2x64xf32>
    %cst_145 = arith.constant dense<0.000000e+00> : vector<2x256xf32>
    %611 = tpu.matmul %610, %7, %cst_145 {dimension_numbers = #tpu.dot_dimension_numbers<[1], [0], [0], [1], [0, 0, 1, 1], [], []>} : vector<2x64xf32>, vector<64x256xf32>, vector<2x256xf32> -> vector<2x256xf32>
    %c20_146 = arith.constant 20 : index
    %c0_147 = arith.constant 0 : index
    %612 = vector.load %arg6[%c20_146, %c0_147] : memref<32x256xf32, #tpu.memory_space<vmem>>, vector<2x128xf32>
    %613 = vector.extract_strided_slice %611 {offsets = [0, 0], sizes = [2, 128], strides = [1, 1]} : vector<2x256xf32> to vector<2x128xf32>
    %614 = arith.addf %612, %613 : vector<2x128xf32>
    %c10_148 = arith.constant 10 : index
    %c128_149 = arith.constant 128 : index
    %615 = vector.load %arg6[%c10_148, %c128_149] : memref<32x256xf32, #tpu.memory_space<vmem>>, vector<2x128xf32>
    %616 = vector.extract_strided_slice %611 {offsets = [0, 128], sizes = [2, 128], strides = [1, 1]} : vector<2x256xf32> to vector<2x128xf32>
    %617 = arith.addf %615, %616 : vector<2x128xf32>
    %618 = vector.extract_strided_slice %614 {offsets = [0, 0], sizes = [2, 32], strides = [1, 1]} : vector<2x128xf32> to vector<2x32xf32>
    %619 = arith.negf %618 : vector<2x32xf32>
    %620 = math.exp %619 : vector<2x32xf32>
    %cst_150 = arith.constant 1.000000e+00 : f32
    %621 = vector.broadcast %cst_150 : f32 to vector<2x32xf32>
    %622 = arith.addf %621, %620 : vector<2x32xf32>
    %623 = arith.divf %621, %622 : vector<2x32xf32>
    %624 = vector.extract_strided_slice %614 {offsets = [0, 32], sizes = [2, 32], strides = [1, 1]} : vector<2x128xf32> to vector<2x32xf32>
    %625 = arith.negf %624 : vector<2x32xf32>
    %626 = math.exp %625 : vector<2x32xf32>
    %cst_151 = arith.constant 1.000000e+00 : f32
    %627 = vector.broadcast %cst_151 : f32 to vector<2x32xf32>
    %628 = arith.addf %627, %626 : vector<2x32xf32>
    %629 = arith.divf %627, %628 : vector<2x32xf32>
    %630 = vector.extract_strided_slice %614 {offsets = [0, 64], sizes = [2, 32], strides = [1, 1]} : vector<2x128xf32> to vector<2x32xf32>
    %631 = math.tanh %630 : vector<2x32xf32>
    %632 = vector.extract_strided_slice %614 {offsets = [0, 96], sizes = [2, 32], strides = [1, 1]} : vector<2x128xf32> to vector<2x32xf32>
    %633 = arith.negf %632 : vector<2x32xf32>
    %634 = math.exp %633 : vector<2x32xf32>
    %cst_152 = arith.constant 1.000000e+00 : f32
    %635 = vector.broadcast %cst_152 : f32 to vector<2x32xf32>
    %636 = arith.addf %635, %634 : vector<2x32xf32>
    %637 = arith.divf %635, %636 : vector<2x32xf32>
    %638 = arith.mulf %629, %580 : vector<2x32xf32>
    %639 = arith.mulf %623, %631 : vector<2x32xf32>
    %640 = arith.addf %638, %639 : vector<2x32xf32>
    %641 = math.tanh %640 : vector<2x32xf32>
    %642 = arith.mulf %637, %641 : vector<2x32xf32>
    %643 = vector.extract_strided_slice %617 {offsets = [0, 0], sizes = [2, 32], strides = [1, 1]} : vector<2x128xf32> to vector<2x32xf32>
    %644 = arith.negf %643 : vector<2x32xf32>
    %645 = math.exp %644 : vector<2x32xf32>
    %cst_153 = arith.constant 1.000000e+00 : f32
    %646 = vector.broadcast %cst_153 : f32 to vector<2x32xf32>
    %647 = arith.addf %646, %645 : vector<2x32xf32>
    %648 = arith.divf %646, %647 : vector<2x32xf32>
    %649 = vector.extract_strided_slice %617 {offsets = [0, 32], sizes = [2, 32], strides = [1, 1]} : vector<2x128xf32> to vector<2x32xf32>
    %650 = arith.negf %649 : vector<2x32xf32>
    %651 = math.exp %650 : vector<2x32xf32>
    %cst_154 = arith.constant 1.000000e+00 : f32
    %652 = vector.broadcast %cst_154 : f32 to vector<2x32xf32>
    %653 = arith.addf %652, %651 : vector<2x32xf32>
    %654 = arith.divf %652, %653 : vector<2x32xf32>
    %655 = vector.extract_strided_slice %617 {offsets = [0, 64], sizes = [2, 32], strides = [1, 1]} : vector<2x128xf32> to vector<2x32xf32>
    %656 = math.tanh %655 : vector<2x32xf32>
    %657 = vector.extract_strided_slice %617 {offsets = [0, 96], sizes = [2, 32], strides = [1, 1]} : vector<2x128xf32> to vector<2x32xf32>
    %658 = arith.negf %657 : vector<2x32xf32>
    %659 = math.exp %658 : vector<2x32xf32>
    %cst_155 = arith.constant 1.000000e+00 : f32
    %660 = vector.broadcast %cst_155 : f32 to vector<2x32xf32>
    %661 = arith.addf %660, %659 : vector<2x32xf32>
    %662 = arith.divf %660, %661 : vector<2x32xf32>
    %663 = arith.mulf %654, %605 : vector<2x32xf32>
    %664 = arith.mulf %648, %656 : vector<2x32xf32>
    %665 = arith.addf %663, %664 : vector<2x32xf32>
    %666 = math.tanh %665 : vector<2x32xf32>
    %667 = arith.mulf %662, %666 : vector<2x32xf32>
    %c20_156 = arith.constant 20 : index
    %c0_157 = arith.constant 0 : index
    %668 = vector.load %arg5[%c20_156, %c0_157] : memref<32x64xf32, #tpu.memory_space<vmem>>, vector<2x32xf32>
    tpu.vector_store %arg5[%c20_156, %c0_157], %642 {strides = array<i32>} : memref<32x64xf32, #tpu.memory_space<vmem>>, vector<2x32xf32>,
    %c10_158 = arith.constant 10 : index
    %c32_159 = arith.constant 32 : index
    %669 = vector.load %arg5[%c10_158, %c32_159] : memref<32x64xf32, #tpu.memory_space<vmem>>, vector<2x32xf32>
    tpu.vector_store %arg5[%c10_158, %c32_159], %667 {strides = array<i32>} : memref<32x64xf32, #tpu.memory_space<vmem>>, vector<2x32xf32>,
    %670 = tpu.concatenate %642, %667 in 1 : vector<2x32xf32>, vector<2x32xf32> -> vector<2x64xf32>
    %cst_160 = arith.constant dense<0.000000e+00> : vector<2x256xf32>
    %671 = tpu.matmul %670, %7, %cst_160 {dimension_numbers = #tpu.dot_dimension_numbers<[1], [0], [0], [1], [0, 0, 1, 1], [], []>} : vector<2x64xf32>, vector<64x256xf32>, vector<2x256xf32> -> vector<2x256xf32>
    %c22_161 = arith.constant 22 : index
    %c0_162 = arith.constant 0 : index
    %672 = vector.load %arg6[%c22_161, %c0_162] : memref<32x256xf32, #tpu.memory_space<vmem>>, vector<2x128xf32>
    %673 = vector.extract_strided_slice %671 {offsets = [0, 0], sizes = [2, 128], strides = [1, 1]} : vector<2x256xf32> to vector<2x128xf32>
    %674 = arith.addf %672, %673 : vector<2x128xf32>
    %c8_163 = arith.constant 8 : index
    %c128_164 = arith.constant 128 : index
    %675 = vector.load %arg6[%c8_163, %c128_164] : memref<32x256xf32, #tpu.memory_space<vmem>>, vector<2x128xf32>
    %676 = vector.extract_strided_slice %671 {offsets = [0, 128], sizes = [2, 128], strides = [1, 1]} : vector<2x256xf32> to vector<2x128xf32>
    %677 = arith.addf %675, %676 : vector<2x128xf32>
    %678 = vector.extract_strided_slice %674 {offsets = [0, 0], sizes = [2, 32], strides = [1, 1]} : vector<2x128xf32> to vector<2x32xf32>
    %679 = arith.negf %678 : vector<2x32xf32>
    %680 = math.exp %679 : vector<2x32xf32>
    %cst_165 = arith.constant 1.000000e+00 : f32
    %681 = vector.broadcast %cst_165 : f32 to vector<2x32xf32>
    %682 = arith.addf %681, %680 : vector<2x32xf32>
    %683 = arith.divf %681, %682 : vector<2x32xf32>
    %684 = vector.extract_strided_slice %674 {offsets = [0, 32], sizes = [2, 32], strides = [1, 1]} : vector<2x128xf32> to vector<2x32xf32>
    %685 = arith.negf %684 : vector<2x32xf32>
    %686 = math.exp %685 : vector<2x32xf32>
    %cst_166 = arith.constant 1.000000e+00 : f32
    %687 = vector.broadcast %cst_166 : f32 to vector<2x32xf32>
    %688 = arith.addf %687, %686 : vector<2x32xf32>
    %689 = arith.divf %687, %688 : vector<2x32xf32>
    %690 = vector.extract_strided_slice %674 {offsets = [0, 64], sizes = [2, 32], strides = [1, 1]} : vector<2x128xf32> to vector<2x32xf32>
    %691 = math.tanh %690 : vector<2x32xf32>
    %692 = vector.extract_strided_slice %674 {offsets = [0, 96], sizes = [2, 32], strides = [1, 1]} : vector<2x128xf32> to vector<2x32xf32>
    %693 = arith.negf %692 : vector<2x32xf32>
    %694 = math.exp %693 : vector<2x32xf32>
    %cst_167 = arith.constant 1.000000e+00 : f32
    %695 = vector.broadcast %cst_167 : f32 to vector<2x32xf32>
    %696 = arith.addf %695, %694 : vector<2x32xf32>
    %697 = arith.divf %695, %696 : vector<2x32xf32>
    %698 = arith.mulf %689, %640 : vector<2x32xf32>
    %699 = arith.mulf %683, %691 : vector<2x32xf32>
    %700 = arith.addf %698, %699 : vector<2x32xf32>
    %701 = math.tanh %700 : vector<2x32xf32>
    %702 = arith.mulf %697, %701 : vector<2x32xf32>
    %703 = vector.extract_strided_slice %677 {offsets = [0, 0], sizes = [2, 32], strides = [1, 1]} : vector<2x128xf32> to vector<2x32xf32>
    %704 = arith.negf %703 : vector<2x32xf32>
    %705 = math.exp %704 : vector<2x32xf32>
    %cst_168 = arith.constant 1.000000e+00 : f32
    %706 = vector.broadcast %cst_168 : f32 to vector<2x32xf32>
    %707 = arith.addf %706, %705 : vector<2x32xf32>
    %708 = arith.divf %706, %707 : vector<2x32xf32>
    %709 = vector.extract_strided_slice %677 {offsets = [0, 32], sizes = [2, 32], strides = [1, 1]} : vector<2x128xf32> to vector<2x32xf32>
    %710 = arith.negf %709 : vector<2x32xf32>
    %711 = math.exp %710 : vector<2x32xf32>
    %cst_169 = arith.constant 1.000000e+00 : f32
    %712 = vector.broadcast %cst_169 : f32 to vector<2x32xf32>
    %713 = arith.addf %712, %711 : vector<2x32xf32>
    %714 = arith.divf %712, %713 : vector<2x32xf32>
    %715 = vector.extract_strided_slice %677 {offsets = [0, 64], sizes = [2, 32], strides = [1, 1]} : vector<2x128xf32> to vector<2x32xf32>
    %716 = math.tanh %715 : vector<2x32xf32>
    %717 = vector.extract_strided_slice %677 {offsets = [0, 96], sizes = [2, 32], strides = [1, 1]} : vector<2x128xf32> to vector<2x32xf32>
    %718 = arith.negf %717 : vector<2x32xf32>
    %719 = math.exp %718 : vector<2x32xf32>
    %cst_170 = arith.constant 1.000000e+00 : f32
    %720 = vector.broadcast %cst_170 : f32 to vector<2x32xf32>
    %721 = arith.addf %720, %719 : vector<2x32xf32>
    %722 = arith.divf %720, %721 : vector<2x32xf32>
    %723 = arith.mulf %714, %665 : vector<2x32xf32>
    %724 = arith.mulf %708, %716 : vector<2x32xf32>
    %725 = arith.addf %723, %724 : vector<2x32xf32>
    %726 = math.tanh %725 : vector<2x32xf32>
    %727 = arith.mulf %722, %726 : vector<2x32xf32>
    %c22_171 = arith.constant 22 : index
    %c0_172 = arith.constant 0 : index
    %728 = vector.load %arg5[%c22_171, %c0_172] : memref<32x64xf32, #tpu.memory_space<vmem>>, vector<2x32xf32>
    tpu.vector_store %arg5[%c22_171, %c0_172], %702 {strides = array<i32>} : memref<32x64xf32, #tpu.memory_space<vmem>>, vector<2x32xf32>,
    %c8_173 = arith.constant 8 : index
    %c32_174 = arith.constant 32 : index
    %729 = vector.load %arg5[%c8_173, %c32_174] : memref<32x64xf32, #tpu.memory_space<vmem>>, vector<2x32xf32>
    tpu.vector_store %arg5[%c8_173, %c32_174], %727 {strides = array<i32>} : memref<32x64xf32, #tpu.memory_space<vmem>>, vector<2x32xf32>,
    %730 = tpu.concatenate %702, %727 in 1 : vector<2x32xf32>, vector<2x32xf32> -> vector<2x64xf32>
    %cst_175 = arith.constant dense<0.000000e+00> : vector<2x256xf32>
    %731 = tpu.matmul %730, %7, %cst_175 {dimension_numbers = #tpu.dot_dimension_numbers<[1], [0], [0], [1], [0, 0, 1, 1], [], []>} : vector<2x64xf32>, vector<64x256xf32>, vector<2x256xf32> -> vector<2x256xf32>
    %c24_176 = arith.constant 24 : index
    %c0_177 = arith.constant 0 : index
    %732 = vector.load %arg6[%c24_176, %c0_177] : memref<32x256xf32, #tpu.memory_space<vmem>>, vector<2x128xf32>
    %733 = vector.extract_strided_slice %731 {offsets = [0, 0], sizes = [2, 128], strides = [1, 1]} : vector<2x256xf32> to vector<2x128xf32>
    %734 = arith.addf %732, %733 : vector<2x128xf32>
    %c6_178 = arith.constant 6 : index
    %c128_179 = arith.constant 128 : index
    %735 = vector.load %arg6[%c6_178, %c128_179] : memref<32x256xf32, #tpu.memory_space<vmem>>, vector<2x128xf32>
    %736 = vector.extract_strided_slice %731 {offsets = [0, 128], sizes = [2, 128], strides = [1, 1]} : vector<2x256xf32> to vector<2x128xf32>
    %737 = arith.addf %735, %736 : vector<2x128xf32>
    %738 = vector.extract_strided_slice %734 {offsets = [0, 0], sizes = [2, 32], strides = [1, 1]} : vector<2x128xf32> to vector<2x32xf32>
    %739 = arith.negf %738 : vector<2x32xf32>
    %740 = math.exp %739 : vector<2x32xf32>
    %cst_180 = arith.constant 1.000000e+00 : f32
    %741 = vector.broadcast %cst_180 : f32 to vector<2x32xf32>
    %742 = arith.addf %741, %740 : vector<2x32xf32>
    %743 = arith.divf %741, %742 : vector<2x32xf32>
    %744 = vector.extract_strided_slice %734 {offsets = [0, 32], sizes = [2, 32], strides = [1, 1]} : vector<2x128xf32> to vector<2x32xf32>
    %745 = arith.negf %744 : vector<2x32xf32>
    %746 = math.exp %745 : vector<2x32xf32>
    %cst_181 = arith.constant 1.000000e+00 : f32
    %747 = vector.broadcast %cst_181 : f32 to vector<2x32xf32>
    %748 = arith.addf %747, %746 : vector<2x32xf32>
    %749 = arith.divf %747, %748 : vector<2x32xf32>
    %750 = vector.extract_strided_slice %734 {offsets = [0, 64], sizes = [2, 32], strides = [1, 1]} : vector<2x128xf32> to vector<2x32xf32>
    %751 = math.tanh %750 : vector<2x32xf32>
    %752 = vector.extract_strided_slice %734 {offsets = [0, 96], sizes = [2, 32], strides = [1, 1]} : vector<2x128xf32> to vector<2x32xf32>
    %753 = arith.negf %752 : vector<2x32xf32>
    %754 = math.exp %753 : vector<2x32xf32>
    %cst_182 = arith.constant 1.000000e+00 : f32
    %755 = vector.broadcast %cst_182 : f32 to vector<2x32xf32>
    %756 = arith.addf %755, %754 : vector<2x32xf32>
    %757 = arith.divf %755, %756 : vector<2x32xf32>
    %758 = arith.mulf %749, %700 : vector<2x32xf32>
    %759 = arith.mulf %743, %751 : vector<2x32xf32>
    %760 = arith.addf %758, %759 : vector<2x32xf32>
    %761 = math.tanh %760 : vector<2x32xf32>
    %762 = arith.mulf %757, %761 : vector<2x32xf32>
    %763 = vector.extract_strided_slice %737 {offsets = [0, 0], sizes = [2, 32], strides = [1, 1]} : vector<2x128xf32> to vector<2x32xf32>
    %764 = arith.negf %763 : vector<2x32xf32>
    %765 = math.exp %764 : vector<2x32xf32>
    %cst_183 = arith.constant 1.000000e+00 : f32
    %766 = vector.broadcast %cst_183 : f32 to vector<2x32xf32>
    %767 = arith.addf %766, %765 : vector<2x32xf32>
    %768 = arith.divf %766, %767 : vector<2x32xf32>
    %769 = vector.extract_strided_slice %737 {offsets = [0, 32], sizes = [2, 32], strides = [1, 1]} : vector<2x128xf32> to vector<2x32xf32>
    %770 = arith.negf %769 : vector<2x32xf32>
    %771 = math.exp %770 : vector<2x32xf32>
    %cst_184 = arith.constant 1.000000e+00 : f32
    %772 = vector.broadcast %cst_184 : f32 to vector<2x32xf32>
    %773 = arith.addf %772, %771 : vector<2x32xf32>
    %774 = arith.divf %772, %773 : vector<2x32xf32>
    %775 = vector.extract_strided_slice %737 {offsets = [0, 64], sizes = [2, 32], strides = [1, 1]} : vector<2x128xf32> to vector<2x32xf32>
    %776 = math.tanh %775 : vector<2x32xf32>
    %777 = vector.extract_strided_slice %737 {offsets = [0, 96], sizes = [2, 32], strides = [1, 1]} : vector<2x128xf32> to vector<2x32xf32>
    %778 = arith.negf %777 : vector<2x32xf32>
    %779 = math.exp %778 : vector<2x32xf32>
    %cst_185 = arith.constant 1.000000e+00 : f32
    %780 = vector.broadcast %cst_185 : f32 to vector<2x32xf32>
    %781 = arith.addf %780, %779 : vector<2x32xf32>
    %782 = arith.divf %780, %781 : vector<2x32xf32>
    %783 = arith.mulf %774, %725 : vector<2x32xf32>
    %784 = arith.mulf %768, %776 : vector<2x32xf32>
    %785 = arith.addf %783, %784 : vector<2x32xf32>
    %786 = math.tanh %785 : vector<2x32xf32>
    %787 = arith.mulf %782, %786 : vector<2x32xf32>
    %c24_186 = arith.constant 24 : index
    %c0_187 = arith.constant 0 : index
    %788 = vector.load %arg5[%c24_186, %c0_187] : memref<32x64xf32, #tpu.memory_space<vmem>>, vector<2x32xf32>
    tpu.vector_store %arg5[%c24_186, %c0_187], %762 {strides = array<i32>} : memref<32x64xf32, #tpu.memory_space<vmem>>, vector<2x32xf32>,
    %c6_188 = arith.constant 6 : index
    %c32_189 = arith.constant 32 : index
    %789 = vector.load %arg5[%c6_188, %c32_189] : memref<32x64xf32, #tpu.memory_space<vmem>>, vector<2x32xf32>
    tpu.vector_store %arg5[%c6_188, %c32_189], %787 {strides = array<i32>} : memref<32x64xf32, #tpu.memory_space<vmem>>, vector<2x32xf32>,
    %790 = tpu.concatenate %762, %787 in 1 : vector<2x32xf32>, vector<2x32xf32> -> vector<2x64xf32>
    %cst_190 = arith.constant dense<0.000000e+00> : vector<2x256xf32>
    %791 = tpu.matmul %790, %7, %cst_190 {dimension_numbers = #tpu.dot_dimension_numbers<[1], [0], [0], [1], [0, 0, 1, 1], [], []>} : vector<2x64xf32>, vector<64x256xf32>, vector<2x256xf32> -> vector<2x256xf32>
    %c26_191 = arith.constant 26 : index
    %c0_192 = arith.constant 0 : index
    %792 = vector.load %arg6[%c26_191, %c0_192] : memref<32x256xf32, #tpu.memory_space<vmem>>, vector<2x128xf32>
    %793 = vector.extract_strided_slice %791 {offsets = [0, 0], sizes = [2, 128], strides = [1, 1]} : vector<2x256xf32> to vector<2x128xf32>
    %794 = arith.addf %792, %793 : vector<2x128xf32>
    %c4_193 = arith.constant 4 : index
    %c128_194 = arith.constant 128 : index
    %795 = vector.load %arg6[%c4_193, %c128_194] : memref<32x256xf32, #tpu.memory_space<vmem>>, vector<2x128xf32>
    %796 = vector.extract_strided_slice %791 {offsets = [0, 128], sizes = [2, 128], strides = [1, 1]} : vector<2x256xf32> to vector<2x128xf32>
    %797 = arith.addf %795, %796 : vector<2x128xf32>
    %798 = vector.extract_strided_slice %794 {offsets = [0, 0], sizes = [2, 32], strides = [1, 1]} : vector<2x128xf32> to vector<2x32xf32>
    %799 = arith.negf %798 : vector<2x32xf32>
    %800 = math.exp %799 : vector<2x32xf32>
    %cst_195 = arith.constant 1.000000e+00 : f32
    %801 = vector.broadcast %cst_195 : f32 to vector<2x32xf32>
    %802 = arith.addf %801, %800 : vector<2x32xf32>
    %803 = arith.divf %801, %802 : vector<2x32xf32>
    %804 = vector.extract_strided_slice %794 {offsets = [0, 32], sizes = [2, 32], strides = [1, 1]} : vector<2x128xf32> to vector<2x32xf32>
    %805 = arith.negf %804 : vector<2x32xf32>
    %806 = math.exp %805 : vector<2x32xf32>
    %cst_196 = arith.constant 1.000000e+00 : f32
    %807 = vector.broadcast %cst_196 : f32 to vector<2x32xf32>
    %808 = arith.addf %807, %806 : vector<2x32xf32>
    %809 = arith.divf %807, %808 : vector<2x32xf32>
    %810 = vector.extract_strided_slice %794 {offsets = [0, 64], sizes = [2, 32], strides = [1, 1]} : vector<2x128xf32> to vector<2x32xf32>
    %811 = math.tanh %810 : vector<2x32xf32>
    %812 = vector.extract_strided_slice %794 {offsets = [0, 96], sizes = [2, 32], strides = [1, 1]} : vector<2x128xf32> to vector<2x32xf32>
    %813 = arith.negf %812 : vector<2x32xf32>
    %814 = math.exp %813 : vector<2x32xf32>
    %cst_197 = arith.constant 1.000000e+00 : f32
    %815 = vector.broadcast %cst_197 : f32 to vector<2x32xf32>
    %816 = arith.addf %815, %814 : vector<2x32xf32>
    %817 = arith.divf %815, %816 : vector<2x32xf32>
    %818 = arith.mulf %809, %760 : vector<2x32xf32>
    %819 = arith.mulf %803, %811 : vector<2x32xf32>
    %820 = arith.addf %818, %819 : vector<2x32xf32>
    %821 = math.tanh %820 : vector<2x32xf32>
    %822 = arith.mulf %817, %821 : vector<2x32xf32>
    %823 = vector.extract_strided_slice %797 {offsets = [0, 0], sizes = [2, 32], strides = [1, 1]} : vector<2x128xf32> to vector<2x32xf32>
    %824 = arith.negf %823 : vector<2x32xf32>
    %825 = math.exp %824 : vector<2x32xf32>
    %cst_198 = arith.constant 1.000000e+00 : f32
    %826 = vector.broadcast %cst_198 : f32 to vector<2x32xf32>
    %827 = arith.addf %826, %825 : vector<2x32xf32>
    %828 = arith.divf %826, %827 : vector<2x32xf32>
    %829 = vector.extract_strided_slice %797 {offsets = [0, 32], sizes = [2, 32], strides = [1, 1]} : vector<2x128xf32> to vector<2x32xf32>
    %830 = arith.negf %829 : vector<2x32xf32>
    %831 = math.exp %830 : vector<2x32xf32>
    %cst_199 = arith.constant 1.000000e+00 : f32
    %832 = vector.broadcast %cst_199 : f32 to vector<2x32xf32>
    %833 = arith.addf %832, %831 : vector<2x32xf32>
    %834 = arith.divf %832, %833 : vector<2x32xf32>
    %835 = vector.extract_strided_slice %797 {offsets = [0, 64], sizes = [2, 32], strides = [1, 1]} : vector<2x128xf32> to vector<2x32xf32>
    %836 = math.tanh %835 : vector<2x32xf32>
    %837 = vector.extract_strided_slice %797 {offsets = [0, 96], sizes = [2, 32], strides = [1, 1]} : vector<2x128xf32> to vector<2x32xf32>
    %838 = arith.negf %837 : vector<2x32xf32>
    %839 = math.exp %838 : vector<2x32xf32>
    %cst_200 = arith.constant 1.000000e+00 : f32
    %840 = vector.broadcast %cst_200 : f32 to vector<2x32xf32>
    %841 = arith.addf %840, %839 : vector<2x32xf32>
    %842 = arith.divf %840, %841 : vector<2x32xf32>
    %843 = arith.mulf %834, %785 : vector<2x32xf32>
    %844 = arith.mulf %828, %836 : vector<2x32xf32>
    %845 = arith.addf %843, %844 : vector<2x32xf32>
    %846 = math.tanh %845 : vector<2x32xf32>
    %847 = arith.mulf %842, %846 : vector<2x32xf32>
    %c26_201 = arith.constant 26 : index
    %c0_202 = arith.constant 0 : index
    %848 = vector.load %arg5[%c26_201, %c0_202] : memref<32x64xf32, #tpu.memory_space<vmem>>, vector<2x32xf32>
    tpu.vector_store %arg5[%c26_201, %c0_202], %822 {strides = array<i32>} : memref<32x64xf32, #tpu.memory_space<vmem>>, vector<2x32xf32>,
    %c4_203 = arith.constant 4 : index
    %c32_204 = arith.constant 32 : index
    %849 = vector.load %arg5[%c4_203, %c32_204] : memref<32x64xf32, #tpu.memory_space<vmem>>, vector<2x32xf32>
    tpu.vector_store %arg5[%c4_203, %c32_204], %847 {strides = array<i32>} : memref<32x64xf32, #tpu.memory_space<vmem>>, vector<2x32xf32>,
    %850 = tpu.concatenate %822, %847 in 1 : vector<2x32xf32>, vector<2x32xf32> -> vector<2x64xf32>
    %cst_205 = arith.constant dense<0.000000e+00> : vector<2x256xf32>
    %851 = tpu.matmul %850, %7, %cst_205 {dimension_numbers = #tpu.dot_dimension_numbers<[1], [0], [0], [1], [0, 0, 1, 1], [], []>} : vector<2x64xf32>, vector<64x256xf32>, vector<2x256xf32> -> vector<2x256xf32>
    %c28_206 = arith.constant 28 : index
    %c0_207 = arith.constant 0 : index
    %852 = vector.load %arg6[%c28_206, %c0_207] : memref<32x256xf32, #tpu.memory_space<vmem>>, vector<2x128xf32>
    %853 = vector.extract_strided_slice %851 {offsets = [0, 0], sizes = [2, 128], strides = [1, 1]} : vector<2x256xf32> to vector<2x128xf32>
    %854 = arith.addf %852, %853 : vector<2x128xf32>
    %c2_208 = arith.constant 2 : index
    %c128_209 = arith.constant 128 : index
    %855 = vector.load %arg6[%c2_208, %c128_209] : memref<32x256xf32, #tpu.memory_space<vmem>>, vector<2x128xf32>
    %856 = vector.extract_strided_slice %851 {offsets = [0, 128], sizes = [2, 128], strides = [1, 1]} : vector<2x256xf32> to vector<2x128xf32>
    %857 = arith.addf %855, %856 : vector<2x128xf32>
    %858 = vector.extract_strided_slice %854 {offsets = [0, 0], sizes = [2, 32], strides = [1, 1]} : vector<2x128xf32> to vector<2x32xf32>
    %859 = arith.negf %858 : vector<2x32xf32>
    %860 = math.exp %859 : vector<2x32xf32>
    %cst_210 = arith.constant 1.000000e+00 : f32
    %861 = vector.broadcast %cst_210 : f32 to vector<2x32xf32>
    %862 = arith.addf %861, %860 : vector<2x32xf32>
    %863 = arith.divf %861, %862 : vector<2x32xf32>
    %864 = vector.extract_strided_slice %854 {offsets = [0, 32], sizes = [2, 32], strides = [1, 1]} : vector<2x128xf32> to vector<2x32xf32>
    %865 = arith.negf %864 : vector<2x32xf32>
    %866 = math.exp %865 : vector<2x32xf32>
    %cst_211 = arith.constant 1.000000e+00 : f32
    %867 = vector.broadcast %cst_211 : f32 to vector<2x32xf32>
    %868 = arith.addf %867, %866 : vector<2x32xf32>
    %869 = arith.divf %867, %868 : vector<2x32xf32>
    %870 = vector.extract_strided_slice %854 {offsets = [0, 64], sizes = [2, 32], strides = [1, 1]} : vector<2x128xf32> to vector<2x32xf32>
    %871 = math.tanh %870 : vector<2x32xf32>
    %872 = vector.extract_strided_slice %854 {offsets = [0, 96], sizes = [2, 32], strides = [1, 1]} : vector<2x128xf32> to vector<2x32xf32>
    %873 = arith.negf %872 : vector<2x32xf32>
    %874 = math.exp %873 : vector<2x32xf32>
    %cst_212 = arith.constant 1.000000e+00 : f32
    %875 = vector.broadcast %cst_212 : f32 to vector<2x32xf32>
    %876 = arith.addf %875, %874 : vector<2x32xf32>
    %877 = arith.divf %875, %876 : vector<2x32xf32>
    %878 = arith.mulf %869, %820 : vector<2x32xf32>
    %879 = arith.mulf %863, %871 : vector<2x32xf32>
    %880 = arith.addf %878, %879 : vector<2x32xf32>
    %881 = math.tanh %880 : vector<2x32xf32>
    %882 = arith.mulf %877, %881 : vector<2x32xf32>
    %883 = vector.extract_strided_slice %857 {offsets = [0, 0], sizes = [2, 32], strides = [1, 1]} : vector<2x128xf32> to vector<2x32xf32>
    %884 = arith.negf %883 : vector<2x32xf32>
    %885 = math.exp %884 : vector<2x32xf32>
    %cst_213 = arith.constant 1.000000e+00 : f32
    %886 = vector.broadcast %cst_213 : f32 to vector<2x32xf32>
    %887 = arith.addf %886, %885 : vector<2x32xf32>
    %888 = arith.divf %886, %887 : vector<2x32xf32>
    %889 = vector.extract_strided_slice %857 {offsets = [0, 32], sizes = [2, 32], strides = [1, 1]} : vector<2x128xf32> to vector<2x32xf32>
    %890 = arith.negf %889 : vector<2x32xf32>
    %891 = math.exp %890 : vector<2x32xf32>
    %cst_214 = arith.constant 1.000000e+00 : f32
    %892 = vector.broadcast %cst_214 : f32 to vector<2x32xf32>
    %893 = arith.addf %892, %891 : vector<2x32xf32>
    %894 = arith.divf %892, %893 : vector<2x32xf32>
    %895 = vector.extract_strided_slice %857 {offsets = [0, 64], sizes = [2, 32], strides = [1, 1]} : vector<2x128xf32> to vector<2x32xf32>
    %896 = math.tanh %895 : vector<2x32xf32>
    %897 = vector.extract_strided_slice %857 {offsets = [0, 96], sizes = [2, 32], strides = [1, 1]} : vector<2x128xf32> to vector<2x32xf32>
    %898 = arith.negf %897 : vector<2x32xf32>
    %899 = math.exp %898 : vector<2x32xf32>
    %cst_215 = arith.constant 1.000000e+00 : f32
    %900 = vector.broadcast %cst_215 : f32 to vector<2x32xf32>
    %901 = arith.addf %900, %899 : vector<2x32xf32>
    %902 = arith.divf %900, %901 : vector<2x32xf32>
    %903 = arith.mulf %894, %845 : vector<2x32xf32>
    %904 = arith.mulf %888, %896 : vector<2x32xf32>
    %905 = arith.addf %903, %904 : vector<2x32xf32>
    %906 = math.tanh %905 : vector<2x32xf32>
    %907 = arith.mulf %902, %906 : vector<2x32xf32>
    %c28_216 = arith.constant 28 : index
    %c0_217 = arith.constant 0 : index
    %908 = vector.load %arg5[%c28_216, %c0_217] : memref<32x64xf32, #tpu.memory_space<vmem>>, vector<2x32xf32>
    tpu.vector_store %arg5[%c28_216, %c0_217], %882 {strides = array<i32>} : memref<32x64xf32, #tpu.memory_space<vmem>>, vector<2x32xf32>,
    %c2_218 = arith.constant 2 : index
    %c32_219 = arith.constant 32 : index
    %909 = vector.load %arg5[%c2_218, %c32_219] : memref<32x64xf32, #tpu.memory_space<vmem>>, vector<2x32xf32>
    tpu.vector_store %arg5[%c2_218, %c32_219], %907 {strides = array<i32>} : memref<32x64xf32, #tpu.memory_space<vmem>>, vector<2x32xf32>,
    %910 = tpu.concatenate %882, %907 in 1 : vector<2x32xf32>, vector<2x32xf32> -> vector<2x64xf32>
    %cst_220 = arith.constant dense<0.000000e+00> : vector<2x256xf32>
    %911 = tpu.matmul %910, %7, %cst_220 {dimension_numbers = #tpu.dot_dimension_numbers<[1], [0], [0], [1], [0, 0, 1, 1], [], []>} : vector<2x64xf32>, vector<64x256xf32>, vector<2x256xf32> -> vector<2x256xf32>
    %c30_221 = arith.constant 30 : index
    %c0_222 = arith.constant 0 : index
    %912 = vector.load %arg6[%c30_221, %c0_222] : memref<32x256xf32, #tpu.memory_space<vmem>>, vector<2x128xf32>
    %913 = vector.extract_strided_slice %911 {offsets = [0, 0], sizes = [2, 128], strides = [1, 1]} : vector<2x256xf32> to vector<2x128xf32>
    %914 = arith.addf %912, %913 : vector<2x128xf32>
    %c0_223 = arith.constant 0 : index
    %c128_224 = arith.constant 128 : index
    %915 = vector.load %arg6[%c0_223, %c128_224] : memref<32x256xf32, #tpu.memory_space<vmem>>, vector<2x128xf32>
    %916 = vector.extract_strided_slice %911 {offsets = [0, 128], sizes = [2, 128], strides = [1, 1]} : vector<2x256xf32> to vector<2x128xf32>
    %917 = arith.addf %915, %916 : vector<2x128xf32>
    %918 = vector.extract_strided_slice %914 {offsets = [0, 0], sizes = [2, 32], strides = [1, 1]} : vector<2x128xf32> to vector<2x32xf32>
    %919 = arith.negf %918 : vector<2x32xf32>
    %920 = math.exp %919 : vector<2x32xf32>
    %cst_225 = arith.constant 1.000000e+00 : f32
    %921 = vector.broadcast %cst_225 : f32 to vector<2x32xf32>
    %922 = arith.addf %921, %920 : vector<2x32xf32>
    %923 = arith.divf %921, %922 : vector<2x32xf32>
    %924 = vector.extract_strided_slice %914 {offsets = [0, 32], sizes = [2, 32], strides = [1, 1]} : vector<2x128xf32> to vector<2x32xf32>
    %925 = arith.negf %924 : vector<2x32xf32>
    %926 = math.exp %925 : vector<2x32xf32>
    %cst_226 = arith.constant 1.000000e+00 : f32
    %927 = vector.broadcast %cst_226 : f32 to vector<2x32xf32>
    %928 = arith.addf %927, %926 : vector<2x32xf32>
    %929 = arith.divf %927, %928 : vector<2x32xf32>
    %930 = vector.extract_strided_slice %914 {offsets = [0, 64], sizes = [2, 32], strides = [1, 1]} : vector<2x128xf32> to vector<2x32xf32>
    %931 = math.tanh %930 : vector<2x32xf32>
    %932 = vector.extract_strided_slice %914 {offsets = [0, 96], sizes = [2, 32], strides = [1, 1]} : vector<2x128xf32> to vector<2x32xf32>
    %933 = arith.negf %932 : vector<2x32xf32>
    %934 = math.exp %933 : vector<2x32xf32>
    %cst_227 = arith.constant 1.000000e+00 : f32
    %935 = vector.broadcast %cst_227 : f32 to vector<2x32xf32>
    %936 = arith.addf %935, %934 : vector<2x32xf32>
    %937 = arith.divf %935, %936 : vector<2x32xf32>
    %938 = arith.mulf %929, %880 : vector<2x32xf32>
    %939 = arith.mulf %923, %931 : vector<2x32xf32>
    %940 = arith.addf %938, %939 : vector<2x32xf32>
    %941 = math.tanh %940 : vector<2x32xf32>
    %942 = arith.mulf %937, %941 : vector<2x32xf32>
    %943 = vector.extract_strided_slice %917 {offsets = [0, 0], sizes = [2, 32], strides = [1, 1]} : vector<2x128xf32> to vector<2x32xf32>
    %944 = arith.negf %943 : vector<2x32xf32>
    %945 = math.exp %944 : vector<2x32xf32>
    %cst_228 = arith.constant 1.000000e+00 : f32
    %946 = vector.broadcast %cst_228 : f32 to vector<2x32xf32>
    %947 = arith.addf %946, %945 : vector<2x32xf32>
    %948 = arith.divf %946, %947 : vector<2x32xf32>
    %949 = vector.extract_strided_slice %917 {offsets = [0, 32], sizes = [2, 32], strides = [1, 1]} : vector<2x128xf32> to vector<2x32xf32>
    %950 = arith.negf %949 : vector<2x32xf32>
    %951 = math.exp %950 : vector<2x32xf32>
    %cst_229 = arith.constant 1.000000e+00 : f32
    %952 = vector.broadcast %cst_229 : f32 to vector<2x32xf32>
    %953 = arith.addf %952, %951 : vector<2x32xf32>
    %954 = arith.divf %952, %953 : vector<2x32xf32>
    %955 = vector.extract_strided_slice %917 {offsets = [0, 64], sizes = [2, 32], strides = [1, 1]} : vector<2x128xf32> to vector<2x32xf32>
    %956 = math.tanh %955 : vector<2x32xf32>
    %957 = vector.extract_strided_slice %917 {offsets = [0, 96], sizes = [2, 32], strides = [1, 1]} : vector<2x128xf32> to vector<2x32xf32>
    %958 = arith.negf %957 : vector<2x32xf32>
    %959 = math.exp %958 : vector<2x32xf32>
    %cst_230 = arith.constant 1.000000e+00 : f32
    %960 = vector.broadcast %cst_230 : f32 to vector<2x32xf32>
    %961 = arith.addf %960, %959 : vector<2x32xf32>
    %962 = arith.divf %960, %961 : vector<2x32xf32>
    %963 = arith.mulf %954, %905 : vector<2x32xf32>
    %964 = arith.mulf %948, %956 : vector<2x32xf32>
    %965 = arith.addf %963, %964 : vector<2x32xf32>
    %966 = math.tanh %965 : vector<2x32xf32>
    %967 = arith.mulf %962, %966 : vector<2x32xf32>
    %c30_231 = arith.constant 30 : index
    %c0_232 = arith.constant 0 : index
    %968 = vector.load %arg5[%c30_231, %c0_232] : memref<32x64xf32, #tpu.memory_space<vmem>>, vector<2x32xf32>
    tpu.vector_store %arg5[%c30_231, %c0_232], %942 {strides = array<i32>} : memref<32x64xf32, #tpu.memory_space<vmem>>, vector<2x32xf32>,
    %c0_233 = arith.constant 0 : index
    %c32_234 = arith.constant 32 : index
    %969 = vector.load %arg5[%c0_233, %c32_234] : memref<32x64xf32, #tpu.memory_space<vmem>>, vector<2x32xf32>
    tpu.vector_store %arg5[%c0_233, %c32_234], %967 {strides = array<i32>} : memref<32x64xf32, #tpu.memory_space<vmem>>, vector<2x32xf32>,
    return
  }
  func.func @transform_0(%arg0: i32) -> (i32, i32) {
    %c0_i32 = arith.constant 0 : i32
    %c0_i32_0 = arith.constant 0 : i32
    %c0_i32_1 = arith.constant 0 : i32
    return %c0_i32, %c0_i32_0 : i32, i32
  }
  func.func @transform_1(%arg0: i32) -> (i32, i32) {
    %c0_i32 = arith.constant 0 : i32
    %c0_i32_0 = arith.constant 0 : i32
    %c0_i32_1 = arith.constant 0 : i32
    return %c0_i32, %c0_i32_0 : i32, i32
  }
  func.func @transform_2(%arg0: i32) -> (i32, i32) {
    %c0_i32 = arith.constant 0 : i32
    %c0_i32_0 = arith.constant 0 : i32
    %c0_i32_1 = arith.constant 0 : i32
    return %c0_i32, %c0_i32_0 : i32, i32
  }
  func.func @transform_3(%arg0: i32) -> (i32, i32) {
    %c0_i32 = arith.constant 0 : i32
    %c0_i32_0 = arith.constant 0 : i32
    %c0_i32_1 = arith.constant 0 : i32
    return %c0_i32, %c0_i32_0 : i32, i32
  }
  func.func @transform_4(%arg0: i32) -> (i32, i32) {
    %c0_i32 = arith.constant 0 : i32
    %c0_i32_0 = arith.constant 0 : i32
    %c0_i32_1 = arith.constant 0 : i32
    return %c0_i32, %c0_i32_0 : i32, i32
  }
}

module attributes {stable_mosaic.version = 11 : i64} {
  func.func @_se_mlp_head_kernel(%arg0: i32, %arg1: memref<32x64xf32, #tpu.memory_space<vmem>>, %arg2: memref<64x8xf32, #tpu.memory_space<vmem>>, %arg3: memref<1x8xf32, #tpu.memory_space<vmem>>, %arg4: memref<8x64xf32, #tpu.memory_space<vmem>>, %arg5: memref<1x64xf32, #tpu.memory_space<vmem>>, %arg6: memref<64x32xf32, #tpu.memory_space<vmem>>, %arg7: memref<1x32xf32, #tpu.memory_space<vmem>>, %arg8: memref<32x2xf32, #tpu.memory_space<vmem>>, %arg9: memref<1x2xf32, #tpu.memory_space<vmem>>, %arg10: memref<32x2xf32, #tpu.memory_space<vmem>>) attributes {dimension_semantics = [#tpu.dimension_semantics<arbitrary>], iteration_bounds = array<i64: 1>, scalar_prefetch = 0 : i64, scratch_operands = 0 : i64, tpu.core_type = #tpu.core_type<tc>, window_params = [{pipeline_mode = #tpu.pipeline_mode<synchronous>, transform_indices = @transform_0, window_bounds = array<i64: 32, 64>}, {pipeline_mode = #tpu.pipeline_mode<synchronous>, transform_indices = @transform_1, window_bounds = array<i64: 64, 8>}, {pipeline_mode = #tpu.pipeline_mode<synchronous>, transform_indices = @transform_2, window_bounds = array<i64: 1, 8>}, {pipeline_mode = #tpu.pipeline_mode<synchronous>, transform_indices = @transform_3, window_bounds = array<i64: 8, 64>}, {pipeline_mode = #tpu.pipeline_mode<synchronous>, transform_indices = @transform_4, window_bounds = array<i64: 1, 64>}, {pipeline_mode = #tpu.pipeline_mode<synchronous>, transform_indices = @transform_5, window_bounds = array<i64: 64, 32>}, {pipeline_mode = #tpu.pipeline_mode<synchronous>, transform_indices = @transform_6, window_bounds = array<i64: 1, 32>}, {pipeline_mode = #tpu.pipeline_mode<synchronous>, transform_indices = @transform_7, window_bounds = array<i64: 32, 2>}, {pipeline_mode = #tpu.pipeline_mode<synchronous>, transform_indices = @transform_8, window_bounds = array<i64: 1, 2>}, {pipeline_mode = #tpu.pipeline_mode<synchronous>, transform_indices = @transform_9, window_bounds = array<i64: 32, 2>}]} {
    %c0 = arith.constant 0 : index
    %c0_0 = arith.constant 0 : index
    %0 = vector.load %arg1[%c0, %c0_0] : memref<32x64xf32, #tpu.memory_space<vmem>>, vector<32x64xf32>
    %1 = tpu.iota {dimensions = array<i32: 1>} : vector<2x32xi32>
    %c2_i32 = arith.constant 2 : i32
    %c0_i32 = arith.constant 0 : i32
    %2 = arith.cmpi eq, %c2_i32, %c0_i32 : i32
    %c1_i32 = arith.constant 1 : i32
    %3 = arith.select %2, %c1_i32, %c2_i32 : i32
    %4 = vector.broadcast %3 : i32 to vector<2x32xi32>
    %5 = arith.remsi %1, %4 : vector<2x32xi32>
    %c0_i32_1 = arith.constant 0 : i32
    %6 = vector.broadcast %c0_i32_1 : i32 to vector<2x32xi32>
    %7 = arith.cmpi ne, %5, %6 : vector<2x32xi32>
    %c0_i32_2 = arith.constant 0 : i32
    %8 = vector.broadcast %c0_i32_2 : i32 to vector<2x32xi32>
    %9 = arith.cmpi slt, %5, %8 : vector<2x32xi32>
    %c0_i32_3 = arith.constant 0 : i32
    %10 = arith.cmpi slt, %3, %c0_i32_3 : i32
    %11 = vector.broadcast %10 : i1 to vector<2x32xi1>
    %12 = vector.broadcast %11 : vector<2x32xi1> to vector<2x32xi1>
    %13 = arith.xori %9, %12 : vector<2x32xi1>
    %14 = arith.andi %13, %7 : vector<2x32xi1>
    %15 = vector.broadcast %3 : i32 to vector<2x32xi32>
    %16 = arith.addi %5, %15 : vector<2x32xi32>
    %17 = arith.select %14, %16, %5 : vector<2x32xi1>, vector<2x32xi32>
    %18 = tpu.iota {dimensions = array<i32: 0>} : vector<2x32xi32>
    %19 = arith.cmpi eq, %17, %18 : vector<2x32xi32>
    %20 = arith.extui %19 : vector<2x32xi1> to vector<2x32xi32>
    %21 = arith.sitofp %20 : vector<2x32xi32> to vector<2x32xf32>
    %cst = arith.constant 6.250000e-02 : f32
    %22 = vector.broadcast %cst : f32 to vector<2x32xf32>
    %23 = arith.mulf %21, %22 : vector<2x32xf32>
    %cst_4 = arith.constant dense<0.000000e+00> : vector<2x64xf32>
    %24 = tpu.matmul %23, %0, %cst_4 {dimension_numbers = #tpu.dot_dimension_numbers<[1], [0], [0], [1], [0, 0, 1, 1], [], []>} : vector<2x32xf32>, vector<32x64xf32>, vector<2x64xf32> -> vector<2x64xf32>
    %c0_5 = arith.constant 0 : index
    %c0_6 = arith.constant 0 : index
    %25 = vector.load %arg2[%c0_5, %c0_6] : memref<64x8xf32, #tpu.memory_space<vmem>>, vector<64x8xf32>
    %cst_7 = arith.constant dense<0.000000e+00> : vector<2x8xf32>
    %26 = tpu.matmul %24, %25, %cst_7 {dimension_numbers = #tpu.dot_dimension_numbers<[1], [0], [0], [1], [0, 0, 1, 1], [], []>} : vector<2x64xf32>, vector<64x8xf32>, vector<2x8xf32> -> vector<2x8xf32>
    %c0_8 = arith.constant 0 : index
    %c0_9 = arith.constant 0 : index
    %27 = vector.load %arg3[%c0_8, %c0_9] : memref<1x8xf32, #tpu.memory_space<vmem>>, vector<1x8xf32>
    %28 = vector.broadcast %27 : vector<1x8xf32> to vector<2x8xf32>
    %29 = arith.addf %26, %28 : vector<2x8xf32>
    %cst_10 = arith.constant 0.000000e+00 : f32
    %30 = vector.broadcast %cst_10 : f32 to vector<2x8xf32>
    %31 = arith.maximumf %29, %30 : vector<2x8xf32>
    %c0_11 = arith.constant 0 : index
    %c0_12 = arith.constant 0 : index
    %32 = vector.load %arg4[%c0_11, %c0_12] : memref<8x64xf32, #tpu.memory_space<vmem>>, vector<8x64xf32>
    %cst_13 = arith.constant dense<0.000000e+00> : vector<2x64xf32>
    %33 = tpu.matmul %31, %32, %cst_13 {dimension_numbers = #tpu.dot_dimension_numbers<[1], [0], [0], [1], [0, 0, 1, 1], [], []>} : vector<2x8xf32>, vector<8x64xf32>, vector<2x64xf32> -> vector<2x64xf32>
    %c0_14 = arith.constant 0 : index
    %c0_15 = arith.constant 0 : index
    %34 = vector.load %arg5[%c0_14, %c0_15] : memref<1x64xf32, #tpu.memory_space<vmem>>, vector<1x64xf32>
    %35 = vector.broadcast %34 : vector<1x64xf32> to vector<2x64xf32>
    %36 = arith.addf %33, %35 : vector<2x64xf32>
    %37 = arith.negf %36 : vector<2x64xf32>
    %38 = math.exp %37 : vector<2x64xf32>
    %cst_16 = arith.constant 1.000000e+00 : f32
    %39 = vector.broadcast %cst_16 : f32 to vector<2x64xf32>
    %40 = arith.addf %39, %38 : vector<2x64xf32>
    %41 = arith.divf %39, %40 : vector<2x64xf32>
    %42 = tpu.iota {dimensions = array<i32: 0>} : vector<32x2xi32>
    %c2_i32_17 = arith.constant 2 : i32
    %c0_i32_18 = arith.constant 0 : i32
    %43 = arith.cmpi eq, %c2_i32_17, %c0_i32_18 : i32
    %c1_i32_19 = arith.constant 1 : i32
    %44 = arith.select %43, %c1_i32_19, %c2_i32_17 : i32
    %45 = vector.broadcast %44 : i32 to vector<32x2xi32>
    %46 = arith.remsi %42, %45 : vector<32x2xi32>
    %c0_i32_20 = arith.constant 0 : i32
    %47 = vector.broadcast %c0_i32_20 : i32 to vector<32x2xi32>
    %48 = arith.cmpi ne, %46, %47 : vector<32x2xi32>
    %c0_i32_21 = arith.constant 0 : i32
    %49 = vector.broadcast %c0_i32_21 : i32 to vector<32x2xi32>
    %50 = arith.cmpi slt, %46, %49 : vector<32x2xi32>
    %c0_i32_22 = arith.constant 0 : i32
    %51 = arith.cmpi slt, %44, %c0_i32_22 : i32
    %52 = vector.broadcast %51 : i1 to vector<32x2xi1>
    %53 = vector.broadcast %52 : vector<32x2xi1> to vector<32x2xi1>
    %54 = arith.xori %50, %53 : vector<32x2xi1>
    %55 = arith.andi %54, %48 : vector<32x2xi1>
    %56 = vector.broadcast %44 : i32 to vector<32x2xi32>
    %57 = arith.addi %46, %56 : vector<32x2xi32>
    %58 = arith.select %55, %57, %46 : vector<32x2xi1>, vector<32x2xi32>
    %59 = tpu.iota {dimensions = array<i32: 1>} : vector<32x2xi32>
    %60 = arith.cmpi eq, %58, %59 : vector<32x2xi32>
    %61 = arith.extui %60 : vector<32x2xi1> to vector<32x2xi32>
    %62 = arith.sitofp %61 : vector<32x2xi32> to vector<32x2xf32>
    %cst_23 = arith.constant dense<0.000000e+00> : vector<32x64xf32>
    %63 = tpu.matmul %62, %41, %cst_23 {dimension_numbers = #tpu.dot_dimension_numbers<[1], [0], [0], [1], [0, 0, 1, 1], [], []>} : vector<32x2xf32>, vector<2x64xf32>, vector<32x64xf32> -> vector<32x64xf32>
    %64 = arith.mulf %0, %63 : vector<32x64xf32>
    %c0_24 = arith.constant 0 : index
    %c0_25 = arith.constant 0 : index
    %65 = vector.load %arg6[%c0_24, %c0_25] : memref<64x32xf32, #tpu.memory_space<vmem>>, vector<64x32xf32>
    %cst_26 = arith.constant dense<0.000000e+00> : vector<32x32xf32>
    %66 = tpu.matmul %64, %65, %cst_26 {dimension_numbers = #tpu.dot_dimension_numbers<[1], [0], [0], [1], [0, 0, 1, 1], [], []>} : vector<32x64xf32>, vector<64x32xf32>, vector<32x32xf32> -> vector<32x32xf32>
    %c0_27 = arith.constant 0 : index
    %c0_28 = arith.constant 0 : index
    %67 = vector.load %arg7[%c0_27, %c0_28] : memref<1x32xf32, #tpu.memory_space<vmem>>, vector<1x32xf32>
    %68 = vector.broadcast %67 : vector<1x32xf32> to vector<32x32xf32>
    %69 = arith.addf %66, %68 : vector<32x32xf32>
    %cst_29 = arith.constant 0.000000e+00 : f32
    %70 = vector.broadcast %cst_29 : f32 to vector<32x32xf32>
    %71 = arith.maximumf %69, %70 : vector<32x32xf32>
    %c0_30 = arith.constant 0 : index
    %c0_31 = arith.constant 0 : index
    %72 = vector.load %arg8[%c0_30, %c0_31] : memref<32x2xf32, #tpu.memory_space<vmem>>, vector<32x2xf32>
    %cst_32 = arith.constant dense<0.000000e+00> : vector<32x2xf32>
    %73 = tpu.matmul %71, %72, %cst_32 {dimension_numbers = #tpu.dot_dimension_numbers<[1], [0], [0], [1], [0, 0, 1, 1], [], []>} : vector<32x32xf32>, vector<32x2xf32>, vector<32x2xf32> -> vector<32x2xf32>
    %c0_33 = arith.constant 0 : index
    %c0_34 = arith.constant 0 : index
    %74 = vector.load %arg9[%c0_33, %c0_34] : memref<1x2xf32, #tpu.memory_space<vmem>>, vector<1x2xf32>
    %75 = vector.broadcast %74 : vector<1x2xf32> to vector<32x2xf32>
    %76 = arith.addf %73, %75 : vector<32x2xf32>
    %c0_35 = arith.constant 0 : index
    %c0_36 = arith.constant 0 : index
    %77 = vector.load %arg10[%c0_35, %c0_36] : memref<32x2xf32, #tpu.memory_space<vmem>>, vector<32x2xf32>
    tpu.vector_store %arg10[%c0_35, %c0_36], %76 {strides = array<i32>} : memref<32x2xf32, #tpu.memory_space<vmem>>, vector<32x2xf32>,
    return
  }
  func.func @transform_0(%arg0: i32) -> (i32, i32) {
    %c0_i32 = arith.constant 0 : i32
    %c0_i32_0 = arith.constant 0 : i32
    %c0_i32_1 = arith.constant 0 : i32
    return %c0_i32, %c0_i32_0 : i32, i32
  }
  func.func @transform_1(%arg0: i32) -> (i32, i32) {
    %c0_i32 = arith.constant 0 : i32
    %c0_i32_0 = arith.constant 0 : i32
    %c0_i32_1 = arith.constant 0 : i32
    return %c0_i32, %c0_i32_0 : i32, i32
  }
  func.func @transform_2(%arg0: i32) -> (i32, i32) {
    %c0_i32 = arith.constant 0 : i32
    %c0_i32_0 = arith.constant 0 : i32
    %c0_i32_1 = arith.constant 0 : i32
    return %c0_i32, %c0_i32_0 : i32, i32
  }
  func.func @transform_3(%arg0: i32) -> (i32, i32) {
    %c0_i32 = arith.constant 0 : i32
    %c0_i32_0 = arith.constant 0 : i32
    %c0_i32_1 = arith.constant 0 : i32
    return %c0_i32, %c0_i32_0 : i32, i32
  }
  func.func @transform_4(%arg0: i32) -> (i32, i32) {
    %c0_i32 = arith.constant 0 : i32
    %c0_i32_0 = arith.constant 0 : i32
    %c0_i32_1 = arith.constant 0 : i32
    return %c0_i32, %c0_i32_0 : i32, i32
  }
  func.func @transform_5(%arg0: i32) -> (i32, i32) {
    %c0_i32 = arith.constant 0 : i32
    %c0_i32_0 = arith.constant 0 : i32
    %c0_i32_1 = arith.constant 0 : i32
    return %c0_i32, %c0_i32_0 : i32, i32
  }
  func.func @transform_6(%arg0: i32) -> (i32, i32) {
    %c0_i32 = arith.constant 0 : i32
    %c0_i32_0 = arith.constant 0 : i32
    %c0_i32_1 = arith.constant 0 : i32
    return %c0_i32, %c0_i32_0 : i32, i32
  }
  func.func @transform_7(%arg0: i32) -> (i32, i32) {
    %c0_i32 = arith.constant 0 : i32
    %c0_i32_0 = arith.constant 0 : i32
    %c0_i32_1 = arith.constant 0 : i32
    return %c0_i32, %c0_i32_0 : i32, i32
  }
  func.func @transform_8(%arg0: i32) -> (i32, i32) {
    %c0_i32 = arith.constant 0 : i32
    %c0_i32_0 = arith.constant 0 : i32
    %c0_i32_1 = arith.constant 0 : i32
    return %c0_i32, %c0_i32_0 : i32, i32
  }
  func.func @transform_9(%arg0: i32) -> (i32, i32) {
    %c0_i32 = arith.constant 0 : i32
    %c0_i32_0 = arith.constant 0 : i32
    %c0_i32_1 = arith.constant 0 : i32
    return %c0_i32, %c0_i32_0 : i32, i32
  }
}

</mosaic_0001>

<llo_original>
// kernel: rr_lstm_forward.5
$region0: #{rr_lstm_forward.5}
  #allocation0 [shape = 'u32[]', space=smem, size = 0x4, offset = 0x4, fixed_abs, tag = 'smem constant byte address 0x4 - core index']
  #allocation1 [shape = 'u32[144,128]{1,0:T(1,128)}', space=vmem, size = 0x12000, scoped, tag = 'internal scratch']
  %s0 = inlined_call_operand.vmem [shape: f32[32,64], index: 0, kind: input, shape index: {}]
  %s1 = inlined_call_operand.vmem [shape: f32[64,8], index: 1, kind: input, shape index: {}]
  %s2 = inlined_call_operand.vmem [shape: f32[1,8], index: 2, kind: input, shape index: {}]
  %s3 = inlined_call_operand.vmem [shape: f32[8,64], index: 3, kind: input, shape index: {}]
  %s4 = inlined_call_operand.vmem [shape: f32[1,64], index: 4, kind: input, shape index: {}]
  %s5 = inlined_call_operand.vmem [shape: f32[64,32], index: 5, kind: input, shape index: {}]
  %s6 = inlined_call_operand.vmem [shape: f32[1,32], index: 6, kind: input, shape index: {}]
  %s7 = inlined_call_operand.vmem [shape: f32[32,2], index: 7, kind: input, shape index: {}]
  %s8 = inlined_call_operand.vmem [shape: f32[1,2], index: 8, kind: input, shape index: {}]
  %s9 = inlined_call_operand.vmem [shape: f32[32,2], index: 9, kind: output, shape index: {}]
  %s10 = sld [smem:[#allocation0]]
  $region46: #{rr_lstm_forward.5} parent=0
    _
  %s12 = ssub.s32 1, %s10
  %s13 = scalar_select 0, %s12, %s10
  // Predicated region
  $region2: #{rr_lstm_forward.5} parent=0 // pred_check
    _
  $region3: #{rr_lstm_forward.5} parent=0 // pred_check_branch
    %15 = sbr.rel (0) target = $region5
  $region4: #{rr_lstm_forward.5} parent=0 // pred_region
    _
  $region5: #{rr_lstm_forward.5} parent=0 // pred_fallthru
    _
  // Predicated region
  $region6: #{rr_lstm_forward.5} parent=0 // pred_check
    _
  $region7: #{rr_lstm_forward.5} parent=0 // pred_check_branch
    %17 = sbr.rel (0) target = $region9
  $region8: #{rr_lstm_forward.5} parent=0 // pred_region
    _
  $region9: #{rr_lstm_forward.5} parent=0 // pred_fallthru
    _
  // Predicated region
  $region10: #{rr_lstm_forward.5} parent=0 // pred_check
    _
  $region11: #{rr_lstm_forward.5} parent=0 // pred_check_branch
    %19 = sbr.rel (0) target = $region13
  $region12: #{rr_lstm_forward.5} parent=0 // pred_region
    _
  $region13: #{rr_lstm_forward.5} parent=0 // pred_fallthru
    _
  // Predicated region
  $region14: #{rr_lstm_forward.5} parent=0 // pred_check
    _
  $region15: #{rr_lstm_forward.5} parent=0 // pred_check_branch
    %21 = sbr.rel (0) target = $region17
  $region16: #{rr_lstm_forward.5} parent=0 // pred_region
    _
  $region17: #{rr_lstm_forward.5} parent=0 // pred_fallthru
    _
  // Predicated region
  $region18: #{rr_lstm_forward.5} parent=0 // pred_check
    _
  $region19: #{rr_lstm_forward.5} parent=0 // pred_check_branch
    %23 = sbr.rel (0) target = $region21
  $region20: #{rr_lstm_forward.5} parent=0 // pred_region
    _
  $region21: #{rr_lstm_forward.5} parent=0 // pred_fallthru
    _
  // Predicated region
  $region22: #{rr_lstm_forward.5} parent=0 // pred_check
    _
  $region23: #{rr_lstm_forward.5} parent=0 // pred_check_branch
    %25 = sbr.rel (0) target = $region25
  $region24: #{rr_lstm_forward.5} parent=0 // pred_region
    _
  $region25: #{rr_lstm_forward.5} parent=0 // pred_fallthru
    _
  // Predicated region
  $region26: #{rr_lstm_forward.5} parent=0 // pred_check
    _
  $region27: #{rr_lstm_forward.5} parent=0 // pred_check_branch
    %27 = sbr.rel (0) target = $region29
  $region28: #{rr_lstm_forward.5} parent=0 // pred_region
    _
  $region29: #{rr_lstm_forward.5} parent=0 // pred_fallthru
    _
  // Predicated region
  $region30: #{rr_lstm_forward.5} parent=0 // pred_check
    _
  $region31: #{rr_lstm_forward.5} parent=0 // pred_check_branch
    %29 = sbr.rel (0) target = $region33
  $region32: #{rr_lstm_forward.5} parent=0 // pred_region
    _
  $region33: #{rr_lstm_forward.5} parent=0 // pred_fallthru
    _
  // Predicated region
  $region34: #{rr_lstm_forward.5} parent=0 // pred_check
    _
  $region35: #{rr_lstm_forward.5} parent=0 // pred_check_branch
    %31 = sbr.rel (0) target = $region37
  $region36: #{rr_lstm_forward.5} parent=0 // pred_region
    _
  $region37: #{rr_lstm_forward.5} parent=0 // pred_fallthru
    _
  %v32 = vld [vmem:[%s0] sm:$0xff]
  %v33 = vld [vmem:[%s0 + $0x8] sm:$0xff]
  %v34 = vld [vmem:[%s0 + $0x10] sm:$0xff]
  %v35 = vld [vmem:[%s0 + $0x18] sm:$0xff]
  %v36 = vlaneseq
  %v37 = vand.u32 %v36, 127
  %vm38 = vcmp.lt.s32.totalorder %v37, 0
  %v39 = vsub.s32 0, %v37
  %v40 = vsel %vm38, %v39, %v37
  %v41 = vshrl.u32 %v40, 1
  %v42 = vand.u32 %v40, 1
  %v43 = vsub.s32 0, %v42
  %v44 = vsel %vm38, %v43, %v42
  %vm45 = vcmp.ne.s32.totalorder %v44, 0
  %vm46 = vcmp.lt.s32.totalorder %v44, 0
  %vm47 = vmand %vm46, %vm45
  %v48 = vadd.s32 %v44, 2
  %v49 = vsel %vm47, %v48, %v44
  %v50 = vlaneseq
  %v51 = vshrl.u32 %v50, 7
  %vm52 = vcmp.eq.s32.totalorder %v49, %v51
  %v53 = vsel %vm52, 1, 0
  %v54 = vcvt.s32.f32 %v53
  %v55 = vmul.f32 %v54, 0.0625
  %vm56 = vcmask 261120
  %v58 = vsel %vm56, %v55, 0
  %60 = vmatprep.subr.mxu0 0.0
  %61 = vmatpush1.msra.mxu0 %v32
  %62 = vmatprep.subr.mxu0 0.0
  %63 = vmatpush1.msra.mxu0 %v33
  %64 = vmatprep.subr.mxu0 0.0
  %65 = vmatpush1.msra.mxu0 %v34
  %66 = vmatprep.subr.mxu0 0.0
  %67 = vmatpush1.msra.mxu0 %v35
  %68 = vmatprep.subr.mxu0 0.0
  %69 = vmatpush1.msra.mxu0 0.0
  %70 = vmatprep.subr.mxu0 0.0
  %71 = vmatpush1.msra.mxu0 0.0
  %72 = vmatprep.subr.mxu0 0.0
  %73 = vmatpush1.msra.mxu0 0.0
  %74 = vmatprep.subr.mxu0 0.0
  %75 = vmatpush1.msra.mxu0 0.0
  %76 = vmatprep.subr.mxu0 0.0
  %77 = vmatpush1.msra.mxu0 0.0
  %78 = vmatprep.subr.mxu0 0.0
  %79 = vmatpush1.msra.mxu0 0.0
  %80 = vmatprep.subr.mxu0 0.0
  %81 = vmatpush1.msra.mxu0 0.0
  %82 = vmatprep.subr.mxu0 0.0
  %83 = vmatpush1.msra.mxu0 0.0
  %84 = vmatprep.subr.mxu0 0.0
  %85 = vmatpush1.msra.mxu0 0.0
  %86 = vmatprep.subr.mxu0 0.0
  %87 = vmatpush1.msra.mxu0 0.0
  %88 = vmatprep.subr.mxu0 0.0
  %89 = vmatpush1.msra.mxu0 0.0
  %90 = vmatprep.subr.mxu0 0.0
  %91 = vmatpush1.msra.mxu0 0.0
  %92 = vmatprep.subr.mxu0 0.0
  %93 = vmatpush1.msra.mxu0 0.0
  %94 = vmatprep.subr.mxu0 0.0
  %95 = vmatpush1.msra.mxu0 0.0
  %96 = vmatprep.subr.mxu0 0.0
  %97 = vmatpush1.msra.mxu0 0.0
  %98 = vmatprep.subr.mxu0 0.0
  %99 = vmatpush1.msra.mxu0 0.0
  %100 = vmatprep.subr.mxu0 0.0
  %101 = vmatpush1.msra.mxu0 0.0
  %102 = vmatprep.subr.mxu0 0.0
  %103 = vmatpush1.msra.mxu0 0.0
  %104 = vmatprep.subr.mxu0 0.0
  %105 = vmatpush1.msra.mxu0 0.0
  %106 = vmatprep.subr.mxu0 0.0
  %107 = vmatpush1.msra.mxu0 0.0
  %108 = vmatprep.subr.mxu0 0.0
  %109 = vmatpush1.msra.mxu0 0.0
  %110 = vmatprep.subr.mxu0 0.0
  %111 = vmatpush1.msra.mxu0 0.0
  %112 = vmatprep.subr.mxu0 0.0
  %113 = vmatpush1.msra.mxu0 0.0
  %114 = vmatprep.subr.mxu0 0.0
  %115 = vmatpush1.msra.mxu0 0.0
  %116 = vmatprep.subr.mxu0 0.0
  %117 = vmatpush1.msra.mxu0 0.0
  %118 = vmatprep.subr.mxu0 0.0
  %119 = vmatpush1.msra.mxu0 0.0
  %120 = vmatprep.subr.mxu0 0.0
  %121 = vmatpush1.msra.mxu0 0.0
  %122 = vmatprep.subr.mxu0 0.0
  %123 = vmatpush1.msra.mxu0 0.0
  %124 = vmatprep.mubr.f32.mxu0 0.0
  %125 = vmatmul.mubr.f32.gmra.mrb[0].mxu0 %v58
  %v126 = vpop.f32.mrb[0].mxu0
  %v127 = vadd.f32 0.0, %v126
  %v128 = vpop.f32.mrb[0].mxu0
  %129 = vdwg.mxu0
  %v130 = vld [vmem:[%s1] sm:$0xff]
  %v131 = vld [vmem:[%s1 + $0x8] sm:$0xff]
  %v132 = vld [vmem:[%s1 + $0x10] sm:$0xff]
  %v133 = vld [vmem:[%s1 + $0x18] sm:$0xff]
  %v134 = vld [vmem:[%s1 + $0x20] sm:$0xff]
  %v135 = vld [vmem:[%s1 + $0x28] sm:$0xff]
  %v136 = vld [vmem:[%s1 + $0x30] sm:$0xff]
  %v137 = vld [vmem:[%s1 + $0x38] sm:$0xff]
  %v138 = vld [vmem:[%s2] sm:$0x1]
  %v140 = vlaneseq
  %v141 = vshrl.u32 %v140, 7
  %v142 = vsub.s32 0, %v141
  %v143 = vrot.slane %v138, %v142
  %vm145 = vcmask 523264
  %v147 = vsel %vm145, %v127, 0
  %149 = vmatprep.subr.mxu0 0.0
  %150 = vmatpush1.msra.mxu0 %v130
  %151 = vmatprep.subr.mxu0 0.0
  %152 = vmatpush1.msra.mxu0 %v131
  %153 = vmatprep.subr.mxu0 0.0
  %154 = vmatpush1.msra.mxu0 %v132
  %155 = vmatprep.subr.mxu0 0.0
  %156 = vmatpush1.msra.mxu0 %v133
  %157 = vmatprep.subr.mxu0 0.0
  %158 = vmatpush1.msra.mxu0 %v134
  %159 = vmatprep.subr.mxu0 0.0
  %160 = vmatpush1.msra.mxu0 %v135
  %161 = vmatprep.subr.mxu0 0.0
  %162 = vmatpush1.msra.mxu0 %v136
  %163 = vmatprep.subr.mxu0 0.0
  %164 = vmatpush1.msra.mxu0 %v137
  %165 = vmatprep.subr.mxu0 0.0
  %166 = vmatpush1.msra.mxu0 0.0
  %167 = vmatprep.subr.mxu0 0.0
  %168 = vmatpush1.msra.mxu0 0.0
  %169 = vmatprep.subr.mxu0 0.0
  %170 = vmatpush1.msra.mxu0 0.0
  %171 = vmatprep.subr.mxu0 0.0
  %172 = vmatpush1.msra.mxu0 0.0
  %173 = vmatprep.subr.mxu0 0.0
  %174 = vmatpush1.msra.mxu0 0.0
  %175 = vmatprep.subr.mxu0 0.0
  %176 = vmatpush1.msra.mxu0 0.0
  %177 = vmatprep.subr.mxu0 0.0
  %178 = vmatpush1.msra.mxu0 0.0
  %179 = vmatprep.subr.mxu0 0.0
  %180 = vmatpush1.msra.mxu0 0.0
  %181 = vmatprep.subr.mxu0 0.0
  %182 = vmatpush1.msra.mxu0 0.0
  %183 = vmatprep.subr.mxu0 0.0
  %184 = vmatpush1.msra.mxu0 0.0
  %185 = vmatprep.subr.mxu0 0.0
  %186 = vmatpush1.msra.mxu0 0.0
  %187 = vmatprep.subr.mxu0 0.0
  %188 = vmatpush1.msra.mxu0 0.0
  %189 = vmatprep.subr.mxu0 0.0
  %190 = vmatpush1.msra.mxu0 0.0
  %191 = vmatprep.subr.mxu0 0.0
  %192 = vmatpush1.msra.mxu0 0.0
  %193 = vmatprep.subr.mxu0 0.0
  %194 = vmatpush1.msra.mxu0 0.0
  %195 = vmatprep.subr.mxu0 0.0
  %196 = vmatpush1.msra.mxu0 0.0
  %197 = vmatprep.subr.mxu0 0.0
  %198 = vmatpush1.msra.mxu0 0.0
  %199 = vmatprep.subr.mxu0 0.0
  %200 = vmatpush1.msra.mxu0 0.0
  %201 = vmatprep.subr.mxu0 0.0
  %202 = vmatpush1.msra.mxu0 0.0
  %203 = vmatprep.subr.mxu0 0.0
  %204 = vmatpush1.msra.mxu0 0.0
  %205 = vmatprep.subr.mxu0 0.0
  %206 = vmatpush1.msra.mxu0 0.0
  %207 = vmatprep.subr.mxu0 0.0
  %208 = vmatpush1.msra.mxu0 0.0
  %209 = vmatprep.subr.mxu0 0.0
  %210 = vmatpush1.msra.mxu0 0.0
  %211 = vmatprep.subr.mxu0 0.0
  %212 = vmatpush1.msra.mxu0 0.0
  %213 = vmatprep.mubr.f32.mxu0 0.0
  %214 = vmatmul.mubr.f32.gmra.mrb[0].mxu0 %v147
  %v215 = vpop.f32.mrb[0].mxu0
  %v216 = vadd.f32 %v143, %v215
  %v217 = vpop.f32.mrb[0].mxu0
  %218 = vdwg.mxu0
  %v219 = vmax.f32 %v216, 0.0
  %v220 = vld [vmem:[%s3] sm:$0xff]
  %v221 = vld [vmem:[%s4] sm:$0x1]
  %v223 = vlaneseq
  %v224 = vshrl.u32 %v223, 7
  %v225 = vsub.s32 0, %v224
  %v226 = vrot.slane %v221, %v225
  %vm228 = vcmask 64512
  %v230 = vsel %vm228, %v219, 0
  %232 = vmatprep.subr.mxu0 0.0
  %233 = vmatpush1.msra.mxu0 %v220
  %234 = vmatprep.subr.mxu0 0.0
  %235 = vmatpush1.msra.mxu0 0.0
  %236 = vmatprep.subr.mxu0 0.0
  %237 = vmatpush1.msra.mxu0 0.0
  %238 = vmatprep.subr.mxu0 0.0
  %239 = vmatpush1.msra.mxu0 0.0
  %240 = vmatprep.subr.mxu0 0.0
  %241 = vmatpush1.msra.mxu0 0.0
  %242 = vmatprep.subr.mxu0 0.0
  %243 = vmatpush1.msra.mxu0 0.0
  %244 = vmatprep.subr.mxu0 0.0
  %245 = vmatpush1.msra.mxu0 0.0
  %246 = vmatprep.subr.mxu0 0.0
  %247 = vmatpush1.msra.mxu0 0.0
  %248 = vmatprep.subr.mxu0 0.0
  %249 = vmatpush1.msra.mxu0 0.0
  %250 = vmatprep.subr.mxu0 0.0
  %251 = vmatpush1.msra.mxu0 0.0
  %252 = vmatprep.subr.mxu0 0.0
  %253 = vmatpush1.msra.mxu0 0.0
  %254 = vmatprep.subr.mxu0 0.0
  %255 = vmatpush1.msra.mxu0 0.0
  %256 = vmatprep.subr.mxu0 0.0
  %257 = vmatpush1.msra.mxu0 0.0
  %258 = vmatprep.subr.mxu0 0.0
  %259 = vmatpush1.msra.mxu0 0.0
  %260 = vmatprep.subr.mxu0 0.0
  %261 = vmatpush1.msra.mxu0 0.0
  %262 = vmatprep.subr.mxu0 0.0
  %263 = vmatpush1.msra.mxu0 0.0
  %264 = vmatprep.subr.mxu0 0.0
  %265 = vmatpush1.msra.mxu0 0.0
  %266 = vmatprep.subr.mxu0 0.0
  %267 = vmatpush1.msra.mxu0 0.0
  %268 = vmatprep.subr.mxu0 0.0
  %269 = vmatpush1.msra.mxu0 0.0
  %270 = vmatprep.subr.mxu0 0.0
  %271 = vmatpush1.msra.mxu0 0.0
  %272 = vmatprep.subr.mxu0 0.0
  %273 = vmatpush1.msra.mxu0 0.0
  %274 = vmatprep.subr.mxu0 0.0
  %275 = vmatpush1.msra.mxu0 0.0
  %276 = vmatprep.subr.mxu0 0.0
  %277 = vmatpush1.msra.mxu0 0.0
  %278 = vmatprep.subr.mxu0 0.0
  %279 = vmatpush1.msra.mxu0 0.0
  %280 = vmatprep.subr.mxu0 0.0
  %281 = vmatpush1.msra.mxu0 0.0
  %282 = vmatprep.subr.mxu0 0.0
  %283 = vmatpush1.msra.mxu0 0.0
  %284 = vmatprep.subr.mxu0 0.0
  %285 = vmatpush1.msra.mxu0 0.0
  %286 = vmatprep.subr.mxu0 0.0
  %287 = vmatpush1.msra.mxu0 0.0
  %288 = vmatprep.subr.mxu0 0.0
  %289 = vmatpush1.msra.mxu0 0.0
  %290 = vmatprep.subr.mxu0 0.0
  %291 = vmatpush1.msra.mxu0 0.0
  %292 = vmatprep.subr.mxu0 0.0
  %293 = vmatpush1.msra.mxu0 0.0
  %294 = vmatprep.subr.mxu0 0.0
  %295 = vmatpush1.msra.mxu0 0.0
  %296 = vmatprep.mubr.f32.mxu0 0.0
  %297 = vmatmul.mubr.f32.gmra.mrb[0].mxu0 %v230
  %v298 = vpop.f32.mrb[0].mxu0
  %v299 = vadd.f32 %v226, %v298
  %v300 = vpop.f32.mrb[0].mxu0
  %301 = vdwg.mxu0
  %v302 = vxor.u32 %v299, 2147483648
  %v303 = vmul.f32 %v302, 1.442695
  %v304 = vpow.pop %v303
  %v305 = vadd.f32 %v304, 1.0
  %v306 = vrcp.pop %v305
  %v307 = vmul.f32 1.0, %v306
  %v308 = vadd.s32 %v51, 8
  %v309 = vadd.s32 %v51, 16
  %v310 = vadd.s32 %v51, 24
  %vm311 = vcmp.lt.s32.totalorder %v51, 0
  %v312 = vsub.s32 0, %v51
  %v313 = vsel %vm311, %v312, %v51
  %v314 = vshrl.u32 %v313, 1
  %v315 = vand.u32 %v313, 1
  %v316 = vsub.s32 0, %v315
  %v317 = vsel %vm311, %v316, %v315
  %vm318 = vcmp.lt.s32.totalorder %v308, 0
  %v319 = vsub.s32 0, %v308
  %v320 = vsel %vm318, %v319, %v308
  %v321 = vshrl.u32 %v320, 1
  %v322 = vand.u32 %v320, 1
  %v323 = vsub.s32 0, %v322
  %v324 = vsel %vm318, %v323, %v322
  %vm325 = vcmp.lt.s32.totalorder %v309, 0
  %v326 = vsub.s32 0, %v309
  %v327 = vsel %vm325, %v326, %v309
  %v328 = vshrl.u32 %v327, 1
  %v329 = vand.u32 %v327, 1
  %v330 = vsub.s32 0, %v329
  %v331 = vsel %vm325, %v330, %v329
  %vm332 = vcmp.lt.s32.totalorder %v310, 0
  %v333 = vsub.s32 0, %v310
  %v334 = vsel %vm332, %v333, %v310
  %v335 = vshrl.u32 %v334, 1
  %v336 = vand.u32 %v334, 1
  %v337 = vsub.s32 0, %v336
  %v338 = vsel %vm332, %v337, %v336
  %vm339 = vcmp.ne.s32.totalorder %v317, 0
  %vm340 = vcmp.ne.s32.totalorder %v324, 0
  %vm341 = vcmp.ne.s32.totalorder %v331, 0
  %vm342 = vcmp.ne.s32.totalorder %v338, 0
  %vm343 = vcmp.lt.s32.totalorder %v317, 0
  %vm344 = vcmp.lt.s32.totalorder %v324, 0
  %vm345 = vcmp.lt.s32.totalorder %v331, 0
  %vm346 = vcmp.lt.s32.totalorder %v338, 0
  %vm347 = vmand %vm343, %vm339
  %vm348 = vmand %vm344, %vm340
  %vm349 = vmand %vm345, %vm341
  %vm350 = vmand %vm346, %vm342
  %v351 = vadd.s32 %v317, 2
  %v352 = vadd.s32 %v324, 2
  %v353 = vadd.s32 %v331, 2
  %v354 = vadd.s32 %v338, 2
  %v355 = vsel %vm347, %v351, %v317
  %v356 = vsel %vm348, %v352, %v324
  %v357 = vsel %vm349, %v353, %v331
  %v358 = vsel %vm350, %v354, %v338
  %vm359 = vcmp.eq.s32.totalorder %v355, %v37
  %vm360 = vcmp.eq.s32.totalorder %v356, %v37
  %vm361 = vcmp.eq.s32.totalorder %v357, %v37
  %vm362 = vcmp.eq.s32.totalorder %v358, %v37
  %v363 = vsel %vm359, 1, 0
  %v364 = vsel %vm360, 1, 0
  %v365 = vsel %vm361, 1, 0
  %v366 = vsel %vm362, 1, 0
  %v367 = vcvt.s32.f32 %v363
  %v368 = vcvt.s32.f32 %v364
  %v369 = vcvt.s32.f32 %v365
  %v370 = vcvt.s32.f32 %v366
  %vm371 = vcmask 15360
  %v373 = vsel %vm371, %v367, 0
  %v376 = vsel %vm371, %v368, 0
  %v379 = vsel %vm371, %v369, 0
  %v382 = vsel %vm371, %v370, 0
  %vm384 = vcmask 1041408
  %v386 = vsel %vm384, %v307, 0
  %388 = vmatprep.subr.mxu0 0.0
  %389 = vmatpush1.msra.mxu0 %v386
  %390 = vmatprep.subr.mxu0 0.0
  %391 = vmatpush1.msra.mxu0 0.0
  %392 = vmatprep.subr.mxu0 0.0
  %393 = vmatpush1.msra.mxu0 0.0
  %394 = vmatprep.subr.mxu0 0.0
  %395 = vmatpush1.msra.mxu0 0.0
  %396 = vmatprep.subr.mxu0 0.0
  %397 = vmatpush1.msra.mxu0 0.0
  %398 = vmatprep.subr.mxu0 0.0
  %399 = vmatpush1.msra.mxu0 0.0
  %400 = vmatprep.subr.mxu0 0.0
  %401 = vmatpush1.msra.mxu0 0.0
  %402 = vmatprep.subr.mxu0 0.0
  %403 = vmatpush1.msra.mxu0 0.0
  %404 = vmatprep.subr.mxu0 0.0
  %405 = vmatpush1.msra.mxu0 0.0
  %406 = vmatprep.subr.mxu0 0.0
  %407 = vmatpush1.msra.mxu0 0.0
  %408 = vmatprep.subr.mxu0 0.0
  %409 = vmatpush1.msra.mxu0 0.0
  %410 = vmatprep.subr.mxu0 0.0
  %411 = vmatpush1.msra.mxu0 0.0
  %412 = vmatprep.subr.mxu0 0.0
  %413 = vmatpush1.msra.mxu0 0.0
  %414 = vmatprep.subr.mxu0 0.0
  %415 = vmatpush1.msra.mxu0 0.0
  %416 = vmatprep.subr.mxu0 0.0
  %417 = vmatpush1.msra.mxu0 0.0
  %418 = vmatprep.subr.mxu0 0.0
  %419 = vmatpush1.msra.mxu0 0.0
  %420 = vmatprep.subr.mxu0 0.0
  %421 = vmatpush1.msra.mxu0 0.0
  %422 = vmatprep.subr.mxu0 0.0
  %423 = vmatpush1.msra.mxu0 0.0
  %424 = vmatprep.subr.mxu0 0.0
  %425 = vmatpush1.msra.mxu0 0.0
  %426 = vmatprep.subr.mxu0 0.0
  %427 = vmatpush1.msra.mxu0 0.0
  %428 = vmatprep.subr.mxu0 0.0
  %429 = vmatpush1.msra.mxu0 0.0
  %430 = vmatprep.subr.mxu0 0.0
  %431 = vmatpush1.msra.mxu0 0.0
  %432 = vmatprep.subr.mxu0 0.0
  %433 = vmatpush1.msra.mxu0 0.0
  %434 = vmatprep.subr.mxu0 0.0
  %435 = vmatpush1.msra.mxu0 0.0
  %436 = vmatprep.subr.mxu0 0.0
  %437 = vmatpush1.msra.mxu0 0.0
  %438 = vmatprep.subr.mxu0 0.0
  %439 = vmatpush1.msra.mxu0 0.0
  %440 = vmatprep.subr.mxu0 0.0
  %441 = vmatpush1.msra.mxu0 0.0
  %442 = vmatprep.subr.mxu0 0.0
  %443 = vmatpush1.msra.mxu0 0.0
  %444 = vmatprep.subr.mxu0 0.0
  %445 = vmatpush1.msra.mxu0 0.0
  %446 = vmatprep.subr.mxu0 0.0
  %447 = vmatpush1.msra.mxu0 0.0
  %448 = vmatprep.subr.mxu0 0.0
  %449 = vmatpush1.msra.mxu0 0.0
  %450 = vmatprep.subr.mxu0 0.0
  %451 = vmatpush1.msra.mxu0 0.0
  %452 = vmatprep.mubr.f32.mxu0 0.0
  %453 = vmatmul.mubr.f32.gmra.mrb[0].mxu0 %v373
  %v454 = vpop.f32.mrb[0].mxu0
  %v455 = vadd.f32 0.0, %v454
  %v456 = vpop.f32.mrb[0].mxu0
  %457 = vmatprep.mubr.f32.mxu0 0.0
  %458 = vmatmul.mubr.f32.gmra.mrb[0].mxu0 %v376
  %v459 = vpop.f32.mrb[0].mxu0
  %v460 = vadd.f32 0.0, %v459
  %v461 = vpop.f32.mrb[0].mxu0
  %462 = vmatprep.mubr.f32.mxu0 0.0
  %463 = vmatmul.mubr.f32.gmra.mrb[0].mxu0 %v379
  %v464 = vpop.f32.mrb[0].mxu0
  %v465 = vadd.f32 0.0, %v464
  %v466 = vpop.f32.mrb[0].mxu0
  %467 = vmatprep.mubr.f32.mxu0 0.0
  %468 = vmatmul.mubr.f32.gmra.mrb[0].mxu0 %v382
  %v469 = vpop.f32.mrb[0].mxu0
  %v470 = vadd.f32 0.0, %v469
  %v471 = vpop.f32.mrb[0].mxu0
  %472 = vdwg.mxu0
  %v473 = vmul.f32 %v32, %v455
  %v474 = vmul.f32 %v33, %v460
  %v475 = vmul.f32 %v34, %v465
  %v476 = vmul.f32 %v35, %v470
  %v477 = vld [vmem:[%s5] sm:$0xff]
  %v478 = vld [vmem:[%s5 + $0x8] sm:$0xff]
  %v479 = vld [vmem:[%s5 + $0x10] sm:$0xff]
  %v480 = vld [vmem:[%s5 + $0x18] sm:$0xff]
  %v481 = vld [vmem:[%s5 + $0x20] sm:$0xff]
  %v482 = vld [vmem:[%s5 + $0x28] sm:$0xff]
  %v483 = vld [vmem:[%s5 + $0x30] sm:$0xff]
  %v484 = vld [vmem:[%s5 + $0x38] sm:$0xff]
  %v485 = vld [vmem:[%s6] sm:$0x1]
  %v487 = vlaneseq
  %v488 = vshrl.u32 %v487, 7
  %v489 = vsub.s32 0, %v488
  %v490 = vrot.slane %v485, %v489
  %v493 = vsel %vm145, %v473, 0
  %v496 = vsel %vm145, %v474, 0
  %v499 = vsel %vm145, %v475, 0
  %v502 = vsel %vm145, %v476, 0
  %504 = vmatprep.subr.mxu0 0.0
  %505 = vmatpush1.msra.mxu0 %v477
  %506 = vmatprep.subr.mxu0 0.0
  %507 = vmatpush1.msra.mxu0 %v478
  %508 = vmatprep.subr.mxu0 0.0
  %509 = vmatpush1.msra.mxu0 %v479
  %510 = vmatprep.subr.mxu0 0.0
  %511 = vmatpush1.msra.mxu0 %v480
  %512 = vmatprep.subr.mxu0 0.0
  %513 = vmatpush1.msra.mxu0 %v481
  %514 = vmatprep.subr.mxu0 0.0
  %515 = vmatpush1.msra.mxu0 %v482
  %516 = vmatprep.subr.mxu0 0.0
  %517 = vmatpush1.msra.mxu0 %v483
  %518 = vmatprep.subr.mxu0 0.0
  %519 = vmatpush1.msra.mxu0 %v484
  %520 = vmatprep.subr.mxu0 0.0
  %521 = vmatpush1.msra.mxu0 0.0
  %522 = vmatprep.subr.mxu0 0.0
  %523 = vmatpush1.msra.mxu0 0.0
  %524 = vmatprep.subr.mxu0 0.0
  %525 = vmatpush1.msra.mxu0 0.0
  %526 = vmatprep.subr.mxu0 0.0
  %527 = vmatpush1.msra.mxu0 0.0
  %528 = vmatprep.subr.mxu0 0.0
  %529 = vmatpush1.msra.mxu0 0.0
  %530 = vmatprep.subr.mxu0 0.0
  %531 = vmatpush1.msra.mxu0 0.0
  %532 = vmatprep.subr.mxu0 0.0
  %533 = vmatpush1.msra.mxu0 0.0
  %534 = vmatprep.subr.mxu0 0.0
  %535 = vmatpush1.msra.mxu0 0.0
  %536 = vmatprep.subr.mxu0 0.0
  %537 = vmatpush1.msra.mxu0 0.0
  %538 = vmatprep.subr.mxu0 0.0
  %539 = vmatpush1.msra.mxu0 0.0
  %540 = vmatprep.subr.mxu0 0.0
  %541 = vmatpush1.msra.mxu0 0.0
  %542 = vmatprep.subr.mxu0 0.0
  %543 = vmatpush1.msra.mxu0 0.0
  %544 = vmatprep.subr.mxu0 0.0
  %545 = vmatpush1.msra.mxu0 0.0
  %546 = vmatprep.subr.mxu0 0.0
  %547 = vmatpush1.msra.mxu0 0.0
  %548 = vmatprep.subr.mxu0 0.0
  %549 = vmatpush1.msra.mxu0 0.0
  %550 = vmatprep.subr.mxu0 0.0
  %551 = vmatpush1.msra.mxu0 0.0
  %552 = vmatprep.subr.mxu0 0.0
  %553 = vmatpush1.msra.mxu0 0.0
  %554 = vmatprep.subr.mxu0 0.0
  %555 = vmatpush1.msra.mxu0 0.0
  %556 = vmatprep.subr.mxu0 0.0
  %557 = vmatpush1.msra.mxu0 0.0
  %558 = vmatprep.subr.mxu0 0.0
  %559 = vmatpush1.msra.mxu0 0.0
  %560 = vmatprep.subr.mxu0 0.0
  %561 = vmatpush1.msra.mxu0 0.0
  %562 = vmatprep.subr.mxu0 0.0
  %563 = vmatpush1.msra.mxu0 0.0
  %564 = vmatprep.subr.mxu0 0.0
  %565 = vmatpush1.msra.mxu0 0.0
  %566 = vmatprep.subr.mxu0 0.0
  %567 = vmatpush1.msra.mxu0 0.0
  %568 = vmatprep.mubr.f32.mxu0 0.0
  %569 = vmatmul.mubr.f32.gmra.mrb[0].mxu0 %v493
  %v570 = vpop.f32.mrb[0].mxu0
  %v571 = vadd.f32 %v490, %v570
  %v572 = vpop.f32.mrb[0].mxu0
  %573 = vmatprep.mubr.f32.mxu0 0.0
  %574 = vmatmul.mubr.f32.gmra.mrb[0].mxu0 %v496
  %v575 = vpop.f32.mrb[0].mxu0
  %v576 = vadd.f32 %v490, %v575
  %v577 = vpop.f32.mrb[0].mxu0
  %578 = vmatprep.mubr.f32.mxu0 0.0
  %579 = vmatmul.mubr.f32.gmra.mrb[0].mxu0 %v499
  %v580 = vpop.f32.mrb[0].mxu0
  %v581 = vadd.f32 %v490, %v580
  %v582 = vpop.f32.mrb[0].mxu0
  %583 = vmatprep.mubr.f32.mxu0 0.0
  %584 = vmatmul.mubr.f32.gmra.mrb[0].mxu0 %v502
  %v585 = vpop.f32.mrb[0].mxu0
  %v586 = vadd.f32 %v490, %v585
  %v587 = vpop.f32.mrb[0].mxu0
  %588 = vdwg.mxu0
  %v589 = vmax.f32 %v571, 0.0
  %v590 = vmax.f32 %v576, 0.0
  %v591 = vmax.f32 %v581, 0.0
  %v592 = vmax.f32 %v586, 0.0
  %v593 = vld [vmem:[%s7] sm:$0xff]
  %v594 = vld [vmem:[%s7 + $0x8] sm:$0xff]
  %v595 = vld [vmem:[%s7 + $0x10] sm:$0xff]
  %v596 = vld [vmem:[%s7 + $0x18] sm:$0xff]
  %v597 = vld [vmem:[%s8] sm:$0x1]
  %v599 = vlaneseq
  %v600 = vshrl.u32 %v599, 7
  %v601 = vsub.s32 0, %v600
  %v602 = vrot.slane %v597, %v601
  %v605 = vsel %vm56, %v589, 0
  %v608 = vsel %vm56, %v590, 0
  %v611 = vsel %vm56, %v591, 0
  %v614 = vsel %vm56, %v592, 0
  %616 = vmatprep.subr.mxu0 0.0
  %617 = vmatpush1.msra.mxu0 %v593
  %618 = vmatprep.subr.mxu0 0.0
  %619 = vmatpush1.msra.mxu0 %v594
  %620 = vmatprep.subr.mxu0 0.0
  %621 = vmatpush1.msra.mxu0 %v595
  %622 = vmatprep.subr.mxu0 0.0
  %623 = vmatpush1.msra.mxu0 %v596
  %624 = vmatprep.subr.mxu0 0.0
  %625 = vmatpush1.msra.mxu0 0.0
  %626 = vmatprep.subr.mxu0 0.0
  %627 = vmatpush1.msra.mxu0 0.0
  %628 = vmatprep.subr.mxu0 0.0
  %629 = vmatpush1.msra.mxu0 0.0
  %630 = vmatprep.subr.mxu0 0.0
  %631 = vmatpush1.msra.mxu0 0.0
  %632 = vmatprep.subr.mxu0 0.0
  %633 = vmatpush1.msra.mxu0 0.0
  %634 = vmatprep.subr.mxu0 0.0
  %635 = vmatpush1.msra.mxu0 0.0
  %636 = vmatprep.subr.mxu0 0.0
  %637 = vmatpush1.msra.mxu0 0.0
  %638 = vmatprep.subr.mxu0 0.0
  %639 = vmatpush1.msra.mxu0 0.0
  %640 = vmatprep.subr.mxu0 0.0
  %641 = vmatpush1.msra.mxu0 0.0
  %642 = vmatprep.subr.mxu0 0.0
  %643 = vmatpush1.msra.mxu0 0.0
  %644 = vmatprep.subr.mxu0 0.0
  %645 = vmatpush1.msra.mxu0 0.0
  %646 = vmatprep.subr.mxu0 0.0
  %647 = vmatpush1.msra.mxu0 0.0
  %648 = vmatprep.subr.mxu0 0.0
  %649 = vmatpush1.msra.mxu0 0.0
  %650 = vmatprep.subr.mxu0 0.0
  %651 = vmatpush1.msra.mxu0 0.0
  %652 = vmatprep.subr.mxu0 0.0
  %653 = vmatpush1.msra.mxu0 0.0
  %654 = vmatprep.subr.mxu0 0.0
  %655 = vmatpush1.msra.mxu0 0.0
  %656 = vmatprep.subr.mxu0 0.0
  %657 = vmatpush1.msra.mxu0 0.0
  %658 = vmatprep.subr.mxu0 0.0
  %659 = vmatpush1.msra.mxu0 0.0
  %660 = vmatprep.subr.mxu0 0.0
  %661 = vmatpush1.msra.mxu0 0.0
  %662 = vmatprep.subr.mxu0 0.0
  %663 = vmatpush1.msra.mxu0 0.0
  %664 = vmatprep.subr.mxu0 0.0
  %665 = vmatpush1.msra.mxu0 0.0
  %666 = vmatprep.subr.mxu0 0.0
  %667 = vmatpush1.msra.mxu0 0.0
  %668 = vmatprep.subr.mxu0 0.0
  %669 = vmatpush1.msra.mxu0 0.0
  %670 = vmatprep.subr.mxu0 0.0
  %671 = vmatpush1.msra.mxu0 0.0
  %672 = vmatprep.subr.mxu0 0.0
  %673 = vmatpush1.msra.mxu0 0.0
  %674 = vmatprep.subr.mxu0 0.0
  %675 = vmatpush1.msra.mxu0 0.0
  %676 = vmatprep.subr.mxu0 0.0
  %677 = vmatpush1.msra.mxu0 0.0
  %678 = vmatprep.subr.mxu0 0.0
  %679 = vmatpush1.msra.mxu0 0.0
  %680 = vmatprep.mubr.f32.mxu0 0.0
  %681 = vmatmul.mubr.f32.gmra.mrb[0].mxu0 %v605
  %v682 = vpop.f32.mrb[0].mxu0
  %v683 = vadd.f32 %v602, %v682
  %v684 = vpop.f32.mrb[0].mxu0
  %685 = vmatprep.mubr.f32.mxu0 0.0
  %686 = vmatmul.mubr.f32.gmra.mrb[0].mxu0 %v608
  %v687 = vpop.f32.mrb[0].mxu0
  %v688 = vadd.f32 %v602, %v687
  %v689 = vpop.f32.mrb[0].mxu0
  %690 = vmatprep.mubr.f32.mxu0 0.0
  %691 = vmatmul.mubr.f32.gmra.mrb[0].mxu0 %v611
  %v692 = vpop.f32.mrb[0].mxu0
  %v693 = vadd.f32 %v602, %v692
  %v694 = vpop.f32.mrb[0].mxu0
  %695 = vmatprep.mubr.f32.mxu0 0.0
  %696 = vmatmul.mubr.f32.gmra.mrb[0].mxu0 %v614
  %v697 = vpop.f32.mrb[0].mxu0
  %v698 = vadd.f32 %v602, %v697
  %v699 = vpop.f32.mrb[0].mxu0
  %700 = vdwg.mxu0
  %701 = vst.msk [vmem:[%s9] sm:$0xff] %vm371, %v683
  %702 = vst.msk [vmem:[%s9 + $0x8] sm:$0xff] %vm371, %v688
  %703 = vst.msk [vmem:[%s9 + $0x10] sm:$0xff] %vm371, %v693
  %704 = vst.msk [vmem:[%s9 + $0x18] sm:$0xff] %vm371, %v698
  // Predicated region
  $region38: #{rr_lstm_forward.5} parent=0 // pred_check
    _
  $region39: #{rr_lstm_forward.5} parent=0 // pred_check_branch
    %706 = sbr.rel (0) target = $region41
  $region40: #{rr_lstm_forward.5} parent=0 // pred_region
    _
  $region41: #{rr_lstm_forward.5} parent=0 // pred_fallthru
    _
  // Predicated region
  $region42: #{rr_lstm_forward.5} parent=0 // pred_check
    _
  $region43: #{rr_lstm_forward.5} parent=0 // pred_check_branch
    %708 = sbr.rel (0) target = $region45
  $region44: #{rr_lstm_forward.5} parent=0 // pred_region
    _
  $region45: #{rr_lstm_forward.5} parent=0 // pred_fallthru
    _

// kernel: rr_lstm_forward.4
$region0: #{rr_lstm_forward.4}
  #allocation0 [shape = 'u32[]', space=smem, size = 0x4, offset = 0x4, fixed_abs, tag = 'smem constant byte address 0x4 - core index']
  #allocation1 [shape = 'u32[144,128]{1,0:T(1,128)}', space=vmem, size = 0x12000, scoped, tag = 'internal scratch']
  #allocation2 [shape = 'f32[32,256]{1,0:T(8,128)}', space=vmem, size = 0x8000, scoped, tag = 'scratch operand']
  %s0 = inlined_call_operand.vmem [shape: f32[32,64], index: 0, kind: input, shape index: {}]
  %s1 = inlined_call_operand.vmem [shape: f32[64,256], index: 1, kind: input, shape index: {}]
  %s2 = inlined_call_operand.vmem [shape: f32[64,256], index: 2, kind: input, shape index: {}]
  %s3 = inlined_call_operand.vmem [shape: f32[1,256], index: 3, kind: input, shape index: {}]
  %s4 = inlined_call_operand.vmem [shape: f32[32,64], index: 4, kind: output, shape index: {}]
  %s5 = sld [smem:[#allocation0]]
  $region26: #{rr_lstm_forward.4} parent=0
    _
  %s7 = ssub.s32 1, %s5
  %s8 = scalar_select 0, %s7, %s5
  // Predicated region
  $region2: #{rr_lstm_forward.4} parent=0 // pred_check
    _
  $region3: #{rr_lstm_forward.4} parent=0 // pred_check_branch
    %10 = sbr.rel (0) target = $region5
  $region4: #{rr_lstm_forward.4} parent=0 // pred_region
    _
  $region5: #{rr_lstm_forward.4} parent=0 // pred_fallthru
    _
  // Predicated region
  $region6: #{rr_lstm_forward.4} parent=0 // pred_check
    _
  $region7: #{rr_lstm_forward.4} parent=0 // pred_check_branch
    %12 = sbr.rel (0) target = $region9
  $region8: #{rr_lstm_forward.4} parent=0 // pred_region
    _
  $region9: #{rr_lstm_forward.4} parent=0 // pred_fallthru
    _
  // Predicated region
  $region10: #{rr_lstm_forward.4} parent=0 // pred_check
    _
  $region11: #{rr_lstm_forward.4} parent=0 // pred_check_branch
    %14 = sbr.rel (0) target = $region13
  $region12: #{rr_lstm_forward.4} parent=0 // pred_region
    _
  $region13: #{rr_lstm_forward.4} parent=0 // pred_fallthru
    _
  // Predicated region
  $region14: #{rr_lstm_forward.4} parent=0 // pred_check
    _
  $region15: #{rr_lstm_forward.4} parent=0 // pred_check_branch
    %16 = sbr.rel (0) target = $region17
  $region16: #{rr_lstm_forward.4} parent=0 // pred_region
    _
  $region17: #{rr_lstm_forward.4} parent=0 // pred_fallthru
    _
  %v17 = vld [vmem:[%s0] sm:$0xff]
  %v18 = vld [vmem:[%s0 + $0x8] sm:$0xff]
  %v19 = vld [vmem:[%s0 + $0x10] sm:$0xff]
  %v20 = vld [vmem:[%s0 + $0x18] sm:$0xff]
  %v21 = vld [vmem:[%s1] sm:$0xff]
  %v22 = vld [vmem:[%s1 + $0x8] sm:$0xff]
  %v23 = vld [vmem:[%s1 + $0x10] sm:$0xff]
  %v24 = vld [vmem:[%s1 + $0x18] sm:$0xff]
  %v25 = vld [vmem:[%s1 + $0x20] sm:$0xff]
  %v26 = vld [vmem:[%s1 + $0x28] sm:$0xff]
  %v27 = vld [vmem:[%s1 + $0x30] sm:$0xff]
  %v28 = vld [vmem:[%s1 + $0x38] sm:$0xff]
  %v29 = vld [vmem:[%s1 + $0x40] sm:$0xff]
  %v30 = vld [vmem:[%s1 + $0x48] sm:$0xff]
  %v31 = vld [vmem:[%s1 + $0x50] sm:$0xff]
  %v32 = vld [vmem:[%s1 + $0x58] sm:$0xff]
  %v33 = vld [vmem:[%s1 + $0x60] sm:$0xff]
  %v34 = vld [vmem:[%s1 + $0x68] sm:$0xff]
  %v35 = vld [vmem:[%s1 + $0x70] sm:$0xff]
  %v36 = vld [vmem:[%s1 + $0x78] sm:$0xff]
  %v37 = vld [vmem:[%s3] sm:$0x3]
  %v39 = vlaneseq
  %v40 = vshrl.u32 %v39, 7
  %v41 = vsub.s32 0, %v40
  %v42 = vrot.slane %v37, %v41
  %v43 = vlaneseq
  %v44 = vshrl.u32 %v43, 7
  %v45 = vsub.s32 1, %v44
  %v46 = vrot.slane %v37, %v45
  %vm49 = vcmask 523264
  %v51 = vsel %vm49, %v17, 0
  %v54 = vsel %vm49, %v18, 0
  %v57 = vsel %vm49, %v19, 0
  %v60 = vsel %vm49, %v20, 0
  %62 = vmatprep.subr.mxu0 %v22
  %63 = vmatpush1.msra.mxu0 %v21
  %64 = vmatprep.subr.mxu0 %v24
  %65 = vmatpush1.msra.mxu0 %v23
  %66 = vmatprep.subr.mxu0 %v26
  %67 = vmatpush1.msra.mxu0 %v25
  %68 = vmatprep.subr.mxu0 %v28
  %69 = vmatpush1.msra.mxu0 %v27
  %70 = vmatprep.subr.mxu0 %v30
  %71 = vmatpush1.msra.mxu0 %v29
  %72 = vmatprep.subr.mxu0 %v32
  %73 = vmatpush1.msra.mxu0 %v31
  %74 = vmatprep.subr.mxu0 %v34
  %75 = vmatpush1.msra.mxu0 %v33
  %76 = vmatprep.subr.mxu0 %v36
  %77 = vmatpush1.msra.mxu0 %v35
  %78 = vmatprep.subr.mxu0 0.0
  %79 = vmatpush1.msra.mxu0 0.0
  %80 = vmatprep.subr.mxu0 0.0
  %81 = vmatpush1.msra.mxu0 0.0
  %82 = vmatprep.subr.mxu0 0.0
  %83 = vmatpush1.msra.mxu0 0.0
  %84 = vmatprep.subr.mxu0 0.0
  %85 = vmatpush1.msra.mxu0 0.0
  %86 = vmatprep.subr.mxu0 0.0
  %87 = vmatpush1.msra.mxu0 0.0
  %88 = vmatprep.subr.mxu0 0.0
  %89 = vmatpush1.msra.mxu0 0.0
  %90 = vmatprep.subr.mxu0 0.0
  %91 = vmatpush1.msra.mxu0 0.0
  %92 = vmatprep.subr.mxu0 0.0
  %93 = vmatpush1.msra.mxu0 0.0
  %94 = vmatprep.subr.mxu0 0.0
  %95 = vmatpush1.msra.mxu0 0.0
  %96 = vmatprep.subr.mxu0 0.0
  %97 = vmatpush1.msra.mxu0 0.0
  %98 = vmatprep.subr.mxu0 0.0
  %99 = vmatpush1.msra.mxu0 0.0
  %100 = vmatprep.subr.mxu0 0.0
  %101 = vmatpush1.msra.mxu0 0.0
  %102 = vmatprep.subr.mxu0 0.0
  %103 = vmatpush1.msra.mxu0 0.0
  %104 = vmatprep.subr.mxu0 0.0
  %105 = vmatpush1.msra.mxu0 0.0
  %106 = vmatprep.subr.mxu0 0.0
  %107 = vmatpush1.msra.mxu0 0.0
  %108 = vmatprep.subr.mxu0 0.0
  %109 = vmatpush1.msra.mxu0 0.0
  %110 = vmatprep.subr.mxu0 0.0
  %111 = vmatpush1.msra.mxu0 0.0
  %112 = vmatprep.subr.mxu0 0.0
  %113 = vmatpush1.msra.mxu0 0.0
  %114 = vmatprep.subr.mxu0 0.0
  %115 = vmatpush1.msra.mxu0 0.0
  %116 = vmatprep.subr.mxu0 0.0
  %117 = vmatpush1.msra.mxu0 0.0
  %118 = vmatprep.subr.mxu0 0.0
  %119 = vmatpush1.msra.mxu0 0.0
  %120 = vmatprep.subr.mxu0 0.0
  %121 = vmatpush1.msra.mxu0 0.0
  %122 = vmatprep.subr.mxu0 0.0
  %123 = vmatpush1.msra.mxu0 0.0
  %124 = vmatprep.subr.mxu0 0.0
  %125 = vmatpush1.msra.mxu0 0.0
  %126 = vmatprep.mubr.f32.mxu0 0.0
  %127 = vmatmul.mubr.f32.gmra.mrb[0].mxu0 %v51
  %v128 = vpop.f32.mrb[0].mxu0
  %v129 = vadd.f32 %v42, %v128
  %v130 = vpop.f32.mrb[0].mxu0
  %v131 = vadd.f32 %v46, %v130
  %132 = vmatprep.mubr.f32.mxu0 0.0
  %133 = vmatmul.mubr.f32.gmra.mrb[0].mxu0 %v54
  %v134 = vpop.f32.mrb[0].mxu0
  %v135 = vadd.f32 %v42, %v134
  %v136 = vpop.f32.mrb[0].mxu0
  %v137 = vadd.f32 %v46, %v136
  %138 = vmatprep.mubr.f32.mxu0 0.0
  %139 = vmatmul.mubr.f32.gmra.mrb[0].mxu0 %v57
  %v140 = vpop.f32.mrb[0].mxu0
  %v141 = vadd.f32 %v42, %v140
  %v142 = vpop.f32.mrb[0].mxu0
  %v143 = vadd.f32 %v46, %v142
  %144 = vmatprep.mubr.f32.mxu0 0.0
  %145 = vmatmul.mubr.f32.gmra.mrb[0].mxu0 %v60
  %v146 = vpop.f32.mrb[0].mxu0
  %v147 = vadd.f32 %v42, %v146
  %v148 = vpop.f32.mrb[0].mxu0
  %v149 = vadd.f32 %v46, %v148
  %150 = vdwg.mxu0
  %151 = vst [vmem:[#allocation2] sm:$0xff] %v129
  %152 = vst [vmem:[#allocation2 + $0x8] sm:$0xff] %v131
  %153 = vst [vmem:[#allocation2 + $0x10] sm:$0xff] %v135
  %154 = vst [vmem:[#allocation2 + $0x18] sm:$0xff] %v137
  %155 = vst [vmem:[#allocation2 + $0x20] sm:$0xff] %v141
  %156 = vst [vmem:[#allocation2 + $0x28] sm:$0xff] %v143
  %157 = vst [vmem:[#allocation2 + $0x30] sm:$0xff] %v147
  %158 = vst [vmem:[#allocation2 + $0x38] sm:$0xff] %v149
  %v159 = vld [vmem:[%s2] sm:$0xff]
  %v160 = vld [vmem:[%s2 + $0x8] sm:$0xff]
  %v161 = vld [vmem:[%s2 + $0x10] sm:$0xff]
  %v162 = vld [vmem:[%s2 + $0x18] sm:$0xff]
  %v163 = vld [vmem:[%s2 + $0x20] sm:$0xff]
  %v164 = vld [vmem:[%s2 + $0x28] sm:$0xff]
  %v165 = vld [vmem:[%s2 + $0x30] sm:$0xff]
  %v166 = vld [vmem:[%s2 + $0x38] sm:$0xff]
  %v167 = vld [vmem:[%s2 + $0x40] sm:$0xff]
  %v168 = vld [vmem:[%s2 + $0x48] sm:$0xff]
  %v169 = vld [vmem:[%s2 + $0x50] sm:$0xff]
  %v170 = vld [vmem:[%s2 + $0x58] sm:$0xff]
  %v171 = vld [vmem:[%s2 + $0x60] sm:$0xff]
  %v172 = vld [vmem:[%s2 + $0x68] sm:$0xff]
  %v173 = vld [vmem:[%s2 + $0x70] sm:$0xff]
  %v174 = vld [vmem:[%s2 + $0x78] sm:$0xff]
  %v176 = vsel %vm49, 0.0, 0
  %178 = vmatprep.subr.mxu0 %v160
  %179 = vmatpush1.msra.mxu0 %v159
  %180 = vmatprep.subr.mxu0 %v162
  %181 = vmatpush1.msra.mxu0 %v161
  %182 = vmatprep.subr.mxu0 %v164
  %183 = vmatpush1.msra.mxu0 %v163
  %184 = vmatprep.subr.mxu0 %v166
  %185 = vmatpush1.msra.mxu0 %v165
  %186 = vmatprep.subr.mxu0 %v168
  %187 = vmatpush1.msra.mxu0 %v167
  %188 = vmatprep.subr.mxu0 %v170
  %189 = vmatpush1.msra.mxu0 %v169
  %190 = vmatprep.subr.mxu0 %v172
  %191 = vmatpush1.msra.mxu0 %v171
  %192 = vmatprep.subr.mxu0 %v174
  %193 = vmatpush1.msra.mxu0 %v173
  %194 = vmatprep.subr.mxu0 0.0
  %195 = vmatpush1.msra.mxu0 0.0
  %196 = vmatprep.subr.mxu0 0.0
  %197 = vmatpush1.msra.mxu0 0.0
  %198 = vmatprep.subr.mxu0 0.0
  %199 = vmatpush1.msra.mxu0 0.0
  %200 = vmatprep.subr.mxu0 0.0
  %201 = vmatpush1.msra.mxu0 0.0
  %202 = vmatprep.subr.mxu0 0.0
  %203 = vmatpush1.msra.mxu0 0.0
  %204 = vmatprep.subr.mxu0 0.0
  %205 = vmatpush1.msra.mxu0 0.0
  %206 = vmatprep.subr.mxu0 0.0
  %207 = vmatpush1.msra.mxu0 0.0
  %208 = vmatprep.subr.mxu0 0.0
  %209 = vmatpush1.msra.mxu0 0.0
  %210 = vmatprep.subr.mxu0 0.0
  %211 = vmatpush1.msra.mxu0 0.0
  %212 = vmatprep.subr.mxu0 0.0
  %213 = vmatpush1.msra.mxu0 0.0
  %214 = vmatprep.subr.mxu0 0.0
  %215 = vmatpush1.msra.mxu0 0.0
  %216 = vmatprep.subr.mxu0 0.0
  %217 = vmatpush1.msra.mxu0 0.0
  %218 = vmatprep.subr.mxu0 0.0
  %219 = vmatpush1.msra.mxu0 0.0
  %220 = vmatprep.subr.mxu0 0.0
  %221 = vmatpush1.msra.mxu0 0.0
  %222 = vmatprep.subr.mxu0 0.0
  %223 = vmatpush1.msra.mxu0 0.0
  %224 = vmatprep.subr.mxu0 0.0
  %225 = vmatpush1.msra.mxu0 0.0
  %226 = vmatprep.subr.mxu0 0.0
  %227 = vmatpush1.msra.mxu0 0.0
  %228 = vmatprep.subr.mxu0 0.0
  %229 = vmatpush1.msra.mxu0 0.0
  %230 = vmatprep.subr.mxu0 0.0
  %231 = vmatpush1.msra.mxu0 0.0
  %232 = vmatprep.subr.mxu0 0.0
  %233 = vmatpush1.msra.mxu0 0.0
  %234 = vmatprep.subr.mxu0 0.0
  %235 = vmatpush1.msra.mxu0 0.0
  %236 = vmatprep.subr.mxu0 0.0
  %237 = vmatpush1.msra.mxu0 0.0
  %238 = vmatprep.subr.mxu0 0.0
  %239 = vmatpush1.msra.mxu0 0.0
  %240 = vmatprep.subr.mxu0 0.0
  %241 = vmatpush1.msra.mxu0 0.0
  %242 = vmatprep.mubr.f32.mxu0 0.0
  %243 = vmatmul.mubr.f32.gmra.mrb[0].mxu0 %v176
  %v244 = vpop.f32.mrb[0].mxu0
  %v245 = vadd.f32 0.0, %v244
  %v246 = vpop.f32.mrb[0].mxu0
  %v247 = vadd.f32 0.0, %v246
  %248 = vdwg.mxu0
  %v249 = vld [vmem:[#allocation2] sm:$0x3]
  %v250 = vadd.f32 %v249, %v245
  %v251 = vld [vmem:[#allocation2 + $0x38] sm:$0xc0]
  %v253 = vrot.slane %v247, 2
  %v255 = vadd.f32 %v251, %v253
  %v256 = vxor.u32 %v250, 2147483648
  %v257 = vmul.f32 %v256, 1.442695
  %v258 = vpow.pop %v257
  %v259 = vadd.f32 %v258, 1.0
  %v260 = vrcp.pop %v259
  %v261 = vmul.f32 1.0, %v260
  %v262 = vtanh.pop %v250
  %v263 = vmul.f32 %v261, 0.0
  %265 = vrot.lane.b32.xlu0 %v262, 64
  %v266 = vpop.permute.xlu0 %265
  %v268 = vmul.f32 %v261, %v266
  %270 = vrot.lane.b32.xlu0 %v268, 32
  %v271 = vpop.permute.xlu0 %270
  %v273 = vadd.f32 %v263, %v271
  %v274 = vtanh.pop %v273
  %276 = vrot.lane.b32.xlu0 %v274, 64
  %v277 = vpop.permute.xlu0 %276
  %v279 = vmul.f32 %v261, %v277
  %v280 = vxor.u32 %v255, 2147483648
  %v281 = vmul.f32 %v280, 1.442695
  %v282 = vpow.pop %v281
  %v283 = vadd.f32 %v282, 1.0
  %v284 = vrcp.pop %v283
  %v285 = vmul.f32 1.0, %v284
  %v286 = vtanh.pop %v255
  %v287 = vmul.f32 %v285, 0.0
  %289 = vrot.lane.b32.xlu0 %v286, 64
  %v290 = vpop.permute.xlu0 %289
  %v292 = vmul.f32 %v285, %v290
  %294 = vrot.lane.b32.xlu0 %v292, 32
  %v295 = vpop.permute.xlu0 %294
  %v297 = vadd.f32 %v287, %v295
  %v298 = vtanh.pop %v297
  %300 = vrot.lane.b32.xlu0 %v298, 64
  %v301 = vpop.permute.xlu0 %300
  %v303 = vmul.f32 %v285, %v301
  %305 = vrot.lane.b32.xlu0 %v279, 32
  %v306 = vpop.permute.xlu0 %305
  %vm308 = vcmask 254976
  %309 = vst.msk [vmem:[%s4] sm:$0x3] %vm308, %v306
  %311 = vrot.lane.b32.xlu0 %v303, 64
  %v312 = vpop.permute.xlu0 %311
  %vm314 = vcmask 523526
  %315 = vst.msk [vmem:[%s4 + $0x18] sm:$0xc0] %vm314, %v312
  %v316 = vrot.slane %v303, 6
  %317 = vrot.lane.b32.xlu0 %v316, 64
  %v318 = vpop.permute.xlu0 %317
  %vm320 = vcmask 261120
  %v321 = vsel %vm320, %v306, %v318
  %v323 = vsel %vm49, %v321, 0
  %325 = vmatprep.subr.mxu0 %v160
  %326 = vmatpush1.msra.mxu0 %v159
  %327 = vmatprep.subr.mxu0 %v162
  %328 = vmatpush1.msra.mxu0 %v161
  %329 = vmatprep.subr.mxu0 %v164
  %330 = vmatpush1.msra.mxu0 %v163
  %331 = vmatprep.subr.mxu0 %v166
  %332 = vmatpush1.msra.mxu0 %v165
  %333 = vmatprep.subr.mxu0 %v168
  %334 = vmatpush1.msra.mxu0 %v167
  %335 = vmatprep.subr.mxu0 %v170
  %336 = vmatpush1.msra.mxu0 %v169
  %337 = vmatprep.subr.mxu0 %v172
  %338 = vmatpush1.msra.mxu0 %v171
  %339 = vmatprep.subr.mxu0 %v174
  %340 = vmatpush1.msra.mxu0 %v173
  %341 = vmatprep.subr.mxu0 0.0
  %342 = vmatpush1.msra.mxu0 0.0
  %343 = vmatprep.subr.mxu0 0.0
  %344 = vmatpush1.msra.mxu0 0.0
  %345 = vmatprep.subr.mxu0 0.0
  %346 = vmatpush1.msra.mxu0 0.0
  %347 = vmatprep.subr.mxu0 0.0
  %348 = vmatpush1.msra.mxu0 0.0
  %349 = vmatprep.subr.mxu0 0.0
  %350 = vmatpush1.msra.mxu0 0.0
  %351 = vmatprep.subr.mxu0 0.0
  %352 = vmatpush1.msra.mxu0 0.0
  %353 = vmatprep.subr.mxu0 0.0
  %354 = vmatpush1.msra.mxu0 0.0
  %355 = vmatprep.subr.mxu0 0.0
  %356 = vmatpush1.msra.mxu0 0.0
  %357 = vmatprep.subr.mxu0 0.0
  %358 = vmatpush1.msra.mxu0 0.0
  %359 = vmatprep.subr.mxu0 0.0
  %360 = vmatpush1.msra.mxu0 0.0
  %361 = vmatprep.subr.mxu0 0.0
  %362 = vmatpush1.msra.mxu0 0.0
  %363 = vmatprep.subr.mxu0 0.0
  %364 = vmatpush1.msra.mxu0 0.0
  %365 = vmatprep.subr.mxu0 0.0
  %366 = vmatpush1.msra.mxu0 0.0
  %367 = vmatprep.subr.mxu0 0.0
  %368 = vmatpush1.msra.mxu0 0.0
  %369 = vmatprep.subr.mxu0 0.0
  %370 = vmatpush1.msra.mxu0 0.0
  %371 = vmatprep.subr.mxu0 0.0
  %372 = vmatpush1.msra.mxu0 0.0
  %373 = vmatprep.subr.mxu0 0.0
  %374 = vmatpush1.msra.mxu0 0.0
  %375 = vmatprep.subr.mxu0 0.0
  %376 = vmatpush1.msra.mxu0 0.0
  %377 = vmatprep.subr.mxu0 0.0
  %378 = vmatpush1.msra.mxu0 0.0
  %379 = vmatprep.subr.mxu0 0.0
  %380 = vmatpush1.msra.mxu0 0.0
  %381 = vmatprep.subr.mxu0 0.0
  %382 = vmatpush1.msra.mxu0 0.0
  %383 = vmatprep.subr.mxu0 0.0
  %384 = vmatpush1.msra.mxu0 0.0
  %385 = vmatprep.subr.mxu0 0.0
  %386 = vmatpush1.msra.mxu0 0.0
  %387 = vmatprep.subr.mxu0 0.0
  %388 = vmatpush1.msra.mxu0 0.0
  %389 = vmatprep.mubr.f32.mxu0 0.0
  %390 = vmatmul.mubr.f32.gmra.mrb[0].mxu0 %v323
  %v391 = vpop.f32.mrb[0].mxu0
  %v392 = vadd.f32 0.0, %v391
  %v393 = vpop.f32.mrb[0].mxu0
  %v394 = vadd.f32 0.0, %v393
  %395 = vdwg.mxu0
  %v396 = vld [vmem:[#allocation2] sm:$0xc]
  %v398 = vrot.slane %v392, 6
  %v400 = vadd.f32 %v396, %v398
  %v401 = vld [vmem:[#allocation2 + $0x38] sm:$0x30]
  %v403 = vrot.slane %v394, 4
  %v405 = vadd.f32 %v401, %v403
  %v406 = vxor.u32 %v400, 2147483648
  %v407 = vmul.f32 %v406, 1.442695
  %v408 = vpow.pop %v407
  %v409 = vadd.f32 %v408, 1.0
  %v410 = vrcp.pop %v409
  %v411 = vmul.f32 1.0, %v410
  %v412 = vtanh.pop %v400
  %v414 = vrot.slane %v273, 6
  %v416 = vmul.f32 %v411, %v414
  %418 = vrot.lane.b32.xlu0 %v412, 64
  %v419 = vpop.permute.xlu0 %418
  %v421 = vmul.f32 %v411, %v419
  %423 = vrot.lane.b32.xlu0 %v421, 32
  %v424 = vpop.permute.xlu0 %423
  %v426 = vadd.f32 %v416, %v424
  %v427 = vtanh.pop %v426
  %429 = vrot.lane.b32.xlu0 %v427, 64
  %v430 = vpop.permute.xlu0 %429
  %v432 = vmul.f32 %v411, %v430
  %v433 = vxor.u32 %v405, 2147483648
  %v434 = vmul.f32 %v433, 1.442695
  %v435 = vpow.pop %v434
  %v436 = vadd.f32 %v435, 1.0
  %v437 = vrcp.pop %v436
  %v438 = vmul.f32 1.0, %v437
  %v439 = vtanh.pop %v405
  %v441 = vrot.slane %v297, 2
  %v443 = vmul.f32 %v438, %v441
  %445 = vrot.lane.b32.xlu0 %v439, 64
  %v446 = vpop.permute.xlu0 %445
  %v448 = vmul.f32 %v438, %v446
  %450 = vrot.lane.b32.xlu0 %v448, 32
  %v451 = vpop.permute.xlu0 %450
  %v453 = vadd.f32 %v443, %v451
  %v454 = vtanh.pop %v453
  %456 = vrot.lane.b32.xlu0 %v454, 64
  %v457 = vpop.permute.xlu0 %456
  %v459 = vmul.f32 %v438, %v457
  %461 = vrot.lane.b32.xlu0 %v432, 32
  %v462 = vpop.permute.xlu0 %461
  %vm464 = vcmask 257026
  %465 = vst.msk [vmem:[%s4] sm:$0xc] %vm464, %v462
  %467 = vrot.lane.b32.xlu0 %v459, 64
  %v468 = vpop.permute.xlu0 %467
  %vm470 = vcmask 521476
  %471 = vst.msk [vmem:[%s4 + $0x18] sm:$0x30] %vm470, %v468
  %v472 = vrot.slane %v459, 2
  %473 = vrot.lane.b32.xlu0 %v472, 64
  %v474 = vpop.permute.xlu0 %473
  %v476 = vsel %vm320, %v462, %v474
  %v478 = vrot.slane %v476, 2
  %v479 = vsel %vm49, %v478, 0
  %481 = vmatprep.subr.mxu0 %v160
  %482 = vmatpush1.msra.mxu0 %v159
  %483 = vmatprep.subr.mxu0 %v162
  %484 = vmatpush1.msra.mxu0 %v161
  %485 = vmatprep.subr.mxu0 %v164
  %486 = vmatpush1.msra.mxu0 %v163
  %487 = vmatprep.subr.mxu0 %v166
  %488 = vmatpush1.msra.mxu0 %v165
  %489 = vmatprep.subr.mxu0 %v168
  %490 = vmatpush1.msra.mxu0 %v167
  %491 = vmatprep.subr.mxu0 %v170
  %492 = vmatpush1.msra.mxu0 %v169
  %493 = vmatprep.subr.mxu0 %v172
  %494 = vmatpush1.msra.mxu0 %v171
  %495 = vmatprep.subr.mxu0 %v174
  %496 = vmatpush1.msra.mxu0 %v173
  %497 = vmatprep.subr.mxu0 0.0
  %498 = vmatpush1.msra.mxu0 0.0
  %499 = vmatprep.subr.mxu0 0.0
  %500 = vmatpush1.msra.mxu0 0.0
  %501 = vmatprep.subr.mxu0 0.0
  %502 = vmatpush1.msra.mxu0 0.0
  %503 = vmatprep.subr.mxu0 0.0
  %504 = vmatpush1.msra.mxu0 0.0
  %505 = vmatprep.subr.mxu0 0.0
  %506 = vmatpush1.msra.mxu0 0.0
  %507 = vmatprep.subr.mxu0 0.0
  %508 = vmatpush1.msra.mxu0 0.0
  %509 = vmatprep.subr.mxu0 0.0
  %510 = vmatpush1.msra.mxu0 0.0
  %511 = vmatprep.subr.mxu0 0.0
  %512 = vmatpush1.msra.mxu0 0.0
  %513 = vmatprep.subr.mxu0 0.0
  %514 = vmatpush1.msra.mxu0 0.0
  %515 = vmatprep.subr.mxu0 0.0
  %516 = vmatpush1.msra.mxu0 0.0
  %517 = vmatprep.subr.mxu0 0.0
  %518 = vmatpush1.msra.mxu0 0.0
  %519 = vmatprep.subr.mxu0 0.0
  %520 = vmatpush1.msra.mxu0 0.0
  %521 = vmatprep.subr.mxu0 0.0
  %522 = vmatpush1.msra.mxu0 0.0
  %523 = vmatprep.subr.mxu0 0.0
  %524 = vmatpush1.msra.mxu0 0.0
  %525 = vmatprep.subr.mxu0 0.0
  %526 = vmatpush1.msra.mxu0 0.0
  %527 = vmatprep.subr.mxu0 0.0
  %528 = vmatpush1.msra.mxu0 0.0
  %529 = vmatprep.subr.mxu0 0.0
  %530 = vmatpush1.msra.mxu0 0.0
  %531 = vmatprep.subr.mxu0 0.0
  %532 = vmatpush1.msra.mxu0 0.0
  %533 = vmatprep.subr.mxu0 0.0
  %534 = vmatpush1.msra.mxu0 0.0
  %535 = vmatprep.subr.mxu0 0.0
  %536 = vmatpush1.msra.mxu0 0.0
  %537 = vmatprep.subr.mxu0 0.0
  %538 = vmatpush1.msra.mxu0 0.0
  %539 = vmatprep.subr.mxu0 0.0
  %540 = vmatpush1.msra.mxu0 0.0
  %541 = vmatprep.subr.mxu0 0.0
  %542 = vmatpush1.msra.mxu0 0.0
  %543 = vmatprep.subr.mxu0 0.0
  %544 = vmatpush1.msra.mxu0 0.0
  %545 = vmatprep.mubr.f32.mxu0 0.0
  %546 = vmatmul.mubr.f32.gmra.mrb[0].mxu0 %v479
  %v547 = vpop.f32.mrb[0].mxu0
  %v548 = vadd.f32 0.0, %v547
  %v549 = vpop.f32.mrb[0].mxu0
  %v550 = vadd.f32 0.0, %v549
  %551 = vdwg.mxu0
  %v552 = vld [vmem:[#allocation2] sm:$0x30]
  %v554 = vrot.slane %v548, 4
  %v556 = vadd.f32 %v552, %v554
  %v557 = vld [vmem:[#allocation2 + $0x38] sm:$0xc]
  %v559 = vrot.slane %v550, 6
  %v561 = vadd.f32 %v557, %v559
  %v562 = vxor.u32 %v556, 2147483648
  %v563 = vmul.f32 %v562, 1.442695
  %v564 = vpow.pop %v563
  %v565 = vadd.f32 %v564, 1.0
  %v566 = vrcp.pop %v565
  %v567 = vmul.f32 1.0, %v566
  %v568 = vtanh.pop %v556
  %v570 = vrot.slane %v426, 6
  %v572 = vmul.f32 %v567, %v570
  %574 = vrot.lane.b32.xlu0 %v568, 64
  %v575 = vpop.permute.xlu0 %574
  %v577 = vmul.f32 %v567, %v575
  %579 = vrot.lane.b32.xlu0 %v577, 32
  %v580 = vpop.permute.xlu0 %579
  %v582 = vadd.f32 %v572, %v580
  %v583 = vtanh.pop %v582
  %585 = vrot.lane.b32.xlu0 %v583, 64
  %v586 = vpop.permute.xlu0 %585
  %v588 = vmul.f32 %v567, %v586
  %v589 = vxor.u32 %v561, 2147483648
  %v590 = vmul.f32 %v589, 1.442695
  %v591 = vpow.pop %v590
  %v592 = vadd.f32 %v591, 1.0
  %v593 = vrcp.pop %v592
  %v594 = vmul.f32 1.0, %v593
  %v595 = vtanh.pop %v561
  %v597 = vrot.slane %v453, 2
  %v599 = vmul.f32 %v594, %v597
  %601 = vrot.lane.b32.xlu0 %v595, 64
  %v602 = vpop.permute.xlu0 %601
  %v604 = vmul.f32 %v594, %v602
  %606 = vrot.lane.b32.xlu0 %v604, 32
  %v607 = vpop.permute.xlu0 %606
  %v609 = vadd.f32 %v599, %v607
  %v610 = vtanh.pop %v609
  %612 = vrot.lane.b32.xlu0 %v610, 64
  %v613 = vpop.permute.xlu0 %612
  %v615 = vmul.f32 %v594, %v613
  %617 = vrot.lane.b32.xlu0 %v588, 32
  %v618 = vpop.permute.xlu0 %617
  %vm620 = vcmask 259076
  %621 = vst.msk [vmem:[%s4] sm:$0x30] %vm620, %v618
  %623 = vrot.lane.b32.xlu0 %v615, 64
  %v624 = vpop.permute.xlu0 %623
  %vm626 = vcmask 519426
  %627 = vst.msk [vmem:[%s4 + $0x18] sm:$0xc] %vm626, %v624
  %v628 = vrot.slane %v615, 6
  %629 = vrot.lane.b32.xlu0 %v628, 64
  %v630 = vpop.permute.xlu0 %629
  %v632 = vsel %vm320, %v618, %v630
  %v634 = vrot.slane %v632, 4
  %v635 = vsel %vm49, %v634, 0
  %637 = vmatprep.subr.mxu0 %v160
  %638 = vmatpush1.msra.mxu0 %v159
  %639 = vmatprep.subr.mxu0 %v162
  %640 = vmatpush1.msra.mxu0 %v161
  %641 = vmatprep.subr.mxu0 %v164
  %642 = vmatpush1.msra.mxu0 %v163
  %643 = vmatprep.subr.mxu0 %v166
  %644 = vmatpush1.msra.mxu0 %v165
  %645 = vmatprep.subr.mxu0 %v168
  %646 = vmatpush1.msra.mxu0 %v167
  %647 = vmatprep.subr.mxu0 %v170
  %648 = vmatpush1.msra.mxu0 %v169
  %649 = vmatprep.subr.mxu0 %v172
  %650 = vmatpush1.msra.mxu0 %v171
  %651 = vmatprep.subr.mxu0 %v174
  %652 = vmatpush1.msra.mxu0 %v173
  %653 = vmatprep.subr.mxu0 0.0
  %654 = vmatpush1.msra.mxu0 0.0
  %655 = vmatprep.subr.mxu0 0.0
  %656 = vmatpush1.msra.mxu0 0.0
  %657 = vmatprep.subr.mxu0 0.0
  %658 = vmatpush1.msra.mxu0 0.0
  %659 = vmatprep.subr.mxu0 0.0
  %660 = vmatpush1.msra.mxu0 0.0
  %661 = vmatprep.subr.mxu0 0.0
  %662 = vmatpush1.msra.mxu0 0.0
  %663 = vmatprep.subr.mxu0 0.0
  %664 = vmatpush1.msra.mxu0 0.0
  %665 = vmatprep.subr.mxu0 0.0
  %666 = vmatpush1.msra.mxu0 0.0
  %667 = vmatprep.subr.mxu0 0.0
  %668 = vmatpush1.msra.mxu0 0.0
  %669 = vmatprep.subr.mxu0 0.0
  %670 = vmatpush1.msra.mxu0 0.0
  %671 = vmatprep.subr.mxu0 0.0
  %672 = vmatpush1.msra.mxu0 0.0
  %673 = vmatprep.subr.mxu0 0.0
  %674 = vmatpush1.msra.mxu0 0.0
  %675 = vmatprep.subr.mxu0 0.0
  %676 = vmatpush1.msra.mxu0 0.0
  %677 = vmatprep.subr.mxu0 0.0
  %678 = vmatpush1.msra.mxu0 0.0
  %679 = vmatprep.subr.mxu0 0.0
  %680 = vmatpush1.msra.mxu0 0.0
  %681 = vmatprep.subr.mxu0 0.0
  %682 = vmatpush1.msra.mxu0 0.0
  %683 = vmatprep.subr.mxu0 0.0
  %684 = vmatpush1.msra.mxu0 0.0
  %685 = vmatprep.subr.mxu0 0.0
  %686 = vmatpush1.msra.mxu0 0.0
  %687 = vmatprep.subr.mxu0 0.0
  %688 = vmatpush1.msra.mxu0 0.0
  %689 = vmatprep.subr.mxu0 0.0
  %690 = vmatpush1.msra.mxu0 0.0
  %691 = vmatprep.subr.mxu0 0.0
  %692 = vmatpush1.msra.mxu0 0.0
  %693 = vmatprep.subr.mxu0 0.0
  %694 = vmatpush1.msra.mxu0 0.0
  %695 = vmatprep.subr.mxu0 0.0
  %696 = vmatpush1.msra.mxu0 0.0
  %697 = vmatprep.subr.mxu0 0.0
  %698 = vmatpush1.msra.mxu0 0.0
  %699 = vmatprep.subr.mxu0 0.0
  %700 = vmatpush1.msra.mxu0 0.0
  %701 = vmatprep.mubr.f32.mxu0 0.0
  %702 = vmatmul.mubr.f32.gmra.mrb[0].mxu0 %v635
  %v703 = vpop.f32.mrb[0].mxu0
  %v704 = vadd.f32 0.0, %v703
  %v705 = vpop.f32.mrb[0].mxu0
  %v706 = vadd.f32 0.0, %v705
  %707 = vdwg.mxu0
  %v708 = vld [vmem:[#allocation2] sm:$0xc0]
  %v710 = vrot.slane %v704, 2
  %v712 = vadd.f32 %v708, %v710
  %v713 = vld [vmem:[#allocation2 + $0x38] sm:$0x3]
  %v714 = vadd.f32 %v713, %v706
  %v715 = vxor.u32 %v712, 2147483648
  %v716 = vmul.f32 %v715, 1.442695
  %v717 = vpow.pop %v716
  %v718 = vadd.f32 %v717, 1.0
  %v719 = vrcp.pop %v718
  %v720 = vmul.f32 1.0, %v719
  %v721 = vtanh.pop %v712
  %v723 = vrot.slane %v582, 6
  %v725 = vmul.f32 %v720, %v723
  %727 = vrot.lane.b32.xlu0 %v721, 64
  %v728 = vpop.permute.xlu0 %727
  %v730 = vmul.f32 %v720, %v728
  %732 = vrot.lane.b32.xlu0 %v730, 32
  %v733 = vpop.permute.xlu0 %732
  %v735 = vadd.f32 %v725, %v733
  %v736 = vtanh.pop %v735
  %738 = vrot.lane.b32.xlu0 %v736, 64
  %v739 = vpop.permute.xlu0 %738
  %v741 = vmul.f32 %v720, %v739
  %v742 = vxor.u32 %v714, 2147483648
  %v743 = vmul.f32 %v742, 1.442695
  %v744 = vpow.pop %v743
  %v745 = vadd.f32 %v744, 1.0
  %v746 = vrcp.pop %v745
  %v747 = vmul.f32 1.0, %v746
  %v748 = vtanh.pop %v714
  %v750 = vrot.slane %v609, 2
  %v752 = vmul.f32 %v747, %v750
  %754 = vrot.lane.b32.xlu0 %v748, 64
  %v755 = vpop.permute.xlu0 %754
  %v757 = vmul.f32 %v747, %v755
  %759 = vrot.lane.b32.xlu0 %v757, 32
  %v760 = vpop.permute.xlu0 %759
  %v762 = vadd.f32 %v752, %v760
  %v763 = vtanh.pop %v762
  %765 = vrot.lane.b32.xlu0 %v763, 64
  %v766 = vpop.permute.xlu0 %765
  %v768 = vmul.f32 %v747, %v766
  %770 = vrot.lane.b32.xlu0 %v741, 32
  %v771 = vpop.permute.xlu0 %770
  %vm773 = vcmask 261126
  %774 = vst.msk [vmem:[%s4] sm:$0xc0] %vm773, %v771
  %776 = vrot.lane.b32.xlu0 %v768, 64
  %v777 = vpop.permute.xlu0 %776
  %vm779 = vcmask 517376
  %780 = vst.msk [vmem:[%s4 + $0x18] sm:$0x3] %vm779, %v777
  %v781 = vrot.slane %v768, 2
  %782 = vrot.lane.b32.xlu0 %v781, 64
  %v783 = vpop.permute.xlu0 %782
  %v785 = vsel %vm320, %v771, %v783
  %v787 = vrot.slane %v785, 6
  %v788 = vsel %vm49, %v787, 0
  %790 = vmatprep.subr.mxu0 %v160
  %791 = vmatpush1.msra.mxu0 %v159
  %792 = vmatprep.subr.mxu0 %v162
  %793 = vmatpush1.msra.mxu0 %v161
  %794 = vmatprep.subr.mxu0 %v164
  %795 = vmatpush1.msra.mxu0 %v163
  %796 = vmatprep.subr.mxu0 %v166
  %797 = vmatpush1.msra.mxu0 %v165
  %798 = vmatprep.subr.mxu0 %v168
  %799 = vmatpush1.msra.mxu0 %v167
  %800 = vmatprep.subr.mxu0 %v170
  %801 = vmatpush1.msra.mxu0 %v169
  %802 = vmatprep.subr.mxu0 %v172
  %803 = vmatpush1.msra.mxu0 %v171
  %804 = vmatprep.subr.mxu0 %v174
  %805 = vmatpush1.msra.mxu0 %v173
  %806 = vmatprep.subr.mxu0 0.0
  %807 = vmatpush1.msra.mxu0 0.0
  %808 = vmatprep.subr.mxu0 0.0
  %809 = vmatpush1.msra.mxu0 0.0
  %810 = vmatprep.subr.mxu0 0.0
  %811 = vmatpush1.msra.mxu0 0.0
  %812 = vmatprep.subr.mxu0 0.0
  %813 = vmatpush1.msra.mxu0 0.0
  %814 = vmatprep.subr.mxu0 0.0
  %815 = vmatpush1.msra.mxu0 0.0
  %816 = vmatprep.subr.mxu0 0.0
  %817 = vmatpush1.msra.mxu0 0.0
  %818 = vmatprep.subr.mxu0 0.0
  %819 = vmatpush1.msra.mxu0 0.0
  %820 = vmatprep.subr.mxu0 0.0
  %821 = vmatpush1.msra.mxu0 0.0
  %822 = vmatprep.subr.mxu0 0.0
  %823 = vmatpush1.msra.mxu0 0.0
  %824 = vmatprep.subr.mxu0 0.0
  %825 = vmatpush1.msra.mxu0 0.0
  %826 = vmatprep.subr.mxu0 0.0
  %827 = vmatpush1.msra.mxu0 0.0
  %828 = vmatprep.subr.mxu0 0.0
  %829 = vmatpush1.msra.mxu0 0.0
  %830 = vmatprep.subr.mxu0 0.0
  %831 = vmatpush1.msra.mxu0 0.0
  %832 = vmatprep.subr.mxu0 0.0
  %833 = vmatpush1.msra.mxu0 0.0
  %834 = vmatprep.subr.mxu0 0.0
  %835 = vmatpush1.msra.mxu0 0.0
  %836 = vmatprep.subr.mxu0 0.0
  %837 = vmatpush1.msra.mxu0 0.0
  %838 = vmatprep.subr.mxu0 0.0
  %839 = vmatpush1.msra.mxu0 0.0
  %840 = vmatprep.subr.mxu0 0.0
  %841 = vmatpush1.msra.mxu0 0.0
  %842 = vmatprep.subr.mxu0 0.0
  %843 = vmatpush1.msra.mxu0 0.0
  %844 = vmatprep.subr.mxu0 0.0
  %845 = vmatpush1.msra.mxu0 0.0
  %846 = vmatprep.subr.mxu0 0.0
  %847 = vmatpush1.msra.mxu0 0.0
  %848 = vmatprep.subr.mxu0 0.0
  %849 = vmatpush1.msra.mxu0 0.0
  %850 = vmatprep.subr.mxu0 0.0
  %851 = vmatpush1.msra.mxu0 0.0
  %852 = vmatprep.subr.mxu0 0.0
  %853 = vmatpush1.msra.mxu0 0.0
  %854 = vmatprep.mubr.f32.mxu0 0.0
  %855 = vmatmul.mubr.f32.gmra.mrb[0].mxu0 %v788
  %v856 = vpop.f32.mrb[0].mxu0
  %v857 = vadd.f32 0.0, %v856
  %v858 = vpop.f32.mrb[0].mxu0
  %v859 = vadd.f32 0.0, %v858
  %860 = vdwg.mxu0
  %v861 = vld [vmem:[#allocation2 + $0x10] sm:$0x3]
  %v862 = vadd.f32 %v861, %v857
  %v863 = vld [vmem:[#allocation2 + $0x28] sm:$0xc0]
  %v865 = vrot.slane %v859, 2
  %v867 = vadd.f32 %v863, %v865
  %v868 = vxor.u32 %v862, 2147483648
  %v869 = vmul.f32 %v868, 1.442695
  %v870 = vpow.pop %v869
  %v871 = vadd.f32 %v870, 1.0
  %v872 = vrcp.pop %v871
  %v873 = vmul.f32 1.0, %v872
  %v874 = vtanh.pop %v862
  %v876 = vrot.slane %v735, 6
  %v878 = vmul.f32 %v873, %v876
  %880 = vrot.lane.b32.xlu0 %v874, 64
  %v881 = vpop.permute.xlu0 %880
  %v883 = vmul.f32 %v873, %v881
  %885 = vrot.lane.b32.xlu0 %v883, 32
  %v886 = vpop.permute.xlu0 %885
  %v888 = vadd.f32 %v878, %v886
  %v889 = vtanh.pop %v888
  %891 = vrot.lane.b32.xlu0 %v889, 64
  %v892 = vpop.permute.xlu0 %891
  %v894 = vmul.f32 %v873, %v892
  %v895 = vxor.u32 %v867, 2147483648
  %v896 = vmul.f32 %v895, 1.442695
  %v897 = vpow.pop %v896
  %v898 = vadd.f32 %v897, 1.0
  %v899 = vrcp.pop %v898
  %v900 = vmul.f32 1.0, %v899
  %v901 = vtanh.pop %v867
  %v903 = vrot.slane %v762, 2
  %v905 = vmul.f32 %v900, %v903
  %907 = vrot.lane.b32.xlu0 %v901, 64
  %v908 = vpop.permute.xlu0 %907
  %v910 = vmul.f32 %v900, %v908
  %912 = vrot.lane.b32.xlu0 %v910, 32
  %v913 = vpop.permute.xlu0 %912
  %v915 = vadd.f32 %v905, %v913
  %v916 = vtanh.pop %v915
  %918 = vrot.lane.b32.xlu0 %v916, 64
  %v919 = vpop.permute.xlu0 %918
  %v921 = vmul.f32 %v900, %v919
  %923 = vrot.lane.b32.xlu0 %v894, 32
  %v924 = vpop.permute.xlu0 %923
  %926 = vst.msk [vmem:[%s4 + $0x8] sm:$0x3] %vm308, %v924
  %928 = vrot.lane.b32.xlu0 %v921, 64
  %v929 = vpop.permute.xlu0 %928
  %931 = vst.msk [vmem:[%s4 + $0x10] sm:$0xc0] %vm314, %v929
  %v932 = vrot.slane %v921, 6
  %933 = vrot.lane.b32.xlu0 %v932, 64
  %v934 = vpop.permute.xlu0 %933
  %v936 = vsel %vm320, %v924, %v934
  %v938 = vsel %vm49, %v936, 0
  %940 = vmatprep.subr.mxu0 %v160
  %941 = vmatpush1.msra.mxu0 %v159
  %942 = vmatprep.subr.mxu0 %v162
  %943 = vmatpush1.msra.mxu0 %v161
  %944 = vmatprep.subr.mxu0 %v164
  %945 = vmatpush1.msra.mxu0 %v163
  %946 = vmatprep.subr.mxu0 %v166
  %947 = vmatpush1.msra.mxu0 %v165
  %948 = vmatprep.subr.mxu0 %v168
  %949 = vmatpush1.msra.mxu0 %v167
  %950 = vmatprep.subr.mxu0 %v170
  %951 = vmatpush1.msra.mxu0 %v169
  %952 = vmatprep.subr.mxu0 %v172
  %953 = vmatpush1.msra.mxu0 %v171
  %954 = vmatprep.subr.mxu0 %v174
  %955 = vmatpush1.msra.mxu0 %v173
  %956 = vmatprep.subr.mxu0 0.0
  %957 = vmatpush1.msra.mxu0 0.0
  %958 = vmatprep.subr.mxu0 0.0
  %959 = vmatpush1.msra.mxu0 0.0
  %960 = vmatprep.subr.mxu0 0.0
  %961 = vmatpush1.msra.mxu0 0.0
  %962 = vmatprep.subr.mxu0 0.0
  %963 = vmatpush1.msra.mxu0 0.0
  %964 = vmatprep.subr.mxu0 0.0
  %965 = vmatpush1.msra.mxu0 0.0
  %966 = vmatprep.subr.mxu0 0.0
  %967 = vmatpush1.msra.mxu0 0.0
  %968 = vmatprep.subr.mxu0 0.0
  %969 = vmatpush1.msra.mxu0 0.0
  %970 = vmatprep.subr.mxu0 0.0
  %971 = vmatpush1.msra.mxu0 0.0
  %972 = vmatprep.subr.mxu0 0.0
  %973 = vmatpush1.msra.mxu0 0.0
  %974 = vmatprep.subr.mxu0 0.0
  %975 = vmatpush1.msra.mxu0 0.0
  %976 = vmatprep.subr.mxu0 0.0
  %977 = vmatpush1.msra.mxu0 0.0
  %978 = vmatprep.subr.mxu0 0.0
  %979 = vmatpush1.msra.mxu0 0.0
  %980 = vmatprep.subr.mxu0 0.0
  %981 = vmatpush1.msra.mxu0 0.0
  %982 = vmatprep.subr.mxu0 0.0
  %983 = vmatpush1.msra.mxu0 0.0
  %984 = vmatprep.subr.mxu0 0.0
  %985 = vmatpush1.msra.mxu0 0.0
  %986 = vmatprep.subr.mxu0 0.0
  %987 = vmatpush1.msra.mxu0 0.0
  %988 = vmatprep.subr.mxu0 0.0
  %989 = vmatpush1.msra.mxu0 0.0
  %990 = vmatprep.subr.mxu0 0.0
  %991 = vmatpush1.msra.mxu0 0.0
  %992 = vmatprep.subr.mxu0 0.0
  %993 = vmatpush1.msra.mxu0 0.0
  %994 = vmatprep.subr.mxu0 0.0
  %995 = vmatpush1.msra.mxu0 0.0
  %996 = vmatprep.subr.mxu0 0.0
  %997 = vmatpush1.msra.mxu0 0.0
  %998 = vmatprep.subr.mxu0 0.0
  %999 = vmatpush1.msra.mxu0 0.0
  %1000 = vmatprep.subr.mxu0 0.0
  %1001 = vmatpush1.msra.mxu0 0.0
  %1002 = vmatprep.subr.mxu0 0.0
  %1003 = vmatpush1.msra.mxu0 0.0
  %1004 = vmatprep.mubr.f32.mxu0 0.0
  %1005 = vmatmul.mubr.f32.gmra.mrb[0].mxu0 %v938
  %v1006 = vpop.f32.mrb[0].mxu0
  %v1007 = vadd.f32 0.0, %v1006
  %v1008 = vpop.f32.mrb[0].mxu0
  %v1009 = vadd.f32 0.0, %v1008
  %1010 = vdwg.mxu0
  %v1011 = vld [vmem:[#allocation2 + $0x10] sm:$0xc]
  %v1013 = vrot.slane %v1007, 6
  %v1015 = vadd.f32 %v1011, %v1013
  %v1016 = vld [vmem:[#allocation2 + $0x28] sm:$0x30]
  %v1018 = vrot.slane %v1009, 4
  %v1020 = vadd.f32 %v1016, %v1018
  %v1021 = vxor.u32 %v1015, 2147483648
  %v1022 = vmul.f32 %v1021, 1.442695
  %v1023 = vpow.pop %v1022
  %v1024 = vadd.f32 %v1023, 1.0
  %v1025 = vrcp.pop %v1024
  %v1026 = vmul.f32 1.0, %v1025
  %v1027 = vtanh.pop %v1015
  %v1029 = vrot.slane %v888, 6
  %v1031 = vmul.f32 %v1026, %v1029
  %1033 = vrot.lane.b32.xlu0 %v1027, 64
  %v1034 = vpop.permute.xlu0 %1033
  %v1036 = vmul.f32 %v1026, %v1034
  %1038 = vrot.lane.b32.xlu0 %v1036, 32
  %v1039 = vpop.permute.xlu0 %1038
  %v1041 = vadd.f32 %v1031, %v1039
  %v1042 = vtanh.pop %v1041
  %1044 = vrot.lane.b32.xlu0 %v1042, 64
  %v1045 = vpop.permute.xlu0 %1044
  %v1047 = vmul.f32 %v1026, %v1045
  %v1048 = vxor.u32 %v1020, 2147483648
  %v1049 = vmul.f32 %v1048, 1.442695
  %v1050 = vpow.pop %v1049
  %v1051 = vadd.f32 %v1050, 1.0
  %v1052 = vrcp.pop %v1051
  %v1053 = vmul.f32 1.0, %v1052
  %v1054 = vtanh.pop %v1020
  %v1056 = vrot.slane %v915, 2
  %v1058 = vmul.f32 %v1053, %v1056
  %1060 = vrot.lane.b32.xlu0 %v1054, 64
  %v1061 = vpop.permute.xlu0 %1060
  %v1063 = vmul.f32 %v1053, %v1061
  %1065 = vrot.lane.b32.xlu0 %v1063, 32
  %v1066 = vpop.permute.xlu0 %1065
  %v1068 = vadd.f32 %v1058, %v1066
  %v1069 = vtanh.pop %v1068
  %1071 = vrot.lane.b32.xlu0 %v1069, 64
  %v1072 = vpop.permute.xlu0 %1071
  %v1074 = vmul.f32 %v1053, %v1072
  %1076 = vrot.lane.b32.xlu0 %v1047, 32
  %v1077 = vpop.permute.xlu0 %1076
  %1079 = vst.msk [vmem:[%s4 + $0x8] sm:$0xc] %vm464, %v1077
  %1081 = vrot.lane.b32.xlu0 %v1074, 64
  %v1082 = vpop.permute.xlu0 %1081
  %1084 = vst.msk [vmem:[%s4 + $0x10] sm:$0x30] %vm470, %v1082
  %v1085 = vrot.slane %v1074, 2
  %1086 = vrot.lane.b32.xlu0 %v1085, 64
  %v1087 = vpop.permute.xlu0 %1086
  %v1089 = vsel %vm320, %v1077, %v1087
  %v1091 = vrot.slane %v1089, 2
  %v1092 = vsel %vm49, %v1091, 0
  %1094 = vmatprep.subr.mxu0 %v160
  %1095 = vmatpush1.msra.mxu0 %v159
  %1096 = vmatprep.subr.mxu0 %v162
  %1097 = vmatpush1.msra.mxu0 %v161
  %1098 = vmatprep.subr.mxu0 %v164
  %1099 = vmatpush1.msra.mxu0 %v163
  %1100 = vmatprep.subr.mxu0 %v166
  %1101 = vmatpush1.msra.mxu0 %v165
  %1102 = vmatprep.subr.mxu0 %v168
  %1103 = vmatpush1.msra.mxu0 %v167
  %1104 = vmatprep.subr.mxu0 %v170
  %1105 = vmatpush1.msra.mxu0 %v169
  %1106 = vmatprep.subr.mxu0 %v172
  %1107 = vmatpush1.msra.mxu0 %v171
  %1108 = vmatprep.subr.mxu0 %v174
  %1109 = vmatpush1.msra.mxu0 %v173
  %1110 = vmatprep.subr.mxu0 0.0
  %1111 = vmatpush1.msra.mxu0 0.0
  %1112 = vmatprep.subr.mxu0 0.0
  %1113 = vmatpush1.msra.mxu0 0.0
  %1114 = vmatprep.subr.mxu0 0.0
  %1115 = vmatpush1.msra.mxu0 0.0
  %1116 = vmatprep.subr.mxu0 0.0
  %1117 = vmatpush1.msra.mxu0 0.0
  %1118 = vmatprep.subr.mxu0 0.0
  %1119 = vmatpush1.msra.mxu0 0.0
  %1120 = vmatprep.subr.mxu0 0.0
  %1121 = vmatpush1.msra.mxu0 0.0
  %1122 = vmatprep.subr.mxu0 0.0
  %1123 = vmatpush1.msra.mxu0 0.0
  %1124 = vmatprep.subr.mxu0 0.0
  %1125 = vmatpush1.msra.mxu0 0.0
  %1126 = vmatprep.subr.mxu0 0.0
  %1127 = vmatpush1.msra.mxu0 0.0
  %1128 = vmatprep.subr.mxu0 0.0
  %1129 = vmatpush1.msra.mxu0 0.0
  %1130 = vmatprep.subr.mxu0 0.0
  %1131 = vmatpush1.msra.mxu0 0.0
  %1132 = vmatprep.subr.mxu0 0.0
  %1133 = vmatpush1.msra.mxu0 0.0
  %1134 = vmatprep.subr.mxu0 0.0
  %1135 = vmatpush1.msra.mxu0 0.0
  %1136 = vmatprep.subr.mxu0 0.0
  %1137 = vmatpush1.msra.mxu0 0.0
  %1138 = vmatprep.subr.mxu0 0.0
  %1139 = vmatpush1.msra.mxu0 0.0
  %1140 = vmatprep.subr.mxu0 0.0
  %1141 = vmatpush1.msra.mxu0 0.0
  %1142 = vmatprep.subr.mxu0 0.0
  %1143 = vmatpush1.msra.mxu0 0.0
  %1144 = vmatprep.subr.mxu0 0.0
  %1145 = vmatpush1.msra.mxu0 0.0
  %1146 = vmatprep.subr.mxu0 0.0
  %1147 = vmatpush1.msra.mxu0 0.0
  %1148 = vmatprep.subr.mxu0 0.0
  %1149 = vmatpush1.msra.mxu0 0.0
  %1150 = vmatprep.subr.mxu0 0.0
  %1151 = vmatpush1.msra.mxu0 0.0
  %1152 = vmatprep.subr.mxu0 0.0
  %1153 = vmatpush1.msra.mxu0 0.0
  %1154 = vmatprep.subr.mxu0 0.0
  %1155 = vmatpush1.msra.mxu0 0.0
  %1156 = vmatprep.subr.mxu0 0.0
  %1157 = vmatpush1.msra.mxu0 0.0
  %1158 = vmatprep.mubr.f32.mxu0 0.0
  %1159 = vmatmul.mubr.f32.gmra.mrb[0].mxu0 %v1092
  %v1160 = vpop.f32.mrb[0].mxu0
  %v1161 = vadd.f32 0.0, %v1160
  %v1162 = vpop.f32.mrb[0].mxu0
  %v1163 = vadd.f32 0.0, %v1162
  %1164 = vdwg.mxu0
  %v1165 = vld [vmem:[#allocation2 + $0x10] sm:$0x30]
  %v1167 = vrot.slane %v1161, 4
  %v1169 = vadd.f32 %v1165, %v1167
  %v1170 = vld [vmem:[#allocation2 + $0x28] sm:$0xc]
  %v1172 = vrot.slane %v1163, 6
  %v1174 = vadd.f32 %v1170, %v1172
  %v1175 = vxor.u32 %v1169, 2147483648
  %v1176 = vmul.f32 %v1175, 1.442695
  %v1177 = vpow.pop %v1176
  %v1178 = vadd.f32 %v1177, 1.0
  %v1179 = vrcp.pop %v1178
  %v1180 = vmul.f32 1.0, %v1179
  %v1181 = vtanh.pop %v1169
  %v1183 = vrot.slane %v1041, 6
  %v1185 = vmul.f32 %v1180, %v1183
  %1187 = vrot.lane.b32.xlu0 %v1181, 64
  %v1188 = vpop.permute.xlu0 %1187
  %v1190 = vmul.f32 %v1180, %v1188
  %1192 = vrot.lane.b32.xlu0 %v1190, 32
  %v1193 = vpop.permute.xlu0 %1192
  %v1195 = vadd.f32 %v1185, %v1193
  %v1196 = vtanh.pop %v1195
  %1198 = vrot.lane.b32.xlu0 %v1196, 64
  %v1199 = vpop.permute.xlu0 %1198
  %v1201 = vmul.f32 %v1180, %v1199
  %v1202 = vxor.u32 %v1174, 2147483648
  %v1203 = vmul.f32 %v1202, 1.442695
  %v1204 = vpow.pop %v1203
  %v1205 = vadd.f32 %v1204, 1.0
  %v1206 = vrcp.pop %v1205
  %v1207 = vmul.f32 1.0, %v1206
  %v1208 = vtanh.pop %v1174
  %v1210 = vrot.slane %v1068, 2
  %v1212 = vmul.f32 %v1207, %v1210
  %1214 = vrot.lane.b32.xlu0 %v1208, 64
  %v1215 = vpop.permute.xlu0 %1214
  %v1217 = vmul.f32 %v1207, %v1215
  %1219 = vrot.lane.b32.xlu0 %v1217, 32
  %v1220 = vpop.permute.xlu0 %1219
  %v1222 = vadd.f32 %v1212, %v1220
  %v1223 = vtanh.pop %v1222
  %1225 = vrot.lane.b32.xlu0 %v1223, 64
  %v1226 = vpop.permute.xlu0 %1225
  %v1228 = vmul.f32 %v1207, %v1226
  %1230 = vrot.lane.b32.xlu0 %v1201, 32
  %v1231 = vpop.permute.xlu0 %1230
  %1233 = vst.msk [vmem:[%s4 + $0x8] sm:$0x30] %vm620, %v1231
  %1235 = vrot.lane.b32.xlu0 %v1228, 64
  %v1236 = vpop.permute.xlu0 %1235
  %1238 = vst.msk [vmem:[%s4 + $0x10] sm:$0xc] %vm626, %v1236
  %v1239 = vrot.slane %v1228, 6
  %1240 = vrot.lane.b32.xlu0 %v1239, 64
  %v1241 = vpop.permute.xlu0 %1240
  %v1243 = vsel %vm320, %v1231, %v1241
  %v1245 = vrot.slane %v1243, 4
  %v1246 = vsel %vm49, %v1245, 0
  %1248 = vmatprep.subr.mxu0 %v160
  %1249 = vmatpush1.msra.mxu0 %v159
  %1250 = vmatprep.subr.mxu0 %v162
  %1251 = vmatpush1.msra.mxu0 %v161
  %1252 = vmatprep.subr.mxu0 %v164
  %1253 = vmatpush1.msra.mxu0 %v163
  %1254 = vmatprep.subr.mxu0 %v166
  %1255 = vmatpush1.msra.mxu0 %v165
  %1256 = vmatprep.subr.mxu0 %v168
  %1257 = vmatpush1.msra.mxu0 %v167
  %1258 = vmatprep.subr.mxu0 %v170
  %1259 = vmatpush1.msra.mxu0 %v169
  %1260 = vmatprep.subr.mxu0 %v172
  %1261 = vmatpush1.msra.mxu0 %v171
  %1262 = vmatprep.subr.mxu0 %v174
  %1263 = vmatpush1.msra.mxu0 %v173
  %1264 = vmatprep.subr.mxu0 0.0
  %1265 = vmatpush1.msra.mxu0 0.0
  %1266 = vmatprep.subr.mxu0 0.0
  %1267 = vmatpush1.msra.mxu0 0.0
  %1268 = vmatprep.subr.mxu0 0.0
  %1269 = vmatpush1.msra.mxu0 0.0
  %1270 = vmatprep.subr.mxu0 0.0
  %1271 = vmatpush1.msra.mxu0 0.0
  %1272 = vmatprep.subr.mxu0 0.0
  %1273 = vmatpush1.msra.mxu0 0.0
  %1274 = vmatprep.subr.mxu0 0.0
  %1275 = vmatpush1.msra.mxu0 0.0
  %1276 = vmatprep.subr.mxu0 0.0
  %1277 = vmatpush1.msra.mxu0 0.0
  %1278 = vmatprep.subr.mxu0 0.0
  %1279 = vmatpush1.msra.mxu0 0.0
  %1280 = vmatprep.subr.mxu0 0.0
  %1281 = vmatpush1.msra.mxu0 0.0
  %1282 = vmatprep.subr.mxu0 0.0
  %1283 = vmatpush1.msra.mxu0 0.0
  %1284 = vmatprep.subr.mxu0 0.0
  %1285 = vmatpush1.msra.mxu0 0.0
  %1286 = vmatprep.subr.mxu0 0.0
  %1287 = vmatpush1.msra.mxu0 0.0
  %1288 = vmatprep.subr.mxu0 0.0
  %1289 = vmatpush1.msra.mxu0 0.0
  %1290 = vmatprep.subr.mxu0 0.0
  %1291 = vmatpush1.msra.mxu0 0.0
  %1292 = vmatprep.subr.mxu0 0.0
  %1293 = vmatpush1.msra.mxu0 0.0
  %1294 = vmatprep.subr.mxu0 0.0
  %1295 = vmatpush1.msra.mxu0 0.0
  %1296 = vmatprep.subr.mxu0 0.0
  %1297 = vmatpush1.msra.mxu0 0.0
  %1298 = vmatprep.subr.mxu0 0.0
  %1299 = vmatpush1.msra.mxu0 0.0
  %1300 = vmatprep.subr.mxu0 0.0
  %1301 = vmatpush1.msra.mxu0 0.0
  %1302 = vmatprep.subr.mxu0 0.0
  %1303 = vmatpush1.msra.mxu0 0.0
  %1304 = vmatprep.subr.mxu0 0.0
  %1305 = vmatpush1.msra.mxu0 0.0
  %1306 = vmatprep.subr.mxu0 0.0
  %1307 = vmatpush1.msra.mxu0 0.0
  %1308 = vmatprep.subr.mxu0 0.0
  %1309 = vmatpush1.msra.mxu0 0.0
  %1310 = vmatprep.subr.mxu0 0.0
  %1311 = vmatpush1.msra.mxu0 0.0
  %1312 = vmatprep.mubr.f32.mxu0 0.0
  %1313 = vmatmul.mubr.f32.gmra.mrb[0].mxu0 %v1246
  %v1314 = vpop.f32.mrb[0].mxu0
  %v1315 = vadd.f32 0.0, %v1314
  %v1316 = vpop.f32.mrb[0].mxu0
  %v1317 = vadd.f32 0.0, %v1316
  %1318 = vdwg.mxu0
  %v1319 = vld [vmem:[#allocation2 + $0x10] sm:$0xc0]
  %v1321 = vrot.slane %v1315, 2
  %v1323 = vadd.f32 %v1319, %v1321
  %v1324 = vld [vmem:[#allocation2 + $0x28] sm:$0x3]
  %v1325 = vadd.f32 %v1324, %v1317
  %v1326 = vxor.u32 %v1323, 2147483648
  %v1327 = vmul.f32 %v1326, 1.442695
  %v1328 = vpow.pop %v1327
  %v1329 = vadd.f32 %v1328, 1.0
  %v1330 = vrcp.pop %v1329
  %v1331 = vmul.f32 1.0, %v1330
  %v1332 = vtanh.pop %v1323
  %v1334 = vrot.slane %v1195, 6
  %v1336 = vmul.f32 %v1331, %v1334
  %1338 = vrot.lane.b32.xlu0 %v1332, 64
  %v1339 = vpop.permute.xlu0 %1338
  %v1341 = vmul.f32 %v1331, %v1339
  %1343 = vrot.lane.b32.xlu0 %v1341, 32
  %v1344 = vpop.permute.xlu0 %1343
  %v1346 = vadd.f32 %v1336, %v1344
  %v1347 = vtanh.pop %v1346
  %1349 = vrot.lane.b32.xlu0 %v1347, 64
  %v1350 = vpop.permute.xlu0 %1349
  %v1352 = vmul.f32 %v1331, %v1350
  %v1353 = vxor.u32 %v1325, 2147483648
  %v1354 = vmul.f32 %v1353, 1.442695
  %v1355 = vpow.pop %v1354
  %v1356 = vadd.f32 %v1355, 1.0
  %v1357 = vrcp.pop %v1356
  %v1358 = vmul.f32 1.0, %v1357
  %v1359 = vtanh.pop %v1325
  %v1361 = vrot.slane %v1222, 2
  %v1363 = vmul.f32 %v1358, %v1361
  %1365 = vrot.lane.b32.xlu0 %v1359, 64
  %v1366 = vpop.permute.xlu0 %1365
  %v1368 = vmul.f32 %v1358, %v1366
  %1370 = vrot.lane.b32.xlu0 %v1368, 32
  %v1371 = vpop.permute.xlu0 %1370
  %v1373 = vadd.f32 %v1363, %v1371
  %v1374 = vtanh.pop %v1373
  %1376 = vrot.lane.b32.xlu0 %v1374, 64
  %v1377 = vpop.permute.xlu0 %1376
  %v1379 = vmul.f32 %v1358, %v1377
  %1381 = vrot.lane.b32.xlu0 %v1352, 32
  %v1382 = vpop.permute.xlu0 %1381
  %1384 = vst.msk [vmem:[%s4 + $0x8] sm:$0xc0] %vm773, %v1382
  %1386 = vrot.lane.b32.xlu0 %v1379, 64
  %v1387 = vpop.permute.xlu0 %1386
  %1389 = vst.msk [vmem:[%s4 + $0x10] sm:$0x3] %vm779, %v1387
  %v1390 = vrot.slane %v1379, 2
  %1391 = vrot.lane.b32.xlu0 %v1390, 64
  %v1392 = vpop.permute.xlu0 %1391
  %v1394 = vsel %vm320, %v1382, %v1392
  %v1396 = vrot.slane %v1394, 6
  %v1397 = vsel %vm49, %v1396, 0
  %1399 = vmatprep.subr.mxu0 %v160
  %1400 = vmatpush1.msra.mxu0 %v159
  %1401 = vmatprep.subr.mxu0 %v162
  %1402 = vmatpush1.msra.mxu0 %v161
  %1403 = vmatprep.subr.mxu0 %v164
  %1404 = vmatpush1.msra.mxu0 %v163
  %1405 = vmatprep.subr.mxu0 %v166
  %1406 = vmatpush1.msra.mxu0 %v165
  %1407 = vmatprep.subr.mxu0 %v168
  %1408 = vmatpush1.msra.mxu0 %v167
  %1409 = vmatprep.subr.mxu0 %v170
  %1410 = vmatpush1.msra.mxu0 %v169
  %1411 = vmatprep.subr.mxu0 %v172
  %1412 = vmatpush1.msra.mxu0 %v171
  %1413 = vmatprep.subr.mxu0 %v174
  %1414 = vmatpush1.msra.mxu0 %v173
  %1415 = vmatprep.subr.mxu0 0.0
  %1416 = vmatpush1.msra.mxu0 0.0
  %1417 = vmatprep.subr.mxu0 0.0
  %1418 = vmatpush1.msra.mxu0 0.0
  %1419 = vmatprep.subr.mxu0 0.0
  %1420 = vmatpush1.msra.mxu0 0.0
  %1421 = vmatprep.subr.mxu0 0.0
  %1422 = vmatpush1.msra.mxu0 0.0
  %1423 = vmatprep.subr.mxu0 0.0
  %1424 = vmatpush1.msra.mxu0 0.0
  %1425 = vmatprep.subr.mxu0 0.0
  %1426 = vmatpush1.msra.mxu0 0.0
  %1427 = vmatprep.subr.mxu0 0.0
  %1428 = vmatpush1.msra.mxu0 0.0
  %1429 = vmatprep.subr.mxu0 0.0
  %1430 = vmatpush1.msra.mxu0 0.0
  %1431 = vmatprep.subr.mxu0 0.0
  %1432 = vmatpush1.msra.mxu0 0.0
  %1433 = vmatprep.subr.mxu0 0.0
  %1434 = vmatpush1.msra.mxu0 0.0
  %1435 = vmatprep.subr.mxu0 0.0
  %1436 = vmatpush1.msra.mxu0 0.0
  %1437 = vmatprep.subr.mxu0 0.0
  %1438 = vmatpush1.msra.mxu0 0.0
  %1439 = vmatprep.subr.mxu0 0.0
  %1440 = vmatpush1.msra.mxu0 0.0
  %1441 = vmatprep.subr.mxu0 0.0
  %1442 = vmatpush1.msra.mxu0 0.0
  %1443 = vmatprep.subr.mxu0 0.0
  %1444 = vmatpush1.msra.mxu0 0.0
  %1445 = vmatprep.subr.mxu0 0.0
  %1446 = vmatpush1.msra.mxu0 0.0
  %1447 = vmatprep.subr.mxu0 0.0
  %1448 = vmatpush1.msra.mxu0 0.0
  %1449 = vmatprep.subr.mxu0 0.0
  %1450 = vmatpush1.msra.mxu0 0.0
  %1451 = vmatprep.subr.mxu0 0.0
  %1452 = vmatpush1.msra.mxu0 0.0
  %1453 = vmatprep.subr.mxu0 0.0
  %1454 = vmatpush1.msra.mxu0 0.0
  %1455 = vmatprep.subr.mxu0 0.0
  %1456 = vmatpush1.msra.mxu0 0.0
  %1457 = vmatprep.subr.mxu0 0.0
  %1458 = vmatpush1.msra.mxu0 0.0
  %1459 = vmatprep.subr.mxu0 0.0
  %1460 = vmatpush1.msra.mxu0 0.0
  %1461 = vmatprep.subr.mxu0 0.0
  %1462 = vmatpush1.msra.mxu0 0.0
  %1463 = vmatprep.mubr.f32.mxu0 0.0
  %1464 = vmatmul.mubr.f32.gmra.mrb[0].mxu0 %v1397
  %v1465 = vpop.f32.mrb[0].mxu0
  %v1466 = vadd.f32 0.0, %v1465
  %v1467 = vpop.f32.mrb[0].mxu0
  %v1468 = vadd.f32 0.0, %v1467
  %1469 = vdwg.mxu0
  %v1470 = vld [vmem:[#allocation2 + $0x20] sm:$0x3]
  %v1471 = vadd.f32 %v1470, %v1466
  %v1472 = vld [vmem:[#allocation2 + $0x18] sm:$0xc0]
  %v1474 = vrot.slane %v1468, 2
  %v1476 = vadd.f32 %v1472, %v1474
  %v1477 = vxor.u32 %v1471, 2147483648
  %v1478 = vmul.f32 %v1477, 1.442695
  %v1479 = vpow.pop %v1478
  %v1480 = vadd.f32 %v1479, 1.0
  %v1481 = vrcp.pop %v1480
  %v1482 = vmul.f32 1.0, %v1481
  %v1483 = vtanh.pop %v1471
  %v1485 = vrot.slane %v1346, 6
  %v1487 = vmul.f32 %v1482, %v1485
  %1489 = vrot.lane.b32.xlu0 %v1483, 64
  %v1490 = vpop.permute.xlu0 %1489
  %v1492 = vmul.f32 %v1482, %v1490
  %1494 = vrot.lane.b32.xlu0 %v1492, 32
  %v1495 = vpop.permute.xlu0 %1494
  %v1497 = vadd.f32 %v1487, %v1495
  %v1498 = vtanh.pop %v1497
  %1500 = vrot.lane.b32.xlu0 %v1498, 64
  %v1501 = vpop.permute.xlu0 %1500
  %v1503 = vmul.f32 %v1482, %v1501
  %v1504 = vxor.u32 %v1476, 2147483648
  %v1505 = vmul.f32 %v1504, 1.442695
  %v1506 = vpow.pop %v1505
  %v1507 = vadd.f32 %v1506, 1.0
  %v1508 = vrcp.pop %v1507
  %v1509 = vmul.f32 1.0, %v1508
  %v1510 = vtanh.pop %v1476
  %v1512 = vrot.slane %v1373, 2
  %v1514 = vmul.f32 %v1509, %v1512
  %1516 = vrot.lane.b32.xlu0 %v1510, 64
  %v1517 = vpop.permute.xlu0 %1516
  %v1519 = vmul.f32 %v1509, %v1517
  %1521 = vrot.lane.b32.xlu0 %v1519, 32
  %v1522 = vpop.permute.xlu0 %1521
  %v1524 = vadd.f32 %v1514, %v1522
  %v1525 = vtanh.pop %v1524
  %1527 = vrot.lane.b32.xlu0 %v1525, 64
  %v1528 = vpop.permute.xlu0 %1527
  %v1530 = vmul.f32 %v1509, %v1528
  %1532 = vrot.lane.b32.xlu0 %v1503, 32
  %v1533 = vpop.permute.xlu0 %1532
  %1535 = vst.msk [vmem:[%s4 + $0x10] sm:$0x3] %vm308, %v1533
  %1537 = vrot.lane.b32.xlu0 %v1530, 64
  %v1538 = vpop.permute.xlu0 %1537
  %1540 = vst.msk [vmem:[%s4 + $0x8] sm:$0xc0] %vm314, %v1538
  %v1541 = vrot.slane %v1530, 6
  %1542 = vrot.lane.b32.xlu0 %v1541, 64
  %v1543 = vpop.permute.xlu0 %1542
  %v1545 = vsel %vm320, %v1533, %v1543
  %v1547 = vsel %vm49, %v1545, 0
  %1549 = vmatprep.subr.mxu0 %v160
  %1550 = vmatpush1.msra.mxu0 %v159
  %1551 = vmatprep.subr.mxu0 %v162
  %1552 = vmatpush1.msra.mxu0 %v161
  %1553 = vmatprep.subr.mxu0 %v164
  %1554 = vmatpush1.msra.mxu0 %v163
  %1555 = vmatprep.subr.mxu0 %v166
  %1556 = vmatpush1.msra.mxu0 %v165
  %1557 = vmatprep.subr.mxu0 %v168
  %1558 = vmatpush1.msra.mxu0 %v167
  %1559 = vmatprep.subr.mxu0 %v170
  %1560 = vmatpush1.msra.mxu0 %v169
  %1561 = vmatprep.subr.mxu0 %v172
  %1562 = vmatpush1.msra.mxu0 %v171
  %1563 = vmatprep.subr.mxu0 %v174
  %1564 = vmatpush1.msra.mxu0 %v173
  %1565 = vmatprep.subr.mxu0 0.0
  %1566 = vmatpush1.msra.mxu0 0.0
  %1567 = vmatprep.subr.mxu0 0.0
  %1568 = vmatpush1.msra.mxu0 0.0
  %1569 = vmatprep.subr.mxu0 0.0
  %1570 = vmatpush1.msra.mxu0 0.0
  %1571 = vmatprep.subr.mxu0 0.0
  %1572 = vmatpush1.msra.mxu0 0.0
  %1573 = vmatprep.subr.mxu0 0.0
  %1574 = vmatpush1.msra.mxu0 0.0
  %1575 = vmatprep.subr.mxu0 0.0
  %1576 = vmatpush1.msra.mxu0 0.0
  %1577 = vmatprep.subr.mxu0 0.0
  %1578 = vmatpush1.msra.mxu0 0.0
  %1579 = vmatprep.subr.mxu0 0.0
  %1580 = vmatpush1.msra.mxu0 0.0
  %1581 = vmatprep.subr.mxu0 0.0
  %1582 = vmatpush1.msra.mxu0 0.0
  %1583 = vmatprep.subr.mxu0 0.0
  %1584 = vmatpush1.msra.mxu0 0.0
  %1585 = vmatprep.subr.mxu0 0.0
  %1586 = vmatpush1.msra.mxu0 0.0
  %1587 = vmatprep.subr.mxu0 0.0
  %1588 = vmatpush1.msra.mxu0 0.0
  %1589 = vmatprep.subr.mxu0 0.0
  %1590 = vmatpush1.msra.mxu0 0.0
  %1591 = vmatprep.subr.mxu0 0.0
  %1592 = vmatpush1.msra.mxu0 0.0
  %1593 = vmatprep.subr.mxu0 0.0
  %1594 = vmatpush1.msra.mxu0 0.0
  %1595 = vmatprep.subr.mxu0 0.0
  %1596 = vmatpush1.msra.mxu0 0.0
  %1597 = vmatprep.subr.mxu0 0.0
  %1598 = vmatpush1.msra.mxu0 0.0
  %1599 = vmatprep.subr.mxu0 0.0
  %1600 = vmatpush1.msra.mxu0 0.0
  %1601 = vmatprep.subr.mxu0 0.0
  %1602 = vmatpush1.msra.mxu0 0.0
  %1603 = vmatprep.subr.mxu0 0.0
  %1604 = vmatpush1.msra.mxu0 0.0
  %1605 = vmatprep.subr.mxu0 0.0
  %1606 = vmatpush1.msra.mxu0 0.0
  %1607 = vmatprep.subr.mxu0 0.0
  %1608 = vmatpush1.msra.mxu0 0.0
  %1609 = vmatprep.subr.mxu0 0.0
  %1610 = vmatpush1.msra.mxu0 0.0
  %1611 = vmatprep.subr.mxu0 0.0
  %1612 = vmatpush1.msra.mxu0 0.0
  %1613 = vmatprep.mubr.f32.mxu0 0.0
  %1614 = vmatmul.mubr.f32.gmra.mrb[0].mxu0 %v1547
  %v1615 = vpop.f32.mrb[0].mxu0
  %v1616 = vadd.f32 0.0, %v1615
  %v1617 = vpop.f32.mrb[0].mxu0
  %v1618 = vadd.f32 0.0, %v1617
  %1619 = vdwg.mxu0
  %v1620 = vld [vmem:[#allocation2 + $0x20] sm:$0xc]
  %v1622 = vrot.slane %v1616, 6
  %v1624 = vadd.f32 %v1620, %v1622
  %v1625 = vld [vmem:[#allocation2 + $0x18] sm:$0x30]
  %v1627 = vrot.slane %v1618, 4
  %v1629 = vadd.f32 %v1625, %v1627
  %v1630 = vxor.u32 %v1624, 2147483648
  %v1631 = vmul.f32 %v1630, 1.442695
  %v1632 = vpow.pop %v1631
  %v1633 = vadd.f32 %v1632, 1.0
  %v1634 = vrcp.pop %v1633
  %v1635 = vmul.f32 1.0, %v1634
  %v1636 = vtanh.pop %v1624
  %v1638 = vrot.slane %v1497, 6
  %v1640 = vmul.f32 %v1635, %v1638
  %1642 = vrot.lane.b32.xlu0 %v1636, 64
  %v1643 = vpop.permute.xlu0 %1642
  %v1645 = vmul.f32 %v1635, %v1643
  %1647 = vrot.lane.b32.xlu0 %v1645, 32
  %v1648 = vpop.permute.xlu0 %1647
  %v1650 = vadd.f32 %v1640, %v1648
  %v1651 = vtanh.pop %v1650
  %1653 = vrot.lane.b32.xlu0 %v1651, 64
  %v1654 = vpop.permute.xlu0 %1653
  %v1656 = vmul.f32 %v1635, %v1654
  %v1657 = vxor.u32 %v1629, 2147483648
  %v1658 = vmul.f32 %v1657, 1.442695
  %v1659 = vpow.pop %v1658
  %v1660 = vadd.f32 %v1659, 1.0
  %v1661 = vrcp.pop %v1660
  %v1662 = vmul.f32 1.0, %v1661
  %v1663 = vtanh.pop %v1629
  %v1665 = vrot.slane %v1524, 2
  %v1667 = vmul.f32 %v1662, %v1665
  %1669 = vrot.lane.b32.xlu0 %v1663, 64
  %v1670 = vpop.permute.xlu0 %1669
  %v1672 = vmul.f32 %v1662, %v1670
  %1674 = vrot.lane.b32.xlu0 %v1672, 32
  %v1675 = vpop.permute.xlu0 %1674
  %v1677 = vadd.f32 %v1667, %v1675
  %v1678 = vtanh.pop %v1677
  %1680 = vrot.lane.b32.xlu0 %v1678, 64
  %v1681 = vpop.permute.xlu0 %1680
  %v1683 = vmul.f32 %v1662, %v1681
  %1685 = vrot.lane.b32.xlu0 %v1656, 32
  %v1686 = vpop.permute.xlu0 %1685
  %1688 = vst.msk [vmem:[%s4 + $0x10] sm:$0xc] %vm464, %v1686
  %1690 = vrot.lane.b32.xlu0 %v1683, 64
  %v1691 = vpop.permute.xlu0 %1690
  %1693 = vst.msk [vmem:[%s4 + $0x8] sm:$0x30] %vm470, %v1691
  %v1694 = vrot.slane %v1683, 2
  %1695 = vrot.lane.b32.xlu0 %v1694, 64
  %v1696 = vpop.permute.xlu0 %1695
  %v1698 = vsel %vm320, %v1686, %v1696
  %v1700 = vrot.slane %v1698, 2
  %v1701 = vsel %vm49, %v1700, 0
  %1703 = vmatprep.subr.mxu0 %v160
  %1704 = vmatpush1.msra.mxu0 %v159
  %1705 = vmatprep.subr.mxu0 %v162
  %1706 = vmatpush1.msra.mxu0 %v161
  %1707 = vmatprep.subr.mxu0 %v164
  %1708 = vmatpush1.msra.mxu0 %v163
  %1709 = vmatprep.subr.mxu0 %v166
  %1710 = vmatpush1.msra.mxu0 %v165
  %1711 = vmatprep.subr.mxu0 %v168
  %1712 = vmatpush1.msra.mxu0 %v167
  %1713 = vmatprep.subr.mxu0 %v170
  %1714 = vmatpush1.msra.mxu0 %v169
  %1715 = vmatprep.subr.mxu0 %v172
  %1716 = vmatpush1.msra.mxu0 %v171
  %1717 = vmatprep.subr.mxu0 %v174
  %1718 = vmatpush1.msra.mxu0 %v173
  %1719 = vmatprep.subr.mxu0 0.0
  %1720 = vmatpush1.msra.mxu0 0.0
  %1721 = vmatprep.subr.mxu0 0.0
  %1722 = vmatpush1.msra.mxu0 0.0
  %1723 = vmatprep.subr.mxu0 0.0
  %1724 = vmatpush1.msra.mxu0 0.0
  %1725 = vmatprep.subr.mxu0 0.0
  %1726 = vmatpush1.msra.mxu0 0.0
  %1727 = vmatprep.subr.mxu0 0.0
  %1728 = vmatpush1.msra.mxu0 0.0
  %1729 = vmatprep.subr.mxu0 0.0
  %1730 = vmatpush1.msra.mxu0 0.0
  %1731 = vmatprep.subr.mxu0 0.0
  %1732 = vmatpush1.msra.mxu0 0.0
  %1733 = vmatprep.subr.mxu0 0.0
  %1734 = vmatpush1.msra.mxu0 0.0
  %1735 = vmatprep.subr.mxu0 0.0
  %1736 = vmatpush1.msra.mxu0 0.0
  %1737 = vmatprep.subr.mxu0 0.0
  %1738 = vmatpush1.msra.mxu0 0.0
  %1739 = vmatprep.subr.mxu0 0.0
  %1740 = vmatpush1.msra.mxu0 0.0
  %1741 = vmatprep.subr.mxu0 0.0
  %1742 = vmatpush1.msra.mxu0 0.0
  %1743 = vmatprep.subr.mxu0 0.0
  %1744 = vmatpush1.msra.mxu0 0.0
  %1745 = vmatprep.subr.mxu0 0.0
  %1746 = vmatpush1.msra.mxu0 0.0
  %1747 = vmatprep.subr.mxu0 0.0
  %1748 = vmatpush1.msra.mxu0 0.0
  %1749 = vmatprep.subr.mxu0 0.0
  %1750 = vmatpush1.msra.mxu0 0.0
  %1751 = vmatprep.subr.mxu0 0.0
  %1752 = vmatpush1.msra.mxu0 0.0
  %1753 = vmatprep.subr.mxu0 0.0
  %1754 = vmatpush1.msra.mxu0 0.0
  %1755 = vmatprep.subr.mxu0 0.0
  %1756 = vmatpush1.msra.mxu0 0.0
  %1757 = vmatprep.subr.mxu0 0.0
  %1758 = vmatpush1.msra.mxu0 0.0
  %1759 = vmatprep.subr.mxu0 0.0
  %1760 = vmatpush1.msra.mxu0 0.0
  %1761 = vmatprep.subr.mxu0 0.0
  %1762 = vmatpush1.msra.mxu0 0.0
  %1763 = vmatprep.subr.mxu0 0.0
  %1764 = vmatpush1.msra.mxu0 0.0
  %1765 = vmatprep.subr.mxu0 0.0
  %1766 = vmatpush1.msra.mxu0 0.0
  %1767 = vmatprep.mubr.f32.mxu0 0.0
  %1768 = vmatmul.mubr.f32.gmra.mrb[0].mxu0 %v1701
  %v1769 = vpop.f32.mrb[0].mxu0
  %v1770 = vadd.f32 0.0, %v1769
  %v1771 = vpop.f32.mrb[0].mxu0
  %v1772 = vadd.f32 0.0, %v1771
  %1773 = vdwg.mxu0
  %v1774 = vld [vmem:[#allocation2 + $0x20] sm:$0x30]
  %v1776 = vrot.slane %v1770, 4
  %v1778 = vadd.f32 %v1774, %v1776
  %v1779 = vld [vmem:[#allocation2 + $0x18] sm:$0xc]
  %v1781 = vrot.slane %v1772, 6
  %v1783 = vadd.f32 %v1779, %v1781
  %v1784 = vxor.u32 %v1778, 2147483648
  %v1785 = vmul.f32 %v1784, 1.442695
  %v1786 = vpow.pop %v1785
  %v1787 = vadd.f32 %v1786, 1.0
  %v1788 = vrcp.pop %v1787
  %v1789 = vmul.f32 1.0, %v1788
  %v1790 = vtanh.pop %v1778
  %v1792 = vrot.slane %v1650, 6
  %v1794 = vmul.f32 %v1789, %v1792
  %1796 = vrot.lane.b32.xlu0 %v1790, 64
  %v1797 = vpop.permute.xlu0 %1796
  %v1799 = vmul.f32 %v1789, %v1797
  %1801 = vrot.lane.b32.xlu0 %v1799, 32
  %v1802 = vpop.permute.xlu0 %1801
  %v1804 = vadd.f32 %v1794, %v1802
  %v1805 = vtanh.pop %v1804
  %1807 = vrot.lane.b32.xlu0 %v1805, 64
  %v1808 = vpop.permute.xlu0 %1807
  %v1810 = vmul.f32 %v1789, %v1808
  %v1811 = vxor.u32 %v1783, 2147483648
  %v1812 = vmul.f32 %v1811, 1.442695
  %v1813 = vpow.pop %v1812
  %v1814 = vadd.f32 %v1813, 1.0
  %v1815 = vrcp.pop %v1814
  %v1816 = vmul.f32 1.0, %v1815
  %v1817 = vtanh.pop %v1783
  %v1819 = vrot.slane %v1677, 2
  %v1821 = vmul.f32 %v1816, %v1819
  %1823 = vrot.lane.b32.xlu0 %v1817, 64
  %v1824 = vpop.permute.xlu0 %1823
  %v1826 = vmul.f32 %v1816, %v1824
  %1828 = vrot.lane.b32.xlu0 %v1826, 32
  %v1829 = vpop.permute.xlu0 %1828
  %v1831 = vadd.f32 %v1821, %v1829
  %v1832 = vtanh.pop %v1831
  %1834 = vrot.lane.b32.xlu0 %v1832, 64
  %v1835 = vpop.permute.xlu0 %1834
  %v1837 = vmul.f32 %v1816, %v1835
  %1839 = vrot.lane.b32.xlu0 %v1810, 32
  %v1840 = vpop.permute.xlu0 %1839
  %1842 = vst.msk [vmem:[%s4 + $0x10] sm:$0x30] %vm620, %v1840
  %1844 = vrot.lane.b32.xlu0 %v1837, 64
  %v1845 = vpop.permute.xlu0 %1844
  %1847 = vst.msk [vmem:[%s4 + $0x8] sm:$0xc] %vm626, %v1845
  %v1848 = vrot.slane %v1837, 6
  %1849 = vrot.lane.b32.xlu0 %v1848, 64
  %v1850 = vpop.permute.xlu0 %1849
  %v1852 = vsel %vm320, %v1840, %v1850
  %v1854 = vrot.slane %v1852, 4
  %v1855 = vsel %vm49, %v1854, 0
  %1857 = vmatprep.subr.mxu0 %v160
  %1858 = vmatpush1.msra.mxu0 %v159
  %1859 = vmatprep.subr.mxu0 %v162
  %1860 = vmatpush1.msra.mxu0 %v161
  %1861 = vmatprep.subr.mxu0 %v164
  %1862 = vmatpush1.msra.mxu0 %v163
  %1863 = vmatprep.subr.mxu0 %v166
  %1864 = vmatpush1.msra.mxu0 %v165
  %1865 = vmatprep.subr.mxu0 %v168
  %1866 = vmatpush1.msra.mxu0 %v167
  %1867 = vmatprep.subr.mxu0 %v170
  %1868 = vmatpush1.msra.mxu0 %v169
  %1869 = vmatprep.subr.mxu0 %v172
  %1870 = vmatpush1.msra.mxu0 %v171
  %1871 = vmatprep.subr.mxu0 %v174
  %1872 = vmatpush1.msra.mxu0 %v173
  %1873 = vmatprep.subr.mxu0 0.0
  %1874 = vmatpush1.msra.mxu0 0.0
  %1875 = vmatprep.subr.mxu0 0.0
  %1876 = vmatpush1.msra.mxu0 0.0
  %1877 = vmatprep.subr.mxu0 0.0
  %1878 = vmatpush1.msra.mxu0 0.0
  %1879 = vmatprep.subr.mxu0 0.0
  %1880 = vmatpush1.msra.mxu0 0.0
  %1881 = vmatprep.subr.mxu0 0.0
  %1882 = vmatpush1.msra.mxu0 0.0
  %1883 = vmatprep.subr.mxu0 0.0
  %1884 = vmatpush1.msra.mxu0 0.0
  %1885 = vmatprep.subr.mxu0 0.0
  %1886 = vmatpush1.msra.mxu0 0.0
  %1887 = vmatprep.subr.mxu0 0.0
  %1888 = vmatpush1.msra.mxu0 0.0
  %1889 = vmatprep.subr.mxu0 0.0
  %1890 = vmatpush1.msra.mxu0 0.0
  %1891 = vmatprep.subr.mxu0 0.0
  %1892 = vmatpush1.msra.mxu0 0.0
  %1893 = vmatprep.subr.mxu0 0.0
  %1894 = vmatpush1.msra.mxu0 0.0
  %1895 = vmatprep.subr.mxu0 0.0
  %1896 = vmatpush1.msra.mxu0 0.0
  %1897 = vmatprep.subr.mxu0 0.0
  %1898 = vmatpush1.msra.mxu0 0.0
  %1899 = vmatprep.subr.mxu0 0.0
  %1900 = vmatpush1.msra.mxu0 0.0
  %1901 = vmatprep.subr.mxu0 0.0
  %1902 = vmatpush1.msra.mxu0 0.0
  %1903 = vmatprep.subr.mxu0 0.0
  %1904 = vmatpush1.msra.mxu0 0.0
  %1905 = vmatprep.subr.mxu0 0.0
  %1906 = vmatpush1.msra.mxu0 0.0
  %1907 = vmatprep.subr.mxu0 0.0
  %1908 = vmatpush1.msra.mxu0 0.0
  %1909 = vmatprep.subr.mxu0 0.0
  %1910 = vmatpush1.msra.mxu0 0.0
  %1911 = vmatprep.subr.mxu0 0.0
  %1912 = vmatpush1.msra.mxu0 0.0
  %1913 = vmatprep.subr.mxu0 0.0
  %1914 = vmatpush1.msra.mxu0 0.0
  %1915 = vmatprep.subr.mxu0 0.0
  %1916 = vmatpush1.msra.mxu0 0.0
  %1917 = vmatprep.subr.mxu0 0.0
  %1918 = vmatpush1.msra.mxu0 0.0
  %1919 = vmatprep.subr.mxu0 0.0
  %1920 = vmatpush1.msra.mxu0 0.0
  %1921 = vmatprep.mubr.f32.mxu0 0.0
  %1922 = vmatmul.mubr.f32.gmra.mrb[0].mxu0 %v1855
  %v1923 = vpop.f32.mrb[0].mxu0
  %v1924 = vadd.f32 0.0, %v1923
  %v1925 = vpop.f32.mrb[0].mxu0
  %v1926 = vadd.f32 0.0, %v1925
  %1927 = vdwg.mxu0
  %v1928 = vld [vmem:[#allocation2 + $0x20] sm:$0xc0]
  %v1930 = vrot.slane %v1924, 2
  %v1932 = vadd.f32 %v1928, %v1930
  %v1933 = vld [vmem:[#allocation2 + $0x18] sm:$0x3]
  %v1934 = vadd.f32 %v1933, %v1926
  %v1935 = vxor.u32 %v1932, 2147483648
  %v1936 = vmul.f32 %v1935, 1.442695
  %v1937 = vpow.pop %v1936
  %v1938 = vadd.f32 %v1937, 1.0
  %v1939 = vrcp.pop %v1938
  %v1940 = vmul.f32 1.0, %v1939
  %v1941 = vtanh.pop %v1932
  %v1943 = vrot.slane %v1804, 6
  %v1945 = vmul.f32 %v1940, %v1943
  %1947 = vrot.lane.b32.xlu0 %v1941, 64
  %v1948 = vpop.permute.xlu0 %1947
  %v1950 = vmul.f32 %v1940, %v1948
  %1952 = vrot.lane.b32.xlu0 %v1950, 32
  %v1953 = vpop.permute.xlu0 %1952
  %v1955 = vadd.f32 %v1945, %v1953
  %v1956 = vtanh.pop %v1955
  %1958 = vrot.lane.b32.xlu0 %v1956, 64
  %v1959 = vpop.permute.xlu0 %1958
  %v1961 = vmul.f32 %v1940, %v1959
  %v1962 = vxor.u32 %v1934, 2147483648
  %v1963 = vmul.f32 %v1962, 1.442695
  %v1964 = vpow.pop %v1963
  %v1965 = vadd.f32 %v1964, 1.0
  %v1966 = vrcp.pop %v1965
  %v1967 = vmul.f32 1.0, %v1966
  %v1968 = vtanh.pop %v1934
  %v1970 = vrot.slane %v1831, 2
  %v1972 = vmul.f32 %v1967, %v1970
  %1974 = vrot.lane.b32.xlu0 %v1968, 64
  %v1975 = vpop.permute.xlu0 %1974
  %v1977 = vmul.f32 %v1967, %v1975
  %1979 = vrot.lane.b32.xlu0 %v1977, 32
  %v1980 = vpop.permute.xlu0 %1979
  %v1982 = vadd.f32 %v1972, %v1980
  %v1983 = vtanh.pop %v1982
  %1985 = vrot.lane.b32.xlu0 %v1983, 64
  %v1986 = vpop.permute.xlu0 %1985
  %v1988 = vmul.f32 %v1967, %v1986
  %1990 = vrot.lane.b32.xlu0 %v1961, 32
  %v1991 = vpop.permute.xlu0 %1990
  %1993 = vst.msk [vmem:[%s4 + $0x10] sm:$0xc0] %vm773, %v1991
  %1995 = vrot.lane.b32.xlu0 %v1988, 64
  %v1996 = vpop.permute.xlu0 %1995
  %1998 = vst.msk [vmem:[%s4 + $0x8] sm:$0x3] %vm779, %v1996
  %v1999 = vrot.slane %v1988, 2
  %2000 = vrot.lane.b32.xlu0 %v1999, 64
  %v2001 = vpop.permute.xlu0 %2000
  %v2003 = vsel %vm320, %v1991, %v2001
  %v2005 = vrot.slane %v2003, 6
  %v2006 = vsel %vm49, %v2005, 0
  %2008 = vmatprep.subr.mxu0 %v160
  %2009 = vmatpush1.msra.mxu0 %v159
  %2010 = vmatprep.subr.mxu0 %v162
  %2011 = vmatpush1.msra.mxu0 %v161
  %2012 = vmatprep.subr.mxu0 %v164
  %2013 = vmatpush1.msra.mxu0 %v163
  %2014 = vmatprep.subr.mxu0 %v166
  %2015 = vmatpush1.msra.mxu0 %v165
  %2016 = vmatprep.subr.mxu0 %v168
  %2017 = vmatpush1.msra.mxu0 %v167
  %2018 = vmatprep.subr.mxu0 %v170
  %2019 = vmatpush1.msra.mxu0 %v169
  %2020 = vmatprep.subr.mxu0 %v172
  %2021 = vmatpush1.msra.mxu0 %v171
  %2022 = vmatprep.subr.mxu0 %v174
  %2023 = vmatpush1.msra.mxu0 %v173
  %2024 = vmatprep.subr.mxu0 0.0
  %2025 = vmatpush1.msra.mxu0 0.0
  %2026 = vmatprep.subr.mxu0 0.0
  %2027 = vmatpush1.msra.mxu0 0.0
  %2028 = vmatprep.subr.mxu0 0.0
  %2029 = vmatpush1.msra.mxu0 0.0
  %2030 = vmatprep.subr.mxu0 0.0
  %2031 = vmatpush1.msra.mxu0 0.0
  %2032 = vmatprep.subr.mxu0 0.0
  %2033 = vmatpush1.msra.mxu0 0.0
  %2034 = vmatprep.subr.mxu0 0.0
  %2035 = vmatpush1.msra.mxu0 0.0
  %2036 = vmatprep.subr.mxu0 0.0
  %2037 = vmatpush1.msra.mxu0 0.0
  %2038 = vmatprep.subr.mxu0 0.0
  %2039 = vmatpush1.msra.mxu0 0.0
  %2040 = vmatprep.subr.mxu0 0.0
  %2041 = vmatpush1.msra.mxu0 0.0
  %2042 = vmatprep.subr.mxu0 0.0
  %2043 = vmatpush1.msra.mxu0 0.0
  %2044 = vmatprep.subr.mxu0 0.0
  %2045 = vmatpush1.msra.mxu0 0.0
  %2046 = vmatprep.subr.mxu0 0.0
  %2047 = vmatpush1.msra.mxu0 0.0
  %2048 = vmatprep.subr.mxu0 0.0
  %2049 = vmatpush1.msra.mxu0 0.0
  %2050 = vmatprep.subr.mxu0 0.0
  %2051 = vmatpush1.msra.mxu0 0.0
  %2052 = vmatprep.subr.mxu0 0.0
  %2053 = vmatpush1.msra.mxu0 0.0
  %2054 = vmatprep.subr.mxu0 0.0
  %2055 = vmatpush1.msra.mxu0 0.0
  %2056 = vmatprep.subr.mxu0 0.0
  %2057 = vmatpush1.msra.mxu0 0.0
  %2058 = vmatprep.subr.mxu0 0.0
  %2059 = vmatpush1.msra.mxu0 0.0
  %2060 = vmatprep.subr.mxu0 0.0
  %2061 = vmatpush1.msra.mxu0 0.0
  %2062 = vmatprep.subr.mxu0 0.0
  %2063 = vmatpush1.msra.mxu0 0.0
  %2064 = vmatprep.subr.mxu0 0.0
  %2065 = vmatpush1.msra.mxu0 0.0
  %2066 = vmatprep.subr.mxu0 0.0
  %2067 = vmatpush1.msra.mxu0 0.0
  %2068 = vmatprep.subr.mxu0 0.0
  %2069 = vmatpush1.msra.mxu0 0.0
  %2070 = vmatprep.subr.mxu0 0.0
  %2071 = vmatpush1.msra.mxu0 0.0
  %2072 = vmatprep.mubr.f32.mxu0 0.0
  %2073 = vmatmul.mubr.f32.gmra.mrb[0].mxu0 %v2006
  %v2074 = vpop.f32.mrb[0].mxu0
  %v2075 = vadd.f32 0.0, %v2074
  %v2076 = vpop.f32.mrb[0].mxu0
  %v2077 = vadd.f32 0.0, %v2076
  %2078 = vdwg.mxu0
  %v2079 = vld [vmem:[#allocation2 + $0x30] sm:$0x3]
  %v2080 = vadd.f32 %v2079, %v2075
  %v2081 = vld [vmem:[#allocation2 + $0x8] sm:$0xc0]
  %v2083 = vrot.slane %v2077, 2
  %v2085 = vadd.f32 %v2081, %v2083
  %v2086 = vxor.u32 %v2080, 2147483648
  %v2087 = vmul.f32 %v2086, 1.442695
  %v2088 = vpow.pop %v2087
  %v2089 = vadd.f32 %v2088, 1.0
  %v2090 = vrcp.pop %v2089
  %v2091 = vmul.f32 1.0, %v2090
  %v2092 = vtanh.pop %v2080
  %v2094 = vrot.slane %v1955, 6
  %v2096 = vmul.f32 %v2091, %v2094
  %2098 = vrot.lane.b32.xlu0 %v2092, 64
  %v2099 = vpop.permute.xlu0 %2098
  %v2101 = vmul.f32 %v2091, %v2099
  %2103 = vrot.lane.b32.xlu0 %v2101, 32
  %v2104 = vpop.permute.xlu0 %2103
  %v2106 = vadd.f32 %v2096, %v2104
  %v2107 = vtanh.pop %v2106
  %2109 = vrot.lane.b32.xlu0 %v2107, 64
  %v2110 = vpop.permute.xlu0 %2109
  %v2112 = vmul.f32 %v2091, %v2110
  %v2113 = vxor.u32 %v2085, 2147483648
  %v2114 = vmul.f32 %v2113, 1.442695
  %v2115 = vpow.pop %v2114
  %v2116 = vadd.f32 %v2115, 1.0
  %v2117 = vrcp.pop %v2116
  %v2118 = vmul.f32 1.0, %v2117
  %v2119 = vtanh.pop %v2085
  %v2121 = vrot.slane %v1982, 2
  %v2123 = vmul.f32 %v2118, %v2121
  %2125 = vrot.lane.b32.xlu0 %v2119, 64
  %v2126 = vpop.permute.xlu0 %2125
  %v2128 = vmul.f32 %v2118, %v2126
  %2130 = vrot.lane.b32.xlu0 %v2128, 32
  %v2131 = vpop.permute.xlu0 %2130
  %v2133 = vadd.f32 %v2123, %v2131
  %v2134 = vtanh.pop %v2133
  %2136 = vrot.lane.b32.xlu0 %v2134, 64
  %v2137 = vpop.permute.xlu0 %2136
  %v2139 = vmul.f32 %v2118, %v2137
  %2141 = vrot.lane.b32.xlu0 %v2112, 32
  %v2142 = vpop.permute.xlu0 %2141
  %2144 = vst.msk [vmem:[%s4 + $0x18] sm:$0x3] %vm308, %v2142
  %2146 = vrot.lane.b32.xlu0 %v2139, 64
  %v2147 = vpop.permute.xlu0 %2146
  %2149 = vst.msk [vmem:[%s4] sm:$0xc0] %vm314, %v2147
  %v2150 = vrot.slane %v2139, 6
  %2151 = vrot.lane.b32.xlu0 %v2150, 64
  %v2152 = vpop.permute.xlu0 %2151
  %v2154 = vsel %vm320, %v2142, %v2152
  %v2156 = vsel %vm49, %v2154, 0
  %2158 = vmatprep.subr.mxu0 %v160
  %2159 = vmatpush1.msra.mxu0 %v159
  %2160 = vmatprep.subr.mxu0 %v162
  %2161 = vmatpush1.msra.mxu0 %v161
  %2162 = vmatprep.subr.mxu0 %v164
  %2163 = vmatpush1.msra.mxu0 %v163
  %2164 = vmatprep.subr.mxu0 %v166
  %2165 = vmatpush1.msra.mxu0 %v165
  %2166 = vmatprep.subr.mxu0 %v168
  %2167 = vmatpush1.msra.mxu0 %v167
  %2168 = vmatprep.subr.mxu0 %v170
  %2169 = vmatpush1.msra.mxu0 %v169
  %2170 = vmatprep.subr.mxu0 %v172
  %2171 = vmatpush1.msra.mxu0 %v171
  %2172 = vmatprep.subr.mxu0 %v174
  %2173 = vmatpush1.msra.mxu0 %v173
  %2174 = vmatprep.subr.mxu0 0.0
  %2175 = vmatpush1.msra.mxu0 0.0
  %2176 = vmatprep.subr.mxu0 0.0
  %2177 = vmatpush1.msra.mxu0 0.0
  %2178 = vmatprep.subr.mxu0 0.0
  %2179 = vmatpush1.msra.mxu0 0.0
  %2180 = vmatprep.subr.mxu0 0.0
  %2181 = vmatpush1.msra.mxu0 0.0
  %2182 = vmatprep.subr.mxu0 0.0
  %2183 = vmatpush1.msra.mxu0 0.0
  %2184 = vmatprep.subr.mxu0 0.0
  %2185 = vmatpush1.msra.mxu0 0.0
  %2186 = vmatprep.subr.mxu0 0.0
  %2187 = vmatpush1.msra.mxu0 0.0
  %2188 = vmatprep.subr.mxu0 0.0
  %2189 = vmatpush1.msra.mxu0 0.0
  %2190 = vmatprep.subr.mxu0 0.0
  %2191 = vmatpush1.msra.mxu0 0.0
  %2192 = vmatprep.subr.mxu0 0.0
  %2193 = vmatpush1.msra.mxu0 0.0
  %2194 = vmatprep.subr.mxu0 0.0
  %2195 = vmatpush1.msra.mxu0 0.0
  %2196 = vmatprep.subr.mxu0 0.0
  %2197 = vmatpush1.msra.mxu0 0.0
  %2198 = vmatprep.subr.mxu0 0.0
  %2199 = vmatpush1.msra.mxu0 0.0
  %2200 = vmatprep.subr.mxu0 0.0
  %2201 = vmatpush1.msra.mxu0 0.0
  %2202 = vmatprep.subr.mxu0 0.0
  %2203 = vmatpush1.msra.mxu0 0.0
  %2204 = vmatprep.subr.mxu0 0.0
  %2205 = vmatpush1.msra.mxu0 0.0
  %2206 = vmatprep.subr.mxu0 0.0
  %2207 = vmatpush1.msra.mxu0 0.0
  %2208 = vmatprep.subr.mxu0 0.0
  %2209 = vmatpush1.msra.mxu0 0.0
  %2210 = vmatprep.subr.mxu0 0.0
  %2211 = vmatpush1.msra.mxu0 0.0
  %2212 = vmatprep.subr.mxu0 0.0
  %2213 = vmatpush1.msra.mxu0 0.0
  %2214 = vmatprep.subr.mxu0 0.0
  %2215 = vmatpush1.msra.mxu0 0.0
  %2216 = vmatprep.subr.mxu0 0.0
  %2217 = vmatpush1.msra.mxu0 0.0
  %2218 = vmatprep.subr.mxu0 0.0
  %2219 = vmatpush1.msra.mxu0 0.0
  %2220 = vmatprep.subr.mxu0 0.0
  %2221 = vmatpush1.msra.mxu0 0.0
  %2222 = vmatprep.mubr.f32.mxu0 0.0
  %2223 = vmatmul.mubr.f32.gmra.mrb[0].mxu0 %v2156
  %v2224 = vpop.f32.mrb[0].mxu0
  %v2225 = vadd.f32 0.0, %v2224
  %v2226 = vpop.f32.mrb[0].mxu0
  %v2227 = vadd.f32 0.0, %v2226
  %2228 = vdwg.mxu0
  %v2229 = vld [vmem:[#allocation2 + $0x30] sm:$0xc]
  %v2231 = vrot.slane %v2225, 6
  %v2233 = vadd.f32 %v2229, %v2231
  %v2234 = vld [vmem:[#allocation2 + $0x8] sm:$0x30]
  %v2236 = vrot.slane %v2227, 4
  %v2238 = vadd.f32 %v2234, %v2236
  %v2239 = vxor.u32 %v2233, 2147483648
  %v2240 = vmul.f32 %v2239, 1.442695
  %v2241 = vpow.pop %v2240
  %v2242 = vadd.f32 %v2241, 1.0
  %v2243 = vrcp.pop %v2242
  %v2244 = vmul.f32 1.0, %v2243
  %v2245 = vtanh.pop %v2233
  %v2247 = vrot.slane %v2106, 6
  %v2249 = vmul.f32 %v2244, %v2247
  %2251 = vrot.lane.b32.xlu0 %v2245, 64
  %v2252 = vpop.permute.xlu0 %2251
  %v2254 = vmul.f32 %v2244, %v2252
  %2256 = vrot.lane.b32.xlu0 %v2254, 32
  %v2257 = vpop.permute.xlu0 %2256
  %v2259 = vadd.f32 %v2249, %v2257
  %v2260 = vtanh.pop %v2259
  %2262 = vrot.lane.b32.xlu0 %v2260, 64
  %v2263 = vpop.permute.xlu0 %2262
  %v2265 = vmul.f32 %v2244, %v2263
  %v2266 = vxor.u32 %v2238, 2147483648
  %v2267 = vmul.f32 %v2266, 1.442695
  %v2268 = vpow.pop %v2267
  %v2269 = vadd.f32 %v2268, 1.0
  %v2270 = vrcp.pop %v2269
  %v2271 = vmul.f32 1.0, %v2270
  %v2272 = vtanh.pop %v2238
  %v2274 = vrot.slane %v2133, 2
  %v2276 = vmul.f32 %v2271, %v2274
  %2278 = vrot.lane.b32.xlu0 %v2272, 64
  %v2279 = vpop.permute.xlu0 %2278
  %v2281 = vmul.f32 %v2271, %v2279
  %2283 = vrot.lane.b32.xlu0 %v2281, 32
  %v2284 = vpop.permute.xlu0 %2283
  %v2286 = vadd.f32 %v2276, %v2284
  %v2287 = vtanh.pop %v2286
  %2289 = vrot.lane.b32.xlu0 %v2287, 64
  %v2290 = vpop.permute.xlu0 %2289
  %v2292 = vmul.f32 %v2271, %v2290
  %2294 = vrot.lane.b32.xlu0 %v2265, 32
  %v2295 = vpop.permute.xlu0 %2294
  %2297 = vst.msk [vmem:[%s4 + $0x18] sm:$0xc] %vm464, %v2295
  %2299 = vrot.lane.b32.xlu0 %v2292, 64
  %v2300 = vpop.permute.xlu0 %2299
  %2302 = vst.msk [vmem:[%s4] sm:$0x30] %vm470, %v2300
  %v2303 = vrot.slane %v2292, 2
  %2304 = vrot.lane.b32.xlu0 %v2303, 64
  %v2305 = vpop.permute.xlu0 %2304
  %v2307 = vsel %vm320, %v2295, %v2305
  %v2309 = vrot.slane %v2307, 2
  %v2310 = vsel %vm49, %v2309, 0
  %2312 = vmatprep.subr.mxu0 %v160
  %2313 = vmatpush1.msra.mxu0 %v159
  %2314 = vmatprep.subr.mxu0 %v162
  %2315 = vmatpush1.msra.mxu0 %v161
  %2316 = vmatprep.subr.mxu0 %v164
  %2317 = vmatpush1.msra.mxu0 %v163
  %2318 = vmatprep.subr.mxu0 %v166
  %2319 = vmatpush1.msra.mxu0 %v165
  %2320 = vmatprep.subr.mxu0 %v168
  %2321 = vmatpush1.msra.mxu0 %v167
  %2322 = vmatprep.subr.mxu0 %v170
  %2323 = vmatpush1.msra.mxu0 %v169
  %2324 = vmatprep.subr.mxu0 %v172
  %2325 = vmatpush1.msra.mxu0 %v171
  %2326 = vmatprep.subr.mxu0 %v174
  %2327 = vmatpush1.msra.mxu0 %v173
  %2328 = vmatprep.subr.mxu0 0.0
  %2329 = vmatpush1.msra.mxu0 0.0
  %2330 = vmatprep.subr.mxu0 0.0
  %2331 = vmatpush1.msra.mxu0 0.0
  %2332 = vmatprep.subr.mxu0 0.0
  %2333 = vmatpush1.msra.mxu0 0.0
  %2334 = vmatprep.subr.mxu0 0.0
  %2335 = vmatpush1.msra.mxu0 0.0
  %2336 = vmatprep.subr.mxu0 0.0
  %2337 = vmatpush1.msra.mxu0 0.0
  %2338 = vmatprep.subr.mxu0 0.0
  %2339 = vmatpush1.msra.mxu0 0.0
  %2340 = vmatprep.subr.mxu0 0.0
  %2341 = vmatpush1.msra.mxu0 0.0
  %2342 = vmatprep.subr.mxu0 0.0
  %2343 = vmatpush1.msra.mxu0 0.0
  %2344 = vmatprep.subr.mxu0 0.0
  %2345 = vmatpush1.msra.mxu0 0.0
  %2346 = vmatprep.subr.mxu0 0.0
  %2347 = vmatpush1.msra.mxu0 0.0
  %2348 = vmatprep.subr.mxu0 0.0
  %2349 = vmatpush1.msra.mxu0 0.0
  %2350 = vmatprep.subr.mxu0 0.0
  %2351 = vmatpush1.msra.mxu0 0.0
  %2352 = vmatprep.subr.mxu0 0.0
  %2353 = vmatpush1.msra.mxu0 0.0
  %2354 = vmatprep.subr.mxu0 0.0
  %2355 = vmatpush1.msra.mxu0 0.0
  %2356 = vmatprep.subr.mxu0 0.0
  %2357 = vmatpush1.msra.mxu0 0.0
  %2358 = vmatprep.subr.mxu0 0.0
  %2359 = vmatpush1.msra.mxu0 0.0
  %2360 = vmatprep.subr.mxu0 0.0
  %2361 = vmatpush1.msra.mxu0 0.0
  %2362 = vmatprep.subr.mxu0 0.0
  %2363 = vmatpush1.msra.mxu0 0.0
  %2364 = vmatprep.subr.mxu0 0.0
  %2365 = vmatpush1.msra.mxu0 0.0
  %2366 = vmatprep.subr.mxu0 0.0
  %2367 = vmatpush1.msra.mxu0 0.0
  %2368 = vmatprep.subr.mxu0 0.0
  %2369 = vmatpush1.msra.mxu0 0.0
  %2370 = vmatprep.subr.mxu0 0.0
  %2371 = vmatpush1.msra.mxu0 0.0
  %2372 = vmatprep.subr.mxu0 0.0
  %2373 = vmatpush1.msra.mxu0 0.0
  %2374 = vmatprep.subr.mxu0 0.0
  %2375 = vmatpush1.msra.mxu0 0.0
  %2376 = vmatprep.mubr.f32.mxu0 0.0
  %2377 = vmatmul.mubr.f32.gmra.mrb[0].mxu0 %v2310
  %v2378 = vpop.f32.mrb[0].mxu0
  %v2379 = vadd.f32 0.0, %v2378
  %v2380 = vpop.f32.mrb[0].mxu0
  %v2381 = vadd.f32 0.0, %v2380
  %2382 = vdwg.mxu0
  %v2383 = vld [vmem:[#allocation2 + $0x30] sm:$0x30]
  %v2385 = vrot.slane %v2379, 4
  %v2387 = vadd.f32 %v2383, %v2385
  %v2388 = vld [vmem:[#allocation2 + $0x8] sm:$0xc]
  %v2390 = vrot.slane %v2381, 6
  %v2392 = vadd.f32 %v2388, %v2390
  %v2393 = vxor.u32 %v2387, 2147483648
  %v2394 = vmul.f32 %v2393, 1.442695
  %v2395 = vpow.pop %v2394
  %v2396 = vadd.f32 %v2395, 1.0
  %v2397 = vrcp.pop %v2396
  %v2398 = vmul.f32 1.0, %v2397
  %v2399 = vtanh.pop %v2387
  %v2401 = vrot.slane %v2259, 6
  %v2403 = vmul.f32 %v2398, %v2401
  %2405 = vrot.lane.b32.xlu0 %v2399, 64
  %v2406 = vpop.permute.xlu0 %2405
  %v2408 = vmul.f32 %v2398, %v2406
  %2410 = vrot.lane.b32.xlu0 %v2408, 32
  %v2411 = vpop.permute.xlu0 %2410
  %v2413 = vadd.f32 %v2403, %v2411
  %v2414 = vtanh.pop %v2413
  %2416 = vrot.lane.b32.xlu0 %v2414, 64
  %v2417 = vpop.permute.xlu0 %2416
  %v2419 = vmul.f32 %v2398, %v2417
  %v2420 = vxor.u32 %v2392, 2147483648
  %v2421 = vmul.f32 %v2420, 1.442695
  %v2422 = vpow.pop %v2421
  %v2423 = vadd.f32 %v2422, 1.0
  %v2424 = vrcp.pop %v2423
  %v2425 = vmul.f32 1.0, %v2424
  %v2426 = vtanh.pop %v2392
  %v2428 = vrot.slane %v2286, 2
  %v2430 = vmul.f32 %v2425, %v2428
  %2432 = vrot.lane.b32.xlu0 %v2426, 64
  %v2433 = vpop.permute.xlu0 %2432
  %v2435 = vmul.f32 %v2425, %v2433
  %2437 = vrot.lane.b32.xlu0 %v2435, 32
  %v2438 = vpop.permute.xlu0 %2437
  %v2440 = vadd.f32 %v2430, %v2438
  %v2441 = vtanh.pop %v2440
  %2443 = vrot.lane.b32.xlu0 %v2441, 64
  %v2444 = vpop.permute.xlu0 %2443
  %v2446 = vmul.f32 %v2425, %v2444
  %2448 = vrot.lane.b32.xlu0 %v2419, 32
  %v2449 = vpop.permute.xlu0 %2448
  %2451 = vst.msk [vmem:[%s4 + $0x18] sm:$0x30] %vm620, %v2449
  %2453 = vrot.lane.b32.xlu0 %v2446, 64
  %v2454 = vpop.permute.xlu0 %2453
  %2456 = vst.msk [vmem:[%s4] sm:$0xc] %vm626, %v2454
  %v2457 = vrot.slane %v2446, 6
  %2458 = vrot.lane.b32.xlu0 %v2457, 64
  %v2459 = vpop.permute.xlu0 %2458
  %v2461 = vsel %vm320, %v2449, %v2459
  %v2463 = vrot.slane %v2461, 4
  %v2464 = vsel %vm49, %v2463, 0
  %2466 = vmatprep.subr.mxu0 %v160
  %2467 = vmatpush1.msra.mxu0 %v159
  %2468 = vmatprep.subr.mxu0 %v162
  %2469 = vmatpush1.msra.mxu0 %v161
  %2470 = vmatprep.subr.mxu0 %v164
  %2471 = vmatpush1.msra.mxu0 %v163
  %2472 = vmatprep.subr.mxu0 %v166
  %2473 = vmatpush1.msra.mxu0 %v165
  %2474 = vmatprep.subr.mxu0 %v168
  %2475 = vmatpush1.msra.mxu0 %v167
  %2476 = vmatprep.subr.mxu0 %v170
  %2477 = vmatpush1.msra.mxu0 %v169
  %2478 = vmatprep.subr.mxu0 %v172
  %2479 = vmatpush1.msra.mxu0 %v171
  %2480 = vmatprep.subr.mxu0 %v174
  %2481 = vmatpush1.msra.mxu0 %v173
  %2482 = vmatprep.subr.mxu0 0.0
  %2483 = vmatpush1.msra.mxu0 0.0
  %2484 = vmatprep.subr.mxu0 0.0
  %2485 = vmatpush1.msra.mxu0 0.0
  %2486 = vmatprep.subr.mxu0 0.0
  %2487 = vmatpush1.msra.mxu0 0.0
  %2488 = vmatprep.subr.mxu0 0.0
  %2489 = vmatpush1.msra.mxu0 0.0
  %2490 = vmatprep.subr.mxu0 0.0
  %2491 = vmatpush1.msra.mxu0 0.0
  %2492 = vmatprep.subr.mxu0 0.0
  %2493 = vmatpush1.msra.mxu0 0.0
  %2494 = vmatprep.subr.mxu0 0.0
  %2495 = vmatpush1.msra.mxu0 0.0
  %2496 = vmatprep.subr.mxu0 0.0
  %2497 = vmatpush1.msra.mxu0 0.0
  %2498 = vmatprep.subr.mxu0 0.0
  %2499 = vmatpush1.msra.mxu0 0.0
  %2500 = vmatprep.subr.mxu0 0.0
  %2501 = vmatpush1.msra.mxu0 0.0
  %2502 = vmatprep.subr.mxu0 0.0
  %2503 = vmatpush1.msra.mxu0 0.0
  %2504 = vmatprep.subr.mxu0 0.0
  %2505 = vmatpush1.msra.mxu0 0.0
  %2506 = vmatprep.subr.mxu0 0.0
  %2507 = vmatpush1.msra.mxu0 0.0
  %2508 = vmatprep.subr.mxu0 0.0
  %2509 = vmatpush1.msra.mxu0 0.0
  %2510 = vmatprep.subr.mxu0 0.0
  %2511 = vmatpush1.msra.mxu0 0.0
  %2512 = vmatprep.subr.mxu0 0.0
  %2513 = vmatpush1.msra.mxu0 0.0
  %2514 = vmatprep.subr.mxu0 0.0
  %2515 = vmatpush1.msra.mxu0 0.0
  %2516 = vmatprep.subr.mxu0 0.0
  %2517 = vmatpush1.msra.mxu0 0.0
  %2518 = vmatprep.subr.mxu0 0.0
  %2519 = vmatpush1.msra.mxu0 0.0
  %2520 = vmatprep.subr.mxu0 0.0
  %2521 = vmatpush1.msra.mxu0 0.0
  %2522 = vmatprep.subr.mxu0 0.0
  %2523 = vmatpush1.msra.mxu0 0.0
  %2524 = vmatprep.subr.mxu0 0.0
  %2525 = vmatpush1.msra.mxu0 0.0
  %2526 = vmatprep.subr.mxu0 0.0
  %2527 = vmatpush1.msra.mxu0 0.0
  %2528 = vmatprep.subr.mxu0 0.0
  %2529 = vmatpush1.msra.mxu0 0.0
  %2530 = vmatprep.mubr.f32.mxu0 0.0
  %2531 = vmatmul.mubr.f32.gmra.mrb[0].mxu0 %v2464
  %v2532 = vpop.f32.mrb[0].mxu0
  %v2533 = vadd.f32 0.0, %v2532
  %v2534 = vpop.f32.mrb[0].mxu0
  %v2535 = vadd.f32 0.0, %v2534
  %2536 = vdwg.mxu0
  %v2537 = vld [vmem:[#allocation2 + $0x30] sm:$0xc0]
  %v2539 = vrot.slane %v2533, 2
  %v2541 = vadd.f32 %v2537, %v2539
  %v2542 = vld [vmem:[#allocation2 + $0x8] sm:$0x3]
  %v2543 = vadd.f32 %v2542, %v2535
  %v2544 = vxor.u32 %v2541, 2147483648
  %v2545 = vmul.f32 %v2544, 1.442695
  %v2546 = vpow.pop %v2545
  %v2547 = vadd.f32 %v2546, 1.0
  %v2548 = vrcp.pop %v2547
  %v2549 = vmul.f32 1.0, %v2548
  %v2550 = vtanh.pop %v2541
  %v2552 = vrot.slane %v2413, 6
  %v2554 = vmul.f32 %v2549, %v2552
  %2556 = vrot.lane.b32.xlu0 %v2550, 64
  %v2557 = vpop.permute.xlu0 %2556
  %v2559 = vmul.f32 %v2549, %v2557
  %2561 = vrot.lane.b32.xlu0 %v2559, 32
  %v2562 = vpop.permute.xlu0 %2561
  %v2564 = vadd.f32 %v2554, %v2562
  %v2565 = vtanh.pop %v2564
  %2567 = vrot.lane.b32.xlu0 %v2565, 64
  %v2568 = vpop.permute.xlu0 %2567
  %v2570 = vmul.f32 %v2549, %v2568
  %v2571 = vxor.u32 %v2543, 2147483648
  %v2572 = vmul.f32 %v2571, 1.442695
  %v2573 = vpow.pop %v2572
  %v2574 = vadd.f32 %v2573, 1.0
  %v2575 = vrcp.pop %v2574
  %v2576 = vmul.f32 1.0, %v2575
  %v2577 = vtanh.pop %v2543
  %v2579 = vrot.slane %v2440, 2
  %v2581 = vmul.f32 %v2576, %v2579
  %2583 = vrot.lane.b32.xlu0 %v2577, 64
  %v2584 = vpop.permute.xlu0 %2583
  %v2586 = vmul.f32 %v2576, %v2584
  %2588 = vrot.lane.b32.xlu0 %v2586, 32
  %v2589 = vpop.permute.xlu0 %2588
  %v2591 = vadd.f32 %v2581, %v2589
  %v2592 = vtanh.pop %v2591
  %2594 = vrot.lane.b32.xlu0 %v2592, 64
  %v2595 = vpop.permute.xlu0 %2594
  %v2597 = vmul.f32 %v2576, %v2595
  %2599 = vrot.lane.b32.xlu0 %v2570, 32
  %v2600 = vpop.permute.xlu0 %2599
  %2602 = vst.msk [vmem:[%s4 + $0x18] sm:$0xc0] %vm773, %v2600
  %2604 = vrot.lane.b32.xlu0 %v2597, 64
  %v2605 = vpop.permute.xlu0 %2604
  %2607 = vst.msk [vmem:[%s4] sm:$0x3] %vm779, %v2605
  // Predicated region
  $region18: #{rr_lstm_forward.4} parent=0 // pred_check
    _
  $region19: #{rr_lstm_forward.4} parent=0 // pred_check_branch
    %2609 = sbr.rel (0) target = $region21
  $region20: #{rr_lstm_forward.4} parent=0 // pred_region
    _
  $region21: #{rr_lstm_forward.4} parent=0 // pred_fallthru
    _
  // Predicated region
  $region22: #{rr_lstm_forward.4} parent=0 // pred_check
    _
  $region23: #{rr_lstm_forward.4} parent=0 // pred_check_branch
    %2611 = sbr.rel (0) target = $region25
  $region24: #{rr_lstm_forward.4} parent=0 // pred_region
    _
  $region25: #{rr_lstm_forward.4} parent=0 // pred_fallthru
    _

// kernel: rr_lstm_forward.3
$region0: #{rr_lstm_forward.3}
  #allocation0 [shape = 'u32[]', space=smem, size = 0x4, offset = 0x4, fixed_abs, tag = 'smem constant byte address 0x4 - core index']
  #allocation1 [shape = 'u32[144,128]{1,0:T(1,128)}', space=vmem, size = 0x12000, scoped, tag = 'internal scratch']
  #allocation2 [shape = 'f32[32,256]{1,0:T(8,128)}', space=vmem, size = 0x8000, scoped, tag = 'scratch operand']
  %s0 = inlined_call_operand.vmem [shape: f32[32,1], index: 0, kind: input, shape index: {}]
  %s1 = inlined_call_operand.vmem [shape: f32[1,256], index: 1, kind: input, shape index: {}]
  %s2 = inlined_call_operand.hbm [shape: f32[64,256], index: 2, kind: input, shape index: {}]
  %s3 = inlined_call_operand.vmem [shape: f32[1,256], index: 3, kind: input, shape index: {}]
  %s4 = inlined_call_operand.vmem [shape: f32[32,64], index: 4, kind: output, shape index: {}]
  %s5 = sld [smem:[#allocation0]]
  $region30: #{rr_lstm_forward.3} parent=0
    _
  %s7 = ssub.s32 1, %s5
  %s8 = scalar_select 0, %s7, %s5
  $region1: #{rr_lstm_forward.3} parent=0
    #allocation3 [shape = 'u8[65536]{0}', space=vmem, size = 0x10000, scoped, tag = 'input window, operand 2, single buffered']
    #allocation4 [shape = 's32[1]{0}', space=sflag, size = 0x4, scoped, tag = 'scoped memory for rr_lstm_forward.3']
    %9 = vsyncpa [#allocation4], 0
    // Predicated region
    $region2: #{rr_lstm_forward.3} parent=1 // pred_check
      _
    $region3: #{rr_lstm_forward.3} parent=1 // pred_check_branch
      %11 = sbr.rel (0) target = $region5
    $region4: #{rr_lstm_forward.3} parent=1 // pred_region
      _
    $region5: #{rr_lstm_forward.3} parent=1 // pred_fallthru
      _
    // Predicated region
    $region6: #{rr_lstm_forward.3} parent=1 // pred_check
      _
    $region7: #{rr_lstm_forward.3} parent=1 // pred_check_branch
      %13 = sbr.rel (0) target = $region9
    $region8: #{rr_lstm_forward.3} parent=1 // pred_region
      _
    $region9: #{rr_lstm_forward.3} parent=1 // pred_fallthru
      _
    // Predicated region
    $region10: #{rr_lstm_forward.3} parent=1 // pred_check
      _
    $region11: #{rr_lstm_forward.3} parent=1 // pred_check_branch
      %15 = sbr.rel (0) target = $region13
    $region12: #{rr_lstm_forward.3} parent=1 // pred_region
      %s17 = ssub.s32 2048, 2048
      %18 = vsyncadd [#allocation4], %s17
      %s19 = sshll.u32 [#allocation3], 4
      %s20 = int_to_ptr.vmem [resolvable:$true] %s19
      %25 = dma.hbm_to_vmem [thread:$0]  %s2, 2048, %s20, [#allocation4], 256, 256, 16
    $region13: #{rr_lstm_forward.3} parent=1 // pred_fallthru
      _
    // Predicated region
    $region14: #{rr_lstm_forward.3} parent=1 // pred_check
      _
    $region15: #{rr_lstm_forward.3} parent=1 // pred_check_branch
      %27 = sbr.rel (0) target = $region17
    $region16: #{rr_lstm_forward.3} parent=1 // pred_region
      _
    $region17: #{rr_lstm_forward.3} parent=1 // pred_fallthru
      _
    // Predicated region
    $region18: #{rr_lstm_forward.3} parent=1 // pred_check
      _
    $region19: #{rr_lstm_forward.3} parent=1 // pred_check_branch
      %29 = sbr.rel (0) target = $region21
    $region20: #{rr_lstm_forward.3} parent=1 // pred_region
      %30 = dma.done [#allocation4], 2048
    $region21: #{rr_lstm_forward.3} parent=1 // pred_fallthru
      _
    %v31 = vld [vmem:[%s0] sm:$0xff]
    %v32 = vld [vmem:[%s0 + $0x8] sm:$0xff]
    %v33 = vld [vmem:[%s0 + $0x10] sm:$0xff]
    %v34 = vld [vmem:[%s0 + $0x18] sm:$0xff]
    %v35 = vld [vmem:[%s1] sm:$0x3]
    %v36 = vld [vmem:[%s3] sm:$0x3]
    %v38 = vlaneseq
    %v39 = vshrl.u32 %v38, 7
    %v40 = vsub.s32 0, %v39
    %v41 = vrot.slane %v36, %v40
    %v42 = vlaneseq
    %v43 = vshrl.u32 %v42, 7
    %v44 = vsub.s32 1, %v43
    %v45 = vrot.slane %v36, %v44
    %v49 = vlaneseq
    %v50 = vshrl.u32 %v49, 7
    %v51 = vsub.s32 0, %v50
    %v52 = vrot.slane %v35, %v51
    %v53 = vlaneseq
    %v54 = vshrl.u32 %v53, 7
    %v55 = vsub.s32 1, %v54
    %v56 = vrot.slane %v35, %v55
    %vm57 = vcmask 7168
    %v59 = vsel %vm57, %v31, 0
    %v62 = vsel %vm57, %v32, 0
    %v65 = vsel %vm57, %v33, 0
    %v68 = vsel %vm57, %v34, 0
    %vm70 = vcmask 1040384
    %v71 = vsel %vm70, %v52, 0
    %v73 = vsel %vm70, %v56, 0
    %75 = vmatprep.subr.mxu0 %v73
    %76 = vmatpush1.msra.mxu0 %v71
    %77 = vmatprep.subr.mxu0 0.0
    %78 = vmatpush1.msra.mxu0 0.0
    %79 = vmatprep.subr.mxu0 0.0
    %80 = vmatpush1.msra.mxu0 0.0
    %81 = vmatprep.subr.mxu0 0.0
    %82 = vmatpush1.msra.mxu0 0.0
    %83 = vmatprep.subr.mxu0 0.0
    %84 = vmatpush1.msra.mxu0 0.0
    %85 = vmatprep.subr.mxu0 0.0
    %86 = vmatpush1.msra.mxu0 0.0
    %87 = vmatprep.subr.mxu0 0.0
    %88 = vmatpush1.msra.mxu0 0.0
    %89 = vmatprep.subr.mxu0 0.0
    %90 = vmatpush1.msra.mxu0 0.0
    %91 = vmatprep.subr.mxu0 0.0
    %92 = vmatpush1.msra.mxu0 0.0
    %93 = vmatprep.subr.mxu0 0.0
    %94 = vmatpush1.msra.mxu0 0.0
    %95 = vmatprep.subr.mxu0 0.0
    %96 = vmatpush1.msra.mxu0 0.0
    %97 = vmatprep.subr.mxu0 0.0
    %98 = vmatpush1.msra.mxu0 0.0
    %99 = vmatprep.subr.mxu0 0.0
    %100 = vmatpush1.msra.mxu0 0.0
    %101 = vmatprep.subr.mxu0 0.0
    %102 = vmatpush1.msra.mxu0 0.0
    %103 = vmatprep.subr.mxu0 0.0
    %104 = vmatpush1.msra.mxu0 0.0
    %105 = vmatprep.subr.mxu0 0.0
    %106 = vmatpush1.msra.mxu0 0.0
    %107 = vmatprep.subr.mxu0 0.0
    %108 = vmatpush1.msra.mxu0 0.0
    %109 = vmatprep.subr.mxu0 0.0
    %110 = vmatpush1.msra.mxu0 0.0
    %111 = vmatprep.subr.mxu0 0.0
    %112 = vmatpush1.msra.mxu0 0.0
    %113 = vmatprep.subr.mxu0 0.0
    %114 = vmatpush1.msra.mxu0 0.0
    %115 = vmatprep.subr.mxu0 0.0
    %116 = vmatpush1.msra.mxu0 0.0
    %117 = vmatprep.subr.mxu0 0.0
    %118 = vmatpush1.msra.mxu0 0.0
    %119 = vmatprep.subr.mxu0 0.0
    %120 = vmatpush1.msra.mxu0 0.0
    %121 = vmatprep.subr.mxu0 0.0
    %122 = vmatpush1.msra.mxu0 0.0
    %123 = vmatprep.subr.mxu0 0.0
    %124 = vmatpush1.msra.mxu0 0.0
    %125 = vmatprep.subr.mxu0 0.0
    %126 = vmatpush1.msra.mxu0 0.0
    %127 = vmatprep.subr.mxu0 0.0
    %128 = vmatpush1.msra.mxu0 0.0
    %129 = vmatprep.subr.mxu0 0.0
    %130 = vmatpush1.msra.mxu0 0.0
    %131 = vmatprep.subr.mxu0 0.0
    %132 = vmatpush1.msra.mxu0 0.0
    %133 = vmatprep.subr.mxu0 0.0
    %134 = vmatpush1.msra.mxu0 0.0
    %135 = vmatprep.subr.mxu0 0.0
    %136 = vmatpush1.msra.mxu0 0.0
    %137 = vmatprep.subr.mxu0 0.0
    %138 = vmatpush1.msra.mxu0 0.0
    %139 = vmatprep.mubr.f32.mxu0 0.0
    %140 = vmatmul.mubr.f32.gmra.mrb[0].mxu0 %v59
    %v141 = vpop.f32.mrb[0].mxu0
    %v142 = vadd.f32 %v41, %v141
    %v143 = vpop.f32.mrb[0].mxu0
    %v144 = vadd.f32 %v45, %v143
    %145 = vmatprep.mubr.f32.mxu0 0.0
    %146 = vmatmul.mubr.f32.gmra.mrb[0].mxu0 %v62
    %v147 = vpop.f32.mrb[0].mxu0
    %v148 = vadd.f32 %v41, %v147
    %v149 = vpop.f32.mrb[0].mxu0
    %v150 = vadd.f32 %v45, %v149
    %151 = vmatprep.mubr.f32.mxu0 0.0
    %152 = vmatmul.mubr.f32.gmra.mrb[0].mxu0 %v65
    %v153 = vpop.f32.mrb[0].mxu0
    %v154 = vadd.f32 %v41, %v153
    %v155 = vpop.f32.mrb[0].mxu0
    %v156 = vadd.f32 %v45, %v155
    %157 = vmatprep.mubr.f32.mxu0 0.0
    %158 = vmatmul.mubr.f32.gmra.mrb[0].mxu0 %v68
    %v159 = vpop.f32.mrb[0].mxu0
    %v160 = vadd.f32 %v41, %v159
    %v161 = vpop.f32.mrb[0].mxu0
    %v162 = vadd.f32 %v45, %v161
    %163 = vdwg.mxu0
    %164 = vst [vmem:[#allocation2] sm:$0xff] %v142
    %165 = vst [vmem:[#allocation2 + $0x8] sm:$0xff] %v144
    %166 = vst [vmem:[#allocation2 + $0x10] sm:$0xff] %v148
    %167 = vst [vmem:[#allocation2 + $0x18] sm:$0xff] %v150
    %168 = vst [vmem:[#allocation2 + $0x20] sm:$0xff] %v154
    %169 = vst [vmem:[#allocation2 + $0x28] sm:$0xff] %v156
    %170 = vst [vmem:[#allocation2 + $0x30] sm:$0xff] %v160
    %171 = vst [vmem:[#allocation2 + $0x38] sm:$0xff] %v162
    %v172 = vld [vmem:[#allocation3] sm:$0xff]
    %v173 = vld [vmem:[#allocation3 + $0x8] sm:$0xff]
    %v174 = vld [vmem:[#allocation3 + $0x10] sm:$0xff]
    %v175 = vld [vmem:[#allocation3 + $0x18] sm:$0xff]
    %v176 = vld [vmem:[#allocation3 + $0x20] sm:$0xff]
    %v177 = vld [vmem:[#allocation3 + $0x28] sm:$0xff]
    %v178 = vld [vmem:[#allocation3 + $0x30] sm:$0xff]
    %v179 = vld [vmem:[#allocation3 + $0x38] sm:$0xff]
    %v180 = vld [vmem:[#allocation3 + $0x40] sm:$0xff]
    %v181 = vld [vmem:[#allocation3 + $0x48] sm:$0xff]
    %v182 = vld [vmem:[#allocation3 + $0x50] sm:$0xff]
    %v183 = vld [vmem:[#allocation3 + $0x58] sm:$0xff]
    %v184 = vld [vmem:[#allocation3 + $0x60] sm:$0xff]
    %v185 = vld [vmem:[#allocation3 + $0x68] sm:$0xff]
    %v186 = vld [vmem:[#allocation3 + $0x70] sm:$0xff]
    %v187 = vld [vmem:[#allocation3 + $0x78] sm:$0xff]
    %vm188 = vcmask 523264
    %v190 = vsel %vm188, 0.0, 0
    %192 = vmatprep.subr.mxu0 %v173
    %193 = vmatpush1.msra.mxu0 %v172
    %194 = vmatprep.subr.mxu0 %v175
    %195 = vmatpush1.msra.mxu0 %v174
    %196 = vmatprep.subr.mxu0 %v177
    %197 = vmatpush1.msra.mxu0 %v176
    %198 = vmatprep.subr.mxu0 %v179
    %199 = vmatpush1.msra.mxu0 %v178
    %200 = vmatprep.subr.mxu0 %v181
    %201 = vmatpush1.msra.mxu0 %v180
    %202 = vmatprep.subr.mxu0 %v183
    %203 = vmatpush1.msra.mxu0 %v182
    %204 = vmatprep.subr.mxu0 %v185
    %205 = vmatpush1.msra.mxu0 %v184
    %206 = vmatprep.subr.mxu0 %v187
    %207 = vmatpush1.msra.mxu0 %v186
    %208 = vmatprep.subr.mxu0 0.0
    %209 = vmatpush1.msra.mxu0 0.0
    %210 = vmatprep.subr.mxu0 0.0
    %211 = vmatpush1.msra.mxu0 0.0
    %212 = vmatprep.subr.mxu0 0.0
    %213 = vmatpush1.msra.mxu0 0.0
    %214 = vmatprep.subr.mxu0 0.0
    %215 = vmatpush1.msra.mxu0 0.0
    %216 = vmatprep.subr.mxu0 0.0
    %217 = vmatpush1.msra.mxu0 0.0
    %218 = vmatprep.subr.mxu0 0.0
    %219 = vmatpush1.msra.mxu0 0.0
    %220 = vmatprep.subr.mxu0 0.0
    %221 = vmatpush1.msra.mxu0 0.0
    %222 = vmatprep.subr.mxu0 0.0
    %223 = vmatpush1.msra.mxu0 0.0
    %224 = vmatprep.subr.mxu0 0.0
    %225 = vmatpush1.msra.mxu0 0.0
    %226 = vmatprep.subr.mxu0 0.0
    %227 = vmatpush1.msra.mxu0 0.0
    %228 = vmatprep.subr.mxu0 0.0
    %229 = vmatpush1.msra.mxu0 0.0
    %230 = vmatprep.subr.mxu0 0.0
    %231 = vmatpush1.msra.mxu0 0.0
    %232 = vmatprep.subr.mxu0 0.0
    %233 = vmatpush1.msra.mxu0 0.0
    %234 = vmatprep.subr.mxu0 0.0
    %235 = vmatpush1.msra.mxu0 0.0
    %236 = vmatprep.subr.mxu0 0.0
    %237 = vmatpush1.msra.mxu0 0.0
    %238 = vmatprep.subr.mxu0 0.0
    %239 = vmatpush1.msra.mxu0 0.0
    %240 = vmatprep.subr.mxu0 0.0
    %241 = vmatpush1.msra.mxu0 0.0
    %242 = vmatprep.subr.mxu0 0.0
    %243 = vmatpush1.msra.mxu0 0.0
    %244 = vmatprep.subr.mxu0 0.0
    %245 = vmatpush1.msra.mxu0 0.0
    %246 = vmatprep.subr.mxu0 0.0
    %247 = vmatpush1.msra.mxu0 0.0
    %248 = vmatprep.subr.mxu0 0.0
    %249 = vmatpush1.msra.mxu0 0.0
    %250 = vmatprep.subr.mxu0 0.0
    %251 = vmatpush1.msra.mxu0 0.0
    %252 = vmatprep.subr.mxu0 0.0
    %253 = vmatpush1.msra.mxu0 0.0
    %254 = vmatprep.subr.mxu0 0.0
    %255 = vmatpush1.msra.mxu0 0.0
    %256 = vmatprep.mubr.f32.mxu0 0.0
    %257 = vmatmul.mubr.f32.gmra.mrb[0].mxu0 %v190
    %v258 = vpop.f32.mrb[0].mxu0
    %v259 = vadd.f32 0.0, %v258
    %v260 = vpop.f32.mrb[0].mxu0
    %v261 = vadd.f32 0.0, %v260
    %262 = vdwg.mxu0
    %v263 = vld [vmem:[#allocation2] sm:$0x3]
    %v264 = vadd.f32 %v263, %v259
    %v265 = vld [vmem:[#allocation2 + $0x38] sm:$0xc0]
    %v267 = vrot.slane %v261, 2
    %v269 = vadd.f32 %v265, %v267
    %v270 = vxor.u32 %v264, 2147483648
    %v271 = vmul.f32 %v270, 1.442695
    %v272 = vpow.pop %v271
    %v273 = vadd.f32 %v272, 1.0
    %v274 = vrcp.pop %v273
    %v275 = vmul.f32 1.0, %v274
    %v276 = vtanh.pop %v264
    %v277 = vmul.f32 %v275, 0.0
    %279 = vrot.lane.b32.xlu0 %v276, 64
    %v280 = vpop.permute.xlu0 %279
    %v282 = vmul.f32 %v275, %v280
    %284 = vrot.lane.b32.xlu0 %v282, 32
    %v285 = vpop.permute.xlu0 %284
    %v287 = vadd.f32 %v277, %v285
    %v288 = vtanh.pop %v287
    %290 = vrot.lane.b32.xlu0 %v288, 64
    %v291 = vpop.permute.xlu0 %290
    %v293 = vmul.f32 %v275, %v291
    %v294 = vxor.u32 %v269, 2147483648
    %v295 = vmul.f32 %v294, 1.442695
    %v296 = vpow.pop %v295
    %v297 = vadd.f32 %v296, 1.0
    %v298 = vrcp.pop %v297
    %v299 = vmul.f32 1.0, %v298
    %v300 = vtanh.pop %v269
    %v301 = vmul.f32 %v299, 0.0
    %303 = vrot.lane.b32.xlu0 %v300, 64
    %v304 = vpop.permute.xlu0 %303
    %v306 = vmul.f32 %v299, %v304
    %308 = vrot.lane.b32.xlu0 %v306, 32
    %v309 = vpop.permute.xlu0 %308
    %v311 = vadd.f32 %v301, %v309
    %v312 = vtanh.pop %v311
    %314 = vrot.lane.b32.xlu0 %v312, 64
    %v315 = vpop.permute.xlu0 %314
    %v317 = vmul.f32 %v299, %v315
    %319 = vrot.lane.b32.xlu0 %v293, 32
    %v320 = vpop.permute.xlu0 %319
    %vm322 = vcmask 254976
    %323 = vst.msk [vmem:[%s4] sm:$0x3] %vm322, %v320
    %325 = vrot.lane.b32.xlu0 %v317, 64
    %v326 = vpop.permute.xlu0 %325
    %vm328 = vcmask 523526
    %329 = vst.msk [vmem:[%s4 + $0x18] sm:$0xc0] %vm328, %v326
    %v330 = vrot.slane %v317, 6
    %331 = vrot.lane.b32.xlu0 %v330, 64
    %v332 = vpop.permute.xlu0 %331
    %vm334 = vcmask 261120
    %v335 = vsel %vm334, %v320, %v332
    %v337 = vsel %vm188, %v335, 0
    %339 = vmatprep.subr.mxu0 %v173
    %340 = vmatpush1.msra.mxu0 %v172
    %341 = vmatprep.subr.mxu0 %v175
    %342 = vmatpush1.msra.mxu0 %v174
    %343 = vmatprep.subr.mxu0 %v177
    %344 = vmatpush1.msra.mxu0 %v176
    %345 = vmatprep.subr.mxu0 %v179
    %346 = vmatpush1.msra.mxu0 %v178
    %347 = vmatprep.subr.mxu0 %v181
    %348 = vmatpush1.msra.mxu0 %v180
    %349 = vmatprep.subr.mxu0 %v183
    %350 = vmatpush1.msra.mxu0 %v182
    %351 = vmatprep.subr.mxu0 %v185
    %352 = vmatpush1.msra.mxu0 %v184
    %353 = vmatprep.subr.mxu0 %v187
    %354 = vmatpush1.msra.mxu0 %v186
    %355 = vmatprep.subr.mxu0 0.0
    %356 = vmatpush1.msra.mxu0 0.0
    %357 = vmatprep.subr.mxu0 0.0
    %358 = vmatpush1.msra.mxu0 0.0
    %359 = vmatprep.subr.mxu0 0.0
    %360 = vmatpush1.msra.mxu0 0.0
    %361 = vmatprep.subr.mxu0 0.0
    %362 = vmatpush1.msra.mxu0 0.0
    %363 = vmatprep.subr.mxu0 0.0
    %364 = vmatpush1.msra.mxu0 0.0
    %365 = vmatprep.subr.mxu0 0.0
    %366 = vmatpush1.msra.mxu0 0.0
    %367 = vmatprep.subr.mxu0 0.0
    %368 = vmatpush1.msra.mxu0 0.0
    %369 = vmatprep.subr.mxu0 0.0
    %370 = vmatpush1.msra.mxu0 0.0
    %371 = vmatprep.subr.mxu0 0.0
    %372 = vmatpush1.msra.mxu0 0.0
    %373 = vmatprep.subr.mxu0 0.0
    %374 = vmatpush1.msra.mxu0 0.0
    %375 = vmatprep.subr.mxu0 0.0
    %376 = vmatpush1.msra.mxu0 0.0
    %377 = vmatprep.subr.mxu0 0.0
    %378 = vmatpush1.msra.mxu0 0.0
    %379 = vmatprep.subr.mxu0 0.0
    %380 = vmatpush1.msra.mxu0 0.0
    %381 = vmatprep.subr.mxu0 0.0
    %382 = vmatpush1.msra.mxu0 0.0
    %383 = vmatprep.subr.mxu0 0.0
    %384 = vmatpush1.msra.mxu0 0.0
    %385 = vmatprep.subr.mxu0 0.0
    %386 = vmatpush1.msra.mxu0 0.0
    %387 = vmatprep.subr.mxu0 0.0
    %388 = vmatpush1.msra.mxu0 0.0
    %389 = vmatprep.subr.mxu0 0.0
    %390 = vmatpush1.msra.mxu0 0.0
    %391 = vmatprep.subr.mxu0 0.0
    %392 = vmatpush1.msra.mxu0 0.0
    %393 = vmatprep.subr.mxu0 0.0
    %394 = vmatpush1.msra.mxu0 0.0
    %395 = vmatprep.subr.mxu0 0.0
    %396 = vmatpush1.msra.mxu0 0.0
    %397 = vmatprep.subr.mxu0 0.0
    %398 = vmatpush1.msra.mxu0 0.0
    %399 = vmatprep.subr.mxu0 0.0
    %400 = vmatpush1.msra.mxu0 0.0
    %401 = vmatprep.subr.mxu0 0.0
    %402 = vmatpush1.msra.mxu0 0.0
    %403 = vmatprep.mubr.f32.mxu0 0.0
    %404 = vmatmul.mubr.f32.gmra.mrb[0].mxu0 %v337
    %v405 = vpop.f32.mrb[0].mxu0
    %v406 = vadd.f32 0.0, %v405
    %v407 = vpop.f32.mrb[0].mxu0
    %v408 = vadd.f32 0.0, %v407
    %409 = vdwg.mxu0
    %v410 = vld [vmem:[#allocation2] sm:$0xc]
    %v412 = vrot.slane %v406, 6
    %v414 = vadd.f32 %v410, %v412
    %v415 = vld [vmem:[#allocation2 + $0x38] sm:$0x30]
    %v417 = vrot.slane %v408, 4
    %v419 = vadd.f32 %v415, %v417
    %v420 = vxor.u32 %v414, 2147483648
    %v421 = vmul.f32 %v420, 1.442695
    %v422 = vpow.pop %v421
    %v423 = vadd.f32 %v422, 1.0
    %v424 = vrcp.pop %v423
    %v425 = vmul.f32 1.0, %v424
    %v426 = vtanh.pop %v414
    %v428 = vrot.slane %v287, 6
    %v430 = vmul.f32 %v425, %v428
    %432 = vrot.lane.b32.xlu0 %v426, 64
    %v433 = vpop.permute.xlu0 %432
    %v435 = vmul.f32 %v425, %v433
    %437 = vrot.lane.b32.xlu0 %v435, 32
    %v438 = vpop.permute.xlu0 %437
    %v440 = vadd.f32 %v430, %v438
    %v441 = vtanh.pop %v440
    %443 = vrot.lane.b32.xlu0 %v441, 64
    %v444 = vpop.permute.xlu0 %443
    %v446 = vmul.f32 %v425, %v444
    %v447 = vxor.u32 %v419, 2147483648
    %v448 = vmul.f32 %v447, 1.442695
    %v449 = vpow.pop %v448
    %v450 = vadd.f32 %v449, 1.0
    %v451 = vrcp.pop %v450
    %v452 = vmul.f32 1.0, %v451
    %v453 = vtanh.pop %v419
    %v455 = vrot.slane %v311, 2
    %v457 = vmul.f32 %v452, %v455
    %459 = vrot.lane.b32.xlu0 %v453, 64
    %v460 = vpop.permute.xlu0 %459
    %v462 = vmul.f32 %v452, %v460
    %464 = vrot.lane.b32.xlu0 %v462, 32
    %v465 = vpop.permute.xlu0 %464
    %v467 = vadd.f32 %v457, %v465
    %v468 = vtanh.pop %v467
    %470 = vrot.lane.b32.xlu0 %v468, 64
    %v471 = vpop.permute.xlu0 %470
    %v473 = vmul.f32 %v452, %v471
    %475 = vrot.lane.b32.xlu0 %v446, 32
    %v476 = vpop.permute.xlu0 %475
    %vm478 = vcmask 257026
    %479 = vst.msk [vmem:[%s4] sm:$0xc] %vm478, %v476
    %481 = vrot.lane.b32.xlu0 %v473, 64
    %v482 = vpop.permute.xlu0 %481
    %vm484 = vcmask 521476
    %485 = vst.msk [vmem:[%s4 + $0x18] sm:$0x30] %vm484, %v482
    %v486 = vrot.slane %v473, 2
    %487 = vrot.lane.b32.xlu0 %v486, 64
    %v488 = vpop.permute.xlu0 %487
    %v490 = vsel %vm334, %v476, %v488
    %v492 = vrot.slane %v490, 2
    %v493 = vsel %vm188, %v492, 0
    %495 = vmatprep.subr.mxu0 %v173
    %496 = vmatpush1.msra.mxu0 %v172
    %497 = vmatprep.subr.mxu0 %v175
    %498 = vmatpush1.msra.mxu0 %v174
    %499 = vmatprep.subr.mxu0 %v177
    %500 = vmatpush1.msra.mxu0 %v176
    %501 = vmatprep.subr.mxu0 %v179
    %502 = vmatpush1.msra.mxu0 %v178
    %503 = vmatprep.subr.mxu0 %v181
    %504 = vmatpush1.msra.mxu0 %v180
    %505 = vmatprep.subr.mxu0 %v183
    %506 = vmatpush1.msra.mxu0 %v182
    %507 = vmatprep.subr.mxu0 %v185
    %508 = vmatpush1.msra.mxu0 %v184
    %509 = vmatprep.subr.mxu0 %v187
    %510 = vmatpush1.msra.mxu0 %v186
    %511 = vmatprep.subr.mxu0 0.0
    %512 = vmatpush1.msra.mxu0 0.0
    %513 = vmatprep.subr.mxu0 0.0
    %514 = vmatpush1.msra.mxu0 0.0
    %515 = vmatprep.subr.mxu0 0.0
    %516 = vmatpush1.msra.mxu0 0.0
    %517 = vmatprep.subr.mxu0 0.0
    %518 = vmatpush1.msra.mxu0 0.0
    %519 = vmatprep.subr.mxu0 0.0
    %520 = vmatpush1.msra.mxu0 0.0
    %521 = vmatprep.subr.mxu0 0.0
    %522 = vmatpush1.msra.mxu0 0.0
    %523 = vmatprep.subr.mxu0 0.0
    %524 = vmatpush1.msra.mxu0 0.0
    %525 = vmatprep.subr.mxu0 0.0
    %526 = vmatpush1.msra.mxu0 0.0
    %527 = vmatprep.subr.mxu0 0.0
    %528 = vmatpush1.msra.mxu0 0.0
    %529 = vmatprep.subr.mxu0 0.0
    %530 = vmatpush1.msra.mxu0 0.0
    %531 = vmatprep.subr.mxu0 0.0
    %532 = vmatpush1.msra.mxu0 0.0
    %533 = vmatprep.subr.mxu0 0.0
    %534 = vmatpush1.msra.mxu0 0.0
    %535 = vmatprep.subr.mxu0 0.0
    %536 = vmatpush1.msra.mxu0 0.0
    %537 = vmatprep.subr.mxu0 0.0
    %538 = vmatpush1.msra.mxu0 0.0
    %539 = vmatprep.subr.mxu0 0.0
    %540 = vmatpush1.msra.mxu0 0.0
    %541 = vmatprep.subr.mxu0 0.0
    %542 = vmatpush1.msra.mxu0 0.0
    %543 = vmatprep.subr.mxu0 0.0
    %544 = vmatpush1.msra.mxu0 0.0
    %545 = vmatprep.subr.mxu0 0.0
    %546 = vmatpush1.msra.mxu0 0.0
    %547 = vmatprep.subr.mxu0 0.0
    %548 = vmatpush1.msra.mxu0 0.0
    %549 = vmatprep.subr.mxu0 0.0
    %550 = vmatpush1.msra.mxu0 0.0
    %551 = vmatprep.subr.mxu0 0.0
    %552 = vmatpush1.msra.mxu0 0.0
    %553 = vmatprep.subr.mxu0 0.0
    %554 = vmatpush1.msra.mxu0 0.0
    %555 = vmatprep.subr.mxu0 0.0
    %556 = vmatpush1.msra.mxu0 0.0
    %557 = vmatprep.subr.mxu0 0.0
    %558 = vmatpush1.msra.mxu0 0.0
    %559 = vmatprep.mubr.f32.mxu0 0.0
    %560 = vmatmul.mubr.f32.gmra.mrb[0].mxu0 %v493
    %v561 = vpop.f32.mrb[0].mxu0
    %v562 = vadd.f32 0.0, %v561
    %v563 = vpop.f32.mrb[0].mxu0
    %v564 = vadd.f32 0.0, %v563
    %565 = vdwg.mxu0
    %v566 = vld [vmem:[#allocation2] sm:$0x30]
    %v568 = vrot.slane %v562, 4
    %v570 = vadd.f32 %v566, %v568
    %v571 = vld [vmem:[#allocation2 + $0x38] sm:$0xc]
    %v573 = vrot.slane %v564, 6
    %v575 = vadd.f32 %v571, %v573
    %v576 = vxor.u32 %v570, 2147483648
    %v577 = vmul.f32 %v576, 1.442695
    %v578 = vpow.pop %v577
    %v579 = vadd.f32 %v578, 1.0
    %v580 = vrcp.pop %v579
    %v581 = vmul.f32 1.0, %v580
    %v582 = vtanh.pop %v570
    %v584 = vrot.slane %v440, 6
    %v586 = vmul.f32 %v581, %v584
    %588 = vrot.lane.b32.xlu0 %v582, 64
    %v589 = vpop.permute.xlu0 %588
    %v591 = vmul.f32 %v581, %v589
    %593 = vrot.lane.b32.xlu0 %v591, 32
    %v594 = vpop.permute.xlu0 %593
    %v596 = vadd.f32 %v586, %v594
    %v597 = vtanh.pop %v596
    %599 = vrot.lane.b32.xlu0 %v597, 64
    %v600 = vpop.permute.xlu0 %599
    %v602 = vmul.f32 %v581, %v600
    %v603 = vxor.u32 %v575, 2147483648
    %v604 = vmul.f32 %v603, 1.442695
    %v605 = vpow.pop %v604
    %v606 = vadd.f32 %v605, 1.0
    %v607 = vrcp.pop %v606
    %v608 = vmul.f32 1.0, %v607
    %v609 = vtanh.pop %v575
    %v611 = vrot.slane %v467, 2
    %v613 = vmul.f32 %v608, %v611
    %615 = vrot.lane.b32.xlu0 %v609, 64
    %v616 = vpop.permute.xlu0 %615
    %v618 = vmul.f32 %v608, %v616
    %620 = vrot.lane.b32.xlu0 %v618, 32
    %v621 = vpop.permute.xlu0 %620
    %v623 = vadd.f32 %v613, %v621
    %v624 = vtanh.pop %v623
    %626 = vrot.lane.b32.xlu0 %v624, 64
    %v627 = vpop.permute.xlu0 %626
    %v629 = vmul.f32 %v608, %v627
    %631 = vrot.lane.b32.xlu0 %v602, 32
    %v632 = vpop.permute.xlu0 %631
    %vm634 = vcmask 259076
    %635 = vst.msk [vmem:[%s4] sm:$0x30] %vm634, %v632
    %637 = vrot.lane.b32.xlu0 %v629, 64
    %v638 = vpop.permute.xlu0 %637
    %vm640 = vcmask 519426
    %641 = vst.msk [vmem:[%s4 + $0x18] sm:$0xc] %vm640, %v638
    %v642 = vrot.slane %v629, 6
    %643 = vrot.lane.b32.xlu0 %v642, 64
    %v644 = vpop.permute.xlu0 %643
    %v646 = vsel %vm334, %v632, %v644
    %v648 = vrot.slane %v646, 4
    %v649 = vsel %vm188, %v648, 0
    %651 = vmatprep.subr.mxu0 %v173
    %652 = vmatpush1.msra.mxu0 %v172
    %653 = vmatprep.subr.mxu0 %v175
    %654 = vmatpush1.msra.mxu0 %v174
    %655 = vmatprep.subr.mxu0 %v177
    %656 = vmatpush1.msra.mxu0 %v176
    %657 = vmatprep.subr.mxu0 %v179
    %658 = vmatpush1.msra.mxu0 %v178
    %659 = vmatprep.subr.mxu0 %v181
    %660 = vmatpush1.msra.mxu0 %v180
    %661 = vmatprep.subr.mxu0 %v183
    %662 = vmatpush1.msra.mxu0 %v182
    %663 = vmatprep.subr.mxu0 %v185
    %664 = vmatpush1.msra.mxu0 %v184
    %665 = vmatprep.subr.mxu0 %v187
    %666 = vmatpush1.msra.mxu0 %v186
    %667 = vmatprep.subr.mxu0 0.0
    %668 = vmatpush1.msra.mxu0 0.0
    %669 = vmatprep.subr.mxu0 0.0
    %670 = vmatpush1.msra.mxu0 0.0
    %671 = vmatprep.subr.mxu0 0.0
    %672 = vmatpush1.msra.mxu0 0.0
    %673 = vmatprep.subr.mxu0 0.0
    %674 = vmatpush1.msra.mxu0 0.0
    %675 = vmatprep.subr.mxu0 0.0
    %676 = vmatpush1.msra.mxu0 0.0
    %677 = vmatprep.subr.mxu0 0.0
    %678 = vmatpush1.msra.mxu0 0.0
    %679 = vmatprep.subr.mxu0 0.0
    %680 = vmatpush1.msra.mxu0 0.0
    %681 = vmatprep.subr.mxu0 0.0
    %682 = vmatpush1.msra.mxu0 0.0
    %683 = vmatprep.subr.mxu0 0.0
    %684 = vmatpush1.msra.mxu0 0.0
    %685 = vmatprep.subr.mxu0 0.0
    %686 = vmatpush1.msra.mxu0 0.0
    %687 = vmatprep.subr.mxu0 0.0
    %688 = vmatpush1.msra.mxu0 0.0
    %689 = vmatprep.subr.mxu0 0.0
    %690 = vmatpush1.msra.mxu0 0.0
    %691 = vmatprep.subr.mxu0 0.0
    %692 = vmatpush1.msra.mxu0 0.0
    %693 = vmatprep.subr.mxu0 0.0
    %694 = vmatpush1.msra.mxu0 0.0
    %695 = vmatprep.subr.mxu0 0.0
    %696 = vmatpush1.msra.mxu0 0.0
    %697 = vmatprep.subr.mxu0 0.0
    %698 = vmatpush1.msra.mxu0 0.0
    %699 = vmatprep.subr.mxu0 0.0
    %700 = vmatpush1.msra.mxu0 0.0
    %701 = vmatprep.subr.mxu0 0.0
    %702 = vmatpush1.msra.mxu0 0.0
    %703 = vmatprep.subr.mxu0 0.0
    %704 = vmatpush1.msra.mxu0 0.0
    %705 = vmatprep.subr.mxu0 0.0
    %706 = vmatpush1.msra.mxu0 0.0
    %707 = vmatprep.subr.mxu0 0.0
    %708 = vmatpush1.msra.mxu0 0.0
    %709 = vmatprep.subr.mxu0 0.0
    %710 = vmatpush1.msra.mxu0 0.0
    %711 = vmatprep.subr.mxu0 0.0
    %712 = vmatpush1.msra.mxu0 0.0
    %713 = vmatprep.subr.mxu0 0.0
    %714 = vmatpush1.msra.mxu0 0.0
    %715 = vmatprep.mubr.f32.mxu0 0.0
    %716 = vmatmul.mubr.f32.gmra.mrb[0].mxu0 %v649
    %v717 = vpop.f32.mrb[0].mxu0
    %v718 = vadd.f32 0.0, %v717
    %v719 = vpop.f32.mrb[0].mxu0
    %v720 = vadd.f32 0.0, %v719
    %721 = vdwg.mxu0
    %v722 = vld [vmem:[#allocation2] sm:$0xc0]
    %v724 = vrot.slane %v718, 2
    %v726 = vadd.f32 %v722, %v724
    %v727 = vld [vmem:[#allocation2 + $0x38] sm:$0x3]
    %v728 = vadd.f32 %v727, %v720
    %v729 = vxor.u32 %v726, 2147483648
    %v730 = vmul.f32 %v729, 1.442695
    %v731 = vpow.pop %v730
    %v732 = vadd.f32 %v731, 1.0
    %v733 = vrcp.pop %v732
    %v734 = vmul.f32 1.0, %v733
    %v735 = vtanh.pop %v726
    %v737 = vrot.slane %v596, 6
    %v739 = vmul.f32 %v734, %v737
    %741 = vrot.lane.b32.xlu0 %v735, 64
    %v742 = vpop.permute.xlu0 %741
    %v744 = vmul.f32 %v734, %v742
    %746 = vrot.lane.b32.xlu0 %v744, 32
    %v747 = vpop.permute.xlu0 %746
    %v749 = vadd.f32 %v739, %v747
    %v750 = vtanh.pop %v749
    %752 = vrot.lane.b32.xlu0 %v750, 64
    %v753 = vpop.permute.xlu0 %752
    %v755 = vmul.f32 %v734, %v753
    %v756 = vxor.u32 %v728, 2147483648
    %v757 = vmul.f32 %v756, 1.442695
    %v758 = vpow.pop %v757
    %v759 = vadd.f32 %v758, 1.0
    %v760 = vrcp.pop %v759
    %v761 = vmul.f32 1.0, %v760
    %v762 = vtanh.pop %v728
    %v764 = vrot.slane %v623, 2
    %v766 = vmul.f32 %v761, %v764
    %768 = vrot.lane.b32.xlu0 %v762, 64
    %v769 = vpop.permute.xlu0 %768
    %v771 = vmul.f32 %v761, %v769
    %773 = vrot.lane.b32.xlu0 %v771, 32
    %v774 = vpop.permute.xlu0 %773
    %v776 = vadd.f32 %v766, %v774
    %v777 = vtanh.pop %v776
    %779 = vrot.lane.b32.xlu0 %v777, 64
    %v780 = vpop.permute.xlu0 %779
    %v782 = vmul.f32 %v761, %v780
    %784 = vrot.lane.b32.xlu0 %v755, 32
    %v785 = vpop.permute.xlu0 %784
    %vm787 = vcmask 261126
    %788 = vst.msk [vmem:[%s4] sm:$0xc0] %vm787, %v785
    %790 = vrot.lane.b32.xlu0 %v782, 64
    %v791 = vpop.permute.xlu0 %790
    %vm793 = vcmask 517376
    %794 = vst.msk [vmem:[%s4 + $0x18] sm:$0x3] %vm793, %v791
    %v795 = vrot.slane %v782, 2
    %796 = vrot.lane.b32.xlu0 %v795, 64
    %v797 = vpop.permute.xlu0 %796
    %v799 = vsel %vm334, %v785, %v797
    %v801 = vrot.slane %v799, 6
    %v802 = vsel %vm188, %v801, 0
    %804 = vmatprep.subr.mxu0 %v173
    %805 = vmatpush1.msra.mxu0 %v172
    %806 = vmatprep.subr.mxu0 %v175
    %807 = vmatpush1.msra.mxu0 %v174
    %808 = vmatprep.subr.mxu0 %v177
    %809 = vmatpush1.msra.mxu0 %v176
    %810 = vmatprep.subr.mxu0 %v179
    %811 = vmatpush1.msra.mxu0 %v178
    %812 = vmatprep.subr.mxu0 %v181
    %813 = vmatpush1.msra.mxu0 %v180
    %814 = vmatprep.subr.mxu0 %v183
    %815 = vmatpush1.msra.mxu0 %v182
    %816 = vmatprep.subr.mxu0 %v185
    %817 = vmatpush1.msra.mxu0 %v184
    %818 = vmatprep.subr.mxu0 %v187
    %819 = vmatpush1.msra.mxu0 %v186
    %820 = vmatprep.subr.mxu0 0.0
    %821 = vmatpush1.msra.mxu0 0.0
    %822 = vmatprep.subr.mxu0 0.0
    %823 = vmatpush1.msra.mxu0 0.0
    %824 = vmatprep.subr.mxu0 0.0
    %825 = vmatpush1.msra.mxu0 0.0
    %826 = vmatprep.subr.mxu0 0.0
    %827 = vmatpush1.msra.mxu0 0.0
    %828 = vmatprep.subr.mxu0 0.0
    %829 = vmatpush1.msra.mxu0 0.0
    %830 = vmatprep.subr.mxu0 0.0
    %831 = vmatpush1.msra.mxu0 0.0
    %832 = vmatprep.subr.mxu0 0.0
    %833 = vmatpush1.msra.mxu0 0.0
    %834 = vmatprep.subr.mxu0 0.0
    %835 = vmatpush1.msra.mxu0 0.0
    %836 = vmatprep.subr.mxu0 0.0
    %837 = vmatpush1.msra.mxu0 0.0
    %838 = vmatprep.subr.mxu0 0.0
    %839 = vmatpush1.msra.mxu0 0.0
    %840 = vmatprep.subr.mxu0 0.0
    %841 = vmatpush1.msra.mxu0 0.0
    %842 = vmatprep.subr.mxu0 0.0
    %843 = vmatpush1.msra.mxu0 0.0
    %844 = vmatprep.subr.mxu0 0.0
    %845 = vmatpush1.msra.mxu0 0.0
    %846 = vmatprep.subr.mxu0 0.0
    %847 = vmatpush1.msra.mxu0 0.0
    %848 = vmatprep.subr.mxu0 0.0
    %849 = vmatpush1.msra.mxu0 0.0
    %850 = vmatprep.subr.mxu0 0.0
    %851 = vmatpush1.msra.mxu0 0.0
    %852 = vmatprep.subr.mxu0 0.0
    %853 = vmatpush1.msra.mxu0 0.0
    %854 = vmatprep.subr.mxu0 0.0
    %855 = vmatpush1.msra.mxu0 0.0
    %856 = vmatprep.subr.mxu0 0.0
    %857 = vmatpush1.msra.mxu0 0.0
    %858 = vmatprep.subr.mxu0 0.0
    %859 = vmatpush1.msra.mxu0 0.0
    %860 = vmatprep.subr.mxu0 0.0
    %861 = vmatpush1.msra.mxu0 0.0
    %862 = vmatprep.subr.mxu0 0.0
    %863 = vmatpush1.msra.mxu0 0.0
    %864 = vmatprep.subr.mxu0 0.0
    %865 = vmatpush1.msra.mxu0 0.0
    %866 = vmatprep.subr.mxu0 0.0
    %867 = vmatpush1.msra.mxu0 0.0
    %868 = vmatprep.mubr.f32.mxu0 0.0
    %869 = vmatmul.mubr.f32.gmra.mrb[0].mxu0 %v802
    %v870 = vpop.f32.mrb[0].mxu0
    %v871 = vadd.f32 0.0, %v870
    %v872 = vpop.f32.mrb[0].mxu0
    %v873 = vadd.f32 0.0, %v872
    %874 = vdwg.mxu0
    %v875 = vld [vmem:[#allocation2 + $0x10] sm:$0x3]
    %v876 = vadd.f32 %v875, %v871
    %v877 = vld [vmem:[#allocation2 + $0x28] sm:$0xc0]
    %v879 = vrot.slane %v873, 2
    %v881 = vadd.f32 %v877, %v879
    %v882 = vxor.u32 %v876, 2147483648
    %v883 = vmul.f32 %v882, 1.442695
    %v884 = vpow.pop %v883
    %v885 = vadd.f32 %v884, 1.0
    %v886 = vrcp.pop %v885
    %v887 = vmul.f32 1.0, %v886
    %v888 = vtanh.pop %v876
    %v890 = vrot.slane %v749, 6
    %v892 = vmul.f32 %v887, %v890
    %894 = vrot.lane.b32.xlu0 %v888, 64
    %v895 = vpop.permute.xlu0 %894
    %v897 = vmul.f32 %v887, %v895
    %899 = vrot.lane.b32.xlu0 %v897, 32
    %v900 = vpop.permute.xlu0 %899
    %v902 = vadd.f32 %v892, %v900
    %v903 = vtanh.pop %v902
    %905 = vrot.lane.b32.xlu0 %v903, 64
    %v906 = vpop.permute.xlu0 %905
    %v908 = vmul.f32 %v887, %v906
    %v909 = vxor.u32 %v881, 2147483648
    %v910 = vmul.f32 %v909, 1.442695
    %v911 = vpow.pop %v910
    %v912 = vadd.f32 %v911, 1.0
    %v913 = vrcp.pop %v912
    %v914 = vmul.f32 1.0, %v913
    %v915 = vtanh.pop %v881
    %v917 = vrot.slane %v776, 2
    %v919 = vmul.f32 %v914, %v917
    %921 = vrot.lane.b32.xlu0 %v915, 64
    %v922 = vpop.permute.xlu0 %921
    %v924 = vmul.f32 %v914, %v922
    %926 = vrot.lane.b32.xlu0 %v924, 32
    %v927 = vpop.permute.xlu0 %926
    %v929 = vadd.f32 %v919, %v927
    %v930 = vtanh.pop %v929
    %932 = vrot.lane.b32.xlu0 %v930, 64
    %v933 = vpop.permute.xlu0 %932
    %v935 = vmul.f32 %v914, %v933
    %937 = vrot.lane.b32.xlu0 %v908, 32
    %v938 = vpop.permute.xlu0 %937
    %940 = vst.msk [vmem:[%s4 + $0x8] sm:$0x3] %vm322, %v938
    %942 = vrot.lane.b32.xlu0 %v935, 64
    %v943 = vpop.permute.xlu0 %942
    %945 = vst.msk [vmem:[%s4 + $0x10] sm:$0xc0] %vm328, %v943
    %v946 = vrot.slane %v935, 6
    %947 = vrot.lane.b32.xlu0 %v946, 64
    %v948 = vpop.permute.xlu0 %947
    %v950 = vsel %vm334, %v938, %v948
    %v952 = vsel %vm188, %v950, 0
    %954 = vmatprep.subr.mxu0 %v173
    %955 = vmatpush1.msra.mxu0 %v172
    %956 = vmatprep.subr.mxu0 %v175
    %957 = vmatpush1.msra.mxu0 %v174
    %958 = vmatprep.subr.mxu0 %v177
    %959 = vmatpush1.msra.mxu0 %v176
    %960 = vmatprep.subr.mxu0 %v179
    %961 = vmatpush1.msra.mxu0 %v178
    %962 = vmatprep.subr.mxu0 %v181
    %963 = vmatpush1.msra.mxu0 %v180
    %964 = vmatprep.subr.mxu0 %v183
    %965 = vmatpush1.msra.mxu0 %v182
    %966 = vmatprep.subr.mxu0 %v185
    %967 = vmatpush1.msra.mxu0 %v184
    %968 = vmatprep.subr.mxu0 %v187
    %969 = vmatpush1.msra.mxu0 %v186
    %970 = vmatprep.subr.mxu0 0.0
    %971 = vmatpush1.msra.mxu0 0.0
    %972 = vmatprep.subr.mxu0 0.0
    %973 = vmatpush1.msra.mxu0 0.0
    %974 = vmatprep.subr.mxu0 0.0
    %975 = vmatpush1.msra.mxu0 0.0
    %976 = vmatprep.subr.mxu0 0.0
    %977 = vmatpush1.msra.mxu0 0.0
    %978 = vmatprep.subr.mxu0 0.0
    %979 = vmatpush1.msra.mxu0 0.0
    %980 = vmatprep.subr.mxu0 0.0
    %981 = vmatpush1.msra.mxu0 0.0
    %982 = vmatprep.subr.mxu0 0.0
    %983 = vmatpush1.msra.mxu0 0.0
    %984 = vmatprep.subr.mxu0 0.0
    %985 = vmatpush1.msra.mxu0 0.0
    %986 = vmatprep.subr.mxu0 0.0
    %987 = vmatpush1.msra.mxu0 0.0
    %988 = vmatprep.subr.mxu0 0.0
    %989 = vmatpush1.msra.mxu0 0.0
    %990 = vmatprep.subr.mxu0 0.0
    %991 = vmatpush1.msra.mxu0 0.0
    %992 = vmatprep.subr.mxu0 0.0
    %993 = vmatpush1.msra.mxu0 0.0
    %994 = vmatprep.subr.mxu0 0.0
    %995 = vmatpush1.msra.mxu0 0.0
    %996 = vmatprep.subr.mxu0 0.0
    %997 = vmatpush1.msra.mxu0 0.0
    %998 = vmatprep.subr.mxu0 0.0
    %999 = vmatpush1.msra.mxu0 0.0
    %1000 = vmatprep.subr.mxu0 0.0
    %1001 = vmatpush1.msra.mxu0 0.0
    %1002 = vmatprep.subr.mxu0 0.0
    %1003 = vmatpush1.msra.mxu0 0.0
    %1004 = vmatprep.subr.mxu0 0.0
    %1005 = vmatpush1.msra.mxu0 0.0
    %1006 = vmatprep.subr.mxu0 0.0
    %1007 = vmatpush1.msra.mxu0 0.0
    %1008 = vmatprep.subr.mxu0 0.0
    %1009 = vmatpush1.msra.mxu0 0.0
    %1010 = vmatprep.subr.mxu0 0.0
    %1011 = vmatpush1.msra.mxu0 0.0
    %1012 = vmatprep.subr.mxu0 0.0
    %1013 = vmatpush1.msra.mxu0 0.0
    %1014 = vmatprep.subr.mxu0 0.0
    %1015 = vmatpush1.msra.mxu0 0.0
    %1016 = vmatprep.subr.mxu0 0.0
    %1017 = vmatpush1.msra.mxu0 0.0
    %1018 = vmatprep.mubr.f32.mxu0 0.0
    %1019 = vmatmul.mubr.f32.gmra.mrb[0].mxu0 %v952
    %v1020 = vpop.f32.mrb[0].mxu0
    %v1021 = vadd.f32 0.0, %v1020
    %v1022 = vpop.f32.mrb[0].mxu0
    %v1023 = vadd.f32 0.0, %v1022
    %1024 = vdwg.mxu0
    %v1025 = vld [vmem:[#allocation2 + $0x10] sm:$0xc]
    %v1027 = vrot.slane %v1021, 6
    %v1029 = vadd.f32 %v1025, %v1027
    %v1030 = vld [vmem:[#allocation2 + $0x28] sm:$0x30]
    %v1032 = vrot.slane %v1023, 4
    %v1034 = vadd.f32 %v1030, %v1032
    %v1035 = vxor.u32 %v1029, 2147483648
    %v1036 = vmul.f32 %v1035, 1.442695
    %v1037 = vpow.pop %v1036
    %v1038 = vadd.f32 %v1037, 1.0
    %v1039 = vrcp.pop %v1038
    %v1040 = vmul.f32 1.0, %v1039
    %v1041 = vtanh.pop %v1029
    %v1043 = vrot.slane %v902, 6
    %v1045 = vmul.f32 %v1040, %v1043
    %1047 = vrot.lane.b32.xlu0 %v1041, 64
    %v1048 = vpop.permute.xlu0 %1047
    %v1050 = vmul.f32 %v1040, %v1048
    %1052 = vrot.lane.b32.xlu0 %v1050, 32
    %v1053 = vpop.permute.xlu0 %1052
    %v1055 = vadd.f32 %v1045, %v1053
    %v1056 = vtanh.pop %v1055
    %1058 = vrot.lane.b32.xlu0 %v1056, 64
    %v1059 = vpop.permute.xlu0 %1058
    %v1061 = vmul.f32 %v1040, %v1059
    %v1062 = vxor.u32 %v1034, 2147483648
    %v1063 = vmul.f32 %v1062, 1.442695
    %v1064 = vpow.pop %v1063
    %v1065 = vadd.f32 %v1064, 1.0
    %v1066 = vrcp.pop %v1065
    %v1067 = vmul.f32 1.0, %v1066
    %v1068 = vtanh.pop %v1034
    %v1070 = vrot.slane %v929, 2
    %v1072 = vmul.f32 %v1067, %v1070
    %1074 = vrot.lane.b32.xlu0 %v1068, 64
    %v1075 = vpop.permute.xlu0 %1074
    %v1077 = vmul.f32 %v1067, %v1075
    %1079 = vrot.lane.b32.xlu0 %v1077, 32
    %v1080 = vpop.permute.xlu0 %1079
    %v1082 = vadd.f32 %v1072, %v1080
    %v1083 = vtanh.pop %v1082
    %1085 = vrot.lane.b32.xlu0 %v1083, 64
    %v1086 = vpop.permute.xlu0 %1085
    %v1088 = vmul.f32 %v1067, %v1086
    %1090 = vrot.lane.b32.xlu0 %v1061, 32
    %v1091 = vpop.permute.xlu0 %1090
    %1093 = vst.msk [vmem:[%s4 + $0x8] sm:$0xc] %vm478, %v1091
    %1095 = vrot.lane.b32.xlu0 %v1088, 64
    %v1096 = vpop.permute.xlu0 %1095
    %1098 = vst.msk [vmem:[%s4 + $0x10] sm:$0x30] %vm484, %v1096
    %v1099 = vrot.slane %v1088, 2
    %1100 = vrot.lane.b32.xlu0 %v1099, 64
    %v1101 = vpop.permute.xlu0 %1100
    %v1103 = vsel %vm334, %v1091, %v1101
    %v1105 = vrot.slane %v1103, 2
    %v1106 = vsel %vm188, %v1105, 0
    %1108 = vmatprep.subr.mxu0 %v173
    %1109 = vmatpush1.msra.mxu0 %v172
    %1110 = vmatprep.subr.mxu0 %v175
    %1111 = vmatpush1.msra.mxu0 %v174
    %1112 = vmatprep.subr.mxu0 %v177
    %1113 = vmatpush1.msra.mxu0 %v176
    %1114 = vmatprep.subr.mxu0 %v179
    %1115 = vmatpush1.msra.mxu0 %v178
    %1116 = vmatprep.subr.mxu0 %v181
    %1117 = vmatpush1.msra.mxu0 %v180
    %1118 = vmatprep.subr.mxu0 %v183
    %1119 = vmatpush1.msra.mxu0 %v182
    %1120 = vmatprep.subr.mxu0 %v185
    %1121 = vmatpush1.msra.mxu0 %v184
    %1122 = vmatprep.subr.mxu0 %v187
    %1123 = vmatpush1.msra.mxu0 %v186
    %1124 = vmatprep.subr.mxu0 0.0
    %1125 = vmatpush1.msra.mxu0 0.0
    %1126 = vmatprep.subr.mxu0 0.0
    %1127 = vmatpush1.msra.mxu0 0.0
    %1128 = vmatprep.subr.mxu0 0.0
    %1129 = vmatpush1.msra.mxu0 0.0
    %1130 = vmatprep.subr.mxu0 0.0
    %1131 = vmatpush1.msra.mxu0 0.0
    %1132 = vmatprep.subr.mxu0 0.0
    %1133 = vmatpush1.msra.mxu0 0.0
    %1134 = vmatprep.subr.mxu0 0.0
    %1135 = vmatpush1.msra.mxu0 0.0
    %1136 = vmatprep.subr.mxu0 0.0
    %1137 = vmatpush1.msra.mxu0 0.0
    %1138 = vmatprep.subr.mxu0 0.0
    %1139 = vmatpush1.msra.mxu0 0.0
    %1140 = vmatprep.subr.mxu0 0.0
    %1141 = vmatpush1.msra.mxu0 0.0
    %1142 = vmatprep.subr.mxu0 0.0
    %1143 = vmatpush1.msra.mxu0 0.0
    %1144 = vmatprep.subr.mxu0 0.0
    %1145 = vmatpush1.msra.mxu0 0.0
    %1146 = vmatprep.subr.mxu0 0.0
    %1147 = vmatpush1.msra.mxu0 0.0
    %1148 = vmatprep.subr.mxu0 0.0
    %1149 = vmatpush1.msra.mxu0 0.0
    %1150 = vmatprep.subr.mxu0 0.0
    %1151 = vmatpush1.msra.mxu0 0.0
    %1152 = vmatprep.subr.mxu0 0.0
    %1153 = vmatpush1.msra.mxu0 0.0
    %1154 = vmatprep.subr.mxu0 0.0
    %1155 = vmatpush1.msra.mxu0 0.0
    %1156 = vmatprep.subr.mxu0 0.0
    %1157 = vmatpush1.msra.mxu0 0.0
    %1158 = vmatprep.subr.mxu0 0.0
    %1159 = vmatpush1.msra.mxu0 0.0
    %1160 = vmatprep.subr.mxu0 0.0
    %1161 = vmatpush1.msra.mxu0 0.0
    %1162 = vmatprep.subr.mxu0 0.0
    %1163 = vmatpush1.msra.mxu0 0.0
    %1164 = vmatprep.subr.mxu0 0.0
    %1165 = vmatpush1.msra.mxu0 0.0
    %1166 = vmatprep.subr.mxu0 0.0
    %1167 = vmatpush1.msra.mxu0 0.0
    %1168 = vmatprep.subr.mxu0 0.0
    %1169 = vmatpush1.msra.mxu0 0.0
    %1170 = vmatprep.subr.mxu0 0.0
    %1171 = vmatpush1.msra.mxu0 0.0
    %1172 = vmatprep.mubr.f32.mxu0 0.0
    %1173 = vmatmul.mubr.f32.gmra.mrb[0].mxu0 %v1106
    %v1174 = vpop.f32.mrb[0].mxu0
    %v1175 = vadd.f32 0.0, %v1174
    %v1176 = vpop.f32.mrb[0].mxu0
    %v1177 = vadd.f32 0.0, %v1176
    %1178 = vdwg.mxu0
    %v1179 = vld [vmem:[#allocation2 + $0x10] sm:$0x30]
    %v1181 = vrot.slane %v1175, 4
    %v1183 = vadd.f32 %v1179, %v1181
    %v1184 = vld [vmem:[#allocation2 + $0x28] sm:$0xc]
    %v1186 = vrot.slane %v1177, 6
    %v1188 = vadd.f32 %v1184, %v1186
    %v1189 = vxor.u32 %v1183, 2147483648
    %v1190 = vmul.f32 %v1189, 1.442695
    %v1191 = vpow.pop %v1190
    %v1192 = vadd.f32 %v1191, 1.0
    %v1193 = vrcp.pop %v1192
    %v1194 = vmul.f32 1.0, %v1193
    %v1195 = vtanh.pop %v1183
    %v1197 = vrot.slane %v1055, 6
    %v1199 = vmul.f32 %v1194, %v1197
    %1201 = vrot.lane.b32.xlu0 %v1195, 64
    %v1202 = vpop.permute.xlu0 %1201
    %v1204 = vmul.f32 %v1194, %v1202
    %1206 = vrot.lane.b32.xlu0 %v1204, 32
    %v1207 = vpop.permute.xlu0 %1206
    %v1209 = vadd.f32 %v1199, %v1207
    %v1210 = vtanh.pop %v1209
    %1212 = vrot.lane.b32.xlu0 %v1210, 64
    %v1213 = vpop.permute.xlu0 %1212
    %v1215 = vmul.f32 %v1194, %v1213
    %v1216 = vxor.u32 %v1188, 2147483648
    %v1217 = vmul.f32 %v1216, 1.442695
    %v1218 = vpow.pop %v1217
    %v1219 = vadd.f32 %v1218, 1.0
    %v1220 = vrcp.pop %v1219
    %v1221 = vmul.f32 1.0, %v1220
    %v1222 = vtanh.pop %v1188
    %v1224 = vrot.slane %v1082, 2
    %v1226 = vmul.f32 %v1221, %v1224
    %1228 = vrot.lane.b32.xlu0 %v1222, 64
    %v1229 = vpop.permute.xlu0 %1228
    %v1231 = vmul.f32 %v1221, %v1229
    %1233 = vrot.lane.b32.xlu0 %v1231, 32
    %v1234 = vpop.permute.xlu0 %1233
    %v1236 = vadd.f32 %v1226, %v1234
    %v1237 = vtanh.pop %v1236
    %1239 = vrot.lane.b32.xlu0 %v1237, 64
    %v1240 = vpop.permute.xlu0 %1239
    %v1242 = vmul.f32 %v1221, %v1240
    %1244 = vrot.lane.b32.xlu0 %v1215, 32
    %v1245 = vpop.permute.xlu0 %1244
    %1247 = vst.msk [vmem:[%s4 + $0x8] sm:$0x30] %vm634, %v1245
    %1249 = vrot.lane.b32.xlu0 %v1242, 64
    %v1250 = vpop.permute.xlu0 %1249
    %1252 = vst.msk [vmem:[%s4 + $0x10] sm:$0xc] %vm640, %v1250
    %v1253 = vrot.slane %v1242, 6
    %1254 = vrot.lane.b32.xlu0 %v1253, 64
    %v1255 = vpop.permute.xlu0 %1254
    %v1257 = vsel %vm334, %v1245, %v1255
    %v1259 = vrot.slane %v1257, 4
    %v1260 = vsel %vm188, %v1259, 0
    %1262 = vmatprep.subr.mxu0 %v173
    %1263 = vmatpush1.msra.mxu0 %v172
    %1264 = vmatprep.subr.mxu0 %v175
    %1265 = vmatpush1.msra.mxu0 %v174
    %1266 = vmatprep.subr.mxu0 %v177
    %1267 = vmatpush1.msra.mxu0 %v176
    %1268 = vmatprep.subr.mxu0 %v179
    %1269 = vmatpush1.msra.mxu0 %v178
    %1270 = vmatprep.subr.mxu0 %v181
    %1271 = vmatpush1.msra.mxu0 %v180
    %1272 = vmatprep.subr.mxu0 %v183
    %1273 = vmatpush1.msra.mxu0 %v182
    %1274 = vmatprep.subr.mxu0 %v185
    %1275 = vmatpush1.msra.mxu0 %v184
    %1276 = vmatprep.subr.mxu0 %v187
    %1277 = vmatpush1.msra.mxu0 %v186
    %1278 = vmatprep.subr.mxu0 0.0
    %1279 = vmatpush1.msra.mxu0 0.0
    %1280 = vmatprep.subr.mxu0 0.0
    %1281 = vmatpush1.msra.mxu0 0.0
    %1282 = vmatprep.subr.mxu0 0.0
    %1283 = vmatpush1.msra.mxu0 0.0
    %1284 = vmatprep.subr.mxu0 0.0
    %1285 = vmatpush1.msra.mxu0 0.0
    %1286 = vmatprep.subr.mxu0 0.0
    %1287 = vmatpush1.msra.mxu0 0.0
    %1288 = vmatprep.subr.mxu0 0.0
    %1289 = vmatpush1.msra.mxu0 0.0
    %1290 = vmatprep.subr.mxu0 0.0
    %1291 = vmatpush1.msra.mxu0 0.0
    %1292 = vmatprep.subr.mxu0 0.0
    %1293 = vmatpush1.msra.mxu0 0.0
    %1294 = vmatprep.subr.mxu0 0.0
    %1295 = vmatpush1.msra.mxu0 0.0
    %1296 = vmatprep.subr.mxu0 0.0
    %1297 = vmatpush1.msra.mxu0 0.0
    %1298 = vmatprep.subr.mxu0 0.0
    %1299 = vmatpush1.msra.mxu0 0.0
    %1300 = vmatprep.subr.mxu0 0.0
    %1301 = vmatpush1.msra.mxu0 0.0
    %1302 = vmatprep.subr.mxu0 0.0
    %1303 = vmatpush1.msra.mxu0 0.0
    %1304 = vmatprep.subr.mxu0 0.0
    %1305 = vmatpush1.msra.mxu0 0.0
    %1306 = vmatprep.subr.mxu0 0.0
    %1307 = vmatpush1.msra.mxu0 0.0
    %1308 = vmatprep.subr.mxu0 0.0
    %1309 = vmatpush1.msra.mxu0 0.0
    %1310 = vmatprep.subr.mxu0 0.0
    %1311 = vmatpush1.msra.mxu0 0.0
    %1312 = vmatprep.subr.mxu0 0.0
    %1313 = vmatpush1.msra.mxu0 0.0
    %1314 = vmatprep.subr.mxu0 0.0
    %1315 = vmatpush1.msra.mxu0 0.0
    %1316 = vmatprep.subr.mxu0 0.0
    %1317 = vmatpush1.msra.mxu0 0.0
    %1318 = vmatprep.subr.mxu0 0.0
    %1319 = vmatpush1.msra.mxu0 0.0
    %1320 = vmatprep.subr.mxu0 0.0
    %1321 = vmatpush1.msra.mxu0 0.0
    %1322 = vmatprep.subr.mxu0 0.0
    %1323 = vmatpush1.msra.mxu0 0.0
    %1324 = vmatprep.subr.mxu0 0.0
    %1325 = vmatpush1.msra.mxu0 0.0
    %1326 = vmatprep.mubr.f32.mxu0 0.0
    %1327 = vmatmul.mubr.f32.gmra.mrb[0].mxu0 %v1260
    %v1328 = vpop.f32.mrb[0].mxu0
    %v1329 = vadd.f32 0.0, %v1328
    %v1330 = vpop.f32.mrb[0].mxu0
    %v1331 = vadd.f32 0.0, %v1330
    %1332 = vdwg.mxu0
    %v1333 = vld [vmem:[#allocation2 + $0x10] sm:$0xc0]
    %v1335 = vrot.slane %v1329, 2
    %v1337 = vadd.f32 %v1333, %v1335
    %v1338 = vld [vmem:[#allocation2 + $0x28] sm:$0x3]
    %v1339 = vadd.f32 %v1338, %v1331
    %v1340 = vxor.u32 %v1337, 2147483648
    %v1341 = vmul.f32 %v1340, 1.442695
    %v1342 = vpow.pop %v1341
    %v1343 = vadd.f32 %v1342, 1.0
    %v1344 = vrcp.pop %v1343
    %v1345 = vmul.f32 1.0, %v1344
    %v1346 = vtanh.pop %v1337
    %v1348 = vrot.slane %v1209, 6
    %v1350 = vmul.f32 %v1345, %v1348
    %1352 = vrot.lane.b32.xlu0 %v1346, 64
    %v1353 = vpop.permute.xlu0 %1352
    %v1355 = vmul.f32 %v1345, %v1353
    %1357 = vrot.lane.b32.xlu0 %v1355, 32
    %v1358 = vpop.permute.xlu0 %1357
    %v1360 = vadd.f32 %v1350, %v1358
    %v1361 = vtanh.pop %v1360
    %1363 = vrot.lane.b32.xlu0 %v1361, 64
    %v1364 = vpop.permute.xlu0 %1363
    %v1366 = vmul.f32 %v1345, %v1364
    %v1367 = vxor.u32 %v1339, 2147483648
    %v1368 = vmul.f32 %v1367, 1.442695
    %v1369 = vpow.pop %v1368
    %v1370 = vadd.f32 %v1369, 1.0
    %v1371 = vrcp.pop %v1370
    %v1372 = vmul.f32 1.0, %v1371
    %v1373 = vtanh.pop %v1339
    %v1375 = vrot.slane %v1236, 2
    %v1377 = vmul.f32 %v1372, %v1375
    %1379 = vrot.lane.b32.xlu0 %v1373, 64
    %v1380 = vpop.permute.xlu0 %1379
    %v1382 = vmul.f32 %v1372, %v1380
    %1384 = vrot.lane.b32.xlu0 %v1382, 32
    %v1385 = vpop.permute.xlu0 %1384
    %v1387 = vadd.f32 %v1377, %v1385
    %v1388 = vtanh.pop %v1387
    %1390 = vrot.lane.b32.xlu0 %v1388, 64
    %v1391 = vpop.permute.xlu0 %1390
    %v1393 = vmul.f32 %v1372, %v1391
    %1395 = vrot.lane.b32.xlu0 %v1366, 32
    %v1396 = vpop.permute.xlu0 %1395
    %1398 = vst.msk [vmem:[%s4 + $0x8] sm:$0xc0] %vm787, %v1396
    %1400 = vrot.lane.b32.xlu0 %v1393, 64
    %v1401 = vpop.permute.xlu0 %1400
    %1403 = vst.msk [vmem:[%s4 + $0x10] sm:$0x3] %vm793, %v1401
    %v1404 = vrot.slane %v1393, 2
    %1405 = vrot.lane.b32.xlu0 %v1404, 64
    %v1406 = vpop.permute.xlu0 %1405
    %v1408 = vsel %vm334, %v1396, %v1406
    %v1410 = vrot.slane %v1408, 6
    %v1411 = vsel %vm188, %v1410, 0
    %1413 = vmatprep.subr.mxu0 %v173
    %1414 = vmatpush1.msra.mxu0 %v172
    %1415 = vmatprep.subr.mxu0 %v175
    %1416 = vmatpush1.msra.mxu0 %v174
    %1417 = vmatprep.subr.mxu0 %v177
    %1418 = vmatpush1.msra.mxu0 %v176
    %1419 = vmatprep.subr.mxu0 %v179
    %1420 = vmatpush1.msra.mxu0 %v178
    %1421 = vmatprep.subr.mxu0 %v181
    %1422 = vmatpush1.msra.mxu0 %v180
    %1423 = vmatprep.subr.mxu0 %v183
    %1424 = vmatpush1.msra.mxu0 %v182
    %1425 = vmatprep.subr.mxu0 %v185
    %1426 = vmatpush1.msra.mxu0 %v184
    %1427 = vmatprep.subr.mxu0 %v187
    %1428 = vmatpush1.msra.mxu0 %v186
    %1429 = vmatprep.subr.mxu0 0.0
    %1430 = vmatpush1.msra.mxu0 0.0
    %1431 = vmatprep.subr.mxu0 0.0
    %1432 = vmatpush1.msra.mxu0 0.0
    %1433 = vmatprep.subr.mxu0 0.0
    %1434 = vmatpush1.msra.mxu0 0.0
    %1435 = vmatprep.subr.mxu0 0.0
    %1436 = vmatpush1.msra.mxu0 0.0
    %1437 = vmatprep.subr.mxu0 0.0
    %1438 = vmatpush1.msra.mxu0 0.0
    %1439 = vmatprep.subr.mxu0 0.0
    %1440 = vmatpush1.msra.mxu0 0.0
    %1441 = vmatprep.subr.mxu0 0.0
    %1442 = vmatpush1.msra.mxu0 0.0
    %1443 = vmatprep.subr.mxu0 0.0
    %1444 = vmatpush1.msra.mxu0 0.0
    %1445 = vmatprep.subr.mxu0 0.0
    %1446 = vmatpush1.msra.mxu0 0.0
    %1447 = vmatprep.subr.mxu0 0.0
    %1448 = vmatpush1.msra.mxu0 0.0
    %1449 = vmatprep.subr.mxu0 0.0
    %1450 = vmatpush1.msra.mxu0 0.0
    %1451 = vmatprep.subr.mxu0 0.0
    %1452 = vmatpush1.msra.mxu0 0.0
    %1453 = vmatprep.subr.mxu0 0.0
    %1454 = vmatpush1.msra.mxu0 0.0
    %1455 = vmatprep.subr.mxu0 0.0
    %1456 = vmatpush1.msra.mxu0 0.0
    %1457 = vmatprep.subr.mxu0 0.0
    %1458 = vmatpush1.msra.mxu0 0.0
    %1459 = vmatprep.subr.mxu0 0.0
    %1460 = vmatpush1.msra.mxu0 0.0
    %1461 = vmatprep.subr.mxu0 0.0
    %1462 = vmatpush1.msra.mxu0 0.0
    %1463 = vmatprep.subr.mxu0 0.0
    %1464 = vmatpush1.msra.mxu0 0.0
    %1465 = vmatprep.subr.mxu0 0.0
    %1466 = vmatpush1.msra.mxu0 0.0
    %1467 = vmatprep.subr.mxu0 0.0
    %1468 = vmatpush1.msra.mxu0 0.0
    %1469 = vmatprep.subr.mxu0 0.0
    %1470 = vmatpush1.msra.mxu0 0.0
    %1471 = vmatprep.subr.mxu0 0.0
    %1472 = vmatpush1.msra.mxu0 0.0
    %1473 = vmatprep.subr.mxu0 0.0
    %1474 = vmatpush1.msra.mxu0 0.0
    %1475 = vmatprep.subr.mxu0 0.0
    %1476 = vmatpush1.msra.mxu0 0.0
    %1477 = vmatprep.mubr.f32.mxu0 0.0
    %1478 = vmatmul.mubr.f32.gmra.mrb[0].mxu0 %v1411
    %v1479 = vpop.f32.mrb[0].mxu0
    %v1480 = vadd.f32 0.0, %v1479
    %v1481 = vpop.f32.mrb[0].mxu0
    %v1482 = vadd.f32 0.0, %v1481
    %1483 = vdwg.mxu0
    %v1484 = vld [vmem:[#allocation2 + $0x20] sm:$0x3]
    %v1485 = vadd.f32 %v1484, %v1480
    %v1486 = vld [vmem:[#allocation2 + $0x18] sm:$0xc0]
    %v1488 = vrot.slane %v1482, 2
    %v1490 = vadd.f32 %v1486, %v1488
    %v1491 = vxor.u32 %v1485, 2147483648
    %v1492 = vmul.f32 %v1491, 1.442695
    %v1493 = vpow.pop %v1492
    %v1494 = vadd.f32 %v1493, 1.0
    %v1495 = vrcp.pop %v1494
    %v1496 = vmul.f32 1.0, %v1495
    %v1497 = vtanh.pop %v1485
    %v1499 = vrot.slane %v1360, 6
    %v1501 = vmul.f32 %v1496, %v1499
    %1503 = vrot.lane.b32.xlu0 %v1497, 64
    %v1504 = vpop.permute.xlu0 %1503
    %v1506 = vmul.f32 %v1496, %v1504
    %1508 = vrot.lane.b32.xlu0 %v1506, 32
    %v1509 = vpop.permute.xlu0 %1508
    %v1511 = vadd.f32 %v1501, %v1509
    %v1512 = vtanh.pop %v1511
    %1514 = vrot.lane.b32.xlu0 %v1512, 64
    %v1515 = vpop.permute.xlu0 %1514
    %v1517 = vmul.f32 %v1496, %v1515
    %v1518 = vxor.u32 %v1490, 2147483648
    %v1519 = vmul.f32 %v1518, 1.442695
    %v1520 = vpow.pop %v1519
    %v1521 = vadd.f32 %v1520, 1.0
    %v1522 = vrcp.pop %v1521
    %v1523 = vmul.f32 1.0, %v1522
    %v1524 = vtanh.pop %v1490
    %v1526 = vrot.slane %v1387, 2
    %v1528 = vmul.f32 %v1523, %v1526
    %1530 = vrot.lane.b32.xlu0 %v1524, 64
    %v1531 = vpop.permute.xlu0 %1530
    %v1533 = vmul.f32 %v1523, %v1531
    %1535 = vrot.lane.b32.xlu0 %v1533, 32
    %v1536 = vpop.permute.xlu0 %1535
    %v1538 = vadd.f32 %v1528, %v1536
    %v1539 = vtanh.pop %v1538
    %1541 = vrot.lane.b32.xlu0 %v1539, 64
    %v1542 = vpop.permute.xlu0 %1541
    %v1544 = vmul.f32 %v1523, %v1542
    %1546 = vrot.lane.b32.xlu0 %v1517, 32
    %v1547 = vpop.permute.xlu0 %1546
    %1549 = vst.msk [vmem:[%s4 + $0x10] sm:$0x3] %vm322, %v1547
    %1551 = vrot.lane.b32.xlu0 %v1544, 64
    %v1552 = vpop.permute.xlu0 %1551
    %1554 = vst.msk [vmem:[%s4 + $0x8] sm:$0xc0] %vm328, %v1552
    %v1555 = vrot.slane %v1544, 6
    %1556 = vrot.lane.b32.xlu0 %v1555, 64
    %v1557 = vpop.permute.xlu0 %1556
    %v1559 = vsel %vm334, %v1547, %v1557
    %v1561 = vsel %vm188, %v1559, 0
    %1563 = vmatprep.subr.mxu0 %v173
    %1564 = vmatpush1.msra.mxu0 %v172
    %1565 = vmatprep.subr.mxu0 %v175
    %1566 = vmatpush1.msra.mxu0 %v174
    %1567 = vmatprep.subr.mxu0 %v177
    %1568 = vmatpush1.msra.mxu0 %v176
    %1569 = vmatprep.subr.mxu0 %v179
    %1570 = vmatpush1.msra.mxu0 %v178
    %1571 = vmatprep.subr.mxu0 %v181
    %1572 = vmatpush1.msra.mxu0 %v180
    %1573 = vmatprep.subr.mxu0 %v183
    %1574 = vmatpush1.msra.mxu0 %v182
    %1575 = vmatprep.subr.mxu0 %v185
    %1576 = vmatpush1.msra.mxu0 %v184
    %1577 = vmatprep.subr.mxu0 %v187
    %1578 = vmatpush1.msra.mxu0 %v186
    %1579 = vmatprep.subr.mxu0 0.0
    %1580 = vmatpush1.msra.mxu0 0.0
    %1581 = vmatprep.subr.mxu0 0.0
    %1582 = vmatpush1.msra.mxu0 0.0
    %1583 = vmatprep.subr.mxu0 0.0
    %1584 = vmatpush1.msra.mxu0 0.0
    %1585 = vmatprep.subr.mxu0 0.0
    %1586 = vmatpush1.msra.mxu0 0.0
    %1587 = vmatprep.subr.mxu0 0.0
    %1588 = vmatpush1.msra.mxu0 0.0
    %1589 = vmatprep.subr.mxu0 0.0
    %1590 = vmatpush1.msra.mxu0 0.0
    %1591 = vmatprep.subr.mxu0 0.0
    %1592 = vmatpush1.msra.mxu0 0.0
    %1593 = vmatprep.subr.mxu0 0.0
    %1594 = vmatpush1.msra.mxu0 0.0
    %1595 = vmatprep.subr.mxu0 0.0
    %1596 = vmatpush1.msra.mxu0 0.0
    %1597 = vmatprep.subr.mxu0 0.0
    %1598 = vmatpush1.msra.mxu0 0.0
    %1599 = vmatprep.subr.mxu0 0.0
    %1600 = vmatpush1.msra.mxu0 0.0
    %1601 = vmatprep.subr.mxu0 0.0
    %1602 = vmatpush1.msra.mxu0 0.0
    %1603 = vmatprep.subr.mxu0 0.0
    %1604 = vmatpush1.msra.mxu0 0.0
    %1605 = vmatprep.subr.mxu0 0.0
    %1606 = vmatpush1.msra.mxu0 0.0
    %1607 = vmatprep.subr.mxu0 0.0
    %1608 = vmatpush1.msra.mxu0 0.0
    %1609 = vmatprep.subr.mxu0 0.0
    %1610 = vmatpush1.msra.mxu0 0.0
    %1611 = vmatprep.subr.mxu0 0.0
    %1612 = vmatpush1.msra.mxu0 0.0
    %1613 = vmatprep.subr.mxu0 0.0
    %1614 = vmatpush1.msra.mxu0 0.0
    %1615 = vmatprep.subr.mxu0 0.0
    %1616 = vmatpush1.msra.mxu0 0.0
    %1617 = vmatprep.subr.mxu0 0.0
    %1618 = vmatpush1.msra.mxu0 0.0
    %1619 = vmatprep.subr.mxu0 0.0
    %1620 = vmatpush1.msra.mxu0 0.0
    %1621 = vmatprep.subr.mxu0 0.0
    %1622 = vmatpush1.msra.mxu0 0.0
    %1623 = vmatprep.subr.mxu0 0.0
    %1624 = vmatpush1.msra.mxu0 0.0
    %1625 = vmatprep.subr.mxu0 0.0
    %1626 = vmatpush1.msra.mxu0 0.0
    %1627 = vmatprep.mubr.f32.mxu0 0.0
    %1628 = vmatmul.mubr.f32.gmra.mrb[0].mxu0 %v1561
    %v1629 = vpop.f32.mrb[0].mxu0
    %v1630 = vadd.f32 0.0, %v1629
    %v1631 = vpop.f32.mrb[0].mxu0
    %v1632 = vadd.f32 0.0, %v1631
    %1633 = vdwg.mxu0
    %v1634 = vld [vmem:[#allocation2 + $0x20] sm:$0xc]
    %v1636 = vrot.slane %v1630, 6
    %v1638 = vadd.f32 %v1634, %v1636
    %v1639 = vld [vmem:[#allocation2 + $0x18] sm:$0x30]
    %v1641 = vrot.slane %v1632, 4
    %v1643 = vadd.f32 %v1639, %v1641
    %v1644 = vxor.u32 %v1638, 2147483648
    %v1645 = vmul.f32 %v1644, 1.442695
    %v1646 = vpow.pop %v1645
    %v1647 = vadd.f32 %v1646, 1.0
    %v1648 = vrcp.pop %v1647
    %v1649 = vmul.f32 1.0, %v1648
    %v1650 = vtanh.pop %v1638
    %v1652 = vrot.slane %v1511, 6
    %v1654 = vmul.f32 %v1649, %v1652
    %1656 = vrot.lane.b32.xlu0 %v1650, 64
    %v1657 = vpop.permute.xlu0 %1656
    %v1659 = vmul.f32 %v1649, %v1657
    %1661 = vrot.lane.b32.xlu0 %v1659, 32
    %v1662 = vpop.permute.xlu0 %1661
    %v1664 = vadd.f32 %v1654, %v1662
    %v1665 = vtanh.pop %v1664
    %1667 = vrot.lane.b32.xlu0 %v1665, 64
    %v1668 = vpop.permute.xlu0 %1667
    %v1670 = vmul.f32 %v1649, %v1668
    %v1671 = vxor.u32 %v1643, 2147483648
    %v1672 = vmul.f32 %v1671, 1.442695
    %v1673 = vpow.pop %v1672
    %v1674 = vadd.f32 %v1673, 1.0
    %v1675 = vrcp.pop %v1674
    %v1676 = vmul.f32 1.0, %v1675
    %v1677 = vtanh.pop %v1643
    %v1679 = vrot.slane %v1538, 2
    %v1681 = vmul.f32 %v1676, %v1679
    %1683 = vrot.lane.b32.xlu0 %v1677, 64
    %v1684 = vpop.permute.xlu0 %1683
    %v1686 = vmul.f32 %v1676, %v1684
    %1688 = vrot.lane.b32.xlu0 %v1686, 32
    %v1689 = vpop.permute.xlu0 %1688
    %v1691 = vadd.f32 %v1681, %v1689
    %v1692 = vtanh.pop %v1691
    %1694 = vrot.lane.b32.xlu0 %v1692, 64
    %v1695 = vpop.permute.xlu0 %1694
    %v1697 = vmul.f32 %v1676, %v1695
    %1699 = vrot.lane.b32.xlu0 %v1670, 32
    %v1700 = vpop.permute.xlu0 %1699
    %1702 = vst.msk [vmem:[%s4 + $0x10] sm:$0xc] %vm478, %v1700
    %1704 = vrot.lane.b32.xlu0 %v1697, 64
    %v1705 = vpop.permute.xlu0 %1704
    %1707 = vst.msk [vmem:[%s4 + $0x8] sm:$0x30] %vm484, %v1705
    %v1708 = vrot.slane %v1697, 2
    %1709 = vrot.lane.b32.xlu0 %v1708, 64
    %v1710 = vpop.permute.xlu0 %1709
    %v1712 = vsel %vm334, %v1700, %v1710
    %v1714 = vrot.slane %v1712, 2
    %v1715 = vsel %vm188, %v1714, 0
    %1717 = vmatprep.subr.mxu0 %v173
    %1718 = vmatpush1.msra.mxu0 %v172
    %1719 = vmatprep.subr.mxu0 %v175
    %1720 = vmatpush1.msra.mxu0 %v174
    %1721 = vmatprep.subr.mxu0 %v177
    %1722 = vmatpush1.msra.mxu0 %v176
    %1723 = vmatprep.subr.mxu0 %v179
    %1724 = vmatpush1.msra.mxu0 %v178
    %1725 = vmatprep.subr.mxu0 %v181
    %1726 = vmatpush1.msra.mxu0 %v180
    %1727 = vmatprep.subr.mxu0 %v183
    %1728 = vmatpush1.msra.mxu0 %v182
    %1729 = vmatprep.subr.mxu0 %v185
    %1730 = vmatpush1.msra.mxu0 %v184
    %1731 = vmatprep.subr.mxu0 %v187
    %1732 = vmatpush1.msra.mxu0 %v186
    %1733 = vmatprep.subr.mxu0 0.0
    %1734 = vmatpush1.msra.mxu0 0.0
    %1735 = vmatprep.subr.mxu0 0.0
    %1736 = vmatpush1.msra.mxu0 0.0
    %1737 = vmatprep.subr.mxu0 0.0
    %1738 = vmatpush1.msra.mxu0 0.0
    %1739 = vmatprep.subr.mxu0 0.0
    %1740 = vmatpush1.msra.mxu0 0.0
    %1741 = vmatprep.subr.mxu0 0.0
    %1742 = vmatpush1.msra.mxu0 0.0
    %1743 = vmatprep.subr.mxu0 0.0
    %1744 = vmatpush1.msra.mxu0 0.0
    %1745 = vmatprep.subr.mxu0 0.0
    %1746 = vmatpush1.msra.mxu0 0.0
    %1747 = vmatprep.subr.mxu0 0.0
    %1748 = vmatpush1.msra.mxu0 0.0
    %1749 = vmatprep.subr.mxu0 0.0
    %1750 = vmatpush1.msra.mxu0 0.0
    %1751 = vmatprep.subr.mxu0 0.0
    %1752 = vmatpush1.msra.mxu0 0.0
    %1753 = vmatprep.subr.mxu0 0.0
    %1754 = vmatpush1.msra.mxu0 0.0
    %1755 = vmatprep.subr.mxu0 0.0
    %1756 = vmatpush1.msra.mxu0 0.0
    %1757 = vmatprep.subr.mxu0 0.0
    %1758 = vmatpush1.msra.mxu0 0.0
    %1759 = vmatprep.subr.mxu0 0.0
    %1760 = vmatpush1.msra.mxu0 0.0
    %1761 = vmatprep.subr.mxu0 0.0
    %1762 = vmatpush1.msra.mxu0 0.0
    %1763 = vmatprep.subr.mxu0 0.0
    %1764 = vmatpush1.msra.mxu0 0.0
    %1765 = vmatprep.subr.mxu0 0.0
    %1766 = vmatpush1.msra.mxu0 0.0
    %1767 = vmatprep.subr.mxu0 0.0
    %1768 = vmatpush1.msra.mxu0 0.0
    %1769 = vmatprep.subr.mxu0 0.0
    %1770 = vmatpush1.msra.mxu0 0.0
    %1771 = vmatprep.subr.mxu0 0.0
    %1772 = vmatpush1.msra.mxu0 0.0
    %1773 = vmatprep.subr.mxu0 0.0
    %1774 = vmatpush1.msra.mxu0 0.0
    %1775 = vmatprep.subr.mxu0 0.0
    %1776 = vmatpush1.msra.mxu0 0.0
    %1777 = vmatprep.subr.mxu0 0.0
    %1778 = vmatpush1.msra.mxu0 0.0
    %1779 = vmatprep.subr.mxu0 0.0
    %1780 = vmatpush1.msra.mxu0 0.0
    %1781 = vmatprep.mubr.f32.mxu0 0.0
    %1782 = vmatmul.mubr.f32.gmra.mrb[0].mxu0 %v1715
    %v1783 = vpop.f32.mrb[0].mxu0
    %v1784 = vadd.f32 0.0, %v1783
    %v1785 = vpop.f32.mrb[0].mxu0
    %v1786 = vadd.f32 0.0, %v1785
    %1787 = vdwg.mxu0
    %v1788 = vld [vmem:[#allocation2 + $0x20] sm:$0x30]
    %v1790 = vrot.slane %v1784, 4
    %v1792 = vadd.f32 %v1788, %v1790
    %v1793 = vld [vmem:[#allocation2 + $0x18] sm:$0xc]
    %v1795 = vrot.slane %v1786, 6
    %v1797 = vadd.f32 %v1793, %v1795
    %v1798 = vxor.u32 %v1792, 2147483648
    %v1799 = vmul.f32 %v1798, 1.442695
    %v1800 = vpow.pop %v1799
    %v1801 = vadd.f32 %v1800, 1.0
    %v1802 = vrcp.pop %v1801
    %v1803 = vmul.f32 1.0, %v1802
    %v1804 = vtanh.pop %v1792
    %v1806 = vrot.slane %v1664, 6
    %v1808 = vmul.f32 %v1803, %v1806
    %1810 = vrot.lane.b32.xlu0 %v1804, 64
    %v1811 = vpop.permute.xlu0 %1810
    %v1813 = vmul.f32 %v1803, %v1811
    %1815 = vrot.lane.b32.xlu0 %v1813, 32
    %v1816 = vpop.permute.xlu0 %1815
    %v1818 = vadd.f32 %v1808, %v1816
    %v1819 = vtanh.pop %v1818
    %1821 = vrot.lane.b32.xlu0 %v1819, 64
    %v1822 = vpop.permute.xlu0 %1821
    %v1824 = vmul.f32 %v1803, %v1822
    %v1825 = vxor.u32 %v1797, 2147483648
    %v1826 = vmul.f32 %v1825, 1.442695
    %v1827 = vpow.pop %v1826
    %v1828 = vadd.f32 %v1827, 1.0
    %v1829 = vrcp.pop %v1828
    %v1830 = vmul.f32 1.0, %v1829
    %v1831 = vtanh.pop %v1797
    %v1833 = vrot.slane %v1691, 2
    %v1835 = vmul.f32 %v1830, %v1833
    %1837 = vrot.lane.b32.xlu0 %v1831, 64
    %v1838 = vpop.permute.xlu0 %1837
    %v1840 = vmul.f32 %v1830, %v1838
    %1842 = vrot.lane.b32.xlu0 %v1840, 32
    %v1843 = vpop.permute.xlu0 %1842
    %v1845 = vadd.f32 %v1835, %v1843
    %v1846 = vtanh.pop %v1845
    %1848 = vrot.lane.b32.xlu0 %v1846, 64
    %v1849 = vpop.permute.xlu0 %1848
    %v1851 = vmul.f32 %v1830, %v1849
    %1853 = vrot.lane.b32.xlu0 %v1824, 32
    %v1854 = vpop.permute.xlu0 %1853
    %1856 = vst.msk [vmem:[%s4 + $0x10] sm:$0x30] %vm634, %v1854
    %1858 = vrot.lane.b32.xlu0 %v1851, 64
    %v1859 = vpop.permute.xlu0 %1858
    %1861 = vst.msk [vmem:[%s4 + $0x8] sm:$0xc] %vm640, %v1859
    %v1862 = vrot.slane %v1851, 6
    %1863 = vrot.lane.b32.xlu0 %v1862, 64
    %v1864 = vpop.permute.xlu0 %1863
    %v1866 = vsel %vm334, %v1854, %v1864
    %v1868 = vrot.slane %v1866, 4
    %v1869 = vsel %vm188, %v1868, 0
    %1871 = vmatprep.subr.mxu0 %v173
    %1872 = vmatpush1.msra.mxu0 %v172
    %1873 = vmatprep.subr.mxu0 %v175
    %1874 = vmatpush1.msra.mxu0 %v174
    %1875 = vmatprep.subr.mxu0 %v177
    %1876 = vmatpush1.msra.mxu0 %v176
    %1877 = vmatprep.subr.mxu0 %v179
    %1878 = vmatpush1.msra.mxu0 %v178
    %1879 = vmatprep.subr.mxu0 %v181
    %1880 = vmatpush1.msra.mxu0 %v180
    %1881 = vmatprep.subr.mxu0 %v183
    %1882 = vmatpush1.msra.mxu0 %v182
    %1883 = vmatprep.subr.mxu0 %v185
    %1884 = vmatpush1.msra.mxu0 %v184
    %1885 = vmatprep.subr.mxu0 %v187
    %1886 = vmatpush1.msra.mxu0 %v186
    %1887 = vmatprep.subr.mxu0 0.0
    %1888 = vmatpush1.msra.mxu0 0.0
    %1889 = vmatprep.subr.mxu0 0.0
    %1890 = vmatpush1.msra.mxu0 0.0
    %1891 = vmatprep.subr.mxu0 0.0
    %1892 = vmatpush1.msra.mxu0 0.0
    %1893 = vmatprep.subr.mxu0 0.0
    %1894 = vmatpush1.msra.mxu0 0.0
    %1895 = vmatprep.subr.mxu0 0.0
    %1896 = vmatpush1.msra.mxu0 0.0
    %1897 = vmatprep.subr.mxu0 0.0
    %1898 = vmatpush1.msra.mxu0 0.0
    %1899 = vmatprep.subr.mxu0 0.0
    %1900 = vmatpush1.msra.mxu0 0.0
    %1901 = vmatprep.subr.mxu0 0.0
    %1902 = vmatpush1.msra.mxu0 0.0
    %1903 = vmatprep.subr.mxu0 0.0
    %1904 = vmatpush1.msra.mxu0 0.0
    %1905 = vmatprep.subr.mxu0 0.0
    %1906 = vmatpush1.msra.mxu0 0.0
    %1907 = vmatprep.subr.mxu0 0.0
    %1908 = vmatpush1.msra.mxu0 0.0
    %1909 = vmatprep.subr.mxu0 0.0
    %1910 = vmatpush1.msra.mxu0 0.0
    %1911 = vmatprep.subr.mxu0 0.0
    %1912 = vmatpush1.msra.mxu0 0.0
    %1913 = vmatprep.subr.mxu0 0.0
    %1914 = vmatpush1.msra.mxu0 0.0
    %1915 = vmatprep.subr.mxu0 0.0
    %1916 = vmatpush1.msra.mxu0 0.0
    %1917 = vmatprep.subr.mxu0 0.0
    %1918 = vmatpush1.msra.mxu0 0.0
    %1919 = vmatprep.subr.mxu0 0.0
    %1920 = vmatpush1.msra.mxu0 0.0
    %1921 = vmatprep.subr.mxu0 0.0
    %1922 = vmatpush1.msra.mxu0 0.0
    %1923 = vmatprep.subr.mxu0 0.0
    %1924 = vmatpush1.msra.mxu0 0.0
    %1925 = vmatprep.subr.mxu0 0.0
    %1926 = vmatpush1.msra.mxu0 0.0
    %1927 = vmatprep.subr.mxu0 0.0
    %1928 = vmatpush1.msra.mxu0 0.0
    %1929 = vmatprep.subr.mxu0 0.0
    %1930 = vmatpush1.msra.mxu0 0.0
    %1931 = vmatprep.subr.mxu0 0.0
    %1932 = vmatpush1.msra.mxu0 0.0
    %1933 = vmatprep.subr.mxu0 0.0
    %1934 = vmatpush1.msra.mxu0 0.0
    %1935 = vmatprep.mubr.f32.mxu0 0.0
    %1936 = vmatmul.mubr.f32.gmra.mrb[0].mxu0 %v1869
    %v1937 = vpop.f32.mrb[0].mxu0
    %v1938 = vadd.f32 0.0, %v1937
    %v1939 = vpop.f32.mrb[0].mxu0
    %v1940 = vadd.f32 0.0, %v1939
    %1941 = vdwg.mxu0
    %v1942 = vld [vmem:[#allocation2 + $0x20] sm:$0xc0]
    %v1944 = vrot.slane %v1938, 2
    %v1946 = vadd.f32 %v1942, %v1944
    %v1947 = vld [vmem:[#allocation2 + $0x18] sm:$0x3]
    %v1948 = vadd.f32 %v1947, %v1940
    %v1949 = vxor.u32 %v1946, 2147483648
    %v1950 = vmul.f32 %v1949, 1.442695
    %v1951 = vpow.pop %v1950
    %v1952 = vadd.f32 %v1951, 1.0
    %v1953 = vrcp.pop %v1952
    %v1954 = vmul.f32 1.0, %v1953
    %v1955 = vtanh.pop %v1946
    %v1957 = vrot.slane %v1818, 6
    %v1959 = vmul.f32 %v1954, %v1957
    %1961 = vrot.lane.b32.xlu0 %v1955, 64
    %v1962 = vpop.permute.xlu0 %1961
    %v1964 = vmul.f32 %v1954, %v1962
    %1966 = vrot.lane.b32.xlu0 %v1964, 32
    %v1967 = vpop.permute.xlu0 %1966
    %v1969 = vadd.f32 %v1959, %v1967
    %v1970 = vtanh.pop %v1969
    %1972 = vrot.lane.b32.xlu0 %v1970, 64
    %v1973 = vpop.permute.xlu0 %1972
    %v1975 = vmul.f32 %v1954, %v1973
    %v1976 = vxor.u32 %v1948, 2147483648
    %v1977 = vmul.f32 %v1976, 1.442695
    %v1978 = vpow.pop %v1977
    %v1979 = vadd.f32 %v1978, 1.0
    %v1980 = vrcp.pop %v1979
    %v1981 = vmul.f32 1.0, %v1980
    %v1982 = vtanh.pop %v1948
    %v1984 = vrot.slane %v1845, 2
    %v1986 = vmul.f32 %v1981, %v1984
    %1988 = vrot.lane.b32.xlu0 %v1982, 64
    %v1989 = vpop.permute.xlu0 %1988
    %v1991 = vmul.f32 %v1981, %v1989
    %1993 = vrot.lane.b32.xlu0 %v1991, 32
    %v1994 = vpop.permute.xlu0 %1993
    %v1996 = vadd.f32 %v1986, %v1994
    %v1997 = vtanh.pop %v1996
    %1999 = vrot.lane.b32.xlu0 %v1997, 64
    %v2000 = vpop.permute.xlu0 %1999
    %v2002 = vmul.f32 %v1981, %v2000
    %2004 = vrot.lane.b32.xlu0 %v1975, 32
    %v2005 = vpop.permute.xlu0 %2004
    %2007 = vst.msk [vmem:[%s4 + $0x10] sm:$0xc0] %vm787, %v2005
    %2009 = vrot.lane.b32.xlu0 %v2002, 64
    %v2010 = vpop.permute.xlu0 %2009
    %2012 = vst.msk [vmem:[%s4 + $0x8] sm:$0x3] %vm793, %v2010
    %v2013 = vrot.slane %v2002, 2
    %2014 = vrot.lane.b32.xlu0 %v2013, 64
    %v2015 = vpop.permute.xlu0 %2014
    %v2017 = vsel %vm334, %v2005, %v2015
    %v2019 = vrot.slane %v2017, 6
    %v2020 = vsel %vm188, %v2019, 0
    %2022 = vmatprep.subr.mxu0 %v173
    %2023 = vmatpush1.msra.mxu0 %v172
    %2024 = vmatprep.subr.mxu0 %v175
    %2025 = vmatpush1.msra.mxu0 %v174
    %2026 = vmatprep.subr.mxu0 %v177
    %2027 = vmatpush1.msra.mxu0 %v176
    %2028 = vmatprep.subr.mxu0 %v179
    %2029 = vmatpush1.msra.mxu0 %v178
    %2030 = vmatprep.subr.mxu0 %v181
    %2031 = vmatpush1.msra.mxu0 %v180
    %2032 = vmatprep.subr.mxu0 %v183
    %2033 = vmatpush1.msra.mxu0 %v182
    %2034 = vmatprep.subr.mxu0 %v185
    %2035 = vmatpush1.msra.mxu0 %v184
    %2036 = vmatprep.subr.mxu0 %v187
    %2037 = vmatpush1.msra.mxu0 %v186
    %2038 = vmatprep.subr.mxu0 0.0
    %2039 = vmatpush1.msra.mxu0 0.0
    %2040 = vmatprep.subr.mxu0 0.0
    %2041 = vmatpush1.msra.mxu0 0.0
    %2042 = vmatprep.subr.mxu0 0.0
    %2043 = vmatpush1.msra.mxu0 0.0
    %2044 = vmatprep.subr.mxu0 0.0
    %2045 = vmatpush1.msra.mxu0 0.0
    %2046 = vmatprep.subr.mxu0 0.0
    %2047 = vmatpush1.msra.mxu0 0.0
    %2048 = vmatprep.subr.mxu0 0.0
    %2049 = vmatpush1.msra.mxu0 0.0
    %2050 = vmatprep.subr.mxu0 0.0
    %2051 = vmatpush1.msra.mxu0 0.0
    %2052 = vmatprep.subr.mxu0 0.0
    %2053 = vmatpush1.msra.mxu0 0.0
    %2054 = vmatprep.subr.mxu0 0.0
    %2055 = vmatpush1.msra.mxu0 0.0
    %2056 = vmatprep.subr.mxu0 0.0
    %2057 = vmatpush1.msra.mxu0 0.0
    %2058 = vmatprep.subr.mxu0 0.0
    %2059 = vmatpush1.msra.mxu0 0.0
    %2060 = vmatprep.subr.mxu0 0.0
    %2061 = vmatpush1.msra.mxu0 0.0
    %2062 = vmatprep.subr.mxu0 0.0
    %2063 = vmatpush1.msra.mxu0 0.0
    %2064 = vmatprep.subr.mxu0 0.0
    %2065 = vmatpush1.msra.mxu0 0.0
    %2066 = vmatprep.subr.mxu0 0.0
    %2067 = vmatpush1.msra.mxu0 0.0
    %2068 = vmatprep.subr.mxu0 0.0
    %2069 = vmatpush1.msra.mxu0 0.0
    %2070 = vmatprep.subr.mxu0 0.0
    %2071 = vmatpush1.msra.mxu0 0.0
    %2072 = vmatprep.subr.mxu0 0.0
    %2073 = vmatpush1.msra.mxu0 0.0
    %2074 = vmatprep.subr.mxu0 0.0
    %2075 = vmatpush1.msra.mxu0 0.0
    %2076 = vmatprep.subr.mxu0 0.0
    %2077 = vmatpush1.msra.mxu0 0.0
    %2078 = vmatprep.subr.mxu0 0.0
    %2079 = vmatpush1.msra.mxu0 0.0
    %2080 = vmatprep.subr.mxu0 0.0
    %2081 = vmatpush1.msra.mxu0 0.0
    %2082 = vmatprep.subr.mxu0 0.0
    %2083 = vmatpush1.msra.mxu0 0.0
    %2084 = vmatprep.subr.mxu0 0.0
    %2085 = vmatpush1.msra.mxu0 0.0
    %2086 = vmatprep.mubr.f32.mxu0 0.0
    %2087 = vmatmul.mubr.f32.gmra.mrb[0].mxu0 %v2020
    %v2088 = vpop.f32.mrb[0].mxu0
    %v2089 = vadd.f32 0.0, %v2088
    %v2090 = vpop.f32.mrb[0].mxu0
    %v2091 = vadd.f32 0.0, %v2090
    %2092 = vdwg.mxu0
    %v2093 = vld [vmem:[#allocation2 + $0x30] sm:$0x3]
    %v2094 = vadd.f32 %v2093, %v2089
    %v2095 = vld [vmem:[#allocation2 + $0x8] sm:$0xc0]
    %v2097 = vrot.slane %v2091, 2
    %v2099 = vadd.f32 %v2095, %v2097
    %v2100 = vxor.u32 %v2094, 2147483648
    %v2101 = vmul.f32 %v2100, 1.442695
    %v2102 = vpow.pop %v2101
    %v2103 = vadd.f32 %v2102, 1.0
    %v2104 = vrcp.pop %v2103
    %v2105 = vmul.f32 1.0, %v2104
    %v2106 = vtanh.pop %v2094
    %v2108 = vrot.slane %v1969, 6
    %v2110 = vmul.f32 %v2105, %v2108
    %2112 = vrot.lane.b32.xlu0 %v2106, 64
    %v2113 = vpop.permute.xlu0 %2112
    %v2115 = vmul.f32 %v2105, %v2113
    %2117 = vrot.lane.b32.xlu0 %v2115, 32
    %v2118 = vpop.permute.xlu0 %2117
    %v2120 = vadd.f32 %v2110, %v2118
    %v2121 = vtanh.pop %v2120
    %2123 = vrot.lane.b32.xlu0 %v2121, 64
    %v2124 = vpop.permute.xlu0 %2123
    %v2126 = vmul.f32 %v2105, %v2124
    %v2127 = vxor.u32 %v2099, 2147483648
    %v2128 = vmul.f32 %v2127, 1.442695
    %v2129 = vpow.pop %v2128
    %v2130 = vadd.f32 %v2129, 1.0
    %v2131 = vrcp.pop %v2130
    %v2132 = vmul.f32 1.0, %v2131
    %v2133 = vtanh.pop %v2099
    %v2135 = vrot.slane %v1996, 2
    %v2137 = vmul.f32 %v2132, %v2135
    %2139 = vrot.lane.b32.xlu0 %v2133, 64
    %v2140 = vpop.permute.xlu0 %2139
    %v2142 = vmul.f32 %v2132, %v2140
    %2144 = vrot.lane.b32.xlu0 %v2142, 32
    %v2145 = vpop.permute.xlu0 %2144
    %v2147 = vadd.f32 %v2137, %v2145
    %v2148 = vtanh.pop %v2147
    %2150 = vrot.lane.b32.xlu0 %v2148, 64
    %v2151 = vpop.permute.xlu0 %2150
    %v2153 = vmul.f32 %v2132, %v2151
    %2155 = vrot.lane.b32.xlu0 %v2126, 32
    %v2156 = vpop.permute.xlu0 %2155
    %2158 = vst.msk [vmem:[%s4 + $0x18] sm:$0x3] %vm322, %v2156
    %2160 = vrot.lane.b32.xlu0 %v2153, 64
    %v2161 = vpop.permute.xlu0 %2160
    %2163 = vst.msk [vmem:[%s4] sm:$0xc0] %vm328, %v2161
    %v2164 = vrot.slane %v2153, 6
    %2165 = vrot.lane.b32.xlu0 %v2164, 64
    %v2166 = vpop.permute.xlu0 %2165
    %v2168 = vsel %vm334, %v2156, %v2166
    %v2170 = vsel %vm188, %v2168, 0
    %2172 = vmatprep.subr.mxu0 %v173
    %2173 = vmatpush1.msra.mxu0 %v172
    %2174 = vmatprep.subr.mxu0 %v175
    %2175 = vmatpush1.msra.mxu0 %v174
    %2176 = vmatprep.subr.mxu0 %v177
    %2177 = vmatpush1.msra.mxu0 %v176
    %2178 = vmatprep.subr.mxu0 %v179
    %2179 = vmatpush1.msra.mxu0 %v178
    %2180 = vmatprep.subr.mxu0 %v181
    %2181 = vmatpush1.msra.mxu0 %v180
    %2182 = vmatprep.subr.mxu0 %v183
    %2183 = vmatpush1.msra.mxu0 %v182
    %2184 = vmatprep.subr.mxu0 %v185
    %2185 = vmatpush1.msra.mxu0 %v184
    %2186 = vmatprep.subr.mxu0 %v187
    %2187 = vmatpush1.msra.mxu0 %v186
    %2188 = vmatprep.subr.mxu0 0.0
    %2189 = vmatpush1.msra.mxu0 0.0
    %2190 = vmatprep.subr.mxu0 0.0
    %2191 = vmatpush1.msra.mxu0 0.0
    %2192 = vmatprep.subr.mxu0 0.0
    %2193 = vmatpush1.msra.mxu0 0.0
    %2194 = vmatprep.subr.mxu0 0.0
    %2195 = vmatpush1.msra.mxu0 0.0
    %2196 = vmatprep.subr.mxu0 0.0
    %2197 = vmatpush1.msra.mxu0 0.0
    %2198 = vmatprep.subr.mxu0 0.0
    %2199 = vmatpush1.msra.mxu0 0.0
    %2200 = vmatprep.subr.mxu0 0.0
    %2201 = vmatpush1.msra.mxu0 0.0
    %2202 = vmatprep.subr.mxu0 0.0
    %2203 = vmatpush1.msra.mxu0 0.0
    %2204 = vmatprep.subr.mxu0 0.0
    %2205 = vmatpush1.msra.mxu0 0.0
    %2206 = vmatprep.subr.mxu0 0.0
    %2207 = vmatpush1.msra.mxu0 0.0
    %2208 = vmatprep.subr.mxu0 0.0
    %2209 = vmatpush1.msra.mxu0 0.0
    %2210 = vmatprep.subr.mxu0 0.0
    %2211 = vmatpush1.msra.mxu0 0.0
    %2212 = vmatprep.subr.mxu0 0.0
    %2213 = vmatpush1.msra.mxu0 0.0
    %2214 = vmatprep.subr.mxu0 0.0
    %2215 = vmatpush1.msra.mxu0 0.0
    %2216 = vmatprep.subr.mxu0 0.0
    %2217 = vmatpush1.msra.mxu0 0.0
    %2218 = vmatprep.subr.mxu0 0.0
    %2219 = vmatpush1.msra.mxu0 0.0
    %2220 = vmatprep.subr.mxu0 0.0
    %2221 = vmatpush1.msra.mxu0 0.0
    %2222 = vmatprep.subr.mxu0 0.0
    %2223 = vmatpush1.msra.mxu0 0.0
    %2224 = vmatprep.subr.mxu0 0.0
    %2225 = vmatpush1.msra.mxu0 0.0
    %2226 = vmatprep.subr.mxu0 0.0
    %2227 = vmatpush1.msra.mxu0 0.0
    %2228 = vmatprep.subr.mxu0 0.0
    %2229 = vmatpush1.msra.mxu0 0.0
    %2230 = vmatprep.subr.mxu0 0.0
    %2231 = vmatpush1.msra.mxu0 0.0
    %2232 = vmatprep.subr.mxu0 0.0
    %2233 = vmatpush1.msra.mxu0 0.0
    %2234 = vmatprep.subr.mxu0 0.0
    %2235 = vmatpush1.msra.mxu0 0.0
    %2236 = vmatprep.mubr.f32.mxu0 0.0
    %2237 = vmatmul.mubr.f32.gmra.mrb[0].mxu0 %v2170
    %v2238 = vpop.f32.mrb[0].mxu0
    %v2239 = vadd.f32 0.0, %v2238
    %v2240 = vpop.f32.mrb[0].mxu0
    %v2241 = vadd.f32 0.0, %v2240
    %2242 = vdwg.mxu0
    %v2243 = vld [vmem:[#allocation2 + $0x30] sm:$0xc]
    %v2245 = vrot.slane %v2239, 6
    %v2247 = vadd.f32 %v2243, %v2245
    %v2248 = vld [vmem:[#allocation2 + $0x8] sm:$0x30]
    %v2250 = vrot.slane %v2241, 4
    %v2252 = vadd.f32 %v2248, %v2250
    %v2253 = vxor.u32 %v2247, 2147483648
    %v2254 = vmul.f32 %v2253, 1.442695
    %v2255 = vpow.pop %v2254
    %v2256 = vadd.f32 %v2255, 1.0
    %v2257 = vrcp.pop %v2256
    %v2258 = vmul.f32 1.0, %v2257
    %v2259 = vtanh.pop %v2247
    %v2261 = vrot.slane %v2120, 6
    %v2263 = vmul.f32 %v2258, %v2261
    %2265 = vrot.lane.b32.xlu0 %v2259, 64
    %v2266 = vpop.permute.xlu0 %2265
    %v2268 = vmul.f32 %v2258, %v2266
    %2270 = vrot.lane.b32.xlu0 %v2268, 32
    %v2271 = vpop.permute.xlu0 %2270
    %v2273 = vadd.f32 %v2263, %v2271
    %v2274 = vtanh.pop %v2273
    %2276 = vrot.lane.b32.xlu0 %v2274, 64
    %v2277 = vpop.permute.xlu0 %2276
    %v2279 = vmul.f32 %v2258, %v2277
    %v2280 = vxor.u32 %v2252, 2147483648
    %v2281 = vmul.f32 %v2280, 1.442695
    %v2282 = vpow.pop %v2281
    %v2283 = vadd.f32 %v2282, 1.0
    %v2284 = vrcp.pop %v2283
    %v2285 = vmul.f32 1.0, %v2284
    %v2286 = vtanh.pop %v2252
    %v2288 = vrot.slane %v2147, 2
    %v2290 = vmul.f32 %v2285, %v2288
    %2292 = vrot.lane.b32.xlu0 %v2286, 64
    %v2293 = vpop.permute.xlu0 %2292
    %v2295 = vmul.f32 %v2285, %v2293
    %2297 = vrot.lane.b32.xlu0 %v2295, 32
    %v2298 = vpop.permute.xlu0 %2297
    %v2300 = vadd.f32 %v2290, %v2298
    %v2301 = vtanh.pop %v2300
    %2303 = vrot.lane.b32.xlu0 %v2301, 64
    %v2304 = vpop.permute.xlu0 %2303
    %v2306 = vmul.f32 %v2285, %v2304
    %2308 = vrot.lane.b32.xlu0 %v2279, 32
    %v2309 = vpop.permute.xlu0 %2308
    %2311 = vst.msk [vmem:[%s4 + $0x18] sm:$0xc] %vm478, %v2309
    %2313 = vrot.lane.b32.xlu0 %v2306, 64
    %v2314 = vpop.permute.xlu0 %2313
    %2316 = vst.msk [vmem:[%s4] sm:$0x30] %vm484, %v2314
    %v2317 = vrot.slane %v2306, 2
    %2318 = vrot.lane.b32.xlu0 %v2317, 64
    %v2319 = vpop.permute.xlu0 %2318
    %v2321 = vsel %vm334, %v2309, %v2319
    %v2323 = vrot.slane %v2321, 2
    %v2324 = vsel %vm188, %v2323, 0
    %2326 = vmatprep.subr.mxu0 %v173
    %2327 = vmatpush1.msra.mxu0 %v172
    %2328 = vmatprep.subr.mxu0 %v175
    %2329 = vmatpush1.msra.mxu0 %v174
    %2330 = vmatprep.subr.mxu0 %v177
    %2331 = vmatpush1.msra.mxu0 %v176
    %2332 = vmatprep.subr.mxu0 %v179
    %2333 = vmatpush1.msra.mxu0 %v178
    %2334 = vmatprep.subr.mxu0 %v181
    %2335 = vmatpush1.msra.mxu0 %v180
    %2336 = vmatprep.subr.mxu0 %v183
    %2337 = vmatpush1.msra.mxu0 %v182
    %2338 = vmatprep.subr.mxu0 %v185
    %2339 = vmatpush1.msra.mxu0 %v184
    %2340 = vmatprep.subr.mxu0 %v187
    %2341 = vmatpush1.msra.mxu0 %v186
    %2342 = vmatprep.subr.mxu0 0.0
    %2343 = vmatpush1.msra.mxu0 0.0
    %2344 = vmatprep.subr.mxu0 0.0
    %2345 = vmatpush1.msra.mxu0 0.0
    %2346 = vmatprep.subr.mxu0 0.0
    %2347 = vmatpush1.msra.mxu0 0.0
    %2348 = vmatprep.subr.mxu0 0.0
    %2349 = vmatpush1.msra.mxu0 0.0
    %2350 = vmatprep.subr.mxu0 0.0
    %2351 = vmatpush1.msra.mxu0 0.0
    %2352 = vmatprep.subr.mxu0 0.0
    %2353 = vmatpush1.msra.mxu0 0.0
    %2354 = vmatprep.subr.mxu0 0.0
    %2355 = vmatpush1.msra.mxu0 0.0
    %2356 = vmatprep.subr.mxu0 0.0
    %2357 = vmatpush1.msra.mxu0 0.0
    %2358 = vmatprep.subr.mxu0 0.0
    %2359 = vmatpush1.msra.mxu0 0.0
    %2360 = vmatprep.subr.mxu0 0.0
    %2361 = vmatpush1.msra.mxu0 0.0
    %2362 = vmatprep.subr.mxu0 0.0
    %2363 = vmatpush1.msra.mxu0 0.0
    %2364 = vmatprep.subr.mxu0 0.0
    %2365 = vmatpush1.msra.mxu0 0.0
    %2366 = vmatprep.subr.mxu0 0.0
    %2367 = vmatpush1.msra.mxu0 0.0
    %2368 = vmatprep.subr.mxu0 0.0
    %2369 = vmatpush1.msra.mxu0 0.0
    %2370 = vmatprep.subr.mxu0 0.0
    %2371 = vmatpush1.msra.mxu0 0.0
    %2372 = vmatprep.subr.mxu0 0.0
    %2373 = vmatpush1.msra.mxu0 0.0
    %2374 = vmatprep.subr.mxu0 0.0
    %2375 = vmatpush1.msra.mxu0 0.0
    %2376 = vmatprep.subr.mxu0 0.0
    %2377 = vmatpush1.msra.mxu0 0.0
    %2378 = vmatprep.subr.mxu0 0.0
    %2379 = vmatpush1.msra.mxu0 0.0
    %2380 = vmatprep.subr.mxu0 0.0
    %2381 = vmatpush1.msra.mxu0 0.0
    %2382 = vmatprep.subr.mxu0 0.0
    %2383 = vmatpush1.msra.mxu0 0.0
    %2384 = vmatprep.subr.mxu0 0.0
    %2385 = vmatpush1.msra.mxu0 0.0
    %2386 = vmatprep.subr.mxu0 0.0
    %2387 = vmatpush1.msra.mxu0 0.0
    %2388 = vmatprep.subr.mxu0 0.0
    %2389 = vmatpush1.msra.mxu0 0.0
    %2390 = vmatprep.mubr.f32.mxu0 0.0
    %2391 = vmatmul.mubr.f32.gmra.mrb[0].mxu0 %v2324
    %v2392 = vpop.f32.mrb[0].mxu0
    %v2393 = vadd.f32 0.0, %v2392
    %v2394 = vpop.f32.mrb[0].mxu0
    %v2395 = vadd.f32 0.0, %v2394
    %2396 = vdwg.mxu0
    %v2397 = vld [vmem:[#allocation2 + $0x30] sm:$0x30]
    %v2399 = vrot.slane %v2393, 4
    %v2401 = vadd.f32 %v2397, %v2399
    %v2402 = vld [vmem:[#allocation2 + $0x8] sm:$0xc]
    %v2404 = vrot.slane %v2395, 6
    %v2406 = vadd.f32 %v2402, %v2404
    %v2407 = vxor.u32 %v2401, 2147483648
    %v2408 = vmul.f32 %v2407, 1.442695
    %v2409 = vpow.pop %v2408
    %v2410 = vadd.f32 %v2409, 1.0
    %v2411 = vrcp.pop %v2410
    %v2412 = vmul.f32 1.0, %v2411
    %v2413 = vtanh.pop %v2401
    %v2415 = vrot.slane %v2273, 6
    %v2417 = vmul.f32 %v2412, %v2415
    %2419 = vrot.lane.b32.xlu0 %v2413, 64
    %v2420 = vpop.permute.xlu0 %2419
    %v2422 = vmul.f32 %v2412, %v2420
    %2424 = vrot.lane.b32.xlu0 %v2422, 32
    %v2425 = vpop.permute.xlu0 %2424
    %v2427 = vadd.f32 %v2417, %v2425
    %v2428 = vtanh.pop %v2427
    %2430 = vrot.lane.b32.xlu0 %v2428, 64
    %v2431 = vpop.permute.xlu0 %2430
    %v2433 = vmul.f32 %v2412, %v2431
    %v2434 = vxor.u32 %v2406, 2147483648
    %v2435 = vmul.f32 %v2434, 1.442695
    %v2436 = vpow.pop %v2435
    %v2437 = vadd.f32 %v2436, 1.0
    %v2438 = vrcp.pop %v2437
    %v2439 = vmul.f32 1.0, %v2438
    %v2440 = vtanh.pop %v2406
    %v2442 = vrot.slane %v2300, 2
    %v2444 = vmul.f32 %v2439, %v2442
    %2446 = vrot.lane.b32.xlu0 %v2440, 64
    %v2447 = vpop.permute.xlu0 %2446
    %v2449 = vmul.f32 %v2439, %v2447
    %2451 = vrot.lane.b32.xlu0 %v2449, 32
    %v2452 = vpop.permute.xlu0 %2451
    %v2454 = vadd.f32 %v2444, %v2452
    %v2455 = vtanh.pop %v2454
    %2457 = vrot.lane.b32.xlu0 %v2455, 64
    %v2458 = vpop.permute.xlu0 %2457
    %v2460 = vmul.f32 %v2439, %v2458
    %2462 = vrot.lane.b32.xlu0 %v2433, 32
    %v2463 = vpop.permute.xlu0 %2462
    %2465 = vst.msk [vmem:[%s4 + $0x18] sm:$0x30] %vm634, %v2463
    %2467 = vrot.lane.b32.xlu0 %v2460, 64
    %v2468 = vpop.permute.xlu0 %2467
    %2470 = vst.msk [vmem:[%s4] sm:$0xc] %vm640, %v2468
    %v2471 = vrot.slane %v2460, 6
    %2472 = vrot.lane.b32.xlu0 %v2471, 64
    %v2473 = vpop.permute.xlu0 %2472
    %v2475 = vsel %vm334, %v2463, %v2473
    %v2477 = vrot.slane %v2475, 4
    %v2478 = vsel %vm188, %v2477, 0
    %2480 = vmatprep.subr.mxu0 %v173
    %2481 = vmatpush1.msra.mxu0 %v172
    %2482 = vmatprep.subr.mxu0 %v175
    %2483 = vmatpush1.msra.mxu0 %v174
    %2484 = vmatprep.subr.mxu0 %v177
    %2485 = vmatpush1.msra.mxu0 %v176
    %2486 = vmatprep.subr.mxu0 %v179
    %2487 = vmatpush1.msra.mxu0 %v178
    %2488 = vmatprep.subr.mxu0 %v181
    %2489 = vmatpush1.msra.mxu0 %v180
    %2490 = vmatprep.subr.mxu0 %v183
    %2491 = vmatpush1.msra.mxu0 %v182
    %2492 = vmatprep.subr.mxu0 %v185
    %2493 = vmatpush1.msra.mxu0 %v184
    %2494 = vmatprep.subr.mxu0 %v187
    %2495 = vmatpush1.msra.mxu0 %v186
    %2496 = vmatprep.subr.mxu0 0.0
    %2497 = vmatpush1.msra.mxu0 0.0
    %2498 = vmatprep.subr.mxu0 0.0
    %2499 = vmatpush1.msra.mxu0 0.0
    %2500 = vmatprep.subr.mxu0 0.0
    %2501 = vmatpush1.msra.mxu0 0.0
    %2502 = vmatprep.subr.mxu0 0.0
    %2503 = vmatpush1.msra.mxu0 0.0
    %2504 = vmatprep.subr.mxu0 0.0
    %2505 = vmatpush1.msra.mxu0 0.0
    %2506 = vmatprep.subr.mxu0 0.0
    %2507 = vmatpush1.msra.mxu0 0.0
    %2508 = vmatprep.subr.mxu0 0.0
    %2509 = vmatpush1.msra.mxu0 0.0
    %2510 = vmatprep.subr.mxu0 0.0
    %2511 = vmatpush1.msra.mxu0 0.0
    %2512 = vmatprep.subr.mxu0 0.0
    %2513 = vmatpush1.msra.mxu0 0.0
    %2514 = vmatprep.subr.mxu0 0.0
    %2515 = vmatpush1.msra.mxu0 0.0
    %2516 = vmatprep.subr.mxu0 0.0
    %2517 = vmatpush1.msra.mxu0 0.0
    %2518 = vmatprep.subr.mxu0 0.0
    %2519 = vmatpush1.msra.mxu0 0.0
    %2520 = vmatprep.subr.mxu0 0.0
    %2521 = vmatpush1.msra.mxu0 0.0
    %2522 = vmatprep.subr.mxu0 0.0
    %2523 = vmatpush1.msra.mxu0 0.0
    %2524 = vmatprep.subr.mxu0 0.0
    %2525 = vmatpush1.msra.mxu0 0.0
    %2526 = vmatprep.subr.mxu0 0.0
    %2527 = vmatpush1.msra.mxu0 0.0
    %2528 = vmatprep.subr.mxu0 0.0
    %2529 = vmatpush1.msra.mxu0 0.0
    %2530 = vmatprep.subr.mxu0 0.0
    %2531 = vmatpush1.msra.mxu0 0.0
    %2532 = vmatprep.subr.mxu0 0.0
    %2533 = vmatpush1.msra.mxu0 0.0
    %2534 = vmatprep.subr.mxu0 0.0
    %2535 = vmatpush1.msra.mxu0 0.0
    %2536 = vmatprep.subr.mxu0 0.0
    %2537 = vmatpush1.msra.mxu0 0.0
    %2538 = vmatprep.subr.mxu0 0.0
    %2539 = vmatpush1.msra.mxu0 0.0
    %2540 = vmatprep.subr.mxu0 0.0
    %2541 = vmatpush1.msra.mxu0 0.0
    %2542 = vmatprep.subr.mxu0 0.0
    %2543 = vmatpush1.msra.mxu0 0.0
    %2544 = vmatprep.mubr.f32.mxu0 0.0
    %2545 = vmatmul.mubr.f32.gmra.mrb[0].mxu0 %v2478
    %v2546 = vpop.f32.mrb[0].mxu0
    %v2547 = vadd.f32 0.0, %v2546
    %v2548 = vpop.f32.mrb[0].mxu0
    %v2549 = vadd.f32 0.0, %v2548
    %2550 = vdwg.mxu0
    %v2551 = vld [vmem:[#allocation2 + $0x30] sm:$0xc0]
    %v2553 = vrot.slane %v2547, 2
    %v2555 = vadd.f32 %v2551, %v2553
    %v2556 = vld [vmem:[#allocation2 + $0x8] sm:$0x3]
    %v2557 = vadd.f32 %v2556, %v2549
    %v2558 = vxor.u32 %v2555, 2147483648
    %v2559 = vmul.f32 %v2558, 1.442695
    %v2560 = vpow.pop %v2559
    %v2561 = vadd.f32 %v2560, 1.0
    %v2562 = vrcp.pop %v2561
    %v2563 = vmul.f32 1.0, %v2562
    %v2564 = vtanh.pop %v2555
    %v2566 = vrot.slane %v2427, 6
    %v2568 = vmul.f32 %v2563, %v2566
    %2570 = vrot.lane.b32.xlu0 %v2564, 64
    %v2571 = vpop.permute.xlu0 %2570
    %v2573 = vmul.f32 %v2563, %v2571
    %2575 = vrot.lane.b32.xlu0 %v2573, 32
    %v2576 = vpop.permute.xlu0 %2575
    %v2578 = vadd.f32 %v2568, %v2576
    %v2579 = vtanh.pop %v2578
    %2581 = vrot.lane.b32.xlu0 %v2579, 64
    %v2582 = vpop.permute.xlu0 %2581
    %v2584 = vmul.f32 %v2563, %v2582
    %v2585 = vxor.u32 %v2557, 2147483648
    %v2586 = vmul.f32 %v2585, 1.442695
    %v2587 = vpow.pop %v2586
    %v2588 = vadd.f32 %v2587, 1.0
    %v2589 = vrcp.pop %v2588
    %v2590 = vmul.f32 1.0, %v2589
    %v2591 = vtanh.pop %v2557
    %v2593 = vrot.slane %v2454, 2
    %v2595 = vmul.f32 %v2590, %v2593
    %2597 = vrot.lane.b32.xlu0 %v2591, 64
    %v2598 = vpop.permute.xlu0 %2597
    %v2600 = vmul.f32 %v2590, %v2598
    %2602 = vrot.lane.b32.xlu0 %v2600, 32
    %v2603 = vpop.permute.xlu0 %2602
    %v2605 = vadd.f32 %v2595, %v2603
    %v2606 = vtanh.pop %v2605
    %2608 = vrot.lane.b32.xlu0 %v2606, 64
    %v2609 = vpop.permute.xlu0 %2608
    %v2611 = vmul.f32 %v2590, %v2609
    %2613 = vrot.lane.b32.xlu0 %v2584, 32
    %v2614 = vpop.permute.xlu0 %2613
    %2616 = vst.msk [vmem:[%s4 + $0x18] sm:$0xc0] %vm787, %v2614
    %2618 = vrot.lane.b32.xlu0 %v2611, 64
    %v2619 = vpop.permute.xlu0 %2618
    %2621 = vst.msk [vmem:[%s4] sm:$0x3] %vm793, %v2619
    // Predicated region
    $region22: #{rr_lstm_forward.3} parent=1 // pred_check
      _
    $region23: #{rr_lstm_forward.3} parent=1 // pred_check_branch
      %2623 = sbr.rel (0) target = $region25
    $region24: #{rr_lstm_forward.3} parent=1 // pred_region
      _
    $region25: #{rr_lstm_forward.3} parent=1 // pred_fallthru
      _
    // Predicated region
    $region26: #{rr_lstm_forward.3} parent=1 // pred_check
      _
    $region27: #{rr_lstm_forward.3} parent=1 // pred_check_branch
      %2625 = sbr.rel (0) target = $region29
    $region28: #{rr_lstm_forward.3} parent=1 // pred_region
      _
    $region29: #{rr_lstm_forward.3} parent=1 // pred_fallthru
      _
    %2626 = vsyncpa [#allocation4], 1

</llo_original>
